<compile_context>
chip_gen: v7x
topology: tpu7x:2x2x1
jax: 0.10.0
libtpu: 0.0.40
codegen_flags: <defaults>
</compile_context>

<pallas_src>
import functools
import math

import jax
import jax.numpy as jnp
from jax.experimental import pallas as pl
from jax.experimental.pallas import tpu as pltpu

EPS = 1e-5
_VMEM_LIMIT = 32 * 1024 * 1024  # safe scoped-VMEM ceiling across v5e / v6e / v7x


def _make_divisible(v, divisor, min_value=None):
    if min_value is None:
        min_value = divisor
    new_v = max(min_value, int(v + divisor / 2) // divisor * divisor)
    if new_v < 0.9 * v:
        new_v += divisor
    return new_v


def _choose_tile(L, cap=1024):
    """Largest spatial tile that divides L exactly (multiple of 8) -> no pad/slice copies."""
    if L <= cap:
        return L
    for t in range(cap - cap % 8, 7, -8):
        if L % t == 0:
            return t
    return L  # fall back to one full block


# ----------------------------- Pallas kernels -----------------------------

def _act(y, act):
    # epilogue math stays in f32 (v5e has no bf16 VPU/EUP)
    if act == "relu":
        return jnp.maximum(y, 0.0)
    if act == "hswish":
        return y * (jnp.clip(y + 3.0, 0.0, 6.0) / 6.0)  # x * relu6(x+3)/6
    return y


def _pw_kernel(*refs, act, pre_act, has_gate, has_res):
    """Fused pointwise conv: [SE gate * x, pre_act] -> matmul -> +shift -> act -> [+res]."""
    it = iter(refs)
    x_ref = next(it)
    g_ref = next(it) if has_gate else None
    w_ref = next(it)
    b_ref = next(it)
    r_ref = next(it) if has_res else None
    o_ref = next(it)

    x = x_ref[0]                                      # (TH, K) bf16
    if has_gate or pre_act != "none":
        xf = x.astype(jnp.float32)
        if has_gate:
            xf = xf * g_ref[0]                        # per-image SE gate, (1, K) broadcast
        xf = _act(xf, pre_act)
        x = xf.astype(jnp.bfloat16)
    y = jnp.dot(x, w_ref[...], preferred_element_type=jnp.float32)
    y = _act(y + b_ref[...], act)
    if has_res:
        y = y + r_ref[0].astype(jnp.float32)
    o_ref[0] = y.astype(o_ref.dtype)


def _dw_s1_kernel(x_ref, w_ref, b_ref, *rest, k, pad, act, with_pool):
    """Stride-1 depthwise conv; padding done in a VMEM scratch (no HBM padded copy)."""
    if with_pool:
        o_ref, pool_ref, pad_ref = rest
    else:
        o_ref, pad_ref = rest
        pool_ref = None
    _, H, W, C = x_ref.shape
    # Zero the padded scratch each step (VMEM-only; safe under megacore-sharded grids),
    # then drop the input block at row offset `pad`, sublane-aligned column offset 8.
    pad_ref[...] = jnp.zeros(pad_ref.shape, pad_ref.dtype)
    pad_ref[pad:pad + H, 8:8 + W, :] = x_ref[0]
    acc = jnp.zeros((H, W, C), jnp.float32)
    for di in range(k):                      # static unrolled per-tap FMA (VPU only)
        for dj in range(k):
            c0 = 8 - pad + dj
            tap = pad_ref[di:di + H, c0:c0 + W, :].astype(jnp.float32)
            acc = acc + tap * w_ref[di * k + dj]
    y = _act(acc + b_ref[...], act)
    o_ref[0] = y.astype(o_ref.dtype)
    if pool_ref is not None:                 # fused SE squeeze (global average pool)
        pool_ref[...] = jnp.mean(y, axis=(0, 1), keepdims=True)


def _dw_s2_kernel(ph_ref, w_ref, b_ref, *rest, k, stride, hq, act, with_pool):
    """Stride-2 depthwise conv over a stride-phase-decomposed padded input."""
    if with_pool:
        o_ref, pool_ref = rest
    else:
        (o_ref,) = rest
        pool_ref = None
    _, Ho, Wo, C = o_ref.shape
    acc = jnp.zeros((Ho, Wo, C), jnp.float32)
    for di in range(k):
        for dj in range(k):
            base = ((di % stride) * stride + (dj % stride)) * hq
            oi = base + di // stride
            oj = dj // stride
            tap = ph_ref[0, oi:oi + Ho, oj:oj + Wo, :].astype(jnp.float32)
            acc = acc + tap * w_ref[di * k + dj]
    y = _act(acc + b_ref[...], act)
    o_ref[0] = y.astype(o_ref.dtype)
    if pool_ref is not None:
        pool_ref[...] = jnp.mean(y, axis=(0, 1), keepdims=True)


def _avg_pool_kernel(x_ref, o_ref):
    # x_ref: (1, HW, C) -> (1, 1, C) f32 mean
    o_ref[...] = jnp.mean(x_ref[...].astype(jnp.float32), axis=1, keepdims=True)


def _se_mlp_kernel(p_ref, wr_ref, br_ref, we_ref, be_ref, o_ref):
    # pooled (N, C) -> gate (N, C) = h_sigmoid(relu(p @ w_r + b_r) @ w_e + b_e)
    h = jnp.dot(p_ref[...], wr_ref[...], preferred_element_type=jnp.float32) + br_ref[...]
    h = jnp.maximum(h, 0.0)
    g = jnp.dot(h, we_ref[...], preferred_element_type=jnp.float32) + be_ref[...]
    o_ref[...] = jnp.clip(g + 3.0, 0.0, 6.0) / 6.0


# ----------------------------- kernel wrappers -----------------------------

def _full_vmem():
    return pl.BlockSpec(memory_space=pltpu.MemorySpace.VMEM)


def pointwise_conv3d(x3, w, shift, *, act="none", pre_act="none", gate=None,
                     residual=None, out_dtype=jnp.bfloat16):
    """x3 (N, L, K) @ w (K, Cout) + shift, with optional fused SE-gate prologue,
    pre-activation, trailing activation and residual add.  Grid = (N, L // TH)."""
    N, L, K = x3.shape
    Cout = w.shape[1]
    TH = _choose_tile(L)
    grid = (N, L // TH)

    in_specs = [pl.BlockSpec((1, TH, K), lambda n, t: (n, t, 0))]
    args = [x3.astype(jnp.bfloat16)]
    if gate is not None:
        in_specs.append(pl.BlockSpec((1, 1, K), lambda n, t: (n, 0, 0)))
        args.append(gate)                                     # (N, 1, K) f32
    in_specs += [pl.BlockSpec((K, Cout), lambda n, t: (0, 0)),
                 pl.BlockSpec((1, Cout), lambda n, t: (0, 0))]
    args += [w, shift]
    if residual is not None:
        in_specs.append(pl.BlockSpec((1, TH, Cout), lambda n, t: (n, t, 0)))
        args.append(residual.astype(jnp.bfloat16))
    out_spec = pl.BlockSpec((1, TH, Cout), lambda n, t: (n, t, 0))

    cost = pl.CostEstimate(
        flops=2 * N * L * K * Cout, transcendentals=0,
        bytes_accessed=2 * (N * L * K + K * Cout + N * L * Cout) + 4 * Cout)

    return pl.pallas_call(
        functools.partial(_pw_kernel, act=act, pre_act=pre_act,
                          has_gate=gate is not None, has_res=residual is not None),
        out_shape=jax.ShapeDtypeStruct((N, L, Cout), out_dtype),
        grid=grid, in_specs=in_specs, out_specs=out_spec,
        compiler_params=pltpu.CompilerParams(
            dimension_semantics=("parallel", "parallel"),
            vmem_limit_bytes=_VMEM_LIMIT),
        cost_estimate=cost,
    )(*args)


def _dw_phases(x, k, stride, pad):
    """Stride-phase decomposition of the padded NHWC tensor (stride-2 layers only)."""
    N, H, W, C = x.shape
    Ho = (H + 2 * pad - k) // stride + 1
    Wo = (W + 2 * pad - k) // stride + 1
    Hq = (k - 1) // stride + Ho
    Wq = (k - 1) // stride + Wo
    xp = jnp.pad(x, ((0, 0), (pad, pad), (pad, pad), (0, 0)))
    parts = []
    for p in range(stride):
        for q in range(stride):
            ph = xp[:, p::stride, q::stride, :]
            ph = ph[:, :Hq, :Wq, :]
            ph = jnp.pad(ph, ((0, 0), (0, Hq - ph.shape[1]), (0, Wq - ph.shape[2]), (0, 0)))
            parts.append(ph)
    phases = jnp.concatenate(parts, axis=1)  # (N, s*s*Hq, Wq, C)
    return phases, Ho, Wo, Hq, Wq


def depthwise_conv(x, w3, b3, *, k, stride, act, with_pool):
    """Depthwise conv + folded-BN shift + act, optionally emitting the fused SE avg-pool."""
    N, H, W, C = x.shape
    pad = (k - 1) // 2
    KK = k * k
    if stride == 1:
        Ho, Wo = H, W
        Hp, Wp = H + 2 * pad, W + 8 + pad   # input stored at row offset pad, col offset 8
        kernel = functools.partial(_dw_s1_kernel, k=k, pad=pad, act=act, with_pool=with_pool)
        in_specs = [pl.BlockSpec((1, H, W, C), lambda n: (n, 0, 0, 0)),
                    pl.BlockSpec((KK, 1, C), lambda n: (0, 0, 0)),
                    pl.BlockSpec((1, 1, C), lambda n: (0, 0, 0))]
        args = (x, w3, b3)
        scratch = [pltpu.VMEM((Hp, Wp, C), jnp.bfloat16)]
    else:
        phases, Ho, Wo, Hq, Wq = _dw_phases(x, k, stride, pad)
        kernel = functools.partial(_dw_s2_kernel, k=k, stride=stride, hq=Hq,
                                   act=act, with_pool=with_pool)
        in_specs = [pl.BlockSpec((1, stride * stride * Hq, Wq, C), lambda n: (n, 0, 0, 0)),
                    pl.BlockSpec((KK, 1, C), lambda n: (0, 0, 0)),
                    pl.BlockSpec((1, 1, C), lambda n: (0, 0, 0))]
        args = (phases, w3, b3)
        scratch = []

    out_shape = [jax.ShapeDtypeStruct((N, Ho, Wo, C), jnp.bfloat16)]
    out_specs = [pl.BlockSpec((1, Ho, Wo, C), lambda n: (n, 0, 0, 0))]
    if with_pool:
        out_shape.append(jax.ShapeDtypeStruct((N, 1, C), jnp.float32))
        out_specs.append(pl.BlockSpec((1, 1, C), lambda n: (n, 0, 0)))

    res = pl.pallas_call(
        kernel,
        out_shape=out_shape if with_pool else out_shape[0],
        grid=(N,),
        in_specs=in_specs,
        out_specs=out_specs if with_pool else out_specs[0],
        scratch_shapes=scratch,
        compiler_params=pltpu.CompilerParams(dimension_semantics=("parallel",),
                                             vmem_limit_bytes=_VMEM_LIMIT),
    )(*args)
    if with_pool:
        return res[0], res[1]
    return res, None


def global_avg_pool(x3):
    """(N, HW, C) -> (N, 1, C) f32 mean over HW (classifier head only)."""
    N, HW, C = x3.shape
    return pl.pallas_call(
        _avg_pool_kernel,
        out_shape=jax.ShapeDtypeStruct((N, 1, C), jnp.float32),
        grid=(N,),
        in_specs=[pl.BlockSpec((1, HW, C), lambda n: (n, 0, 0))],
        out_specs=pl.BlockSpec((1, 1, C), lambda n: (n, 0, 0)),
        compiler_params=pltpu.CompilerParams(dimension_semantics=("parallel",),
                                             vmem_limit_bytes=_VMEM_LIMIT),
    )(x3)


def se_mlp(pooled, w_r, b_r, w_e, b_e):
    """Fused SE squeeze path: pooled (N,C) -> h_sigmoid gate (N,C)."""
    N, C = pooled.shape
    return pl.pallas_call(
        _se_mlp_kernel,
        out_shape=jax.ShapeDtypeStruct((N, C), jnp.float32),
        in_specs=[_full_vmem()] * 5,
        out_specs=_full_vmem(),
    )(pooled, w_r, b_r, w_e, b_e)


# ----------------------------- JAX glue -----------------------------

def extract_patches(x, k, stride, pad):
    """im2col for the (tiny, 3-channel) stem conv only. x: (N,H,W,C) -> (N,Ho,Wo,k*k,C)."""
    N, H, W, C = x.shape
    xp = jnp.pad(x, ((0, 0), (pad, pad), (pad, pad), (0, 0)))
    Ho = (H + 2 * pad - k) // stride + 1
    Wo = (W + 2 * pad - k) // stride + 1
    cols = []
    for di in range(k):
        for dj in range(k):
            cols.append(xp[:, di:di + stride * Ho:stride, dj:dj + stride * Wo:stride, :])
    return jnp.stack(cols, axis=3), Ho, Wo


# ----------------------------- parameters -----------------------------

class _KeyGen:
    def __init__(self, key):
        self._key = key

    def next(self):
        self._key, k = jax.random.split(self._key)
        return k


def _conv_w(kg, k, cin, cout):
    # NOTE: tap-major (k*k, cin) flattening -- permute PyTorch weights before loading them.
    std = math.sqrt(2.0 / (k * k * cout))
    return jax.random.normal(kg.next(), (k * k * cin, cout), jnp.float32) * std


def _dw_w(kg, k, c):
    std = math.sqrt(2.0 / (k * k * c))
    return jax.random.normal(kg.next(), (k * k, c), jnp.float32) * std


def _bn_fold(w, c):
    """Fold inference BN (gamma=1, beta=0, mean=0, var=1) into weight scale + shift.
    # TODO(synk): real running statistics must be folded here when porting trained weights."""
    gamma = jnp.ones((c,), jnp.float32)
    beta = jnp.zeros((c,), jnp.float32)
    mean = jnp.zeros((c,), jnp.float32)
    var = jnp.ones((c,), jnp.float32)
    scale = gamma / jnp.sqrt(var + EPS)
    shift = beta - mean * scale
    return w * scale[None, :], shift


def _linear(kg, cin, cout):
    w = jax.random.normal(kg.next(), (cin, cout), jnp.float32) * 0.01
    return w.astype(jnp.bfloat16), jnp.zeros((1, cout), jnp.float32)


def _se_params(kg, c):
    reduced = _make_divisible(c * 0.25, 8)
    return dict(
        w_r=_conv_w(kg, 1, c, reduced), b_r=jnp.zeros((1, reduced), jnp.float32),
        w_e=_conv_w(kg, 1, reduced, c), b_e=jnp.zeros((1, c), jnp.float32),
    )


# ----------------------------- model -----------------------------

class MobileNetV3Pallas:
    def __init__(self, cfgs, mode, num_classes=1000, width=1.0, dropout=0.2,
                 flatten=True, key=None):
        assert mode in ["large", "small"]
        self.cfgs = cfgs
        self.flatten = flatten
        self.dropout = dropout
        kg = _KeyGen(key if key is not None else jax.random.PRNGKey(0))

        input_channel = _make_divisible(16 * width, 8)
        w, shift = _bn_fold(_conv_w(kg, 3, 3, input_channel), input_channel)
        self.stem = dict(k=3, stride=2, pad=1,
                         w=w.astype(jnp.bfloat16), shift=shift.reshape(1, -1))

        self.blocks = []
        exp_size = input_channel
        for k, t, c, use_se, use_hs, st in self.cfgs:
            output_channel = _make_divisible(c * width, 8)
            exp_size = _make_divisible(input_channel * t, 8)
            blk = dict(inp=input_channel, hidden=exp_size, oup=output_channel,
                       k=k, stride=st, use_se=bool(use_se), use_hs=bool(use_hs),
                       identity=(st == 1 and input_channel == output_channel))
            if input_channel != exp_size:
                ew, es = _bn_fold(_conv_w(kg, 1, input_channel, exp_size), exp_size)
                blk["exp_w"], blk["exp_shift"] = ew.astype(jnp.bfloat16), es.reshape(1, -1)
            dw, ds = _bn_fold(_dw_w(kg, k, exp_size), exp_size)
            blk["dw_w"] = dw.reshape(k * k, 1, exp_size)       # f32, kernel-ready shape
            blk["dw_shift"] = ds.reshape(1, 1, exp_size)
            blk["se"] = _se_params(kg, exp_size) if use_se else None
            pw, ps = _bn_fold(_conv_w(kg, 1, exp_size, output_channel), output_channel)
            blk["pw_w"], blk["pw_shift"] = pw.astype(jnp.bfloat16), ps.reshape(1, -1)
            self.blocks.append(blk)
            input_channel = output_channel

        fw, fs = _bn_fold(_conv_w(kg, 1, input_channel, exp_size), exp_size)
        self.final_conv = dict(w=fw.astype(jnp.bfloat16), shift=fs.reshape(1, -1))
        self.exp_size = exp_size

        if self.flatten:
            out_ch = {"large": 1280, "small": 1024}[mode]
            out_ch = _make_divisible(out_ch * width, 8) if width > 1.0 else out_ch
            self.fc1 = _linear(kg, exp_size, out_ch)
            self.fc2 = _linear(kg, out_ch, num_classes)

    # --- building blocks ---

    def _pw(self, x, w, shift, *, act="none", pre_act="none", gate=None, residual=None):
        Nb, H, W, C = x.shape
        x3 = x.reshape(Nb, H * W, C)
        r3 = residual.reshape(Nb, H * W, residual.shape[-1]) if residual is not None else None
        y3 = pointwise_conv3d(x3, w, shift, act=act, pre_act=pre_act, gate=gate, residual=r3)
        return y3.reshape(Nb, H, W, y3.shape[-1])

    def _dw(self, x, blk, *, act, with_pool):
        return depthwise_conv(x, blk["dw_w"], blk["dw_shift"],
                              k=blk["k"], stride=blk["stride"], act=act, with_pool=with_pool)

    def _se_gate(self, pool3, sp):
        Nb, _, C = pool3.shape
        gate = se_mlp(pool3.reshape(Nb, C), sp["w_r"], sp["b_r"], sp["w_e"], sp["b_e"])
        return gate.reshape(Nb, 1, C)

    def _block(self, x, blk):
        act = "hswish" if blk["use_hs"] else "relu"
        res = x if blk["identity"] else None
        use_se = blk["se"] is not None
        if blk["inp"] == blk["hidden"]:
            # dw -> BN -> act -> SE -> pw -> BN (+res); SE pool fused into dw, gate into pw.
            y, pool = self._dw(x, blk, act=act, with_pool=use_se)
            gate = self._se_gate(pool, blk["se"]) if use_se else None
            y = self._pw(y, blk["pw_w"], blk["pw_shift"], act="none",
                         gate=gate, pre_act="none", residual=res)
        else:
            # pw -> BN -> act -> dw -> BN -> [SE -> act] -> pw -> BN (+res)
            y = self._pw(x, blk["exp_w"], blk["exp_shift"], act=act)
            if use_se:
                y, pool = self._dw(y, blk, act="none", with_pool=True)
                gate = self._se_gate(pool, blk["se"])
                y = self._pw(y, blk["pw_w"], blk["pw_shift"], act="none",
                             gate=gate, pre_act=act, residual=res)
            else:
                y, _ = self._dw(y, blk, act=act, with_pool=False)
                y = self._pw(y, blk["pw_w"], blk["pw_shift"], act="none", residual=res)
        return y

    # --- forward ---

    def __call__(self, x_nchw):
        x = jnp.transpose(x_nchw, (0, 2, 3, 1)).astype(jnp.bfloat16)  # NCHW -> NHWC bf16
        # TODO(synk): stem im2col still materializes the 3x3 patch stack in HBM (tiny,
        # 3 input channels) -- lowest-priority traffic fix per the perf review.
        patches, Ho, Wo = extract_patches(x, self.stem["k"], self.stem["stride"],
                                          self.stem["pad"])
        Nb = x.shape[0]
        x3 = patches.reshape(Nb, Ho * Wo, -1)
        x = pointwise_conv3d(x3, self.stem["w"], self.stem["shift"],
                             act="hswish").reshape(Nb, Ho, Wo, -1)
        for blk in self.blocks:
            x = self._block(x, blk)
        x = self._pw(x, self.final_conv["w"], self.final_conv["shift"], act="hswish")
        if not self.flatten:
            return jnp.transpose(x.astype(jnp.float32), (0, 3, 1, 2))  # back to NCHW
        Nb, H, W, C = x.shape
        pooled = global_avg_pool(x.reshape(Nb, H * W, C))              # (Nb, 1, C) f32
        # TODO(synk): F.dropout / nn.Dropout are identity at inference (model.eval()).
        w1, b1 = self.fc1
        w2, b2 = self.fc2
        h = pointwise_conv3d(pooled.reshape(1, Nb, C), w1, b1, act="hswish")
        out = pointwise_conv3d(h, w2, b2, act="none", out_dtype=jnp.float32)
        return out.reshape(Nb, -1)


# ----------------------------- main -----------------------------

if __name__ == "__main__":
    # mobilenetv3-small style config (truncated for a small synthetic run):
    # (kernel, expansion t, out channels c, use_se, use_hs, stride)
    cfgs = [
        [3, 1,    16, 1, 0, 2],
        [3, 4.5,  24, 0, 0, 2],
        [3, 3.67, 24, 0, 0, 1],
        [5, 4,    40, 1, 1, 2],
    ]
    model = MobileNetV3Pallas(cfgs, mode="small", num_classes=10, width=1.0,
                              dropout=0.2, flatten=True, key=jax.random.PRNGKey(42))

    x = jax.random.normal(jax.random.PRNGKey(0), (2, 3, 32, 32), jnp.float32)  # NCHW
    out = jax.jit(model.__call__)(x)
    out = jax.block_until_ready(out)
    assert out.shape == (2, 10), out.shape
    assert jnp.all(jnp.isfinite(out))
    print("KERNEL_OK")
</pallas_src>

<mosaic_0001>
module attributes {stable_mosaic.version = 11 : i64} {
  func.func @_pw_kernel(%arg0: i32, %arg1: i32, %arg2: memref<1x256x27xbf16, #tpu.memory_space<vmem>>, %arg3: memref<27x16xbf16, #tpu.memory_space<vmem>>, %arg4: memref<1x16xf32, #tpu.memory_space<vmem>>, %arg5: memref<1x256x16xbf16, #tpu.memory_space<vmem>>) attributes {dimension_semantics = [#tpu.dimension_semantics<parallel>, #tpu.dimension_semantics<parallel>], iteration_bounds = array<i64: 2, 1>, scalar_prefetch = 0 : i64, scratch_operands = 0 : i64, tpu.core_type = #tpu.core_type<tc>, window_params = [{transform_indices = @transform_0, window_bounds = array<i64: 1, 256, 27>}, {pipeline_mode = #tpu.pipeline_mode<synchronous>, transform_indices = @transform_1, window_bounds = array<i64: 27, 16>}, {pipeline_mode = #tpu.pipeline_mode<synchronous>, transform_indices = @transform_2, window_bounds = array<i64: 1, 16>}, {transform_indices = @transform_3, window_bounds = array<i64: 1, 256, 16>}]} {
    %c0 = arith.constant 0 : index
    %c0_0 = arith.constant 0 : index
    %c0_1 = arith.constant 0 : index
    %0 = vector.load %arg2[%c0, %c0_0, %c0_1] : memref<1x256x27xbf16, #tpu.memory_space<vmem>>, vector<1x256x27xbf16>
    %1 = vector.shape_cast %0 : vector<1x256x27xbf16> to vector<256x27xbf16>
    %c0_2 = arith.constant 0 : index
    %c0_3 = arith.constant 0 : index
    %2 = vector.load %arg3[%c0_2, %c0_3] : memref<27x16xbf16, #tpu.memory_space<vmem>>, vector<27x16xbf16>
    %cst = arith.constant dense<0.000000e+00> : vector<256x16xf32>
    %3 = tpu.matmul %1, %2, %cst {dimension_numbers = #tpu.dot_dimension_numbers<[1], [0], [0], [1], [0, 0, 1, 1], [], []>} : vector<256x27xbf16>, vector<27x16xbf16>, vector<256x16xf32> -> vector<256x16xf32>
    %c0_4 = arith.constant 0 : index
    %c0_5 = arith.constant 0 : index
    %4 = vector.load %arg4[%c0_4, %c0_5] : memref<1x16xf32, #tpu.memory_space<vmem>>, vector<1x16xf32>
    %5 = vector.broadcast %4 : vector<1x16xf32> to vector<256x16xf32>
    %6 = arith.addf %3, %5 : vector<256x16xf32>
    %cst_6 = arith.constant 3.000000e+00 : f32
    %7 = vector.broadcast %cst_6 : f32 to vector<256x16xf32>
    %8 = arith.addf %6, %7 : vector<256x16xf32>
    %cst_7 = arith.constant 0.000000e+00 : f32
    %cst_8 = arith.constant 6.000000e+00 : f32
    %9 = vector.broadcast %cst_7 : f32 to vector<256x16xf32>
    %10 = arith.maximumf %9, %8 : vector<256x16xf32>
    %11 = vector.broadcast %cst_8 : f32 to vector<256x16xf32>
    %12 = arith.minimumf %11, %10 : vector<256x16xf32>
    %cst_9 = arith.constant 6.000000e+00 : f32
    %13 = vector.broadcast %cst_9 : f32 to vector<256x16xf32>
    %14 = arith.divf %12, %13 : vector<256x16xf32>
    %15 = arith.mulf %6, %14 : vector<256x16xf32>
    %16 = arith.truncf %15 : vector<256x16xf32> to vector<256x16xbf16>
    %c0_10 = arith.constant 0 : index
    %c0_11 = arith.constant 0 : index
    %c0_12 = arith.constant 0 : index
    %17 = vector.load %arg5[%c0_10, %c0_11, %c0_12] : memref<1x256x16xbf16, #tpu.memory_space<vmem>>, vector<1x256x16xbf16>
    %18 = vector.shape_cast %17 : vector<1x256x16xbf16> to vector<256x16xbf16>
    %19 = vector.shape_cast %16 : vector<256x16xbf16> to vector<1x256x16xbf16>
    tpu.vector_store %arg5[%c0_10, %c0_11, %c0_12], %19 {strides = array<i32>} : memref<1x256x16xbf16, #tpu.memory_space<vmem>>, vector<1x256x16xbf16>,
    return
  }
  func.func @transform_0(%arg0: i32, %arg1: i32) -> (i32, i32, i32) {
    %c0_i32 = arith.constant 0 : i32
    %c0_i32_0 = arith.constant 0 : i32
    return %arg0, %arg1, %c0_i32 : i32, i32, i32
  }
  func.func @transform_1(%arg0: i32, %arg1: i32) -> (i32, i32) {
    %c0_i32 = arith.constant 0 : i32
    %c0_i32_0 = arith.constant 0 : i32
    %c0_i32_1 = arith.constant 0 : i32
    return %c0_i32, %c0_i32_0 : i32, i32
  }
  func.func @transform_2(%arg0: i32, %arg1: i32) -> (i32, i32) {
    %c0_i32 = arith.constant 0 : i32
    %c0_i32_0 = arith.constant 0 : i32
    %c0_i32_1 = arith.constant 0 : i32
    return %c0_i32, %c0_i32_0 : i32, i32
  }
  func.func @transform_3(%arg0: i32, %arg1: i32) -> (i32, i32, i32) {
    %c0_i32 = arith.constant 0 : i32
    %c0_i32_0 = arith.constant 0 : i32
    return %arg0, %arg1, %c0_i32 : i32, i32, i32
  }
}

module attributes {stable_mosaic.version = 11 : i64} {
  func.func @_dw_s2_kernel(%arg0: i32, %arg1: memref<1x36x9x16xbf16, #tpu.memory_space<vmem>>, %arg2: memref<9x1x16xf32, #tpu.memory_space<vmem>>, %arg3: memref<1x1x16xf32, #tpu.memory_space<vmem>>, %arg4: memref<1x8x8x16xbf16, #tpu.memory_space<vmem>>, %arg5: memref<1x1x16xf32, #tpu.memory_space<vmem>>) attributes {dimension_semantics = [#tpu.dimension_semantics<parallel>], iteration_bounds = array<i64: 2>, scalar_prefetch = 0 : i64, scratch_operands = 0 : i64, tpu.core_type = #tpu.core_type<tc>, window_params = [{transform_indices = @transform_0, window_bounds = array<i64: 1, 36, 9, 16>}, {pipeline_mode = #tpu.pipeline_mode<synchronous>, transform_indices = @transform_1, window_bounds = array<i64: 9, 1, 16>}, {pipeline_mode = #tpu.pipeline_mode<synchronous>, transform_indices = @transform_2, window_bounds = array<i64: 1, 1, 16>}, {transform_indices = @transform_3, window_bounds = array<i64: 1, 8, 8, 16>}, {transform_indices = @transform_4, window_bounds = array<i64: 1, 1, 16>}]} {
    %cst = arith.constant 0.000000e+00 : f32
    %0 = vector.broadcast %cst : f32 to vector<8x8x16xf32>
    %c0 = arith.constant 0 : index
    %c0_0 = arith.constant 0 : index
    %c0_1 = arith.constant 0 : index
    %c0_2 = arith.constant 0 : index
    %1 = vector.load %arg1[%c0, %c0_0, %c0_1, %c0_2] : memref<1x36x9x16xbf16, #tpu.memory_space<vmem>>, vector<1x8x8x16xbf16>
    %2 = vector.shape_cast %1 : vector<1x8x8x16xbf16> to vector<8x8x16xbf16>
    %3 = arith.extf %2 : vector<8x8x16xbf16> to vector<8x8x16xf32>
    %c0_3 = arith.constant 0 : index
    %c0_4 = arith.constant 0 : index
    %c0_5 = arith.constant 0 : index
    %4 = vector.load %arg2[%c0_3, %c0_4, %c0_5] : memref<9x1x16xf32, #tpu.memory_space<vmem>>, vector<1x1x16xf32>
    %5 = vector.shape_cast %4 : vector<1x1x16xf32> to vector<1x16xf32>
    %6 = vector.shape_cast %5 : vector<1x16xf32> to vector<1x1x16xf32>
    %7 = vector.broadcast %6 : vector<1x1x16xf32> to vector<8x8x16xf32>
    %8 = arith.mulf %3, %7 : vector<8x8x16xf32>
    %9 = arith.addf %0, %8 : vector<8x8x16xf32>
    %c0_6 = arith.constant 0 : index
    %c9 = arith.constant 9 : index
    %c0_7 = arith.constant 0 : index
    %c0_8 = arith.constant 0 : index
    %10 = vector.load %arg1[%c0_6, %c9, %c0_7, %c0_8] : memref<1x36x9x16xbf16, #tpu.memory_space<vmem>>, vector<1x8x8x16xbf16>
    %11 = vector.shape_cast %10 : vector<1x8x8x16xbf16> to vector<8x8x16xbf16>
    %12 = arith.extf %11 : vector<8x8x16xbf16> to vector<8x8x16xf32>
    %c1 = arith.constant 1 : index
    %c0_9 = arith.constant 0 : index
    %c0_10 = arith.constant 0 : index
    %13 = vector.load %arg2[%c1, %c0_9, %c0_10] : memref<9x1x16xf32, #tpu.memory_space<vmem>>, vector<1x1x16xf32>
    %14 = vector.shape_cast %13 : vector<1x1x16xf32> to vector<1x16xf32>
    %15 = vector.shape_cast %14 : vector<1x16xf32> to vector<1x1x16xf32>
    %16 = vector.broadcast %15 : vector<1x1x16xf32> to vector<8x8x16xf32>
    %17 = arith.mulf %12, %16 : vector<8x8x16xf32>
    %18 = arith.addf %9, %17 : vector<8x8x16xf32>
    %c0_11 = arith.constant 0 : index
    %c0_12 = arith.constant 0 : index
    %c1_13 = arith.constant 1 : index
    %c0_14 = arith.constant 0 : index
    %19 = vector.load %arg1[%c0_11, %c0_12, %c1_13, %c0_14] : memref<1x36x9x16xbf16, #tpu.memory_space<vmem>>, vector<1x8x8x16xbf16>
    %20 = vector.shape_cast %19 : vector<1x8x8x16xbf16> to vector<8x8x16xbf16>
    %21 = arith.extf %20 : vector<8x8x16xbf16> to vector<8x8x16xf32>
    %c2 = arith.constant 2 : index
    %c0_15 = arith.constant 0 : index
    %c0_16 = arith.constant 0 : index
    %22 = vector.load %arg2[%c2, %c0_15, %c0_16] : memref<9x1x16xf32, #tpu.memory_space<vmem>>, vector<1x1x16xf32>
    %23 = vector.shape_cast %22 : vector<1x1x16xf32> to vector<1x16xf32>
    %24 = vector.shape_cast %23 : vector<1x16xf32> to vector<1x1x16xf32>
    %25 = vector.broadcast %24 : vector<1x1x16xf32> to vector<8x8x16xf32>
    %26 = arith.mulf %21, %25 : vector<8x8x16xf32>
    %27 = arith.addf %18, %26 : vector<8x8x16xf32>
    %c0_17 = arith.constant 0 : index
    %c18 = arith.constant 18 : index
    %c0_18 = arith.constant 0 : index
    %c0_19 = arith.constant 0 : index
    %28 = vector.load %arg1[%c0_17, %c18, %c0_18, %c0_19] : memref<1x36x9x16xbf16, #tpu.memory_space<vmem>>, vector<1x8x8x16xbf16>
    %29 = vector.shape_cast %28 : vector<1x8x8x16xbf16> to vector<8x8x16xbf16>
    %30 = arith.extf %29 : vector<8x8x16xbf16> to vector<8x8x16xf32>
    %c3 = arith.constant 3 : index
    %c0_20 = arith.constant 0 : index
    %c0_21 = arith.constant 0 : index
    %31 = vector.load %arg2[%c3, %c0_20, %c0_21] : memref<9x1x16xf32, #tpu.memory_space<vmem>>, vector<1x1x16xf32>
    %32 = vector.shape_cast %31 : vector<1x1x16xf32> to vector<1x16xf32>
    %33 = vector.shape_cast %32 : vector<1x16xf32> to vector<1x1x16xf32>
    %34 = vector.broadcast %33 : vector<1x1x16xf32> to vector<8x8x16xf32>
    %35 = arith.mulf %30, %34 : vector<8x8x16xf32>
    %36 = arith.addf %27, %35 : vector<8x8x16xf32>
    %c0_22 = arith.constant 0 : index
    %c27 = arith.constant 27 : index
    %c0_23 = arith.constant 0 : index
    %c0_24 = arith.constant 0 : index
    %37 = vector.load %arg1[%c0_22, %c27, %c0_23, %c0_24] : memref<1x36x9x16xbf16, #tpu.memory_space<vmem>>, vector<1x8x8x16xbf16>
    %38 = vector.shape_cast %37 : vector<1x8x8x16xbf16> to vector<8x8x16xbf16>
    %39 = arith.extf %38 : vector<8x8x16xbf16> to vector<8x8x16xf32>
    %c4 = arith.constant 4 : index
    %c0_25 = arith.constant 0 : index
    %c0_26 = arith.constant 0 : index
    %40 = vector.load %arg2[%c4, %c0_25, %c0_26] : memref<9x1x16xf32, #tpu.memory_space<vmem>>, vector<1x1x16xf32>
    %41 = vector.shape_cast %40 : vector<1x1x16xf32> to vector<1x16xf32>
    %42 = vector.shape_cast %41 : vector<1x16xf32> to vector<1x1x16xf32>
    %43 = vector.broadcast %42 : vector<1x1x16xf32> to vector<8x8x16xf32>
    %44 = arith.mulf %39, %43 : vector<8x8x16xf32>
    %45 = arith.addf %36, %44 : vector<8x8x16xf32>
    %c0_27 = arith.constant 0 : index
    %c18_28 = arith.constant 18 : index
    %c1_29 = arith.constant 1 : index
    %c0_30 = arith.constant 0 : index
    %46 = vector.load %arg1[%c0_27, %c18_28, %c1_29, %c0_30] : memref<1x36x9x16xbf16, #tpu.memory_space<vmem>>, vector<1x8x8x16xbf16>
    %47 = vector.shape_cast %46 : vector<1x8x8x16xbf16> to vector<8x8x16xbf16>
    %48 = arith.extf %47 : vector<8x8x16xbf16> to vector<8x8x16xf32>
    %c5 = arith.constant 5 : index
    %c0_31 = arith.constant 0 : index
    %c0_32 = arith.constant 0 : index
    %49 = vector.load %arg2[%c5, %c0_31, %c0_32] : memref<9x1x16xf32, #tpu.memory_space<vmem>>, vector<1x1x16xf32>
    %50 = vector.shape_cast %49 : vector<1x1x16xf32> to vector<1x16xf32>
    %51 = vector.shape_cast %50 : vector<1x16xf32> to vector<1x1x16xf32>
    %52 = vector.broadcast %51 : vector<1x1x16xf32> to vector<8x8x16xf32>
    %53 = arith.mulf %48, %52 : vector<8x8x16xf32>
    %54 = arith.addf %45, %53 : vector<8x8x16xf32>
    %c0_33 = arith.constant 0 : index
    %c1_34 = arith.constant 1 : index
    %c0_35 = arith.constant 0 : index
    %c0_36 = arith.constant 0 : index
    %55 = vector.load %arg1[%c0_33, %c1_34, %c0_35, %c0_36] : memref<1x36x9x16xbf16, #tpu.memory_space<vmem>>, vector<1x8x8x16xbf16>
    %56 = vector.shape_cast %55 : vector<1x8x8x16xbf16> to vector<8x8x16xbf16>
    %57 = arith.extf %56 : vector<8x8x16xbf16> to vector<8x8x16xf32>
    %c6 = arith.constant 6 : index
    %c0_37 = arith.constant 0 : index
    %c0_38 = arith.constant 0 : index
    %58 = vector.load %arg2[%c6, %c0_37, %c0_38] : memref<9x1x16xf32, #tpu.memory_space<vmem>>, vector<1x1x16xf32>
    %59 = vector.shape_cast %58 : vector<1x1x16xf32> to vector<1x16xf32>
    %60 = vector.shape_cast %59 : vector<1x16xf32> to vector<1x1x16xf32>
    %61 = vector.broadcast %60 : vector<1x1x16xf32> to vector<8x8x16xf32>
    %62 = arith.mulf %57, %61 : vector<8x8x16xf32>
    %63 = arith.addf %54, %62 : vector<8x8x16xf32>
    %c0_39 = arith.constant 0 : index
    %c10 = arith.constant 10 : index
    %c0_40 = arith.constant 0 : index
    %c0_41 = arith.constant 0 : index
    %64 = vector.load %arg1[%c0_39, %c10, %c0_40, %c0_41] : memref<1x36x9x16xbf16, #tpu.memory_space<vmem>>, vector<1x8x8x16xbf16>
    %65 = vector.shape_cast %64 : vector<1x8x8x16xbf16> to vector<8x8x16xbf16>
    %66 = arith.extf %65 : vector<8x8x16xbf16> to vector<8x8x16xf32>
    %c7 = arith.constant 7 : index
    %c0_42 = arith.constant 0 : index
    %c0_43 = arith.constant 0 : index
    %67 = vector.load %arg2[%c7, %c0_42, %c0_43] : memref<9x1x16xf32, #tpu.memory_space<vmem>>, vector<1x1x16xf32>
    %68 = vector.shape_cast %67 : vector<1x1x16xf32> to vector<1x16xf32>
    %69 = vector.shape_cast %68 : vector<1x16xf32> to vector<1x1x16xf32>
    %70 = vector.broadcast %69 : vector<1x1x16xf32> to vector<8x8x16xf32>
    %71 = arith.mulf %66, %70 : vector<8x8x16xf32>
    %72 = arith.addf %63, %71 : vector<8x8x16xf32>
    %c0_44 = arith.constant 0 : index
    %c1_45 = arith.constant 1 : index
    %c1_46 = arith.constant 1 : index
    %c0_47 = arith.constant 0 : index
    %73 = vector.load %arg1[%c0_44, %c1_45, %c1_46, %c0_47] : memref<1x36x9x16xbf16, #tpu.memory_space<vmem>>, vector<1x8x8x16xbf16>
    %74 = vector.shape_cast %73 : vector<1x8x8x16xbf16> to vector<8x8x16xbf16>
    %75 = arith.extf %74 : vector<8x8x16xbf16> to vector<8x8x16xf32>
    %c8 = arith.constant 8 : index
    %c0_48 = arith.constant 0 : index
    %c0_49 = arith.constant 0 : index
    %76 = vector.load %arg2[%c8, %c0_48, %c0_49] : memref<9x1x16xf32, #tpu.memory_space<vmem>>, vector<1x1x16xf32>
    %77 = vector.shape_cast %76 : vector<1x1x16xf32> to vector<1x16xf32>
    %78 = vector.shape_cast %77 : vector<1x16xf32> to vector<1x1x16xf32>
    %79 = vector.broadcast %78 : vector<1x1x16xf32> to vector<8x8x16xf32>
    %80 = arith.mulf %75, %79 : vector<8x8x16xf32>
    %81 = arith.addf %72, %80 : vector<8x8x16xf32>
    %c0_50 = arith.constant 0 : index
    %c0_51 = arith.constant 0 : index
    %c0_52 = arith.constant 0 : index
    %82 = vector.load %arg3[%c0_50, %c0_51, %c0_52] : memref<1x1x16xf32, #tpu.memory_space<vmem>>, vector<1x1x16xf32>
    %83 = vector.broadcast %82 : vector<1x1x16xf32> to vector<8x8x16xf32>
    %84 = arith.addf %81, %83 : vector<8x8x16xf32>
    %cst_53 = arith.constant 0.000000e+00 : f32
    %85 = vector.broadcast %cst_53 : f32 to vector<8x8x16xf32>
    %86 = arith.maximumf %84, %85 : vector<8x8x16xf32>
    %87 = arith.truncf %86 : vector<8x8x16xf32> to vector<8x8x16xbf16>
    %c0_54 = arith.constant 0 : index
    %c0_55 = arith.constant 0 : index
    %c0_56 = arith.constant 0 : index
    %c0_57 = arith.constant 0 : index
    %88 = vector.load %arg4[%c0_54, %c0_55, %c0_56, %c0_57] : memref<1x8x8x16xbf16, #tpu.memory_space<vmem>>, vector<1x8x8x16xbf16>
    %89 = vector.shape_cast %88 : vector<1x8x8x16xbf16> to vector<8x8x16xbf16>
    %90 = vector.shape_cast %87 : vector<8x8x16xbf16> to vector<1x8x8x16xbf16>
    tpu.vector_store %arg4[%c0_54, %c0_55, %c0_56, %c0_57], %90 {strides = array<i32>} : memref<1x8x8x16xbf16, #tpu.memory_space<vmem>>, vector<1x8x8x16xbf16>,
    %cst_58 = arith.constant dense<0.000000e+00> : vector<16xf32>
    %91 = vector.multi_reduction <add>, %86, %cst_58 [0, 1] : vector<8x8x16xf32> to vector<16xf32>
    %92 = vector.shape_cast %91 : vector<16xf32> to vector<1x1x16xf32>
    %cst_59 = arith.constant 6.400000e+01 : f32
    %93 = vector.broadcast %cst_59 : f32 to vector<1x1x16xf32>
    %94 = arith.divf %92, %93 : vector<1x1x16xf32>
    %c0_60 = arith.constant 0 : index
    %c0_61 = arith.constant 0 : index
    %c0_62 = arith.constant 0 : index
    %95 = vector.load %arg5[%c0_60, %c0_61, %c0_62] : memref<1x1x16xf32, #tpu.memory_space<vmem>>, vector<1x1x16xf32>
    tpu.vector_store %arg5[%c0_60, %c0_61, %c0_62], %94 {strides = array<i32>} : memref<1x1x16xf32, #tpu.memory_space<vmem>>, vector<1x1x16xf32>,
    return
  }
  func.func @transform_0(%arg0: i32) -> (i32, i32, i32, i32) {
    %c0_i32 = arith.constant 0 : i32
    %c0_i32_0 = arith.constant 0 : i32
    %c0_i32_1 = arith.constant 0 : i32
    %c0_i32_2 = arith.constant 0 : i32
    return %arg0, %c0_i32, %c0_i32_0, %c0_i32_1 : i32, i32, i32, i32
  }
  func.func @transform_1(%arg0: i32) -> (i32, i32, i32) {
    %c0_i32 = arith.constant 0 : i32
    %c0_i32_0 = arith.constant 0 : i32
    %c0_i32_1 = arith.constant 0 : i32
    %c0_i32_2 = arith.constant 0 : i32
    return %c0_i32, %c0_i32_0, %c0_i32_1 : i32, i32, i32
  }
  func.func @transform_2(%arg0: i32) -> (i32, i32, i32) {
    %c0_i32 = arith.constant 0 : i32
    %c0_i32_0 = arith.constant 0 : i32
    %c0_i32_1 = arith.constant 0 : i32
    %c0_i32_2 = arith.constant 0 : i32
    return %c0_i32, %c0_i32_0, %c0_i32_1 : i32, i32, i32
  }
  func.func @transform_3(%arg0: i32) -> (i32, i32, i32, i32) {
    %c0_i32 = arith.constant 0 : i32
    %c0_i32_0 = arith.constant 0 : i32
    %c0_i32_1 = arith.constant 0 : i32
    %c0_i32_2 = arith.constant 0 : i32
    return %arg0, %c0_i32, %c0_i32_0, %c0_i32_1 : i32, i32, i32, i32
  }
  func.func @transform_4(%arg0: i32) -> (i32, i32, i32) {
    %c0_i32 = arith.constant 0 : i32
    %c0_i32_0 = arith.constant 0 : i32
    %c0_i32_1 = arith.constant 0 : i32
    return %arg0, %c0_i32, %c0_i32_0 : i32, i32, i32
  }
}

module attributes {stable_mosaic.version = 11 : i64} {
  func.func @_se_mlp_kernel(%arg0: memref<2x16xf32, #tpu.memory_space<vmem>>, %arg1: memref<16x8xf32, #tpu.memory_space<vmem>>, %arg2: memref<1x8xf32, #tpu.memory_space<vmem>>, %arg3: memref<8x16xf32, #tpu.memory_space<vmem>>, %arg4: memref<1x16xf32, #tpu.memory_space<vmem>>, %arg5: memref<2x16xf32, #tpu.memory_space<vmem>>) attributes {dimension_semantics = [], scalar_prefetch = 0 : i64, scratch_operands = 0 : i64, tpu.core_type = #tpu.core_type<tc>} {
    %c0 = arith.constant 0 : index
    %c0_0 = arith.constant 0 : index
    %0 = vector.load %arg0[%c0, %c0_0] : memref<2x16xf32, #tpu.memory_space<vmem>>, vector<2x16xf32>
    %c0_1 = arith.constant 0 : index
    %c0_2 = arith.constant 0 : index
    %1 = vector.load %arg1[%c0_1, %c0_2] : memref<16x8xf32, #tpu.memory_space<vmem>>, vector<16x8xf32>
    %cst = arith.constant dense<0.000000e+00> : vector<2x8xf32>
    %2 = tpu.matmul %0, %1, %cst {dimension_numbers = #tpu.dot_dimension_numbers<[1], [0], [0], [1], [0, 0, 1, 1], [], []>} : vector<2x16xf32>, vector<16x8xf32>, vector<2x8xf32> -> vector<2x8xf32>
    %c0_3 = arith.constant 0 : index
    %c0_4 = arith.constant 0 : index
    %3 = vector.load %arg2[%c0_3, %c0_4] : memref<1x8xf32, #tpu.memory_space<vmem>>, vector<1x8xf32>
    %4 = vector.broadcast %3 : vector<1x8xf32> to vector<2x8xf32>
    %5 = arith.addf %2, %4 : vector<2x8xf32>
    %cst_5 = arith.constant 0.000000e+00 : f32
    %6 = vector.broadcast %cst_5 : f32 to vector<2x8xf32>
    %7 = arith.maximumf %5, %6 : vector<2x8xf32>
    %c0_6 = arith.constant 0 : index
    %c0_7 = arith.constant 0 : index
    %8 = vector.load %arg3[%c0_6, %c0_7] : memref<8x16xf32, #tpu.memory_space<vmem>>, vector<8x16xf32>
    %cst_8 = arith.constant dense<0.000000e+00> : vector<2x16xf32>
    %9 = tpu.matmul %7, %8, %cst_8 {dimension_numbers = #tpu.dot_dimension_numbers<[1], [0], [0], [1], [0, 0, 1, 1], [], []>} : vector<2x8xf32>, vector<8x16xf32>, vector<2x16xf32> -> vector<2x16xf32>
    %c0_9 = arith.constant 0 : index
    %c0_10 = arith.constant 0 : index
    %10 = vector.load %arg4[%c0_9, %c0_10] : memref<1x16xf32, #tpu.memory_space<vmem>>, vector<1x16xf32>
    %11 = vector.broadcast %10 : vector<1x16xf32> to vector<2x16xf32>
    %12 = arith.addf %9, %11 : vector<2x16xf32>
    %cst_11 = arith.constant 3.000000e+00 : f32
    %13 = vector.broadcast %cst_11 : f32 to vector<2x16xf32>
    %14 = arith.addf %12, %13 : vector<2x16xf32>
    %cst_12 = arith.constant 0.000000e+00 : f32
    %cst_13 = arith.constant 6.000000e+00 : f32
    %15 = vector.broadcast %cst_12 : f32 to vector<2x16xf32>
    %16 = arith.maximumf %15, %14 : vector<2x16xf32>
    %17 = vector.broadcast %cst_13 : f32 to vector<2x16xf32>
    %18 = arith.minimumf %17, %16 : vector<2x16xf32>
    %cst_14 = arith.constant 6.000000e+00 : f32
    %19 = vector.broadcast %cst_14 : f32 to vector<2x16xf32>
    %20 = arith.divf %18, %19 : vector<2x16xf32>
    %c0_15 = arith.constant 0 : index
    %c0_16 = arith.constant 0 : index
    %21 = vector.load %arg5[%c0_15, %c0_16] : memref<2x16xf32, #tpu.memory_space<vmem>>, vector<2x16xf32>
    tpu.vector_store %arg5[%c0_15, %c0_16], %20 {strides = array<i32>} : memref<2x16xf32, #tpu.memory_space<vmem>>, vector<2x16xf32>,
    return
  }
}

module attributes {stable_mosaic.version = 11 : i64} {
  func.func @_pw_kernel(%arg0: i32, %arg1: i32, %arg2: memref<1x64x16xbf16, #tpu.memory_space<vmem>>, %arg3: memref<1x1x16xf32, #tpu.memory_space<vmem>>, %arg4: memref<16x16xbf16, #tpu.memory_space<vmem>>, %arg5: memref<1x16xf32, #tpu.memory_space<vmem>>, %arg6: memref<1x64x16xbf16, #tpu.memory_space<vmem>>) attributes {dimension_semantics = [#tpu.dimension_semantics<parallel>, #tpu.dimension_semantics<parallel>], iteration_bounds = array<i64: 2, 1>, scalar_prefetch = 0 : i64, scratch_operands = 0 : i64, tpu.core_type = #tpu.core_type<tc>, window_params = [{transform_indices = @transform_0, window_bounds = array<i64: 1, 64, 16>}, {transform_indices = @transform_1, window_bounds = array<i64: 1, 1, 16>}, {pipeline_mode = #tpu.pipeline_mode<synchronous>, transform_indices = @transform_2, window_bounds = array<i64: 16, 16>}, {pipeline_mode = #tpu.pipeline_mode<synchronous>, transform_indices = @transform_3, window_bounds = array<i64: 1, 16>}, {transform_indices = @transform_4, window_bounds = array<i64: 1, 64, 16>}]} {
    %c0 = arith.constant 0 : index
    %c0_0 = arith.constant 0 : index
    %c0_1 = arith.constant 0 : index
    %0 = vector.load %arg2[%c0, %c0_0, %c0_1] : memref<1x64x16xbf16, #tpu.memory_space<vmem>>, vector<1x64x16xbf16>
    %1 = vector.shape_cast %0 : vector<1x64x16xbf16> to vector<64x16xbf16>
    %2 = arith.extf %1 : vector<64x16xbf16> to vector<64x16xf32>
    %c0_2 = arith.constant 0 : index
    %c0_3 = arith.constant 0 : index
    %c0_4 = arith.constant 0 : index
    %3 = vector.load %arg3[%c0_2, %c0_3, %c0_4] : memref<1x1x16xf32, #tpu.memory_space<vmem>>, vector<1x1x16xf32>
    %4 = vector.shape_cast %3 : vector<1x1x16xf32> to vector<1x16xf32>
    %5 = vector.broadcast %4 : vector<1x16xf32> to vector<64x16xf32>
    %6 = arith.mulf %2, %5 : vector<64x16xf32>
    %7 = arith.truncf %6 : vector<64x16xf32> to vector<64x16xbf16>
    %c0_5 = arith.constant 0 : index
    %c0_6 = arith.constant 0 : index
    %8 = vector.load %arg4[%c0_5, %c0_6] : memref<16x16xbf16, #tpu.memory_space<vmem>>, vector<16x16xbf16>
    %cst = arith.constant dense<0.000000e+00> : vector<64x16xf32>
    %9 = tpu.matmul %7, %8, %cst {dimension_numbers = #tpu.dot_dimension_numbers<[1], [0], [0], [1], [0, 0, 1, 1], [], []>} : vector<64x16xbf16>, vector<16x16xbf16>, vector<64x16xf32> -> vector<64x16xf32>
    %c0_7 = arith.constant 0 : index
    %c0_8 = arith.constant 0 : index
    %10 = vector.load %arg5[%c0_7, %c0_8] : memref<1x16xf32, #tpu.memory_space<vmem>>, vector<1x16xf32>
    %11 = vector.broadcast %10 : vector<1x16xf32> to vector<64x16xf32>
    %12 = arith.addf %9, %11 : vector<64x16xf32>
    %13 = arith.truncf %12 : vector<64x16xf32> to vector<64x16xbf16>
    %c0_9 = arith.constant 0 : index
    %c0_10 = arith.constant 0 : index
    %c0_11 = arith.constant 0 : index
    %14 = vector.load %arg6[%c0_9, %c0_10, %c0_11] : memref<1x64x16xbf16, #tpu.memory_space<vmem>>, vector<1x64x16xbf16>
    %15 = vector.shape_cast %14 : vector<1x64x16xbf16> to vector<64x16xbf16>
    %16 = vector.shape_cast %13 : vector<64x16xbf16> to vector<1x64x16xbf16>
    tpu.vector_store %arg6[%c0_9, %c0_10, %c0_11], %16 {strides = array<i32>} : memref<1x64x16xbf16, #tpu.memory_space<vmem>>, vector<1x64x16xbf16>,
    return
  }
  func.func @transform_0(%arg0: i32, %arg1: i32) -> (i32, i32, i32) {
    %c0_i32 = arith.constant 0 : i32
    %c0_i32_0 = arith.constant 0 : i32
    return %arg0, %arg1, %c0_i32 : i32, i32, i32
  }
  func.func @transform_1(%arg0: i32, %arg1: i32) -> (i32, i32, i32) {
    %c0_i32 = arith.constant 0 : i32
    %c0_i32_0 = arith.constant 0 : i32
    %c0_i32_1 = arith.constant 0 : i32
    return %arg0, %c0_i32, %c0_i32_0 : i32, i32, i32
  }
  func.func @transform_2(%arg0: i32, %arg1: i32) -> (i32, i32) {
    %c0_i32 = arith.constant 0 : i32
    %c0_i32_0 = arith.constant 0 : i32
    %c0_i32_1 = arith.constant 0 : i32
    return %c0_i32, %c0_i32_0 : i32, i32
  }
  func.func @transform_3(%arg0: i32, %arg1: i32) -> (i32, i32) {
    %c0_i32 = arith.constant 0 : i32
    %c0_i32_0 = arith.constant 0 : i32
    %c0_i32_1 = arith.constant 0 : i32
    return %c0_i32, %c0_i32_0 : i32, i32
  }
  func.func @transform_4(%arg0: i32, %arg1: i32) -> (i32, i32, i32) {
    %c0_i32 = arith.constant 0 : i32
    %c0_i32_0 = arith.constant 0 : i32
    return %arg0, %arg1, %c0_i32 : i32, i32, i32
  }
}

module attributes {stable_mosaic.version = 11 : i64} {
  func.func @_pw_kernel(%arg0: i32, %arg1: i32, %arg2: memref<1x64x16xbf16, #tpu.memory_space<vmem>>, %arg3: memref<16x72xbf16, #tpu.memory_space<vmem>>, %arg4: memref<1x72xf32, #tpu.memory_space<vmem>>, %arg5: memref<1x64x72xbf16, #tpu.memory_space<vmem>>) attributes {dimension_semantics = [#tpu.dimension_semantics<parallel>, #tpu.dimension_semantics<parallel>], iteration_bounds = array<i64: 2, 1>, scalar_prefetch = 0 : i64, scratch_operands = 0 : i64, tpu.core_type = #tpu.core_type<tc>, window_params = [{transform_indices = @transform_0, window_bounds = array<i64: 1, 64, 16>}, {pipeline_mode = #tpu.pipeline_mode<synchronous>, transform_indices = @transform_1, window_bounds = array<i64: 16, 72>}, {pipeline_mode = #tpu.pipeline_mode<synchronous>, transform_indices = @transform_2, window_bounds = array<i64: 1, 72>}, {transform_indices = @transform_3, window_bounds = array<i64: 1, 64, 72>}]} {
    %c0 = arith.constant 0 : index
    %c0_0 = arith.constant 0 : index
    %c0_1 = arith.constant 0 : index
    %0 = vector.load %arg2[%c0, %c0_0, %c0_1] : memref<1x64x16xbf16, #tpu.memory_space<vmem>>, vector<1x64x16xbf16>
    %1 = vector.shape_cast %0 : vector<1x64x16xbf16> to vector<64x16xbf16>
    %c0_2 = arith.constant 0 : index
    %c0_3 = arith.constant 0 : index
    %2 = vector.load %arg3[%c0_2, %c0_3] : memref<16x72xbf16, #tpu.memory_space<vmem>>, vector<16x72xbf16>
    %cst = arith.constant dense<0.000000e+00> : vector<64x72xf32>
    %3 = tpu.matmul %1, %2, %cst {dimension_numbers = #tpu.dot_dimension_numbers<[1], [0], [0], [1], [0, 0, 1, 1], [], []>} : vector<64x16xbf16>, vector<16x72xbf16>, vector<64x72xf32> -> vector<64x72xf32>
    %c0_4 = arith.constant 0 : index
    %c0_5 = arith.constant 0 : index
    %4 = vector.load %arg4[%c0_4, %c0_5] : memref<1x72xf32, #tpu.memory_space<vmem>>, vector<1x72xf32>
    %5 = vector.broadcast %4 : vector<1x72xf32> to vector<64x72xf32>
    %6 = arith.addf %3, %5 : vector<64x72xf32>
    %cst_6 = arith.constant 0.000000e+00 : f32
    %7 = vector.broadcast %cst_6 : f32 to vector<64x72xf32>
    %8 = arith.maximumf %6, %7 : vector<64x72xf32>
    %9 = arith.truncf %8 : vector<64x72xf32> to vector<64x72xbf16>
    %c0_7 = arith.constant 0 : index
    %c0_8 = arith.constant 0 : index
    %c0_9 = arith.constant 0 : index
    %10 = vector.load %arg5[%c0_7, %c0_8, %c0_9] : memref<1x64x72xbf16, #tpu.memory_space<vmem>>, vector<1x64x72xbf16>
    %11 = vector.shape_cast %10 : vector<1x64x72xbf16> to vector<64x72xbf16>
    %12 = vector.shape_cast %9 : vector<64x72xbf16> to vector<1x64x72xbf16>
    tpu.vector_store %arg5[%c0_7, %c0_8, %c0_9], %12 {strides = array<i32>} : memref<1x64x72xbf16, #tpu.memory_space<vmem>>, vector<1x64x72xbf16>,
    return
  }
  func.func @transform_0(%arg0: i32, %arg1: i32) -> (i32, i32, i32) {
    %c0_i32 = arith.constant 0 : i32
    %c0_i32_0 = arith.constant 0 : i32
    return %arg0, %arg1, %c0_i32 : i32, i32, i32
  }
  func.func @transform_1(%arg0: i32, %arg1: i32) -> (i32, i32) {
    %c0_i32 = arith.constant 0 : i32
    %c0_i32_0 = arith.constant 0 : i32
    %c0_i32_1 = arith.constant 0 : i32
    return %c0_i32, %c0_i32_0 : i32, i32
  }
  func.func @transform_2(%arg0: i32, %arg1: i32) -> (i32, i32) {
    %c0_i32 = arith.constant 0 : i32
    %c0_i32_0 = arith.constant 0 : i32
    %c0_i32_1 = arith.constant 0 : i32
    return %c0_i32, %c0_i32_0 : i32, i32
  }
  func.func @transform_3(%arg0: i32, %arg1: i32) -> (i32, i32, i32) {
    %c0_i32 = arith.constant 0 : i32
    %c0_i32_0 = arith.constant 0 : i32
    return %arg0, %arg1, %c0_i32 : i32, i32, i32
  }
}

module attributes {stable_mosaic.version = 11 : i64} {
  func.func @_dw_s2_kernel(%arg0: i32, %arg1: memref<1x20x5x72xbf16, #tpu.memory_space<vmem>>, %arg2: memref<9x1x72xf32, #tpu.memory_space<vmem>>, %arg3: memref<1x1x72xf32, #tpu.memory_space<vmem>>, %arg4: memref<1x4x4x72xbf16, #tpu.memory_space<vmem>>) attributes {dimension_semantics = [#tpu.dimension_semantics<parallel>], iteration_bounds = array<i64: 2>, scalar_prefetch = 0 : i64, scratch_operands = 0 : i64, tpu.core_type = #tpu.core_type<tc>, window_params = [{transform_indices = @transform_0, window_bounds = array<i64: 1, 20, 5, 72>}, {pipeline_mode = #tpu.pipeline_mode<synchronous>, transform_indices = @transform_1, window_bounds = array<i64: 9, 1, 72>}, {pipeline_mode = #tpu.pipeline_mode<synchronous>, transform_indices = @transform_2, window_bounds = array<i64: 1, 1, 72>}, {transform_indices = @transform_3, window_bounds = array<i64: 1, 4, 4, 72>}]} {
    %cst = arith.constant 0.000000e+00 : f32
    %0 = vector.broadcast %cst : f32 to vector<4x4x72xf32>
    %c0 = arith.constant 0 : index
    %c0_0 = arith.constant 0 : index
    %c0_1 = arith.constant 0 : index
    %c0_2 = arith.constant 0 : index
    %1 = vector.load %arg1[%c0, %c0_0, %c0_1, %c0_2] : memref<1x20x5x72xbf16, #tpu.memory_space<vmem>>, vector<1x4x4x72xbf16>
    %2 = vector.shape_cast %1 : vector<1x4x4x72xbf16> to vector<4x4x72xbf16>
    %3 = arith.extf %2 : vector<4x4x72xbf16> to vector<4x4x72xf32>
    %c0_3 = arith.constant 0 : index
    %c0_4 = arith.constant 0 : index
    %c0_5 = arith.constant 0 : index
    %4 = vector.load %arg2[%c0_3, %c0_4, %c0_5] : memref<9x1x72xf32, #tpu.memory_space<vmem>>, vector<1x1x72xf32>
    %5 = vector.shape_cast %4 : vector<1x1x72xf32> to vector<1x72xf32>
    %6 = vector.shape_cast %5 : vector<1x72xf32> to vector<1x1x72xf32>
    %7 = vector.broadcast %6 : vector<1x1x72xf32> to vector<4x4x72xf32>
    %8 = arith.mulf %3, %7 : vector<4x4x72xf32>
    %9 = arith.addf %0, %8 : vector<4x4x72xf32>
    %c0_6 = arith.constant 0 : index
    %c5 = arith.constant 5 : index
    %c0_7 = arith.constant 0 : index
    %c0_8 = arith.constant 0 : index
    %10 = vector.load %arg1[%c0_6, %c5, %c0_7, %c0_8] : memref<1x20x5x72xbf16, #tpu.memory_space<vmem>>, vector<1x4x4x72xbf16>
    %11 = vector.shape_cast %10 : vector<1x4x4x72xbf16> to vector<4x4x72xbf16>
    %12 = arith.extf %11 : vector<4x4x72xbf16> to vector<4x4x72xf32>
    %c1 = arith.constant 1 : index
    %c0_9 = arith.constant 0 : index
    %c0_10 = arith.constant 0 : index
    %13 = vector.load %arg2[%c1, %c0_9, %c0_10] : memref<9x1x72xf32, #tpu.memory_space<vmem>>, vector<1x1x72xf32>
    %14 = vector.shape_cast %13 : vector<1x1x72xf32> to vector<1x72xf32>
    %15 = vector.shape_cast %14 : vector<1x72xf32> to vector<1x1x72xf32>
    %16 = vector.broadcast %15 : vector<1x1x72xf32> to vector<4x4x72xf32>
    %17 = arith.mulf %12, %16 : vector<4x4x72xf32>
    %18 = arith.addf %9, %17 : vector<4x4x72xf32>
    %c0_11 = arith.constant 0 : index
    %c0_12 = arith.constant 0 : index
    %c1_13 = arith.constant 1 : index
    %c0_14 = arith.constant 0 : index
    %19 = vector.load %arg1[%c0_11, %c0_12, %c1_13, %c0_14] : memref<1x20x5x72xbf16, #tpu.memory_space<vmem>>, vector<1x4x4x72xbf16>
    %20 = vector.shape_cast %19 : vector<1x4x4x72xbf16> to vector<4x4x72xbf16>
    %21 = arith.extf %20 : vector<4x4x72xbf16> to vector<4x4x72xf32>
    %c2 = arith.constant 2 : index
    %c0_15 = arith.constant 0 : index
    %c0_16 = arith.constant 0 : index
    %22 = vector.load %arg2[%c2, %c0_15, %c0_16] : memref<9x1x72xf32, #tpu.memory_space<vmem>>, vector<1x1x72xf32>
    %23 = vector.shape_cast %22 : vector<1x1x72xf32> to vector<1x72xf32>
    %24 = vector.shape_cast %23 : vector<1x72xf32> to vector<1x1x72xf32>
    %25 = vector.broadcast %24 : vector<1x1x72xf32> to vector<4x4x72xf32>
    %26 = arith.mulf %21, %25 : vector<4x4x72xf32>
    %27 = arith.addf %18, %26 : vector<4x4x72xf32>
    %c0_17 = arith.constant 0 : index
    %c10 = arith.constant 10 : index
    %c0_18 = arith.constant 0 : index
    %c0_19 = arith.constant 0 : index
    %28 = vector.load %arg1[%c0_17, %c10, %c0_18, %c0_19] : memref<1x20x5x72xbf16, #tpu.memory_space<vmem>>, vector<1x4x4x72xbf16>
    %29 = vector.shape_cast %28 : vector<1x4x4x72xbf16> to vector<4x4x72xbf16>
    %30 = arith.extf %29 : vector<4x4x72xbf16> to vector<4x4x72xf32>
    %c3 = arith.constant 3 : index
    %c0_20 = arith.constant 0 : index
    %c0_21 = arith.constant 0 : index
    %31 = vector.load %arg2[%c3, %c0_20, %c0_21] : memref<9x1x72xf32, #tpu.memory_space<vmem>>, vector<1x1x72xf32>
    %32 = vector.shape_cast %31 : vector<1x1x72xf32> to vector<1x72xf32>
    %33 = vector.shape_cast %32 : vector<1x72xf32> to vector<1x1x72xf32>
    %34 = vector.broadcast %33 : vector<1x1x72xf32> to vector<4x4x72xf32>
    %35 = arith.mulf %30, %34 : vector<4x4x72xf32>
    %36 = arith.addf %27, %35 : vector<4x4x72xf32>
    %c0_22 = arith.constant 0 : index
    %c15 = arith.constant 15 : index
    %c0_23 = arith.constant 0 : index
    %c0_24 = arith.constant 0 : index
    %37 = vector.load %arg1[%c0_22, %c15, %c0_23, %c0_24] : memref<1x20x5x72xbf16, #tpu.memory_space<vmem>>, vector<1x4x4x72xbf16>
    %38 = vector.shape_cast %37 : vector<1x4x4x72xbf16> to vector<4x4x72xbf16>
    %39 = arith.extf %38 : vector<4x4x72xbf16> to vector<4x4x72xf32>
    %c4 = arith.constant 4 : index
    %c0_25 = arith.constant 0 : index
    %c0_26 = arith.constant 0 : index
    %40 = vector.load %arg2[%c4, %c0_25, %c0_26] : memref<9x1x72xf32, #tpu.memory_space<vmem>>, vector<1x1x72xf32>
    %41 = vector.shape_cast %40 : vector<1x1x72xf32> to vector<1x72xf32>
    %42 = vector.shape_cast %41 : vector<1x72xf32> to vector<1x1x72xf32>
    %43 = vector.broadcast %42 : vector<1x1x72xf32> to vector<4x4x72xf32>
    %44 = arith.mulf %39, %43 : vector<4x4x72xf32>
    %45 = arith.addf %36, %44 : vector<4x4x72xf32>
    %c0_27 = arith.constant 0 : index
    %c10_28 = arith.constant 10 : index
    %c1_29 = arith.constant 1 : index
    %c0_30 = arith.constant 0 : index
    %46 = vector.load %arg1[%c0_27, %c10_28, %c1_29, %c0_30] : memref<1x20x5x72xbf16, #tpu.memory_space<vmem>>, vector<1x4x4x72xbf16>
    %47 = vector.shape_cast %46 : vector<1x4x4x72xbf16> to vector<4x4x72xbf16>
    %48 = arith.extf %47 : vector<4x4x72xbf16> to vector<4x4x72xf32>
    %c5_31 = arith.constant 5 : index
    %c0_32 = arith.constant 0 : index
    %c0_33 = arith.constant 0 : index
    %49 = vector.load %arg2[%c5_31, %c0_32, %c0_33] : memref<9x1x72xf32, #tpu.memory_space<vmem>>, vector<1x1x72xf32>
    %50 = vector.shape_cast %49 : vector<1x1x72xf32> to vector<1x72xf32>
    %51 = vector.shape_cast %50 : vector<1x72xf32> to vector<1x1x72xf32>
    %52 = vector.broadcast %51 : vector<1x1x72xf32> to vector<4x4x72xf32>
    %53 = arith.mulf %48, %52 : vector<4x4x72xf32>
    %54 = arith.addf %45, %53 : vector<4x4x72xf32>
    %c0_34 = arith.constant 0 : index
    %c1_35 = arith.constant 1 : index
    %c0_36 = arith.constant 0 : index
    %c0_37 = arith.constant 0 : index
    %55 = vector.load %arg1[%c0_34, %c1_35, %c0_36, %c0_37] : memref<1x20x5x72xbf16, #tpu.memory_space<vmem>>, vector<1x4x4x72xbf16>
    %56 = vector.shape_cast %55 : vector<1x4x4x72xbf16> to vector<4x4x72xbf16>
    %57 = arith.extf %56 : vector<4x4x72xbf16> to vector<4x4x72xf32>
    %c6 = arith.constant 6 : index
    %c0_38 = arith.constant 0 : index
    %c0_39 = arith.constant 0 : index
    %58 = vector.load %arg2[%c6, %c0_38, %c0_39] : memref<9x1x72xf32, #tpu.memory_space<vmem>>, vector<1x1x72xf32>
    %59 = vector.shape_cast %58 : vector<1x1x72xf32> to vector<1x72xf32>
    %60 = vector.shape_cast %59 : vector<1x72xf32> to vector<1x1x72xf32>
    %61 = vector.broadcast %60 : vector<1x1x72xf32> to vector<4x4x72xf32>
    %62 = arith.mulf %57, %61 : vector<4x4x72xf32>
    %63 = arith.addf %54, %62 : vector<4x4x72xf32>
    %c0_40 = arith.constant 0 : index
    %c6_41 = arith.constant 6 : index
    %c0_42 = arith.constant 0 : index
    %c0_43 = arith.constant 0 : index
    %64 = vector.load %arg1[%c0_40, %c6_41, %c0_42, %c0_43] : memref<1x20x5x72xbf16, #tpu.memory_space<vmem>>, vector<1x4x4x72xbf16>
    %65 = vector.shape_cast %64 : vector<1x4x4x72xbf16> to vector<4x4x72xbf16>
    %66 = arith.extf %65 : vector<4x4x72xbf16> to vector<4x4x72xf32>
    %c7 = arith.constant 7 : index
    %c0_44 = arith.constant 0 : index
    %c0_45 = arith.constant 0 : index
    %67 = vector.load %arg2[%c7, %c0_44, %c0_45] : memref<9x1x72xf32, #tpu.memory_space<vmem>>, vector<1x1x72xf32>
    %68 = vector.shape_cast %67 : vector<1x1x72xf32> to vector<1x72xf32>
    %69 = vector.shape_cast %68 : vector<1x72xf32> to vector<1x1x72xf32>
    %70 = vector.broadcast %69 : vector<1x1x72xf32> to vector<4x4x72xf32>
    %71 = arith.mulf %66, %70 : vector<4x4x72xf32>
    %72 = arith.addf %63, %71 : vector<4x4x72xf32>
    %c0_46 = arith.constant 0 : index
    %c1_47 = arith.constant 1 : index
    %c1_48 = arith.constant 1 : index
    %c0_49 = arith.constant 0 : index
    %73 = vector.load %arg1[%c0_46, %c1_47, %c1_48, %c0_49] : memref<1x20x5x72xbf16, #tpu.memory_space<vmem>>, vector<1x4x4x72xbf16>
    %74 = vector.shape_cast %73 : vector<1x4x4x72xbf16> to vector<4x4x72xbf16>
    %75 = arith.extf %74 : vector<4x4x72xbf16> to vector<4x4x72xf32>
    %c8 = arith.constant 8 : index
    %c0_50 = arith.constant 0 : index
    %c0_51 = arith.constant 0 : index
    %76 = vector.load %arg2[%c8, %c0_50, %c0_51] : memref<9x1x72xf32, #tpu.memory_space<vmem>>, vector<1x1x72xf32>
    %77 = vector.shape_cast %76 : vector<1x1x72xf32> to vector<1x72xf32>
    %78 = vector.shape_cast %77 : vector<1x72xf32> to vector<1x1x72xf32>
    %79 = vector.broadcast %78 : vector<1x1x72xf32> to vector<4x4x72xf32>
    %80 = arith.mulf %75, %79 : vector<4x4x72xf32>
    %81 = arith.addf %72, %80 : vector<4x4x72xf32>
    %c0_52 = arith.constant 0 : index
    %c0_53 = arith.constant 0 : index
    %c0_54 = arith.constant 0 : index
    %82 = vector.load %arg3[%c0_52, %c0_53, %c0_54] : memref<1x1x72xf32, #tpu.memory_space<vmem>>, vector<1x1x72xf32>
    %83 = vector.broadcast %82 : vector<1x1x72xf32> to vector<4x4x72xf32>
    %84 = arith.addf %81, %83 : vector<4x4x72xf32>
    %cst_55 = arith.constant 0.000000e+00 : f32
    %85 = vector.broadcast %cst_55 : f32 to vector<4x4x72xf32>
    %86 = arith.maximumf %84, %85 : vector<4x4x72xf32>
    %87 = arith.truncf %86 : vector<4x4x72xf32> to vector<4x4x72xbf16>
    %c0_56 = arith.constant 0 : index
    %c0_57 = arith.constant 0 : index
    %c0_58 = arith.constant 0 : index
    %c0_59 = arith.constant 0 : index
    %88 = vector.load %arg4[%c0_56, %c0_57, %c0_58, %c0_59] : memref<1x4x4x72xbf16, #tpu.memory_space<vmem>>, vector<1x4x4x72xbf16>
    %89 = vector.shape_cast %88 : vector<1x4x4x72xbf16> to vector<4x4x72xbf16>
    %90 = vector.shape_cast %87 : vector<4x4x72xbf16> to vector<1x4x4x72xbf16>
    tpu.vector_store %arg4[%c0_56, %c0_57, %c0_58, %c0_59], %90 {strides = array<i32>} : memref<1x4x4x72xbf16, #tpu.memory_space<vmem>>, vector<1x4x4x72xbf16>,
    return
  }
  func.func @transform_0(%arg0: i32) -> (i32, i32, i32, i32) {
    %c0_i32 = arith.constant 0 : i32
    %c0_i32_0 = arith.constant 0 : i32
    %c0_i32_1 = arith.constant 0 : i32
    %c0_i32_2 = arith.constant 0 : i32
    return %arg0, %c0_i32, %c0_i32_0, %c0_i32_1 : i32, i32, i32, i32
  }
  func.func @transform_1(%arg0: i32) -> (i32, i32, i32) {
    %c0_i32 = arith.constant 0 : i32
    %c0_i32_0 = arith.constant 0 : i32
    %c0_i32_1 = arith.constant 0 : i32
    %c0_i32_2 = arith.constant 0 : i32
    return %c0_i32, %c0_i32_0, %c0_i32_1 : i32, i32, i32
  }
  func.func @transform_2(%arg0: i32) -> (i32, i32, i32) {
    %c0_i32 = arith.constant 0 : i32
    %c0_i32_0 = arith.constant 0 : i32
    %c0_i32_1 = arith.constant 0 : i32
    %c0_i32_2 = arith.constant 0 : i32
    return %c0_i32, %c0_i32_0, %c0_i32_1 : i32, i32, i32
  }
  func.func @transform_3(%arg0: i32) -> (i32, i32, i32, i32) {
    %c0_i32 = arith.constant 0 : i32
    %c0_i32_0 = arith.constant 0 : i32
    %c0_i32_1 = arith.constant 0 : i32
    %c0_i32_2 = arith.constant 0 : i32
    return %arg0, %c0_i32, %c0_i32_0, %c0_i32_1 : i32, i32, i32, i32
  }
}

module attributes {stable_mosaic.version = 11 : i64} {
  func.func @_pw_kernel(%arg0: i32, %arg1: i32, %arg2: memref<1x16x72xbf16, #tpu.memory_space<vmem>>, %arg3: memref<72x24xbf16, #tpu.memory_space<vmem>>, %arg4: memref<1x24xf32, #tpu.memory_space<vmem>>, %arg5: memref<1x16x24xbf16, #tpu.memory_space<vmem>>) attributes {dimension_semantics = [#tpu.dimension_semantics<parallel>, #tpu.dimension_semantics<parallel>], iteration_bounds = array<i64: 2, 1>, scalar_prefetch = 0 : i64, scratch_operands = 0 : i64, tpu.core_type = #tpu.core_type<tc>, window_params = [{transform_indices = @transform_0, window_bounds = array<i64: 1, 16, 72>}, {pipeline_mode = #tpu.pipeline_mode<synchronous>, transform_indices = @transform_1, window_bounds = array<i64: 72, 24>}, {pipeline_mode = #tpu.pipeline_mode<synchronous>, transform_indices = @transform_2, window_bounds = array<i64: 1, 24>}, {transform_indices = @transform_3, window_bounds = array<i64: 1, 16, 24>}]} {
    %c0 = arith.constant 0 : index
    %c0_0 = arith.constant 0 : index
    %c0_1 = arith.constant 0 : index
    %0 = vector.load %arg2[%c0, %c0_0, %c0_1] : memref<1x16x72xbf16, #tpu.memory_space<vmem>>, vector<1x16x72xbf16>
    %1 = vector.shape_cast %0 : vector<1x16x72xbf16> to vector<16x72xbf16>
    %c0_2 = arith.constant 0 : index
    %c0_3 = arith.constant 0 : index
    %2 = vector.load %arg3[%c0_2, %c0_3] : memref<72x24xbf16, #tpu.memory_space<vmem>>, vector<72x24xbf16>
    %cst = arith.constant dense<0.000000e+00> : vector<16x24xf32>
    %3 = tpu.matmul %1, %2, %cst {dimension_numbers = #tpu.dot_dimension_numbers<[1], [0], [0], [1], [0, 0, 1, 1], [], []>} : vector<16x72xbf16>, vector<72x24xbf16>, vector<16x24xf32> -> vector<16x24xf32>
    %c0_4 = arith.constant 0 : index
    %c0_5 = arith.constant 0 : index
    %4 = vector.load %arg4[%c0_4, %c0_5] : memref<1x24xf32, #tpu.memory_space<vmem>>, vector<1x24xf32>
    %5 = vector.broadcast %4 : vector<1x24xf32> to vector<16x24xf32>
    %6 = arith.addf %3, %5 : vector<16x24xf32>
    %7 = arith.truncf %6 : vector<16x24xf32> to vector<16x24xbf16>
    %c0_6 = arith.constant 0 : index
    %c0_7 = arith.constant 0 : index
    %c0_8 = arith.constant 0 : index
    %8 = vector.load %arg5[%c0_6, %c0_7, %c0_8] : memref<1x16x24xbf16, #tpu.memory_space<vmem>>, vector<1x16x24xbf16>
    %9 = vector.shape_cast %8 : vector<1x16x24xbf16> to vector<16x24xbf16>
    %10 = vector.shape_cast %7 : vector<16x24xbf16> to vector<1x16x24xbf16>
    tpu.vector_store %arg5[%c0_6, %c0_7, %c0_8], %10 {strides = array<i32>} : memref<1x16x24xbf16, #tpu.memory_space<vmem>>, vector<1x16x24xbf16>,
    return
  }
  func.func @transform_0(%arg0: i32, %arg1: i32) -> (i32, i32, i32) {
    %c0_i32 = arith.constant 0 : i32
    %c0_i32_0 = arith.constant 0 : i32
    return %arg0, %arg1, %c0_i32 : i32, i32, i32
  }
  func.func @transform_1(%arg0: i32, %arg1: i32) -> (i32, i32) {
    %c0_i32 = arith.constant 0 : i32
    %c0_i32_0 = arith.constant 0 : i32
    %c0_i32_1 = arith.constant 0 : i32
    return %c0_i32, %c0_i32_0 : i32, i32
  }
  func.func @transform_2(%arg0: i32, %arg1: i32) -> (i32, i32) {
    %c0_i32 = arith.constant 0 : i32
    %c0_i32_0 = arith.constant 0 : i32
    %c0_i32_1 = arith.constant 0 : i32
    return %c0_i32, %c0_i32_0 : i32, i32
  }
  func.func @transform_3(%arg0: i32, %arg1: i32) -> (i32, i32, i32) {
    %c0_i32 = arith.constant 0 : i32
    %c0_i32_0 = arith.constant 0 : i32
    return %arg0, %arg1, %c0_i32 : i32, i32, i32
  }
}

module attributes {stable_mosaic.version = 11 : i64} {
  func.func @_pw_kernel(%arg0: i32, %arg1: i32, %arg2: memref<1x16x24xbf16, #tpu.memory_space<vmem>>, %arg3: memref<24x88xbf16, #tpu.memory_space<vmem>>, %arg4: memref<1x88xf32, #tpu.memory_space<vmem>>, %arg5: memref<1x16x88xbf16, #tpu.memory_space<vmem>>) attributes {dimension_semantics = [#tpu.dimension_semantics<parallel>, #tpu.dimension_semantics<parallel>], iteration_bounds = array<i64: 2, 1>, scalar_prefetch = 0 : i64, scratch_operands = 0 : i64, tpu.core_type = #tpu.core_type<tc>, window_params = [{transform_indices = @transform_0, window_bounds = array<i64: 1, 16, 24>}, {pipeline_mode = #tpu.pipeline_mode<synchronous>, transform_indices = @transform_1, window_bounds = array<i64: 24, 88>}, {pipeline_mode = #tpu.pipeline_mode<synchronous>, transform_indices = @transform_2, window_bounds = array<i64: 1, 88>}, {transform_indices = @transform_3, window_bounds = array<i64: 1, 16, 88>}]} {
    %c0 = arith.constant 0 : index
    %c0_0 = arith.constant 0 : index
    %c0_1 = arith.constant 0 : index
    %0 = vector.load %arg2[%c0, %c0_0, %c0_1] : memref<1x16x24xbf16, #tpu.memory_space<vmem>>, vector<1x16x24xbf16>
    %1 = vector.shape_cast %0 : vector<1x16x24xbf16> to vector<16x24xbf16>
    %c0_2 = arith.constant 0 : index
    %c0_3 = arith.constant 0 : index
    %2 = vector.load %arg3[%c0_2, %c0_3] : memref<24x88xbf16, #tpu.memory_space<vmem>>, vector<24x88xbf16>
    %cst = arith.constant dense<0.000000e+00> : vector<16x88xf32>
    %3 = tpu.matmul %1, %2, %cst {dimension_numbers = #tpu.dot_dimension_numbers<[1], [0], [0], [1], [0, 0, 1, 1], [], []>} : vector<16x24xbf16>, vector<24x88xbf16>, vector<16x88xf32> -> vector<16x88xf32>
    %c0_4 = arith.constant 0 : index
    %c0_5 = arith.constant 0 : index
    %4 = vector.load %arg4[%c0_4, %c0_5] : memref<1x88xf32, #tpu.memory_space<vmem>>, vector<1x88xf32>
    %5 = vector.broadcast %4 : vector<1x88xf32> to vector<16x88xf32>
    %6 = arith.addf %3, %5 : vector<16x88xf32>
    %cst_6 = arith.constant 0.000000e+00 : f32
    %7 = vector.broadcast %cst_6 : f32 to vector<16x88xf32>
    %8 = arith.maximumf %6, %7 : vector<16x88xf32>
    %9 = arith.truncf %8 : vector<16x88xf32> to vector<16x88xbf16>
    %c0_7 = arith.constant 0 : index
    %c0_8 = arith.constant 0 : index
    %c0_9 = arith.constant 0 : index
    %10 = vector.load %arg5[%c0_7, %c0_8, %c0_9] : memref<1x16x88xbf16, #tpu.memory_space<vmem>>, vector<1x16x88xbf16>
    %11 = vector.shape_cast %10 : vector<1x16x88xbf16> to vector<16x88xbf16>
    %12 = vector.shape_cast %9 : vector<16x88xbf16> to vector<1x16x88xbf16>
    tpu.vector_store %arg5[%c0_7, %c0_8, %c0_9], %12 {strides = array<i32>} : memref<1x16x88xbf16, #tpu.memory_space<vmem>>, vector<1x16x88xbf16>,
    return
  }
  func.func @transform_0(%arg0: i32, %arg1: i32) -> (i32, i32, i32) {
    %c0_i32 = arith.constant 0 : i32
    %c0_i32_0 = arith.constant 0 : i32
    return %arg0, %arg1, %c0_i32 : i32, i32, i32
  }
  func.func @transform_1(%arg0: i32, %arg1: i32) -> (i32, i32) {
    %c0_i32 = arith.constant 0 : i32
    %c0_i32_0 = arith.constant 0 : i32
    %c0_i32_1 = arith.constant 0 : i32
    return %c0_i32, %c0_i32_0 : i32, i32
  }
  func.func @transform_2(%arg0: i32, %arg1: i32) -> (i32, i32) {
    %c0_i32 = arith.constant 0 : i32
    %c0_i32_0 = arith.constant 0 : i32
    %c0_i32_1 = arith.constant 0 : i32
    return %c0_i32, %c0_i32_0 : i32, i32
  }
  func.func @transform_3(%arg0: i32, %arg1: i32) -> (i32, i32, i32) {
    %c0_i32 = arith.constant 0 : i32
    %c0_i32_0 = arith.constant 0 : i32
    return %arg0, %arg1, %c0_i32 : i32, i32, i32
  }
}

module attributes {stable_mosaic.version = 11 : i64} {
  func.func @_dw_s1_kernel(%arg0: i32, %arg1: memref<1x4x4x88xbf16, #tpu.memory_space<vmem>>, %arg2: memref<9x1x88xf32, #tpu.memory_space<vmem>>, %arg3: memref<1x1x88xf32, #tpu.memory_space<vmem>>, %arg4: memref<1x4x4x88xbf16, #tpu.memory_space<vmem>>, %arg5: memref<6x13x88xbf16, #tpu.memory_space<vmem>>) attributes {dimension_semantics = [#tpu.dimension_semantics<parallel>], iteration_bounds = array<i64: 2>, scalar_prefetch = 0 : i64, scratch_operands = 1 : i64, tpu.core_type = #tpu.core_type<tc>, window_params = [{transform_indices = @transform_0, window_bounds = array<i64: 1, 4, 4, 88>}, {pipeline_mode = #tpu.pipeline_mode<synchronous>, transform_indices = @transform_1, window_bounds = array<i64: 9, 1, 88>}, {pipeline_mode = #tpu.pipeline_mode<synchronous>, transform_indices = @transform_2, window_bounds = array<i64: 1, 1, 88>}, {transform_indices = @transform_3, window_bounds = array<i64: 1, 4, 4, 88>}]} {
    %cst = arith.constant 0.000000e+00 : bf16
    %0 = vector.broadcast %cst : bf16 to vector<6x13x88xbf16>
    %c0 = arith.constant 0 : index
    %c0_0 = arith.constant 0 : index
    %c0_1 = arith.constant 0 : index
    %1 = vector.load %arg5[%c0, %c0_0, %c0_1] : memref<6x13x88xbf16, #tpu.memory_space<vmem>>, vector<6x13x88xbf16>
    tpu.vector_store %arg5[%c0, %c0_0, %c0_1], %0 {strides = array<i32>} : memref<6x13x88xbf16, #tpu.memory_space<vmem>>, vector<6x13x88xbf16>,
    %c0_2 = arith.constant 0 : index
    %c0_3 = arith.constant 0 : index
    %c0_4 = arith.constant 0 : index
    %c0_5 = arith.constant 0 : index
    %2 = vector.load %arg1[%c0_2, %c0_3, %c0_4, %c0_5] : memref<1x4x4x88xbf16, #tpu.memory_space<vmem>>, vector<1x4x4x88xbf16>
    %3 = vector.shape_cast %2 : vector<1x4x4x88xbf16> to vector<4x4x88xbf16>
    %c1 = arith.constant 1 : index
    %c8 = arith.constant 8 : index
    %c0_6 = arith.constant 0 : index
    %4 = vector.load %arg5[%c1, %c8, %c0_6] : memref<6x13x88xbf16, #tpu.memory_space<vmem>>, vector<4x4x88xbf16>
    tpu.vector_store %arg5[%c1, %c8, %c0_6], %3 {strides = array<i32>} : memref<6x13x88xbf16, #tpu.memory_space<vmem>>, vector<4x4x88xbf16>,
    %cst_7 = arith.constant 0.000000e+00 : f32
    %5 = vector.broadcast %cst_7 : f32 to vector<4x4x88xf32>
    %c0_8 = arith.constant 0 : index
    %c7 = arith.constant 7 : index
    %c0_9 = arith.constant 0 : index
    %6 = vector.load %arg5[%c0_8, %c7, %c0_9] : memref<6x13x88xbf16, #tpu.memory_space<vmem>>, vector<4x4x88xbf16>
    %7 = arith.extf %6 : vector<4x4x88xbf16> to vector<4x4x88xf32>
    %c0_10 = arith.constant 0 : index
    %c0_11 = arith.constant 0 : index
    %c0_12 = arith.constant 0 : index
    %8 = vector.load %arg2[%c0_10, %c0_11, %c0_12] : memref<9x1x88xf32, #tpu.memory_space<vmem>>, vector<1x1x88xf32>
    %9 = vector.shape_cast %8 : vector<1x1x88xf32> to vector<1x88xf32>
    %10 = vector.shape_cast %9 : vector<1x88xf32> to vector<1x1x88xf32>
    %11 = vector.broadcast %10 : vector<1x1x88xf32> to vector<4x4x88xf32>
    %12 = arith.mulf %7, %11 : vector<4x4x88xf32>
    %13 = arith.addf %5, %12 : vector<4x4x88xf32>
    %c0_13 = arith.constant 0 : index
    %c8_14 = arith.constant 8 : index
    %c0_15 = arith.constant 0 : index
    %14 = vector.load %arg5[%c0_13, %c8_14, %c0_15] : memref<6x13x88xbf16, #tpu.memory_space<vmem>>, vector<4x4x88xbf16>
    %15 = arith.extf %14 : vector<4x4x88xbf16> to vector<4x4x88xf32>
    %c1_16 = arith.constant 1 : index
    %c0_17 = arith.constant 0 : index
    %c0_18 = arith.constant 0 : index
    %16 = vector.load %arg2[%c1_16, %c0_17, %c0_18] : memref<9x1x88xf32, #tpu.memory_space<vmem>>, vector<1x1x88xf32>
    %17 = vector.shape_cast %16 : vector<1x1x88xf32> to vector<1x88xf32>
    %18 = vector.shape_cast %17 : vector<1x88xf32> to vector<1x1x88xf32>
    %19 = vector.broadcast %18 : vector<1x1x88xf32> to vector<4x4x88xf32>
    %20 = arith.mulf %15, %19 : vector<4x4x88xf32>
    %21 = arith.addf %13, %20 : vector<4x4x88xf32>
    %c0_19 = arith.constant 0 : index
    %c9 = arith.constant 9 : index
    %c0_20 = arith.constant 0 : index
    %22 = vector.load %arg5[%c0_19, %c9, %c0_20] : memref<6x13x88xbf16, #tpu.memory_space<vmem>>, vector<4x4x88xbf16>
    %23 = arith.extf %22 : vector<4x4x88xbf16> to vector<4x4x88xf32>
    %c2 = arith.constant 2 : index
    %c0_21 = arith.constant 0 : index
    %c0_22 = arith.constant 0 : index
    %24 = vector.load %arg2[%c2, %c0_21, %c0_22] : memref<9x1x88xf32, #tpu.memory_space<vmem>>, vector<1x1x88xf32>
    %25 = vector.shape_cast %24 : vector<1x1x88xf32> to vector<1x88xf32>
    %26 = vector.shape_cast %25 : vector<1x88xf32> to vector<1x1x88xf32>
    %27 = vector.broadcast %26 : vector<1x1x88xf32> to vector<4x4x88xf32>
    %28 = arith.mulf %23, %27 : vector<4x4x88xf32>
    %29 = arith.addf %21, %28 : vector<4x4x88xf32>
    %c1_23 = arith.constant 1 : index
    %c7_24 = arith.constant 7 : index
    %c0_25 = arith.constant 0 : index
    %30 = vector.load %arg5[%c1_23, %c7_24, %c0_25] : memref<6x13x88xbf16, #tpu.memory_space<vmem>>, vector<4x4x88xbf16>
    %31 = arith.extf %30 : vector<4x4x88xbf16> to vector<4x4x88xf32>
    %c3 = arith.constant 3 : index
    %c0_26 = arith.constant 0 : index
    %c0_27 = arith.constant 0 : index
    %32 = vector.load %arg2[%c3, %c0_26, %c0_27] : memref<9x1x88xf32, #tpu.memory_space<vmem>>, vector<1x1x88xf32>
    %33 = vector.shape_cast %32 : vector<1x1x88xf32> to vector<1x88xf32>
    %34 = vector.shape_cast %33 : vector<1x88xf32> to vector<1x1x88xf32>
    %35 = vector.broadcast %34 : vector<1x1x88xf32> to vector<4x4x88xf32>
    %36 = arith.mulf %31, %35 : vector<4x4x88xf32>
    %37 = arith.addf %29, %36 : vector<4x4x88xf32>
    %c1_28 = arith.constant 1 : index
    %c8_29 = arith.constant 8 : index
    %c0_30 = arith.constant 0 : index
    %38 = vector.load %arg5[%c1_28, %c8_29, %c0_30] : memref<6x13x88xbf16, #tpu.memory_space<vmem>>, vector<4x4x88xbf16>
    %39 = arith.extf %38 : vector<4x4x88xbf16> to vector<4x4x88xf32>
    %c4 = arith.constant 4 : index
    %c0_31 = arith.constant 0 : index
    %c0_32 = arith.constant 0 : index
    %40 = vector.load %arg2[%c4, %c0_31, %c0_32] : memref<9x1x88xf32, #tpu.memory_space<vmem>>, vector<1x1x88xf32>
    %41 = vector.shape_cast %40 : vector<1x1x88xf32> to vector<1x88xf32>
    %42 = vector.shape_cast %41 : vector<1x88xf32> to vector<1x1x88xf32>
    %43 = vector.broadcast %42 : vector<1x1x88xf32> to vector<4x4x88xf32>
    %44 = arith.mulf %39, %43 : vector<4x4x88xf32>
    %45 = arith.addf %37, %44 : vector<4x4x88xf32>
    %c1_33 = arith.constant 1 : index
    %c9_34 = arith.constant 9 : index
    %c0_35 = arith.constant 0 : index
    %46 = vector.load %arg5[%c1_33, %c9_34, %c0_35] : memref<6x13x88xbf16, #tpu.memory_space<vmem>>, vector<4x4x88xbf16>
    %47 = arith.extf %46 : vector<4x4x88xbf16> to vector<4x4x88xf32>
    %c5 = arith.constant 5 : index
    %c0_36 = arith.constant 0 : index
    %c0_37 = arith.constant 0 : index
    %48 = vector.load %arg2[%c5, %c0_36, %c0_37] : memref<9x1x88xf32, #tpu.memory_space<vmem>>, vector<1x1x88xf32>
    %49 = vector.shape_cast %48 : vector<1x1x88xf32> to vector<1x88xf32>
    %50 = vector.shape_cast %49 : vector<1x88xf32> to vector<1x1x88xf32>
    %51 = vector.broadcast %50 : vector<1x1x88xf32> to vector<4x4x88xf32>
    %52 = arith.mulf %47, %51 : vector<4x4x88xf32>
    %53 = arith.addf %45, %52 : vector<4x4x88xf32>
    %c2_38 = arith.constant 2 : index
    %c7_39 = arith.constant 7 : index
    %c0_40 = arith.constant 0 : index
    %54 = vector.load %arg5[%c2_38, %c7_39, %c0_40] : memref<6x13x88xbf16, #tpu.memory_space<vmem>>, vector<4x4x88xbf16>
    %55 = arith.extf %54 : vector<4x4x88xbf16> to vector<4x4x88xf32>
    %c6 = arith.constant 6 : index
    %c0_41 = arith.constant 0 : index
    %c0_42 = arith.constant 0 : index
    %56 = vector.load %arg2[%c6, %c0_41, %c0_42] : memref<9x1x88xf32, #tpu.memory_space<vmem>>, vector<1x1x88xf32>
    %57 = vector.shape_cast %56 : vector<1x1x88xf32> to vector<1x88xf32>
    %58 = vector.shape_cast %57 : vector<1x88xf32> to vector<1x1x88xf32>
    %59 = vector.broadcast %58 : vector<1x1x88xf32> to vector<4x4x88xf32>
    %60 = arith.mulf %55, %59 : vector<4x4x88xf32>
    %61 = arith.addf %53, %60 : vector<4x4x88xf32>
    %c2_43 = arith.constant 2 : index
    %c8_44 = arith.constant 8 : index
    %c0_45 = arith.constant 0 : index
    %62 = vector.load %arg5[%c2_43, %c8_44, %c0_45] : memref<6x13x88xbf16, #tpu.memory_space<vmem>>, vector<4x4x88xbf16>
    %63 = arith.extf %62 : vector<4x4x88xbf16> to vector<4x4x88xf32>
    %c7_46 = arith.constant 7 : index
    %c0_47 = arith.constant 0 : index
    %c0_48 = arith.constant 0 : index
    %64 = vector.load %arg2[%c7_46, %c0_47, %c0_48] : memref<9x1x88xf32, #tpu.memory_space<vmem>>, vector<1x1x88xf32>
    %65 = vector.shape_cast %64 : vector<1x1x88xf32> to vector<1x88xf32>
    %66 = vector.shape_cast %65 : vector<1x88xf32> to vector<1x1x88xf32>
    %67 = vector.broadcast %66 : vector<1x1x88xf32> to vector<4x4x88xf32>
    %68 = arith.mulf %63, %67 : vector<4x4x88xf32>
    %69 = arith.addf %61, %68 : vector<4x4x88xf32>
    %c2_49 = arith.constant 2 : index
    %c9_50 = arith.constant 9 : index
    %c0_51 = arith.constant 0 : index
    %70 = vector.load %arg5[%c2_49, %c9_50, %c0_51] : memref<6x13x88xbf16, #tpu.memory_space<vmem>>, vector<4x4x88xbf16>
    %71 = arith.extf %70 : vector<4x4x88xbf16> to vector<4x4x88xf32>
    %c8_52 = arith.constant 8 : index
    %c0_53 = arith.constant 0 : index
    %c0_54 = arith.constant 0 : index
    %72 = vector.load %arg2[%c8_52, %c0_53, %c0_54] : memref<9x1x88xf32, #tpu.memory_space<vmem>>, vector<1x1x88xf32>
    %73 = vector.shape_cast %72 : vector<1x1x88xf32> to vector<1x88xf32>
    %74 = vector.shape_cast %73 : vector<1x88xf32> to vector<1x1x88xf32>
    %75 = vector.broadcast %74 : vector<1x1x88xf32> to vector<4x4x88xf32>
    %76 = arith.mulf %71, %75 : vector<4x4x88xf32>
    %77 = arith.addf %69, %76 : vector<4x4x88xf32>
    %c0_55 = arith.constant 0 : index
    %c0_56 = arith.constant 0 : index
    %c0_57 = arith.constant 0 : index
    %78 = vector.load %arg3[%c0_55, %c0_56, %c0_57] : memref<1x1x88xf32, #tpu.memory_space<vmem>>, vector<1x1x88xf32>
    %79 = vector.broadcast %78 : vector<1x1x88xf32> to vector<4x4x88xf32>
    %80 = arith.addf %77, %79 : vector<4x4x88xf32>
    %cst_58 = arith.constant 0.000000e+00 : f32
    %81 = vector.broadcast %cst_58 : f32 to vector<4x4x88xf32>
    %82 = arith.maximumf %80, %81 : vector<4x4x88xf32>
    %83 = arith.truncf %82 : vector<4x4x88xf32> to vector<4x4x88xbf16>
    %c0_59 = arith.constant 0 : index
    %c0_60 = arith.constant 0 : index
    %c0_61 = arith.constant 0 : index
    %c0_62 = arith.constant 0 : index
    %84 = vector.load %arg4[%c0_59, %c0_60, %c0_61, %c0_62] : memref<1x4x4x88xbf16, #tpu.memory_space<vmem>>, vector<1x4x4x88xbf16>
    %85 = vector.shape_cast %84 : vector<1x4x4x88xbf16> to vector<4x4x88xbf16>
    %86 = vector.shape_cast %83 : vector<4x4x88xbf16> to vector<1x4x4x88xbf16>
    tpu.vector_store %arg4[%c0_59, %c0_60, %c0_61, %c0_62], %86 {strides = array<i32>} : memref<1x4x4x88xbf16, #tpu.memory_space<vmem>>, vector<1x4x4x88xbf16>,
    return
  }
  func.func @transform_0(%arg0: i32) -> (i32, i32, i32, i32) {
    %c0_i32 = arith.constant 0 : i32
    %c0_i32_0 = arith.constant 0 : i32
    %c0_i32_1 = arith.constant 0 : i32
    %c0_i32_2 = arith.constant 0 : i32
    return %arg0, %c0_i32, %c0_i32_0, %c0_i32_1 : i32, i32, i32, i32
  }
  func.func @transform_1(%arg0: i32) -> (i32, i32, i32) {
    %c0_i32 = arith.constant 0 : i32
    %c0_i32_0 = arith.constant 0 : i32
    %c0_i32_1 = arith.constant 0 : i32
    %c0_i32_2 = arith.constant 0 : i32
    return %c0_i32, %c0_i32_0, %c0_i32_1 : i32, i32, i32
  }
  func.func @transform_2(%arg0: i32) -> (i32, i32, i32) {
    %c0_i32 = arith.constant 0 : i32
    %c0_i32_0 = arith.constant 0 : i32
    %c0_i32_1 = arith.constant 0 : i32
    %c0_i32_2 = arith.constant 0 : i32
    return %c0_i32, %c0_i32_0, %c0_i32_1 : i32, i32, i32
  }
  func.func @transform_3(%arg0: i32) -> (i32, i32, i32, i32) {
    %c0_i32 = arith.constant 0 : i32
    %c0_i32_0 = arith.constant 0 : i32
    %c0_i32_1 = arith.constant 0 : i32
    %c0_i32_2 = arith.constant 0 : i32
    return %arg0, %c0_i32, %c0_i32_0, %c0_i32_1 : i32, i32, i32, i32
  }
}

module attributes {stable_mosaic.version = 11 : i64} {
  func.func @_pw_kernel(%arg0: i32, %arg1: i32, %arg2: memref<1x16x24xbf16, #tpu.memory_space<vmem>>, %arg3: memref<24x96xbf16, #tpu.memory_space<vmem>>, %arg4: memref<1x96xf32, #tpu.memory_space<vmem>>, %arg5: memref<1x16x96xbf16, #tpu.memory_space<vmem>>) attributes {dimension_semantics = [#tpu.dimension_semantics<parallel>, #tpu.dimension_semantics<parallel>], iteration_bounds = array<i64: 2, 1>, scalar_prefetch = 0 : i64, scratch_operands = 0 : i64, tpu.core_type = #tpu.core_type<tc>, window_params = [{transform_indices = @transform_0, window_bounds = array<i64: 1, 16, 24>}, {pipeline_mode = #tpu.pipeline_mode<synchronous>, transform_indices = @transform_1, window_bounds = array<i64: 24, 96>}, {pipeline_mode = #tpu.pipeline_mode<synchronous>, transform_indices = @transform_2, window_bounds = array<i64: 1, 96>}, {transform_indices = @transform_3, window_bounds = array<i64: 1, 16, 96>}]} {
    %c0 = arith.constant 0 : index
    %c0_0 = arith.constant 0 : index
    %c0_1 = arith.constant 0 : index
    %0 = vector.load %arg2[%c0, %c0_0, %c0_1] : memref<1x16x24xbf16, #tpu.memory_space<vmem>>, vector<1x16x24xbf16>
    %1 = vector.shape_cast %0 : vector<1x16x24xbf16> to vector<16x24xbf16>
    %c0_2 = arith.constant 0 : index
    %c0_3 = arith.constant 0 : index
    %2 = vector.load %arg3[%c0_2, %c0_3] : memref<24x96xbf16, #tpu.memory_space<vmem>>, vector<24x96xbf16>
    %cst = arith.constant dense<0.000000e+00> : vector<16x96xf32>
    %3 = tpu.matmul %1, %2, %cst {dimension_numbers = #tpu.dot_dimension_numbers<[1], [0], [0], [1], [0, 0, 1, 1], [], []>} : vector<16x24xbf16>, vector<24x96xbf16>, vector<16x96xf32> -> vector<16x96xf32>
    %c0_4 = arith.constant 0 : index
    %c0_5 = arith.constant 0 : index
    %4 = vector.load %arg4[%c0_4, %c0_5] : memref<1x96xf32, #tpu.memory_space<vmem>>, vector<1x96xf32>
    %5 = vector.broadcast %4 : vector<1x96xf32> to vector<16x96xf32>
    %6 = arith.addf %3, %5 : vector<16x96xf32>
    %cst_6 = arith.constant 3.000000e+00 : f32
    %7 = vector.broadcast %cst_6 : f32 to vector<16x96xf32>
    %8 = arith.addf %6, %7 : vector<16x96xf32>
    %cst_7 = arith.constant 0.000000e+00 : f32
    %cst_8 = arith.constant 6.000000e+00 : f32
    %9 = vector.broadcast %cst_7 : f32 to vector<16x96xf32>
    %10 = arith.maximumf %9, %8 : vector<16x96xf32>
    %11 = vector.broadcast %cst_8 : f32 to vector<16x96xf32>
    %12 = arith.minimumf %11, %10 : vector<16x96xf32>
    %cst_9 = arith.constant 6.000000e+00 : f32
    %13 = vector.broadcast %cst_9 : f32 to vector<16x96xf32>
    %14 = arith.divf %12, %13 : vector<16x96xf32>
    %15 = arith.mulf %6, %14 : vector<16x96xf32>
    %16 = arith.truncf %15 : vector<16x96xf32> to vector<16x96xbf16>
    %c0_10 = arith.constant 0 : index
    %c0_11 = arith.constant 0 : index
    %c0_12 = arith.constant 0 : index
    %17 = vector.load %arg5[%c0_10, %c0_11, %c0_12] : memref<1x16x96xbf16, #tpu.memory_space<vmem>>, vector<1x16x96xbf16>
    %18 = vector.shape_cast %17 : vector<1x16x96xbf16> to vector<16x96xbf16>
    %19 = vector.shape_cast %16 : vector<16x96xbf16> to vector<1x16x96xbf16>
    tpu.vector_store %arg5[%c0_10, %c0_11, %c0_12], %19 {strides = array<i32>} : memref<1x16x96xbf16, #tpu.memory_space<vmem>>, vector<1x16x96xbf16>,
    return
  }
  func.func @transform_0(%arg0: i32, %arg1: i32) -> (i32, i32, i32) {
    %c0_i32 = arith.constant 0 : i32
    %c0_i32_0 = arith.constant 0 : i32
    return %arg0, %arg1, %c0_i32 : i32, i32, i32
  }
  func.func @transform_1(%arg0: i32, %arg1: i32) -> (i32, i32) {
    %c0_i32 = arith.constant 0 : i32
    %c0_i32_0 = arith.constant 0 : i32
    %c0_i32_1 = arith.constant 0 : i32
    return %c0_i32, %c0_i32_0 : i32, i32
  }
  func.func @transform_2(%arg0: i32, %arg1: i32) -> (i32, i32) {
    %c0_i32 = arith.constant 0 : i32
    %c0_i32_0 = arith.constant 0 : i32
    %c0_i32_1 = arith.constant 0 : i32
    return %c0_i32, %c0_i32_0 : i32, i32
  }
  func.func @transform_3(%arg0: i32, %arg1: i32) -> (i32, i32, i32) {
    %c0_i32 = arith.constant 0 : i32
    %c0_i32_0 = arith.constant 0 : i32
    return %arg0, %arg1, %c0_i32 : i32, i32, i32
  }
}

module attributes {stable_mosaic.version = 11 : i64} {
  func.func @_pw_kernel(%arg0: i32, %arg1: i32, %arg2: memref<1x16x88xbf16, #tpu.memory_space<vmem>>, %arg3: memref<88x24xbf16, #tpu.memory_space<vmem>>, %arg4: memref<1x24xf32, #tpu.memory_space<vmem>>, %arg5: memref<1x16x24xbf16, #tpu.memory_space<vmem>>, %arg6: memref<1x16x24xbf16, #tpu.memory_space<vmem>>) attributes {dimension_semantics = [#tpu.dimension_semantics<parallel>, #tpu.dimension_semantics<parallel>], iteration_bounds = array<i64: 2, 1>, scalar_prefetch = 0 : i64, scratch_operands = 0 : i64, tpu.core_type = #tpu.core_type<tc>, window_params = [{transform_indices = @transform_0, window_bounds = array<i64: 1, 16, 88>}, {pipeline_mode = #tpu.pipeline_mode<synchronous>, transform_indices = @transform_1, window_bounds = array<i64: 88, 24>}, {pipeline_mode = #tpu.pipeline_mode<synchronous>, transform_indices = @transform_2, window_bounds = array<i64: 1, 24>}, {transform_indices = @transform_3, window_bounds = array<i64: 1, 16, 24>}, {transform_indices = @transform_4, window_bounds = array<i64: 1, 16, 24>}]} {
    %c0 = arith.constant 0 : index
    %c0_0 = arith.constant 0 : index
    %c0_1 = arith.constant 0 : index
    %0 = vector.load %arg2[%c0, %c0_0, %c0_1] : memref<1x16x88xbf16, #tpu.memory_space<vmem>>, vector<1x16x88xbf16>
    %1 = vector.shape_cast %0 : vector<1x16x88xbf16> to vector<16x88xbf16>
    %c0_2 = arith.constant 0 : index
    %c0_3 = arith.constant 0 : index
    %2 = vector.load %arg3[%c0_2, %c0_3] : memref<88x24xbf16, #tpu.memory_space<vmem>>, vector<88x24xbf16>
    %cst = arith.constant dense<0.000000e+00> : vector<16x24xf32>
    %3 = tpu.matmul %1, %2, %cst {dimension_numbers = #tpu.dot_dimension_numbers<[1], [0], [0], [1], [0, 0, 1, 1], [], []>} : vector<16x88xbf16>, vector<88x24xbf16>, vector<16x24xf32> -> vector<16x24xf32>
    %c0_4 = arith.constant 0 : index
    %c0_5 = arith.constant 0 : index
    %4 = vector.load %arg4[%c0_4, %c0_5] : memref<1x24xf32, #tpu.memory_space<vmem>>, vector<1x24xf32>
    %5 = vector.broadcast %4 : vector<1x24xf32> to vector<16x24xf32>
    %6 = arith.addf %3, %5 : vector<16x24xf32>
    %c0_6 = arith.constant 0 : index
    %c0_7 = arith.constant 0 : index
    %c0_8 = arith.constant 0 : index
    %7 = vector.load %arg5[%c0_6, %c0_7, %c0_8] : memref<1x16x24xbf16, #tpu.memory_space<vmem>>, vector<1x16x24xbf16>
    %8 = vector.shape_cast %7 : vector<1x16x24xbf16> to vector<16x24xbf16>
    %9 = arith.extf %8 : vector<16x24xbf16> to vector<16x24xf32>
    %10 = arith.addf %6, %9 : vector<16x24xf32>
    %11 = arith.truncf %10 : vector<16x24xf32> to vector<16x24xbf16>
    %c0_9 = arith.constant 0 : index
    %c0_10 = arith.constant 0 : index
    %c0_11 = arith.constant 0 : index
    %12 = vector.load %arg6[%c0_9, %c0_10, %c0_11] : memref<1x16x24xbf16, #tpu.memory_space<vmem>>, vector<1x16x24xbf16>
    %13 = vector.shape_cast %12 : vector<1x16x24xbf16> to vector<16x24xbf16>
    %14 = vector.shape_cast %11 : vector<16x24xbf16> to vector<1x16x24xbf16>
    tpu.vector_store %arg6[%c0_9, %c0_10, %c0_11], %14 {strides = array<i32>} : memref<1x16x24xbf16, #tpu.memory_space<vmem>>, vector<1x16x24xbf16>,
    return
  }
  func.func @transform_0(%arg0: i32, %arg1: i32) -> (i32, i32, i32) {
    %c0_i32 = arith.constant 0 : i32
    %c0_i32_0 = arith.constant 0 : i32
    return %arg0, %arg1, %c0_i32 : i32, i32, i32
  }
  func.func @transform_1(%arg0: i32, %arg1: i32) -> (i32, i32) {
    %c0_i32 = arith.constant 0 : i32
    %c0_i32_0 = arith.constant 0 : i32
    %c0_i32_1 = arith.constant 0 : i32
    return %c0_i32, %c0_i32_0 : i32, i32
  }
  func.func @transform_2(%arg0: i32, %arg1: i32) -> (i32, i32) {
    %c0_i32 = arith.constant 0 : i32
    %c0_i32_0 = arith.constant 0 : i32
    %c0_i32_1 = arith.constant 0 : i32
    return %c0_i32, %c0_i32_0 : i32, i32
  }
  func.func @transform_3(%arg0: i32, %arg1: i32) -> (i32, i32, i32) {
    %c0_i32 = arith.constant 0 : i32
    %c0_i32_0 = arith.constant 0 : i32
    return %arg0, %arg1, %c0_i32 : i32, i32, i32
  }
  func.func @transform_4(%arg0: i32, %arg1: i32) -> (i32, i32, i32) {
    %c0_i32 = arith.constant 0 : i32
    %c0_i32_0 = arith.constant 0 : i32
    return %arg0, %arg1, %c0_i32 : i32, i32, i32
  }
}

module attributes {stable_mosaic.version = 11 : i64} {
  func.func @_se_mlp_kernel(%arg0: memref<2x96xf32, #tpu.memory_space<vmem>>, %arg1: memref<96x24xf32, #tpu.memory_space<vmem>>, %arg2: memref<1x24xf32, #tpu.memory_space<vmem>>, %arg3: memref<24x96xf32, #tpu.memory_space<vmem>>, %arg4: memref<1x96xf32, #tpu.memory_space<vmem>>, %arg5: memref<2x96xf32, #tpu.memory_space<vmem>>) attributes {dimension_semantics = [], scalar_prefetch = 0 : i64, scratch_operands = 0 : i64, tpu.core_type = #tpu.core_type<tc>} {
    %c0 = arith.constant 0 : index
    %c0_0 = arith.constant 0 : index
    %0 = vector.load %arg0[%c0, %c0_0] : memref<2x96xf32, #tpu.memory_space<vmem>>, vector<2x96xf32>
    %c0_1 = arith.constant 0 : index
    %c0_2 = arith.constant 0 : index
    %1 = vector.load %arg1[%c0_1, %c0_2] : memref<96x24xf32, #tpu.memory_space<vmem>>, vector<96x24xf32>
    %cst = arith.constant dense<0.000000e+00> : vector<2x24xf32>
    %2 = tpu.matmul %0, %1, %cst {dimension_numbers = #tpu.dot_dimension_numbers<[1], [0], [0], [1], [0, 0, 1, 1], [], []>} : vector<2x96xf32>, vector<96x24xf32>, vector<2x24xf32> -> vector<2x24xf32>
    %c0_3 = arith.constant 0 : index
    %c0_4 = arith.constant 0 : index
    %3 = vector.load %arg2[%c0_3, %c0_4] : memref<1x24xf32, #tpu.memory_space<vmem>>, vector<1x24xf32>
    %4 = vector.broadcast %3 : vector<1x24xf32> to vector<2x24xf32>
    %5 = arith.addf %2, %4 : vector<2x24xf32>
    %cst_5 = arith.constant 0.000000e+00 : f32
    %6 = vector.broadcast %cst_5 : f32 to vector<2x24xf32>
    %7 = arith.maximumf %5, %6 : vector<2x24xf32>
    %c0_6 = arith.constant 0 : index
    %c0_7 = arith.constant 0 : index
    %8 = vector.load %arg3[%c0_6, %c0_7] : memref<24x96xf32, #tpu.memory_space<vmem>>, vector<24x96xf32>
    %cst_8 = arith.constant dense<0.000000e+00> : vector<2x96xf32>
    %9 = tpu.matmul %7, %8, %cst_8 {dimension_numbers = #tpu.dot_dimension_numbers<[1], [0], [0], [1], [0, 0, 1, 1], [], []>} : vector<2x24xf32>, vector<24x96xf32>, vector<2x96xf32> -> vector<2x96xf32>
    %c0_9 = arith.constant 0 : index
    %c0_10 = arith.constant 0 : index
    %10 = vector.load %arg4[%c0_9, %c0_10] : memref<1x96xf32, #tpu.memory_space<vmem>>, vector<1x96xf32>
    %11 = vector.broadcast %10 : vector<1x96xf32> to vector<2x96xf32>
    %12 = arith.addf %9, %11 : vector<2x96xf32>
    %cst_11 = arith.constant 3.000000e+00 : f32
    %13 = vector.broadcast %cst_11 : f32 to vector<2x96xf32>
    %14 = arith.addf %12, %13 : vector<2x96xf32>
    %cst_12 = arith.constant 0.000000e+00 : f32
    %cst_13 = arith.constant 6.000000e+00 : f32
    %15 = vector.broadcast %cst_12 : f32 to vector<2x96xf32>
    %16 = arith.maximumf %15, %14 : vector<2x96xf32>
    %17 = vector.broadcast %cst_13 : f32 to vector<2x96xf32>
    %18 = arith.minimumf %17, %16 : vector<2x96xf32>
    %cst_14 = arith.constant 6.000000e+00 : f32
    %19 = vector.broadcast %cst_14 : f32 to vector<2x96xf32>
    %20 = arith.divf %18, %19 : vector<2x96xf32>
    %c0_15 = arith.constant 0 : index
    %c0_16 = arith.constant 0 : index
    %21 = vector.load %arg5[%c0_15, %c0_16] : memref<2x96xf32, #tpu.memory_space<vmem>>, vector<2x96xf32>
    tpu.vector_store %arg5[%c0_15, %c0_16], %20 {strides = array<i32>} : memref<2x96xf32, #tpu.memory_space<vmem>>, vector<2x96xf32>,
    return
  }
}

module attributes {stable_mosaic.version = 11 : i64} {
  func.func @_pw_kernel(%arg0: i32, %arg1: i32, %arg2: memref<1x4x96xbf16, #tpu.memory_space<vmem>>, %arg3: memref<1x1x96xf32, #tpu.memory_space<vmem>>, %arg4: memref<96x40xbf16, #tpu.memory_space<vmem>>, %arg5: memref<1x40xf32, #tpu.memory_space<vmem>>, %arg6: memref<1x4x40xbf16, #tpu.memory_space<vmem>>) attributes {dimension_semantics = [#tpu.dimension_semantics<parallel>, #tpu.dimension_semantics<parallel>], iteration_bounds = array<i64: 2, 1>, scalar_prefetch = 0 : i64, scratch_operands = 0 : i64, tpu.core_type = #tpu.core_type<tc>, window_params = [{transform_indices = @transform_0, window_bounds = array<i64: 1, 4, 96>}, {transform_indices = @transform_1, window_bounds = array<i64: 1, 1, 96>}, {pipeline_mode = #tpu.pipeline_mode<synchronous>, transform_indices = @transform_2, window_bounds = array<i64: 96, 40>}, {pipeline_mode = #tpu.pipeline_mode<synchronous>, transform_indices = @transform_3, window_bounds = array<i64: 1, 40>}, {transform_indices = @transform_4, window_bounds = array<i64: 1, 4, 40>}]} {
    %c0 = arith.constant 0 : index
    %c0_0 = arith.constant 0 : index
    %c0_1 = arith.constant 0 : index
    %0 = vector.load %arg2[%c0, %c0_0, %c0_1] : memref<1x4x96xbf16, #tpu.memory_space<vmem>>, vector<1x4x96xbf16>
    %1 = vector.shape_cast %0 : vector<1x4x96xbf16> to vector<4x96xbf16>
    %2 = arith.extf %1 : vector<4x96xbf16> to vector<4x96xf32>
    %c0_2 = arith.constant 0 : index
    %c0_3 = arith.constant 0 : index
    %c0_4 = arith.constant 0 : index
    %3 = vector.load %arg3[%c0_2, %c0_3, %c0_4] : memref<1x1x96xf32, #tpu.memory_space<vmem>>, vector<1x1x96xf32>
    %4 = vector.shape_cast %3 : vector<1x1x96xf32> to vector<1x96xf32>
    %5 = vector.broadcast %4 : vector<1x96xf32> to vector<4x96xf32>
    %6 = arith.mulf %2, %5 : vector<4x96xf32>
    %cst = arith.constant 3.000000e+00 : f32
    %7 = vector.broadcast %cst : f32 to vector<4x96xf32>
    %8 = arith.addf %6, %7 : vector<4x96xf32>
    %cst_5 = arith.constant 0.000000e+00 : f32
    %cst_6 = arith.constant 6.000000e+00 : f32
    %9 = vector.broadcast %cst_5 : f32 to vector<4x96xf32>
    %10 = arith.maximumf %9, %8 : vector<4x96xf32>
    %11 = vector.broadcast %cst_6 : f32 to vector<4x96xf32>
    %12 = arith.minimumf %11, %10 : vector<4x96xf32>
    %cst_7 = arith.constant 6.000000e+00 : f32
    %13 = vector.broadcast %cst_7 : f32 to vector<4x96xf32>
    %14 = arith.divf %12, %13 : vector<4x96xf32>
    %15 = arith.mulf %6, %14 : vector<4x96xf32>
    %16 = arith.truncf %15 : vector<4x96xf32> to vector<4x96xbf16>
    %c0_8 = arith.constant 0 : index
    %c0_9 = arith.constant 0 : index
    %17 = vector.load %arg4[%c0_8, %c0_9] : memref<96x40xbf16, #tpu.memory_space<vmem>>, vector<96x40xbf16>
    %cst_10 = arith.constant dense<0.000000e+00> : vector<4x40xf32>
    %18 = tpu.matmul %16, %17, %cst_10 {dimension_numbers = #tpu.dot_dimension_numbers<[1], [0], [0], [1], [0, 0, 1, 1], [], []>} : vector<4x96xbf16>, vector<96x40xbf16>, vector<4x40xf32> -> vector<4x40xf32>
    %c0_11 = arith.constant 0 : index
    %c0_12 = arith.constant 0 : index
    %19 = vector.load %arg5[%c0_11, %c0_12] : memref<1x40xf32, #tpu.memory_space<vmem>>, vector<1x40xf32>
    %20 = vector.broadcast %19 : vector<1x40xf32> to vector<4x40xf32>
    %21 = arith.addf %18, %20 : vector<4x40xf32>
    %22 = arith.truncf %21 : vector<4x40xf32> to vector<4x40xbf16>
    %c0_13 = arith.constant 0 : index
    %c0_14 = arith.constant 0 : index
    %c0_15 = arith.constant 0 : index
    %23 = vector.load %arg6[%c0_13, %c0_14, %c0_15] : memref<1x4x40xbf16, #tpu.memory_space<vmem>>, vector<1x4x40xbf16>
    %24 = vector.shape_cast %23 : vector<1x4x40xbf16> to vector<4x40xbf16>
    %25 = vector.shape_cast %22 : vector<4x40xbf16> to vector<1x4x40xbf16>
    tpu.vector_store %arg6[%c0_13, %c0_14, %c0_15], %25 {strides = array<i32>} : memref<1x4x40xbf16, #tpu.memory_space<vmem>>, vector<1x4x40xbf16>,
    return
  }
  func.func @transform_0(%arg0: i32, %arg1: i32) -> (i32, i32, i32) {
    %c0_i32 = arith.constant 0 : i32
    %c0_i32_0 = arith.constant 0 : i32
    return %arg0, %arg1, %c0_i32 : i32, i32, i32
  }
  func.func @transform_1(%arg0: i32, %arg1: i32) -> (i32, i32, i32) {
    %c0_i32 = arith.constant 0 : i32
    %c0_i32_0 = arith.constant 0 : i32
    %c0_i32_1 = arith.constant 0 : i32
    return %arg0, %c0_i32, %c0_i32_0 : i32, i32, i32
  }
  func.func @transform_2(%arg0: i32, %arg1: i32) -> (i32, i32) {
    %c0_i32 = arith.constant 0 : i32
    %c0_i32_0 = arith.constant 0 : i32
    %c0_i32_1 = arith.constant 0 : i32
    return %c0_i32, %c0_i32_0 : i32, i32
  }
  func.func @transform_3(%arg0: i32, %arg1: i32) -> (i32, i32) {
    %c0_i32 = arith.constant 0 : i32
    %c0_i32_0 = arith.constant 0 : i32
    %c0_i32_1 = arith.constant 0 : i32
    return %c0_i32, %c0_i32_0 : i32, i32
  }
  func.func @transform_4(%arg0: i32, %arg1: i32) -> (i32, i32, i32) {
    %c0_i32 = arith.constant 0 : i32
    %c0_i32_0 = arith.constant 0 : i32
    return %arg0, %arg1, %c0_i32 : i32, i32, i32
  }
}

module attributes {stable_mosaic.version = 11 : i64} {
  func.func @_dw_s2_kernel(%arg0: i32, %arg1: memref<1x16x4x96xbf16, #tpu.memory_space<vmem>>, %arg2: memref<25x1x96xf32, #tpu.memory_space<vmem>>, %arg3: memref<1x1x96xf32, #tpu.memory_space<vmem>>, %arg4: memref<1x2x2x96xbf16, #tpu.memory_space<vmem>>, %arg5: memref<1x1x96xf32, #tpu.memory_space<vmem>>) attributes {dimension_semantics = [#tpu.dimension_semantics<parallel>], iteration_bounds = array<i64: 2>, scalar_prefetch = 0 : i64, scratch_operands = 0 : i64, tpu.core_type = #tpu.core_type<tc>, window_params = [{transform_indices = @transform_0, window_bounds = array<i64: 1, 16, 4, 96>}, {pipeline_mode = #tpu.pipeline_mode<synchronous>, transform_indices = @transform_1, window_bounds = array<i64: 25, 1, 96>}, {pipeline_mode = #tpu.pipeline_mode<synchronous>, transform_indices = @transform_2, window_bounds = array<i64: 1, 1, 96>}, {transform_indices = @transform_3, window_bounds = array<i64: 1, 2, 2, 96>}, {transform_indices = @transform_4, window_bounds = array<i64: 1, 1, 96>}]} {
    %cst = arith.constant 0.000000e+00 : f32
    %0 = vector.broadcast %cst : f32 to vector<2x2x96xf32>
    %c0 = arith.constant 0 : index
    %c0_0 = arith.constant 0 : index
    %c0_1 = arith.constant 0 : index
    %c0_2 = arith.constant 0 : index
    %1 = vector.load %arg1[%c0, %c0_0, %c0_1, %c0_2] : memref<1x16x4x96xbf16, #tpu.memory_space<vmem>>, vector<1x2x2x96xbf16>
    %2 = vector.shape_cast %1 : vector<1x2x2x96xbf16> to vector<2x2x96xbf16>
    %3 = arith.extf %2 : vector<2x2x96xbf16> to vector<2x2x96xf32>
    %c0_3 = arith.constant 0 : index
    %c0_4 = arith.constant 0 : index
    %c0_5 = arith.constant 0 : index
    %4 = vector.load %arg2[%c0_3, %c0_4, %c0_5] : memref<25x1x96xf32, #tpu.memory_space<vmem>>, vector<1x1x96xf32>
    %5 = vector.shape_cast %4 : vector<1x1x96xf32> to vector<1x96xf32>
    %6 = vector.shape_cast %5 : vector<1x96xf32> to vector<1x1x96xf32>
    %7 = vector.broadcast %6 : vector<1x1x96xf32> to vector<2x2x96xf32>
    %8 = arith.mulf %3, %7 : vector<2x2x96xf32>
    %9 = arith.addf %0, %8 : vector<2x2x96xf32>
    %c0_6 = arith.constant 0 : index
    %c4 = arith.constant 4 : index
    %c0_7 = arith.constant 0 : index
    %c0_8 = arith.constant 0 : index
    %10 = vector.load %arg1[%c0_6, %c4, %c0_7, %c0_8] : memref<1x16x4x96xbf16, #tpu.memory_space<vmem>>, vector<1x2x2x96xbf16>
    %11 = vector.shape_cast %10 : vector<1x2x2x96xbf16> to vector<2x2x96xbf16>
    %12 = arith.extf %11 : vector<2x2x96xbf16> to vector<2x2x96xf32>
    %c1 = arith.constant 1 : index
    %c0_9 = arith.constant 0 : index
    %c0_10 = arith.constant 0 : index
    %13 = vector.load %arg2[%c1, %c0_9, %c0_10] : memref<25x1x96xf32, #tpu.memory_space<vmem>>, vector<1x1x96xf32>
    %14 = vector.shape_cast %13 : vector<1x1x96xf32> to vector<1x96xf32>
    %15 = vector.shape_cast %14 : vector<1x96xf32> to vector<1x1x96xf32>
    %16 = vector.broadcast %15 : vector<1x1x96xf32> to vector<2x2x96xf32>
    %17 = arith.mulf %12, %16 : vector<2x2x96xf32>
    %18 = arith.addf %9, %17 : vector<2x2x96xf32>
    %c0_11 = arith.constant 0 : index
    %c0_12 = arith.constant 0 : index
    %c1_13 = arith.constant 1 : index
    %c0_14 = arith.constant 0 : index
    %19 = vector.load %arg1[%c0_11, %c0_12, %c1_13, %c0_14] : memref<1x16x4x96xbf16, #tpu.memory_space<vmem>>, vector<1x2x2x96xbf16>
    %20 = vector.shape_cast %19 : vector<1x2x2x96xbf16> to vector<2x2x96xbf16>
    %21 = arith.extf %20 : vector<2x2x96xbf16> to vector<2x2x96xf32>
    %c2 = arith.constant 2 : index
    %c0_15 = arith.constant 0 : index
    %c0_16 = arith.constant 0 : index
    %22 = vector.load %arg2[%c2, %c0_15, %c0_16] : memref<25x1x96xf32, #tpu.memory_space<vmem>>, vector<1x1x96xf32>
    %23 = vector.shape_cast %22 : vector<1x1x96xf32> to vector<1x96xf32>
    %24 = vector.shape_cast %23 : vector<1x96xf32> to vector<1x1x96xf32>
    %25 = vector.broadcast %24 : vector<1x1x96xf32> to vector<2x2x96xf32>
    %26 = arith.mulf %21, %25 : vector<2x2x96xf32>
    %27 = arith.addf %18, %26 : vector<2x2x96xf32>
    %c0_17 = arith.constant 0 : index
    %c4_18 = arith.constant 4 : index
    %c1_19 = arith.constant 1 : index
    %c0_20 = arith.constant 0 : index
    %28 = vector.load %arg1[%c0_17, %c4_18, %c1_19, %c0_20] : memref<1x16x4x96xbf16, #tpu.memory_space<vmem>>, vector<1x2x2x96xbf16>
    %29 = vector.shape_cast %28 : vector<1x2x2x96xbf16> to vector<2x2x96xbf16>
    %30 = arith.extf %29 : vector<2x2x96xbf16> to vector<2x2x96xf32>
    %c3 = arith.constant 3 : index
    %c0_21 = arith.constant 0 : index
    %c0_22 = arith.constant 0 : index
    %31 = vector.load %arg2[%c3, %c0_21, %c0_22] : memref<25x1x96xf32, #tpu.memory_space<vmem>>, vector<1x1x96xf32>
    %32 = vector.shape_cast %31 : vector<1x1x96xf32> to vector<1x96xf32>
    %33 = vector.shape_cast %32 : vector<1x96xf32> to vector<1x1x96xf32>
    %34 = vector.broadcast %33 : vector<1x1x96xf32> to vector<2x2x96xf32>
    %35 = arith.mulf %30, %34 : vector<2x2x96xf32>
    %36 = arith.addf %27, %35 : vector<2x2x96xf32>
    %c0_23 = arith.constant 0 : index
    %c0_24 = arith.constant 0 : index
    %c2_25 = arith.constant 2 : index
    %c0_26 = arith.constant 0 : index
    %37 = vector.load %arg1[%c0_23, %c0_24, %c2_25, %c0_26] : memref<1x16x4x96xbf16, #tpu.memory_space<vmem>>, vector<1x2x2x96xbf16>
    %38 = vector.shape_cast %37 : vector<1x2x2x96xbf16> to vector<2x2x96xbf16>
    %39 = arith.extf %38 : vector<2x2x96xbf16> to vector<2x2x96xf32>
    %c4_27 = arith.constant 4 : index
    %c0_28 = arith.constant 0 : index
    %c0_29 = arith.constant 0 : index
    %40 = vector.load %arg2[%c4_27, %c0_28, %c0_29] : memref<25x1x96xf32, #tpu.memory_space<vmem>>, vector<1x1x96xf32>
    %41 = vector.shape_cast %40 : vector<1x1x96xf32> to vector<1x96xf32>
    %42 = vector.shape_cast %41 : vector<1x96xf32> to vector<1x1x96xf32>
    %43 = vector.broadcast %42 : vector<1x1x96xf32> to vector<2x2x96xf32>
    %44 = arith.mulf %39, %43 : vector<2x2x96xf32>
    %45 = arith.addf %36, %44 : vector<2x2x96xf32>
    %c0_30 = arith.constant 0 : index
    %c8 = arith.constant 8 : index
    %c0_31 = arith.constant 0 : index
    %c0_32 = arith.constant 0 : index
    %46 = vector.load %arg1[%c0_30, %c8, %c0_31, %c0_32] : memref<1x16x4x96xbf16, #tpu.memory_space<vmem>>, vector<1x2x2x96xbf16>
    %47 = vector.shape_cast %46 : vector<1x2x2x96xbf16> to vector<2x2x96xbf16>
    %48 = arith.extf %47 : vector<2x2x96xbf16> to vector<2x2x96xf32>
    %c5 = arith.constant 5 : index
    %c0_33 = arith.constant 0 : index
    %c0_34 = arith.constant 0 : index
    %49 = vector.load %arg2[%c5, %c0_33, %c0_34] : memref<25x1x96xf32, #tpu.memory_space<vmem>>, vector<1x1x96xf32>
    %50 = vector.shape_cast %49 : vector<1x1x96xf32> to vector<1x96xf32>
    %51 = vector.shape_cast %50 : vector<1x96xf32> to vector<1x1x96xf32>
    %52 = vector.broadcast %51 : vector<1x1x96xf32> to vector<2x2x96xf32>
    %53 = arith.mulf %48, %52 : vector<2x2x96xf32>
    %54 = arith.addf %45, %53 : vector<2x2x96xf32>
    %c0_35 = arith.constant 0 : index
    %c12 = arith.constant 12 : index
    %c0_36 = arith.constant 0 : index
    %c0_37 = arith.constant 0 : index
    %55 = vector.load %arg1[%c0_35, %c12, %c0_36, %c0_37] : memref<1x16x4x96xbf16, #tpu.memory_space<vmem>>, vector<1x2x2x96xbf16>
    %56 = vector.shape_cast %55 : vector<1x2x2x96xbf16> to vector<2x2x96xbf16>
    %57 = arith.extf %56 : vector<2x2x96xbf16> to vector<2x2x96xf32>
    %c6 = arith.constant 6 : index
    %c0_38 = arith.constant 0 : index
    %c0_39 = arith.constant 0 : index
    %58 = vector.load %arg2[%c6, %c0_38, %c0_39] : memref<25x1x96xf32, #tpu.memory_space<vmem>>, vector<1x1x96xf32>
    %59 = vector.shape_cast %58 : vector<1x1x96xf32> to vector<1x96xf32>
    %60 = vector.shape_cast %59 : vector<1x96xf32> to vector<1x1x96xf32>
    %61 = vector.broadcast %60 : vector<1x1x96xf32> to vector<2x2x96xf32>
    %62 = arith.mulf %57, %61 : vector<2x2x96xf32>
    %63 = arith.addf %54, %62 : vector<2x2x96xf32>
    %c0_40 = arith.constant 0 : index
    %c8_41 = arith.constant 8 : index
    %c1_42 = arith.constant 1 : index
    %c0_43 = arith.constant 0 : index
    %64 = vector.load %arg1[%c0_40, %c8_41, %c1_42, %c0_43] : memref<1x16x4x96xbf16, #tpu.memory_space<vmem>>, vector<1x2x2x96xbf16>
    %65 = vector.shape_cast %64 : vector<1x2x2x96xbf16> to vector<2x2x96xbf16>
    %66 = arith.extf %65 : vector<2x2x96xbf16> to vector<2x2x96xf32>
    %c7 = arith.constant 7 : index
    %c0_44 = arith.constant 0 : index
    %c0_45 = arith.constant 0 : index
    %67 = vector.load %arg2[%c7, %c0_44, %c0_45] : memref<25x1x96xf32, #tpu.memory_space<vmem>>, vector<1x1x96xf32>
    %68 = vector.shape_cast %67 : vector<1x1x96xf32> to vector<1x96xf32>
    %69 = vector.shape_cast %68 : vector<1x96xf32> to vector<1x1x96xf32>
    %70 = vector.broadcast %69 : vector<1x1x96xf32> to vector<2x2x96xf32>
    %71 = arith.mulf %66, %70 : vector<2x2x96xf32>
    %72 = arith.addf %63, %71 : vector<2x2x96xf32>
    %c0_46 = arith.constant 0 : index
    %c12_47 = arith.constant 12 : index
    %c1_48 = arith.constant 1 : index
    %c0_49 = arith.constant 0 : index
    %73 = vector.load %arg1[%c0_46, %c12_47, %c1_48, %c0_49] : memref<1x16x4x96xbf16, #tpu.memory_space<vmem>>, vector<1x2x2x96xbf16>
    %74 = vector.shape_cast %73 : vector<1x2x2x96xbf16> to vector<2x2x96xbf16>
    %75 = arith.extf %74 : vector<2x2x96xbf16> to vector<2x2x96xf32>
    %c8_50 = arith.constant 8 : index
    %c0_51 = arith.constant 0 : index
    %c0_52 = arith.constant 0 : index
    %76 = vector.load %arg2[%c8_50, %c0_51, %c0_52] : memref<25x1x96xf32, #tpu.memory_space<vmem>>, vector<1x1x96xf32>
    %77 = vector.shape_cast %76 : vector<1x1x96xf32> to vector<1x96xf32>
    %78 = vector.shape_cast %77 : vector<1x96xf32> to vector<1x1x96xf32>
    %79 = vector.broadcast %78 : vector<1x1x96xf32> to vector<2x2x96xf32>
    %80 = arith.mulf %75, %79 : vector<2x2x96xf32>
    %81 = arith.addf %72, %80 : vector<2x2x96xf32>
    %c0_53 = arith.constant 0 : index
    %c8_54 = arith.constant 8 : index
    %c2_55 = arith.constant 2 : index
    %c0_56 = arith.constant 0 : index
    %82 = vector.load %arg1[%c0_53, %c8_54, %c2_55, %c0_56] : memref<1x16x4x96xbf16, #tpu.memory_space<vmem>>, vector<1x2x2x96xbf16>
    %83 = vector.shape_cast %82 : vector<1x2x2x96xbf16> to vector<2x2x96xbf16>
    %84 = arith.extf %83 : vector<2x2x96xbf16> to vector<2x2x96xf32>
    %c9 = arith.constant 9 : index
    %c0_57 = arith.constant 0 : index
    %c0_58 = arith.constant 0 : index
    %85 = vector.load %arg2[%c9, %c0_57, %c0_58] : memref<25x1x96xf32, #tpu.memory_space<vmem>>, vector<1x1x96xf32>
    %86 = vector.shape_cast %85 : vector<1x1x96xf32> to vector<1x96xf32>
    %87 = vector.shape_cast %86 : vector<1x96xf32> to vector<1x1x96xf32>
    %88 = vector.broadcast %87 : vector<1x1x96xf32> to vector<2x2x96xf32>
    %89 = arith.mulf %84, %88 : vector<2x2x96xf32>
    %90 = arith.addf %81, %89 : vector<2x2x96xf32>
    %c0_59 = arith.constant 0 : index
    %c1_60 = arith.constant 1 : index
    %c0_61 = arith.constant 0 : index
    %c0_62 = arith.constant 0 : index
    %91 = vector.load %arg1[%c0_59, %c1_60, %c0_61, %c0_62] : memref<1x16x4x96xbf16, #tpu.memory_space<vmem>>, vector<1x2x2x96xbf16>
    %92 = vector.shape_cast %91 : vector<1x2x2x96xbf16> to vector<2x2x96xbf16>
    %93 = arith.extf %92 : vector<2x2x96xbf16> to vector<2x2x96xf32>
    %c10 = arith.constant 10 : index
    %c0_63 = arith.constant 0 : index
    %c0_64 = arith.constant 0 : index
    %94 = vector.load %arg2[%c10, %c0_63, %c0_64] : memref<25x1x96xf32, #tpu.memory_space<vmem>>, vector<1x1x96xf32>
    %95 = vector.shape_cast %94 : vector<1x1x96xf32> to vector<1x96xf32>
    %96 = vector.shape_cast %95 : vector<1x96xf32> to vector<1x1x96xf32>
    %97 = vector.broadcast %96 : vector<1x1x96xf32> to vector<2x2x96xf32>
    %98 = arith.mulf %93, %97 : vector<2x2x96xf32>
    %99 = arith.addf %90, %98 : vector<2x2x96xf32>
    %c0_65 = arith.constant 0 : index
    %c5_66 = arith.constant 5 : index
    %c0_67 = arith.constant 0 : index
    %c0_68 = arith.constant 0 : index
    %100 = vector.load %arg1[%c0_65, %c5_66, %c0_67, %c0_68] : memref<1x16x4x96xbf16, #tpu.memory_space<vmem>>, vector<1x2x2x96xbf16>
    %101 = vector.shape_cast %100 : vector<1x2x2x96xbf16> to vector<2x2x96xbf16>
    %102 = arith.extf %101 : vector<2x2x96xbf16> to vector<2x2x96xf32>
    %c11 = arith.constant 11 : index
    %c0_69 = arith.constant 0 : index
    %c0_70 = arith.constant 0 : index
    %103 = vector.load %arg2[%c11, %c0_69, %c0_70] : memref<25x1x96xf32, #tpu.memory_space<vmem>>, vector<1x1x96xf32>
    %104 = vector.shape_cast %103 : vector<1x1x96xf32> to vector<1x96xf32>
    %105 = vector.shape_cast %104 : vector<1x96xf32> to vector<1x1x96xf32>
    %106 = vector.broadcast %105 : vector<1x1x96xf32> to vector<2x2x96xf32>
    %107 = arith.mulf %102, %106 : vector<2x2x96xf32>
    %108 = arith.addf %99, %107 : vector<2x2x96xf32>
    %c0_71 = arith.constant 0 : index
    %c1_72 = arith.constant 1 : index
    %c1_73 = arith.constant 1 : index
    %c0_74 = arith.constant 0 : index
    %109 = vector.load %arg1[%c0_71, %c1_72, %c1_73, %c0_74] : memref<1x16x4x96xbf16, #tpu.memory_space<vmem>>, vector<1x2x2x96xbf16>
    %110 = vector.shape_cast %109 : vector<1x2x2x96xbf16> to vector<2x2x96xbf16>
    %111 = arith.extf %110 : vector<2x2x96xbf16> to vector<2x2x96xf32>
    %c12_75 = arith.constant 12 : index
    %c0_76 = arith.constant 0 : index
    %c0_77 = arith.constant 0 : index
    %112 = vector.load %arg2[%c12_75, %c0_76, %c0_77] : memref<25x1x96xf32, #tpu.memory_space<vmem>>, vector<1x1x96xf32>
    %113 = vector.shape_cast %112 : vector<1x1x96xf32> to vector<1x96xf32>
    %114 = vector.shape_cast %113 : vector<1x96xf32> to vector<1x1x96xf32>
    %115 = vector.broadcast %114 : vector<1x1x96xf32> to vector<2x2x96xf32>
    %116 = arith.mulf %111, %115 : vector<2x2x96xf32>
    %117 = arith.addf %108, %116 : vector<2x2x96xf32>
    %c0_78 = arith.constant 0 : index
    %c5_79 = arith.constant 5 : index
    %c1_80 = arith.constant 1 : index
    %c0_81 = arith.constant 0 : index
    %118 = vector.load %arg1[%c0_78, %c5_79, %c1_80, %c0_81] : memref<1x16x4x96xbf16, #tpu.memory_space<vmem>>, vector<1x2x2x96xbf16>
    %119 = vector.shape_cast %118 : vector<1x2x2x96xbf16> to vector<2x2x96xbf16>
    %120 = arith.extf %119 : vector<2x2x96xbf16> to vector<2x2x96xf32>
    %c13 = arith.constant 13 : index
    %c0_82 = arith.constant 0 : index
    %c0_83 = arith.constant 0 : index
    %121 = vector.load %arg2[%c13, %c0_82, %c0_83] : memref<25x1x96xf32, #tpu.memory_space<vmem>>, vector<1x1x96xf32>
    %122 = vector.shape_cast %121 : vector<1x1x96xf32> to vector<1x96xf32>
    %123 = vector.shape_cast %122 : vector<1x96xf32> to vector<1x1x96xf32>
    %124 = vector.broadcast %123 : vector<1x1x96xf32> to vector<2x2x96xf32>
    %125 = arith.mulf %120, %124 : vector<2x2x96xf32>
    %126 = arith.addf %117, %125 : vector<2x2x96xf32>
    %c0_84 = arith.constant 0 : index
    %c1_85 = arith.constant 1 : index
    %c2_86 = arith.constant 2 : index
    %c0_87 = arith.constant 0 : index
    %127 = vector.load %arg1[%c0_84, %c1_85, %c2_86, %c0_87] : memref<1x16x4x96xbf16, #tpu.memory_space<vmem>>, vector<1x2x2x96xbf16>
    %128 = vector.shape_cast %127 : vector<1x2x2x96xbf16> to vector<2x2x96xbf16>
    %129 = arith.extf %128 : vector<2x2x96xbf16> to vector<2x2x96xf32>
    %c14 = arith.constant 14 : index
    %c0_88 = arith.constant 0 : index
    %c0_89 = arith.constant 0 : index
    %130 = vector.load %arg2[%c14, %c0_88, %c0_89] : memref<25x1x96xf32, #tpu.memory_space<vmem>>, vector<1x1x96xf32>
    %131 = vector.shape_cast %130 : vector<1x1x96xf32> to vector<1x96xf32>
    %132 = vector.shape_cast %131 : vector<1x96xf32> to vector<1x1x96xf32>
    %133 = vector.broadcast %132 : vector<1x1x96xf32> to vector<2x2x96xf32>
    %134 = arith.mulf %129, %133 : vector<2x2x96xf32>
    %135 = arith.addf %126, %134 : vector<2x2x96xf32>
    %c0_90 = arith.constant 0 : index
    %c9_91 = arith.constant 9 : index
    %c0_92 = arith.constant 0 : index
    %c0_93 = arith.constant 0 : index
    %136 = vector.load %arg1[%c0_90, %c9_91, %c0_92, %c0_93] : memref<1x16x4x96xbf16, #tpu.memory_space<vmem>>, vector<1x2x2x96xbf16>
    %137 = vector.shape_cast %136 : vector<1x2x2x96xbf16> to vector<2x2x96xbf16>
    %138 = arith.extf %137 : vector<2x2x96xbf16> to vector<2x2x96xf32>
    %c15 = arith.constant 15 : index
    %c0_94 = arith.constant 0 : index
    %c0_95 = arith.constant 0 : index
    %139 = vector.load %arg2[%c15, %c0_94, %c0_95] : memref<25x1x96xf32, #tpu.memory_space<vmem>>, vector<1x1x96xf32>
    %140 = vector.shape_cast %139 : vector<1x1x96xf32> to vector<1x96xf32>
    %141 = vector.shape_cast %140 : vector<1x96xf32> to vector<1x1x96xf32>
    %142 = vector.broadcast %141 : vector<1x1x96xf32> to vector<2x2x96xf32>
    %143 = arith.mulf %138, %142 : vector<2x2x96xf32>
    %144 = arith.addf %135, %143 : vector<2x2x96xf32>
    %c0_96 = arith.constant 0 : index
    %c13_97 = arith.constant 13 : index
    %c0_98 = arith.constant 0 : index
    %c0_99 = arith.constant 0 : index
    %145 = vector.load %arg1[%c0_96, %c13_97, %c0_98, %c0_99] : memref<1x16x4x96xbf16, #tpu.memory_space<vmem>>, vector<1x2x2x96xbf16>
    %146 = vector.shape_cast %145 : vector<1x2x2x96xbf16> to vector<2x2x96xbf16>
    %147 = arith.extf %146 : vector<2x2x96xbf16> to vector<2x2x96xf32>
    %c16 = arith.constant 16 : index
    %c0_100 = arith.constant 0 : index
    %c0_101 = arith.constant 0 : index
    %148 = vector.load %arg2[%c16, %c0_100, %c0_101] : memref<25x1x96xf32, #tpu.memory_space<vmem>>, vector<1x1x96xf32>
    %149 = vector.shape_cast %148 : vector<1x1x96xf32> to vector<1x96xf32>
    %150 = vector.shape_cast %149 : vector<1x96xf32> to vector<1x1x96xf32>
    %151 = vector.broadcast %150 : vector<1x1x96xf32> to vector<2x2x96xf32>
    %152 = arith.mulf %147, %151 : vector<2x2x96xf32>
    %153 = arith.addf %144, %152 : vector<2x2x96xf32>
    %c0_102 = arith.constant 0 : index
    %c9_103 = arith.constant 9 : index
    %c1_104 = arith.constant 1 : index
    %c0_105 = arith.constant 0 : index
    %154 = vector.load %arg1[%c0_102, %c9_103, %c1_104, %c0_105] : memref<1x16x4x96xbf16, #tpu.memory_space<vmem>>, vector<1x2x2x96xbf16>
    %155 = vector.shape_cast %154 : vector<1x2x2x96xbf16> to vector<2x2x96xbf16>
    %156 = arith.extf %155 : vector<2x2x96xbf16> to vector<2x2x96xf32>
    %c17 = arith.constant 17 : index
    %c0_106 = arith.constant 0 : index
    %c0_107 = arith.constant 0 : index
    %157 = vector.load %arg2[%c17, %c0_106, %c0_107] : memref<25x1x96xf32, #tpu.memory_space<vmem>>, vector<1x1x96xf32>
    %158 = vector.shape_cast %157 : vector<1x1x96xf32> to vector<1x96xf32>
    %159 = vector.shape_cast %158 : vector<1x96xf32> to vector<1x1x96xf32>
    %160 = vector.broadcast %159 : vector<1x1x96xf32> to vector<2x2x96xf32>
    %161 = arith.mulf %156, %160 : vector<2x2x96xf32>
    %162 = arith.addf %153, %161 : vector<2x2x96xf32>
    %c0_108 = arith.constant 0 : index
    %c13_109 = arith.constant 13 : index
    %c1_110 = arith.constant 1 : index
    %c0_111 = arith.constant 0 : index
    %163 = vector.load %arg1[%c0_108, %c13_109, %c1_110, %c0_111] : memref<1x16x4x96xbf16, #tpu.memory_space<vmem>>, vector<1x2x2x96xbf16>
    %164 = vector.shape_cast %163 : vector<1x2x2x96xbf16> to vector<2x2x96xbf16>
    %165 = arith.extf %164 : vector<2x2x96xbf16> to vector<2x2x96xf32>
    %c18 = arith.constant 18 : index
    %c0_112 = arith.constant 0 : index
    %c0_113 = arith.constant 0 : index
    %166 = vector.load %arg2[%c18, %c0_112, %c0_113] : memref<25x1x96xf32, #tpu.memory_space<vmem>>, vector<1x1x96xf32>
    %167 = vector.shape_cast %166 : vector<1x1x96xf32> to vector<1x96xf32>
    %168 = vector.shape_cast %167 : vector<1x96xf32> to vector<1x1x96xf32>
    %169 = vector.broadcast %168 : vector<1x1x96xf32> to vector<2x2x96xf32>
    %170 = arith.mulf %165, %169 : vector<2x2x96xf32>
    %171 = arith.addf %162, %170 : vector<2x2x96xf32>
    %c0_114 = arith.constant 0 : index
    %c9_115 = arith.constant 9 : index
    %c2_116 = arith.constant 2 : index
    %c0_117 = arith.constant 0 : index
    %172 = vector.load %arg1[%c0_114, %c9_115, %c2_116, %c0_117] : memref<1x16x4x96xbf16, #tpu.memory_space<vmem>>, vector<1x2x2x96xbf16>
    %173 = vector.shape_cast %172 : vector<1x2x2x96xbf16> to vector<2x2x96xbf16>
    %174 = arith.extf %173 : vector<2x2x96xbf16> to vector<2x2x96xf32>
    %c19 = arith.constant 19 : index
    %c0_118 = arith.constant 0 : index
    %c0_119 = arith.constant 0 : index
    %175 = vector.load %arg2[%c19, %c0_118, %c0_119] : memref<25x1x96xf32, #tpu.memory_space<vmem>>, vector<1x1x96xf32>
    %176 = vector.shape_cast %175 : vector<1x1x96xf32> to vector<1x96xf32>
    %177 = vector.shape_cast %176 : vector<1x96xf32> to vector<1x1x96xf32>
    %178 = vector.broadcast %177 : vector<1x1x96xf32> to vector<2x2x96xf32>
    %179 = arith.mulf %174, %178 : vector<2x2x96xf32>
    %180 = arith.addf %171, %179 : vector<2x2x96xf32>
    %c0_120 = arith.constant 0 : index
    %c2_121 = arith.constant 2 : index
    %c0_122 = arith.constant 0 : index
    %c0_123 = arith.constant 0 : index
    %181 = vector.load %arg1[%c0_120, %c2_121, %c0_122, %c0_123] : memref<1x16x4x96xbf16, #tpu.memory_space<vmem>>, vector<1x2x2x96xbf16>
    %182 = vector.shape_cast %181 : vector<1x2x2x96xbf16> to vector<2x2x96xbf16>
    %183 = arith.extf %182 : vector<2x2x96xbf16> to vector<2x2x96xf32>
    %c20 = arith.constant 20 : index
    %c0_124 = arith.constant 0 : index
    %c0_125 = arith.constant 0 : index
    %184 = vector.load %arg2[%c20, %c0_124, %c0_125] : memref<25x1x96xf32, #tpu.memory_space<vmem>>, vector<1x1x96xf32>
    %185 = vector.shape_cast %184 : vector<1x1x96xf32> to vector<1x96xf32>
    %186 = vector.shape_cast %185 : vector<1x96xf32> to vector<1x1x96xf32>
    %187 = vector.broadcast %186 : vector<1x1x96xf32> to vector<2x2x96xf32>
    %188 = arith.mulf %183, %187 : vector<2x2x96xf32>
    %189 = arith.addf %180, %188 : vector<2x2x96xf32>
    %c0_126 = arith.constant 0 : index
    %c6_127 = arith.constant 6 : index
    %c0_128 = arith.constant 0 : index
    %c0_129 = arith.constant 0 : index
    %190 = vector.load %arg1[%c0_126, %c6_127, %c0_128, %c0_129] : memref<1x16x4x96xbf16, #tpu.memory_space<vmem>>, vector<1x2x2x96xbf16>
    %191 = vector.shape_cast %190 : vector<1x2x2x96xbf16> to vector<2x2x96xbf16>
    %192 = arith.extf %191 : vector<2x2x96xbf16> to vector<2x2x96xf32>
    %c21 = arith.constant 21 : index
    %c0_130 = arith.constant 0 : index
    %c0_131 = arith.constant 0 : index
    %193 = vector.load %arg2[%c21, %c0_130, %c0_131] : memref<25x1x96xf32, #tpu.memory_space<vmem>>, vector<1x1x96xf32>
    %194 = vector.shape_cast %193 : vector<1x1x96xf32> to vector<1x96xf32>
    %195 = vector.shape_cast %194 : vector<1x96xf32> to vector<1x1x96xf32>
    %196 = vector.broadcast %195 : vector<1x1x96xf32> to vector<2x2x96xf32>
    %197 = arith.mulf %192, %196 : vector<2x2x96xf32>
    %198 = arith.addf %189, %197 : vector<2x2x96xf32>
    %c0_132 = arith.constant 0 : index
    %c2_133 = arith.constant 2 : index
    %c1_134 = arith.constant 1 : index
    %c0_135 = arith.constant 0 : index
    %199 = vector.load %arg1[%c0_132, %c2_133, %c1_134, %c0_135] : memref<1x16x4x96xbf16, #tpu.memory_space<vmem>>, vector<1x2x2x96xbf16>
    %200 = vector.shape_cast %199 : vector<1x2x2x96xbf16> to vector<2x2x96xbf16>
    %201 = arith.extf %200 : vector<2x2x96xbf16> to vector<2x2x96xf32>
    %c22 = arith.constant 22 : index
    %c0_136 = arith.constant 0 : index
    %c0_137 = arith.constant 0 : index
    %202 = vector.load %arg2[%c22, %c0_136, %c0_137] : memref<25x1x96xf32, #tpu.memory_space<vmem>>, vector<1x1x96xf32>
    %203 = vector.shape_cast %202 : vector<1x1x96xf32> to vector<1x96xf32>
    %204 = vector.shape_cast %203 : vector<1x96xf32> to vector<1x1x96xf32>
    %205 = vector.broadcast %204 : vector<1x1x96xf32> to vector<2x2x96xf32>
    %206 = arith.mulf %201, %205 : vector<2x2x96xf32>
    %207 = arith.addf %198, %206 : vector<2x2x96xf32>
    %c0_138 = arith.constant 0 : index
    %c6_139 = arith.constant 6 : index
    %c1_140 = arith.constant 1 : index
    %c0_141 = arith.constant 0 : index
    %208 = vector.load %arg1[%c0_138, %c6_139, %c1_140, %c0_141] : memref<1x16x4x96xbf16, #tpu.memory_space<vmem>>, vector<1x2x2x96xbf16>
    %209 = vector.shape_cast %208 : vector<1x2x2x96xbf16> to vector<2x2x96xbf16>
    %210 = arith.extf %209 : vector<2x2x96xbf16> to vector<2x2x96xf32>
    %c23 = arith.constant 23 : index
    %c0_142 = arith.constant 0 : index
    %c0_143 = arith.constant 0 : index
    %211 = vector.load %arg2[%c23, %c0_142, %c0_143] : memref<25x1x96xf32, #tpu.memory_space<vmem>>, vector<1x1x96xf32>
    %212 = vector.shape_cast %211 : vector<1x1x96xf32> to vector<1x96xf32>
    %213 = vector.shape_cast %212 : vector<1x96xf32> to vector<1x1x96xf32>
    %214 = vector.broadcast %213 : vector<1x1x96xf32> to vector<2x2x96xf32>
    %215 = arith.mulf %210, %214 : vector<2x2x96xf32>
    %216 = arith.addf %207, %215 : vector<2x2x96xf32>
    %c0_144 = arith.constant 0 : index
    %c2_145 = arith.constant 2 : index
    %c2_146 = arith.constant 2 : index
    %c0_147 = arith.constant 0 : index
    %217 = vector.load %arg1[%c0_144, %c2_145, %c2_146, %c0_147] : memref<1x16x4x96xbf16, #tpu.memory_space<vmem>>, vector<1x2x2x96xbf16>
    %218 = vector.shape_cast %217 : vector<1x2x2x96xbf16> to vector<2x2x96xbf16>
    %219 = arith.extf %218 : vector<2x2x96xbf16> to vector<2x2x96xf32>
    %c24 = arith.constant 24 : index
    %c0_148 = arith.constant 0 : index
    %c0_149 = arith.constant 0 : index
    %220 = vector.load %arg2[%c24, %c0_148, %c0_149] : memref<25x1x96xf32, #tpu.memory_space<vmem>>, vector<1x1x96xf32>
    %221 = vector.shape_cast %220 : vector<1x1x96xf32> to vector<1x96xf32>
    %222 = vector.shape_cast %221 : vector<1x96xf32> to vector<1x1x96xf32>
    %223 = vector.broadcast %222 : vector<1x1x96xf32> to vector<2x2x96xf32>
    %224 = arith.mulf %219, %223 : vector<2x2x96xf32>
    %225 = arith.addf %216, %224 : vector<2x2x96xf32>
    %c0_150 = arith.constant 0 : index
    %c0_151 = arith.constant 0 : index
    %c0_152 = arith.constant 0 : index
    %226 = vector.load %arg3[%c0_150, %c0_151, %c0_152] : memref<1x1x96xf32, #tpu.memory_space<vmem>>, vector<1x1x96xf32>
    %227 = vector.broadcast %226 : vector<1x1x96xf32> to vector<2x2x96xf32>
    %228 = arith.addf %225, %227 : vector<2x2x96xf32>
    %229 = arith.truncf %228 : vector<2x2x96xf32> to vector<2x2x96xbf16>
    %c0_153 = arith.constant 0 : index
    %c0_154 = arith.constant 0 : index
    %c0_155 = arith.constant 0 : index
    %c0_156 = arith.constant 0 : index
    %230 = vector.load %arg4[%c0_153, %c0_154, %c0_155, %c0_156] : memref<1x2x2x96xbf16, #tpu.memory_space<vmem>>, vector<1x2x2x96xbf16>
    %231 = vector.shape_cast %230 : vector<1x2x2x96xbf16> to vector<2x2x96xbf16>
    %232 = vector.shape_cast %229 : vector<2x2x96xbf16> to vector<1x2x2x96xbf16>
    tpu.vector_store %arg4[%c0_153, %c0_154, %c0_155, %c0_156], %232 {strides = array<i32>} : memref<1x2x2x96xbf16, #tpu.memory_space<vmem>>, vector<1x2x2x96xbf16>,
    %cst_157 = arith.constant dense<0.000000e+00> : vector<96xf32>
    %233 = vector.multi_reduction <add>, %228, %cst_157 [0, 1] : vector<2x2x96xf32> to vector<96xf32>
    %234 = vector.shape_cast %233 : vector<96xf32> to vector<1x1x96xf32>
    %cst_158 = arith.constant 4.000000e+00 : f32
    %235 = vector.broadcast %cst_158 : f32 to vector<1x1x96xf32>
    %236 = arith.divf %234, %235 : vector<1x1x96xf32>
    %c0_159 = arith.constant 0 : index
    %c0_160 = arith.constant 0 : index
    %c0_161 = arith.constant 0 : index
    %237 = vector.load %arg5[%c0_159, %c0_160, %c0_161] : memref<1x1x96xf32, #tpu.memory_space<vmem>>, vector<1x1x96xf32>
    tpu.vector_store %arg5[%c0_159, %c0_160, %c0_161], %236 {strides = array<i32>} : memref<1x1x96xf32, #tpu.memory_space<vmem>>, vector<1x1x96xf32>,
    return
  }
  func.func @transform_0(%arg0: i32) -> (i32, i32, i32, i32) {
    %c0_i32 = arith.constant 0 : i32
    %c0_i32_0 = arith.constant 0 : i32
    %c0_i32_1 = arith.constant 0 : i32
    %c0_i32_2 = arith.constant 0 : i32
    return %arg0, %c0_i32, %c0_i32_0, %c0_i32_1 : i32, i32, i32, i32
  }
  func.func @transform_1(%arg0: i32) -> (i32, i32, i32) {
    %c0_i32 = arith.constant 0 : i32
    %c0_i32_0 = arith.constant 0 : i32
    %c0_i32_1 = arith.constant 0 : i32
    %c0_i32_2 = arith.constant 0 : i32
    return %c0_i32, %c0_i32_0, %c0_i32_1 : i32, i32, i32
  }
  func.func @transform_2(%arg0: i32) -> (i32, i32, i32) {
    %c0_i32 = arith.constant 0 : i32
    %c0_i32_0 = arith.constant 0 : i32
    %c0_i32_1 = arith.constant 0 : i32
    %c0_i32_2 = arith.constant 0 : i32
    return %c0_i32, %c0_i32_0, %c0_i32_1 : i32, i32, i32
  }
  func.func @transform_3(%arg0: i32) -> (i32, i32, i32, i32) {
    %c0_i32 = arith.constant 0 : i32
    %c0_i32_0 = arith.constant 0 : i32
    %c0_i32_1 = arith.constant 0 : i32
    %c0_i32_2 = arith.constant 0 : i32
    return %arg0, %c0_i32, %c0_i32_0, %c0_i32_1 : i32, i32, i32, i32
  }
  func.func @transform_4(%arg0: i32) -> (i32, i32, i32) {
    %c0_i32 = arith.constant 0 : i32
    %c0_i32_0 = arith.constant 0 : i32
    %c0_i32_1 = arith.constant 0 : i32
    return %arg0, %c0_i32, %c0_i32_0 : i32, i32, i32
  }
}

module attributes {stable_mosaic.version = 11 : i64} {
  func.func @_pw_kernel(%arg0: i32, %arg1: i32, %arg2: memref<1x4x40xbf16, #tpu.memory_space<vmem>>, %arg3: memref<40x96xbf16, #tpu.memory_space<vmem>>, %arg4: memref<1x96xf32, #tpu.memory_space<vmem>>, %arg5: memref<1x4x96xbf16, #tpu.memory_space<vmem>>) attributes {dimension_semantics = [#tpu.dimension_semantics<parallel>, #tpu.dimension_semantics<parallel>], iteration_bounds = array<i64: 2, 1>, scalar_prefetch = 0 : i64, scratch_operands = 0 : i64, tpu.core_type = #tpu.core_type<tc>, window_params = [{transform_indices = @transform_0, window_bounds = array<i64: 1, 4, 40>}, {pipeline_mode = #tpu.pipeline_mode<synchronous>, transform_indices = @transform_1, window_bounds = array<i64: 40, 96>}, {pipeline_mode = #tpu.pipeline_mode<synchronous>, transform_indices = @transform_2, window_bounds = array<i64: 1, 96>}, {transform_indices = @transform_3, window_bounds = array<i64: 1, 4, 96>}]} {
    %c0 = arith.constant 0 : index
    %c0_0 = arith.constant 0 : index
    %c0_1 = arith.constant 0 : index
    %0 = vector.load %arg2[%c0, %c0_0, %c0_1] : memref<1x4x40xbf16, #tpu.memory_space<vmem>>, vector<1x4x40xbf16>
    %1 = vector.shape_cast %0 : vector<1x4x40xbf16> to vector<4x40xbf16>
    %c0_2 = arith.constant 0 : index
    %c0_3 = arith.constant 0 : index
    %2 = vector.load %arg3[%c0_2, %c0_3] : memref<40x96xbf16, #tpu.memory_space<vmem>>, vector<40x96xbf16>
    %cst = arith.constant dense<0.000000e+00> : vector<4x96xf32>
    %3 = tpu.matmul %1, %2, %cst {dimension_numbers = #tpu.dot_dimension_numbers<[1], [0], [0], [1], [0, 0, 1, 1], [], []>} : vector<4x40xbf16>, vector<40x96xbf16>, vector<4x96xf32> -> vector<4x96xf32>
    %c0_4 = arith.constant 0 : index
    %c0_5 = arith.constant 0 : index
    %4 = vector.load %arg4[%c0_4, %c0_5] : memref<1x96xf32, #tpu.memory_space<vmem>>, vector<1x96xf32>
    %5 = vector.broadcast %4 : vector<1x96xf32> to vector<4x96xf32>
    %6 = arith.addf %3, %5 : vector<4x96xf32>
    %cst_6 = arith.constant 3.000000e+00 : f32
    %7 = vector.broadcast %cst_6 : f32 to vector<4x96xf32>
    %8 = arith.addf %6, %7 : vector<4x96xf32>
    %cst_7 = arith.constant 0.000000e+00 : f32
    %cst_8 = arith.constant 6.000000e+00 : f32
    %9 = vector.broadcast %cst_7 : f32 to vector<4x96xf32>
    %10 = arith.maximumf %9, %8 : vector<4x96xf32>
    %11 = vector.broadcast %cst_8 : f32 to vector<4x96xf32>
    %12 = arith.minimumf %11, %10 : vector<4x96xf32>
    %cst_9 = arith.constant 6.000000e+00 : f32
    %13 = vector.broadcast %cst_9 : f32 to vector<4x96xf32>
    %14 = arith.divf %12, %13 : vector<4x96xf32>
    %15 = arith.mulf %6, %14 : vector<4x96xf32>
    %16 = arith.truncf %15 : vector<4x96xf32> to vector<4x96xbf16>
    %c0_10 = arith.constant 0 : index
    %c0_11 = arith.constant 0 : index
    %c0_12 = arith.constant 0 : index
    %17 = vector.load %arg5[%c0_10, %c0_11, %c0_12] : memref<1x4x96xbf16, #tpu.memory_space<vmem>>, vector<1x4x96xbf16>
    %18 = vector.shape_cast %17 : vector<1x4x96xbf16> to vector<4x96xbf16>
    %19 = vector.shape_cast %16 : vector<4x96xbf16> to vector<1x4x96xbf16>
    tpu.vector_store %arg5[%c0_10, %c0_11, %c0_12], %19 {strides = array<i32>} : memref<1x4x96xbf16, #tpu.memory_space<vmem>>, vector<1x4x96xbf16>,
    return
  }
  func.func @transform_0(%arg0: i32, %arg1: i32) -> (i32, i32, i32) {
    %c0_i32 = arith.constant 0 : i32
    %c0_i32_0 = arith.constant 0 : i32
    return %arg0, %arg1, %c0_i32 : i32, i32, i32
  }
  func.func @transform_1(%arg0: i32, %arg1: i32) -> (i32, i32) {
    %c0_i32 = arith.constant 0 : i32
    %c0_i32_0 = arith.constant 0 : i32
    %c0_i32_1 = arith.constant 0 : i32
    return %c0_i32, %c0_i32_0 : i32, i32
  }
  func.func @transform_2(%arg0: i32, %arg1: i32) -> (i32, i32) {
    %c0_i32 = arith.constant 0 : i32
    %c0_i32_0 = arith.constant 0 : i32
    %c0_i32_1 = arith.constant 0 : i32
    return %c0_i32, %c0_i32_0 : i32, i32
  }
  func.func @transform_3(%arg0: i32, %arg1: i32) -> (i32, i32, i32) {
    %c0_i32 = arith.constant 0 : i32
    %c0_i32_0 = arith.constant 0 : i32
    return %arg0, %arg1, %c0_i32 : i32, i32, i32
  }
}

module attributes {stable_mosaic.version = 11 : i64} {
  func.func @_avg_pool_kernel(%arg0: i32, %arg1: memref<1x4x96xbf16, #tpu.memory_space<vmem>>, %arg2: memref<1x1x96xf32, #tpu.memory_space<vmem>>) attributes {dimension_semantics = [#tpu.dimension_semantics<parallel>], iteration_bounds = array<i64: 2>, scalar_prefetch = 0 : i64, scratch_operands = 0 : i64, tpu.core_type = #tpu.core_type<tc>, window_params = [{transform_indices = @transform_0, window_bounds = array<i64: 1, 4, 96>}, {transform_indices = @transform_1, window_bounds = array<i64: 1, 1, 96>}]} {
    %c0 = arith.constant 0 : index
    %c0_0 = arith.constant 0 : index
    %c0_1 = arith.constant 0 : index
    %0 = vector.load %arg1[%c0, %c0_0, %c0_1] : memref<1x4x96xbf16, #tpu.memory_space<vmem>>, vector<1x4x96xbf16>
    %1 = arith.extf %0 : vector<1x4x96xbf16> to vector<1x4x96xf32>
    %cst = arith.constant dense<0.000000e+00> : vector<1x96xf32>
    %2 = vector.multi_reduction <add>, %1, %cst [1] : vector<1x4x96xf32> to vector<1x96xf32>
    %3 = vector.shape_cast %2 : vector<1x96xf32> to vector<1x1x96xf32>
    %cst_2 = arith.constant 4.000000e+00 : f32
    %4 = vector.broadcast %cst_2 : f32 to vector<1x1x96xf32>
    %5 = arith.divf %3, %4 : vector<1x1x96xf32>
    %c0_3 = arith.constant 0 : index
    %c0_4 = arith.constant 0 : index
    %c0_5 = arith.constant 0 : index
    %6 = vector.load %arg2[%c0_3, %c0_4, %c0_5] : memref<1x1x96xf32, #tpu.memory_space<vmem>>, vector<1x1x96xf32>
    tpu.vector_store %arg2[%c0_3, %c0_4, %c0_5], %5 {strides = array<i32>} : memref<1x1x96xf32, #tpu.memory_space<vmem>>, vector<1x1x96xf32>,
    return
  }
  func.func @transform_0(%arg0: i32) -> (i32, i32, i32) {
    %c0_i32 = arith.constant 0 : i32
    %c0_i32_0 = arith.constant 0 : i32
    %c0_i32_1 = arith.constant 0 : i32
    return %arg0, %c0_i32, %c0_i32_0 : i32, i32, i32
  }
  func.func @transform_1(%arg0: i32) -> (i32, i32, i32) {
    %c0_i32 = arith.constant 0 : i32
    %c0_i32_0 = arith.constant 0 : i32
    %c0_i32_1 = arith.constant 0 : i32
    return %arg0, %c0_i32, %c0_i32_0 : i32, i32, i32
  }
}

module attributes {stable_mosaic.version = 11 : i64} {
  func.func @_pw_kernel(%arg0: i32, %arg1: i32, %arg2: memref<1x2x96xbf16, #tpu.memory_space<vmem>>, %arg3: memref<96x1024xbf16, #tpu.memory_space<vmem>>, %arg4: memref<1x1024xf32, #tpu.memory_space<vmem>>, %arg5: memref<1x2x1024xbf16, #tpu.memory_space<vmem>>) attributes {dimension_semantics = [#tpu.dimension_semantics<parallel>, #tpu.dimension_semantics<parallel>], iteration_bounds = array<i64: 1, 1>, scalar_prefetch = 0 : i64, scratch_operands = 0 : i64, tpu.core_type = #tpu.core_type<tc>, window_params = [{transform_indices = @transform_0, window_bounds = array<i64: 1, 2, 96>}, {pipeline_mode = #tpu.pipeline_mode<synchronous>, transform_indices = @transform_1, window_bounds = array<i64: 96, 1024>}, {pipeline_mode = #tpu.pipeline_mode<synchronous>, transform_indices = @transform_2, window_bounds = array<i64: 1, 1024>}, {transform_indices = @transform_3, window_bounds = array<i64: 1, 2, 1024>}]} {
    %c0 = arith.constant 0 : index
    %c0_0 = arith.constant 0 : index
    %c0_1 = arith.constant 0 : index
    %0 = vector.load %arg2[%c0, %c0_0, %c0_1] : memref<1x2x96xbf16, #tpu.memory_space<vmem>>, vector<1x2x96xbf16>
    %1 = vector.shape_cast %0 : vector<1x2x96xbf16> to vector<2x96xbf16>
    %c0_2 = arith.constant 0 : index
    %c0_3 = arith.constant 0 : index
    %2 = vector.load %arg3[%c0_2, %c0_3] : memref<96x1024xbf16, #tpu.memory_space<vmem>>, vector<96x1024xbf16>
    %cst = arith.constant dense<0.000000e+00> : vector<2x1024xf32>
    %3 = tpu.matmul %1, %2, %cst {dimension_numbers = #tpu.dot_dimension_numbers<[1], [0], [0], [1], [0, 0, 1, 1], [], []>} : vector<2x96xbf16>, vector<96x1024xbf16>, vector<2x1024xf32> -> vector<2x1024xf32>
    %c0_4 = arith.constant 0 : index
    %c0_5 = arith.constant 0 : index
    %4 = vector.load %arg4[%c0_4, %c0_5] : memref<1x1024xf32, #tpu.memory_space<vmem>>, vector<1x1024xf32>
    %5 = vector.broadcast %4 : vector<1x1024xf32> to vector<2x1024xf32>
    %6 = arith.addf %3, %5 : vector<2x1024xf32>
    %cst_6 = arith.constant 3.000000e+00 : f32
    %7 = vector.broadcast %cst_6 : f32 to vector<2x1024xf32>
    %8 = arith.addf %6, %7 : vector<2x1024xf32>
    %cst_7 = arith.constant 0.000000e+00 : f32
    %cst_8 = arith.constant 6.000000e+00 : f32
    %9 = vector.broadcast %cst_7 : f32 to vector<2x1024xf32>
    %10 = arith.maximumf %9, %8 : vector<2x1024xf32>
    %11 = vector.broadcast %cst_8 : f32 to vector<2x1024xf32>
    %12 = arith.minimumf %11, %10 : vector<2x1024xf32>
    %cst_9 = arith.constant 6.000000e+00 : f32
    %13 = vector.broadcast %cst_9 : f32 to vector<2x1024xf32>
    %14 = arith.divf %12, %13 : vector<2x1024xf32>
    %15 = arith.mulf %6, %14 : vector<2x1024xf32>
    %16 = arith.truncf %15 : vector<2x1024xf32> to vector<2x1024xbf16>
    %c0_10 = arith.constant 0 : index
    %c0_11 = arith.constant 0 : index
    %c0_12 = arith.constant 0 : index
    %17 = vector.load %arg5[%c0_10, %c0_11, %c0_12] : memref<1x2x1024xbf16, #tpu.memory_space<vmem>>, vector<1x2x1024xbf16>
    %18 = vector.shape_cast %17 : vector<1x2x1024xbf16> to vector<2x1024xbf16>
    %19 = vector.shape_cast %16 : vector<2x1024xbf16> to vector<1x2x1024xbf16>
    tpu.vector_store %arg5[%c0_10, %c0_11, %c0_12], %19 {strides = array<i32>} : memref<1x2x1024xbf16, #tpu.memory_space<vmem>>, vector<1x2x1024xbf16>,
    return
  }
  func.func @transform_0(%arg0: i32, %arg1: i32) -> (i32, i32, i32) {
    %c0_i32 = arith.constant 0 : i32
    %c0_i32_0 = arith.constant 0 : i32
    return %arg0, %arg1, %c0_i32 : i32, i32, i32
  }
  func.func @transform_1(%arg0: i32, %arg1: i32) -> (i32, i32) {
    %c0_i32 = arith.constant 0 : i32
    %c0_i32_0 = arith.constant 0 : i32
    %c0_i32_1 = arith.constant 0 : i32
    return %c0_i32, %c0_i32_0 : i32, i32
  }
  func.func @transform_2(%arg0: i32, %arg1: i32) -> (i32, i32) {
    %c0_i32 = arith.constant 0 : i32
    %c0_i32_0 = arith.constant 0 : i32
    %c0_i32_1 = arith.constant 0 : i32
    return %c0_i32, %c0_i32_0 : i32, i32
  }
  func.func @transform_3(%arg0: i32, %arg1: i32) -> (i32, i32, i32) {
    %c0_i32 = arith.constant 0 : i32
    %c0_i32_0 = arith.constant 0 : i32
    return %arg0, %arg1, %c0_i32 : i32, i32, i32
  }
}

module attributes {stable_mosaic.version = 11 : i64} {
  func.func @_pw_kernel(%arg0: i32, %arg1: i32, %arg2: memref<1x2x1024xbf16, #tpu.memory_space<vmem>>, %arg3: memref<1024x10xbf16, #tpu.memory_space<vmem>>, %arg4: memref<1x10xf32, #tpu.memory_space<vmem>>, %arg5: memref<1x2x10xf32, #tpu.memory_space<vmem>>) attributes {dimension_semantics = [#tpu.dimension_semantics<parallel>, #tpu.dimension_semantics<parallel>], iteration_bounds = array<i64: 1, 1>, scalar_prefetch = 0 : i64, scratch_operands = 0 : i64, tpu.core_type = #tpu.core_type<tc>, window_params = [{transform_indices = @transform_0, window_bounds = array<i64: 1, 2, 1024>}, {pipeline_mode = #tpu.pipeline_mode<synchronous>, transform_indices = @transform_1, window_bounds = array<i64: 1024, 10>}, {pipeline_mode = #tpu.pipeline_mode<synchronous>, transform_indices = @transform_2, window_bounds = array<i64: 1, 10>}, {transform_indices = @transform_3, window_bounds = array<i64: 1, 2, 10>}]} {
    %c0 = arith.constant 0 : index
    %c0_0 = arith.constant 0 : index
    %c0_1 = arith.constant 0 : index
    %0 = vector.load %arg2[%c0, %c0_0, %c0_1] : memref<1x2x1024xbf16, #tpu.memory_space<vmem>>, vector<1x2x1024xbf16>
    %1 = vector.shape_cast %0 : vector<1x2x1024xbf16> to vector<2x1024xbf16>
    %c0_2 = arith.constant 0 : index
    %c0_3 = arith.constant 0 : index
    %2 = vector.load %arg3[%c0_2, %c0_3] : memref<1024x10xbf16, #tpu.memory_space<vmem>>, vector<1024x10xbf16>
    %cst = arith.constant dense<0.000000e+00> : vector<2x10xf32>
    %3 = tpu.matmul %1, %2, %cst {dimension_numbers = #tpu.dot_dimension_numbers<[1], [0], [0], [1], [0, 0, 1, 1], [], []>} : vector<2x1024xbf16>, vector<1024x10xbf16>, vector<2x10xf32> -> vector<2x10xf32>
    %c0_4 = arith.constant 0 : index
    %c0_5 = arith.constant 0 : index
    %4 = vector.load %arg4[%c0_4, %c0_5] : memref<1x10xf32, #tpu.memory_space<vmem>>, vector<1x10xf32>
    %5 = vector.broadcast %4 : vector<1x10xf32> to vector<2x10xf32>
    %6 = arith.addf %3, %5 : vector<2x10xf32>
    %c0_6 = arith.constant 0 : index
    %c0_7 = arith.constant 0 : index
    %c0_8 = arith.constant 0 : index
    %7 = vector.load %arg5[%c0_6, %c0_7, %c0_8] : memref<1x2x10xf32, #tpu.memory_space<vmem>>, vector<1x2x10xf32>
    %8 = vector.shape_cast %7 : vector<1x2x10xf32> to vector<2x10xf32>
    %9 = vector.shape_cast %6 : vector<2x10xf32> to vector<1x2x10xf32>
    tpu.vector_store %arg5[%c0_6, %c0_7, %c0_8], %9 {strides = array<i32>} : memref<1x2x10xf32, #tpu.memory_space<vmem>>, vector<1x2x10xf32>,
    return
  }
  func.func @transform_0(%arg0: i32, %arg1: i32) -> (i32, i32, i32) {
    %c0_i32 = arith.constant 0 : i32
    %c0_i32_0 = arith.constant 0 : i32
    return %arg0, %arg1, %c0_i32 : i32, i32, i32
  }
  func.func @transform_1(%arg0: i32, %arg1: i32) -> (i32, i32) {
    %c0_i32 = arith.constant 0 : i32
    %c0_i32_0 = arith.constant 0 : i32
    %c0_i32_1 = arith.constant 0 : i32
    return %c0_i32, %c0_i32_0 : i32, i32
  }
  func.func @transform_2(%arg0: i32, %arg1: i32) -> (i32, i32) {
    %c0_i32 = arith.constant 0 : i32
    %c0_i32_0 = arith.constant 0 : i32
    %c0_i32_1 = arith.constant 0 : i32
    return %c0_i32, %c0_i32_0 : i32, i32
  }
  func.func @transform_3(%arg0: i32, %arg1: i32) -> (i32, i32, i32) {
    %c0_i32 = arith.constant 0 : i32
    %c0_i32_0 = arith.constant 0 : i32
    return %arg0, %arg1, %c0_i32 : i32, i32, i32
  }
}

</mosaic_0001>

<llo_original>
// kernel: a_call__.18
$region0: #{a_call__.18}
  #allocation0 [shape = 'u32[]', space=smem, size = 0x4, offset = 0x4, fixed_abs, tag = 'smem constant byte address 0x4 - core index']
  #allocation1 [shape = 'u32[144,128]{1,0:T(1,128)}', space=vmem, size = 0x12000, scoped, tag = 'internal scratch']
  %s0 = inlined_call_operand.vmem [shape: bf16[2,256,27], index: 0, kind: input, shape index: {}]
  %s1 = inlined_call_operand.vmem [shape: bf16[27,16], index: 1, kind: input, shape index: {}]
  %s2 = inlined_call_operand.vmem [shape: f32[1,16], index: 2, kind: input, shape index: {}]
  %s3 = inlined_call_operand.vmem [shape: bf16[2,256,16], index: 3, kind: output, shape index: {}]
  %s4 = sld [smem:[#allocation0]]
  $region45: #{a_call__.18} parent=0
    _
  %s6 = ssub.s32 1, %s4
  %s7 = scalar_select 0, %s6, %s4
  loop: start=0, step=1, limit=4
  $region2: #{a_call__.18} parent=0 // loop_pre_header
    _
  $region3: #{a_call__.18} parent=0 // loop_header
    %s9 = sphi 0, %s13
    %p10 = scmp.ge.s32.totalorder %s9, 4
    %s16 = sphi 0, %s28
    %s17 = sphi 0, %s24
    %s18 = sphi 0, %s16
    %s19 = sphi 0, %s17
    %s20 = sphi 0, %s18
    %s21 = sphi 0, %s19
    %s33 = sphi 0, %s35
    %s36 = sphi 0, %s33
    %s37 = sphi 0, %s36
    %s53 = sphi 0, %s37
    %s57 = sphi 0, %s57
    %s59 = sphi 0, %s57
    %s60 = sphi 0, %s59
    %s74 = sphi 0, %s60
    %s78 = sphi 0, %s78
    %s80 = sphi 0, %s78
    %s81 = sphi 0, %s80
    %s95 = sphi 0, %s81
    %s103 = sphi 0, %s105
    %s106 = sphi 0, %s103
    %s107 = sphi 0, %s106
    %s123 = sphi 0, %s107
  $region4: #{a_call__.18} parent=0 // loop_header_branch
    %12 = sbr.rel (%p10) target = $region8
  $region5: #{a_call__.18} parent=0 // loop_body
    %s14 = ssub.s32 %s9, 1
    %s15 = ssub.s32 %s9, 2
    %s22 = sadd.s32 1, %s17
    %p23 = scmp.ge.s32.totalorder %s22, 1
    %s24 = scalar_select %p23, 0, %s22
    %s25 = sadd.s32 1, %s16
    %s26 = scalar_select %p23, %s25, %s16
    %p27 = scmp.ge.s32.totalorder %s26, 2
    %s28 = scalar_select %p27, 0, %s26
    %s29 = ssub.s32 %s16, %s28
    %s30 = ssub.s32 %s17, %s24
    %s31 = sor.u32 %s29, %s30
    %p32 = scmp.eq.s32.totalorder %s31, 0
    %s34 = sadd.s32 %s33, 1
    %s35 = scalar_select %p32, %s33, %s34
    %p38 = pneg %p32
    %p39 = scmp.eq.s32.totalorder %s9, 1
    %p40 = por %p38, %p39
    %p41 = scmp.ne.s32.totalorder %s33, %s36
    %p42 = scmp.eq.s32.totalorder %s9, 0
    %p43 = por %p41, %p42
    %p44 = scmp.ne.s32.totalorder %s33, %s36
    %p45 = scmp.eq.s32.totalorder %s14, 1
    %p46 = por %p44, %p45
    %p47 = scmp.ne.s32.totalorder %s36, %s37
    %p48 = scmp.eq.s32.totalorder %s14, 0
    %p49 = por %p47, %p48
    %p50 = scmp.ne.s32.totalorder %s36, %s37
    %p51 = scmp.eq.s32.totalorder %s15, 1
    %p52 = por %p50, %p51
    %p54 = scmp.ne.s32.totalorder %s37, %s53
    %p55 = scmp.eq.s32.totalorder %s15, 0
    %p56 = por %p54, %p55
    %s58 = sadd.s32 %s57, 1
    %p61 = scmp.eq.s32.totalorder %s9, 1
    %p62 = scmp.ne.s32.totalorder %s57, %s59
    %p63 = scmp.eq.s32.totalorder %s9, 0
    %p64 = por %p62, %p63
    %p65 = scmp.ne.s32.totalorder %s57, %s59
    %p66 = scmp.eq.s32.totalorder %s14, 1
    %p67 = por %p65, %p66
    %p68 = scmp.ne.s32.totalorder %s59, %s60
    %p69 = scmp.eq.s32.totalorder %s14, 0
    %p70 = por %p68, %p69
    %p71 = scmp.ne.s32.totalorder %s59, %s60
    %p72 = scmp.eq.s32.totalorder %s15, 1
    %p73 = por %p71, %p72
    %p75 = scmp.ne.s32.totalorder %s60, %s74
    %p76 = scmp.eq.s32.totalorder %s15, 0
    %p77 = por %p75, %p76
    %s79 = sadd.s32 %s78, 1
    %p82 = scmp.eq.s32.totalorder %s9, 1
    %p83 = scmp.ne.s32.totalorder %s78, %s80
    %p84 = scmp.eq.s32.totalorder %s9, 0
    %p85 = por %p83, %p84
    %p86 = scmp.ne.s32.totalorder %s78, %s80
    %p87 = scmp.eq.s32.totalorder %s14, 1
    %p88 = por %p86, %p87
    %p89 = scmp.ne.s32.totalorder %s80, %s81
    %p90 = scmp.eq.s32.totalorder %s14, 0
    %p91 = por %p89, %p90
    %p92 = scmp.ne.s32.totalorder %s80, %s81
    %p93 = scmp.eq.s32.totalorder %s15, 1
    %p94 = por %p92, %p93
    %p96 = scmp.ne.s32.totalorder %s81, %s95
    %p97 = scmp.eq.s32.totalorder %s15, 0
    %p98 = por %p96, %p97
    %s99 = ssub.s32 %s16, %s28
    %s100 = ssub.s32 %s17, %s24
    %s101 = sor.u32 %s99, %s100
    %p102 = scmp.eq.s32.totalorder %s101, 0
    %s104 = sadd.s32 %s103, 1
    %s105 = scalar_select %p102, %s103, %s104
    %p108 = pneg %p102
    %p109 = scmp.eq.s32.totalorder %s9, 1
    %p110 = por %p108, %p109
    %p111 = scmp.ne.s32.totalorder %s103, %s106
    %p112 = scmp.eq.s32.totalorder %s9, 0
    %p113 = por %p111, %p112
    %p114 = scmp.ne.s32.totalorder %s103, %s106
    %p115 = scmp.eq.s32.totalorder %s14, 1
    %p116 = por %p114, %p115
    %p117 = scmp.ne.s32.totalorder %s106, %s107
    %p118 = scmp.eq.s32.totalorder %s14, 0
    %p119 = por %p117, %p118
    %p120 = scmp.ne.s32.totalorder %s106, %s107
    %p121 = scmp.eq.s32.totalorder %s15, 1
    %p122 = por %p120, %p121
    %p124 = scmp.ne.s32.totalorder %s107, %s123
    %p125 = scmp.eq.s32.totalorder %s15, 0
    %p126 = por %p124, %p125
    %p127 = scmp.le.s32.totalorder 1, %s9
    %p128 = scmp.lt.s32.totalorder %s9, 3
    %p129 = pnand %p127, %p128
    %p130 = pneg %p129
    // Predicated region
    $region9: #{a_call__.18} parent=5 // pred_check
      _
    $region10: #{a_call__.18} parent=5 // pred_check_branch
      %132 = sbr.rel (%p129) target = $region12
    $region11: #{a_call__.18} parent=5 // pred_region
      %s133 = ssub.s32 %s9, 1
      // Predicated region
      $region13: #{a_call__.18} parent=11 // pred_check
        %p134 = pneg %p70
      $region14: #{a_call__.18} parent=11 // pred_check_branch
        %136 = sbr.rel (%p134) target = $region16
      $region15: #{a_call__.18} parent=11 // pred_region
        _
      $region16: #{a_call__.18} parent=11 // pred_fallthru
        _
      // Predicated region
      $region17: #{a_call__.18} parent=11 // pred_check
        %p137 = pneg %p91
      $region18: #{a_call__.18} parent=11 // pred_check_branch
        %139 = sbr.rel (%p137) target = $region20
      $region19: #{a_call__.18} parent=11 // pred_region
        _
      $region20: #{a_call__.18} parent=11 // pred_fallthru
        _
    $region12: #{a_call__.18} parent=5 // pred_fallthru
      _
    %p140 = scmp.lt.s32.totalorder %s9, 2
    // Predicated region
    $region21: #{a_call__.18} parent=5 // pred_check
      %p141 = pneg %p140
    $region22: #{a_call__.18} parent=5 // pred_check_branch
      %143 = sbr.rel (%p141) target = $region24
    $region23: #{a_call__.18} parent=5 // pred_region
      // Predicated region
      $region25: #{a_call__.18} parent=23 // pred_check
        %p144 = pneg %p43
      $region26: #{a_call__.18} parent=23 // pred_check_branch
        %146 = sbr.rel (%p144) target = $region28
      $region27: #{a_call__.18} parent=23 // pred_region
        %s147 = smul.u32 32, %s17
        %p148 = scmp.lt.s32.totalorder %s16, 1
        %s149 = scalar_select %p148, %s16, 1
        %p150 = scmp.lt.s32.totalorder %s147, 31
        %s151 = scalar_select %p150, %s147, 31
        %s152 = smul.addr %s149, 32
        %s153 = sadd.s32 %s151, %s152
        %s154 = smul.addr %s153, 4
        %s155 = scalar_lea.vmem %s0, %s154
        %s156 = smul.u32 32, %s17
      $region28: #{a_call__.18} parent=23 // pred_fallthru
        _
    $region24: #{a_call__.18} parent=5 // pred_fallthru
      _
    %p157 = scmp.le.s32.totalorder 1, %s9
    %p158 = scmp.lt.s32.totalorder %s9, 3
    %p159 = pnand %p157, %p158
    %p160 = pneg %p159
    // Predicated region
    $region29: #{a_call__.18} parent=5 // pred_check
      _
    $region30: #{a_call__.18} parent=5 // pred_check_branch
      %162 = sbr.rel (%p159) target = $region32
    $region31: #{a_call__.18} parent=5 // pred_region
      %s163 = ssub.s32 %s9, 1
      %s164 = smul.u32 32, %s19
      %p165 = scmp.lt.s32.totalorder %s18, 1
      %s166 = scalar_select %p165, %s18, 1
      %p167 = scmp.lt.s32.totalorder %s164, 31
      %s168 = scalar_select %p167, %s164, 31
      %s169 = smul.addr %s166, 32
      %s170 = sadd.s32 %s168, %s169
      %s171 = smul.addr %s170, 4
      %s172 = scalar_lea.vmem %s0, %s171
      %p173 = pneg %p49
      %p174 = pneg %p46
      %p175 = pneg %p70
      %p176 = pneg %p67
      %p177 = pneg %p91
      %p178 = pneg %p88
      %p179 = pneg %p119
      %p180 = pneg %p116
      %s181 = smul.u32 32, %s19
      %p182 = scmp.lt.s32.totalorder %s18, 1
      %s183 = scalar_select %p182, %s18, 1
      %p184 = scmp.lt.s32.totalorder %s181, 31
      %s185 = scalar_select %p184, %s181, 31
      %s186 = smul.addr %s183, 32
      %s187 = sadd.s32 %s185, %s186
      %s188 = smul.addr %s187, 4
      %s189 = scalar_lea.vmem %s3, %s188
      %s190 = smul.u32 32, %s19
      %p191 = scmp.lt.s32.totalorder %s18, 1
      %s192 = scalar_select %p191, %s18, 1
      %p193 = scmp.lt.s32.totalorder %s190, 31
      %s194 = scalar_select %p193, %s190, 31
      %s195 = smul.addr %s192, 32
      %s196 = sadd.s32 %s194, %s195
      %s197 = smul.addr %s196, 4
      %s198 = scalar_lea.vmem %s0, %s197
      %s199 = smul.u32 32, %s19
      %s200 = smul.u32 32, %s19
      %p201 = scmp.lt.s32.totalorder %s18, 1
      %s202 = scalar_select %p201, %s18, 1
      %p203 = scmp.lt.s32.totalorder %s200, 31
      %s204 = scalar_select %p203, %s200, 31
      %s205 = smul.addr %s202, 32
      %s206 = sadd.s32 %s204, %s205
      %s207 = smul.addr %s206, 4
      %s208 = scalar_lea.vmem %s3, %s207
      %s209 = smul.u32 32, %s19
      %v211 = vld [vmem:[%s198] sm:$0xf]
      %v212 = vld [vmem:[%s198 + $0x4] sm:$0xf]
      %v213 = vld [vmem:[%s198 + $0x8] sm:$0xf]
      %v214 = vld [vmem:[%s198 + $0xc] sm:$0xf]
      %v215 = vld [vmem:[%s198 + $0x10] sm:$0xf]
      %v216 = vld [vmem:[%s198 + $0x14] sm:$0xf]
      %v217 = vld [vmem:[%s198 + $0x18] sm:$0xf]
      %v218 = vld [vmem:[%s198 + $0x1c] sm:$0xf]
      %v219 = vld [vmem:[%s198 + $0x20] sm:$0xf]
      %v220 = vld [vmem:[%s198 + $0x24] sm:$0xf]
      %v221 = vld [vmem:[%s198 + $0x28] sm:$0xf]
      %v222 = vld [vmem:[%s198 + $0x2c] sm:$0xf]
      %v223 = vld [vmem:[%s198 + $0x30] sm:$0xf]
      %v224 = vld [vmem:[%s198 + $0x34] sm:$0xf]
      %v225 = vld [vmem:[%s198 + $0x38] sm:$0xf]
      %v226 = vld [vmem:[%s198 + $0x3c] sm:$0xf]
      %v227 = vld [vmem:[%s198 + $0x40] sm:$0xf]
      %v228 = vld [vmem:[%s198 + $0x44] sm:$0xf]
      %v229 = vld [vmem:[%s198 + $0x48] sm:$0xf]
      %v230 = vld [vmem:[%s198 + $0x4c] sm:$0xf]
      %v231 = vld [vmem:[%s198 + $0x50] sm:$0xf]
      %v232 = vld [vmem:[%s198 + $0x54] sm:$0xf]
      %v233 = vld [vmem:[%s198 + $0x58] sm:$0xf]
      %v234 = vld [vmem:[%s198 + $0x5c] sm:$0xf]
      %v235 = vld [vmem:[%s198 + $0x60] sm:$0xf]
      %v236 = vld [vmem:[%s198 + $0x64] sm:$0xf]
      %v237 = vld [vmem:[%s198 + $0x68] sm:$0xf]
      %v238 = vld [vmem:[%s198 + $0x6c] sm:$0xf]
      %v239 = vld [vmem:[%s198 + $0x70] sm:$0xf]
      %v240 = vld [vmem:[%s198 + $0x74] sm:$0xf]
      %v241 = vld [vmem:[%s198 + $0x78] sm:$0xf]
      %v242 = vld [vmem:[%s198 + $0x7c] sm:$0xf]
      %v243 = vld [vmem:[%s1] sm:$0xf]
      %v244 = vld [vmem:[%s1 + $0x4] sm:$0xf]
      %v245 = vld [vmem:[%s1 + $0x8] sm:$0xf]
      %v246 = vld [vmem:[%s1 + $0xc] sm:$0x3]
      %v247 = vld [vmem:[%s2] sm:$0x1]
      %v249 = vlaneseq
      %v250 = vshrl.u32 %v249, 7
      %v251 = vsub.s32 0, %v250
      %v252 = vrot.slane %v247, %v251
      %v286 = vunpack.c.l.b16 %v211
      %v287 = vunpack.c.l.b16 %v212
      %v288 = vunpack.c.l.b16 %v213
      %v289 = vunpack.c.l.b16 %v214
      %v290 = vunpack.c.l.b16 %v215
      %v291 = vunpack.c.l.b16 %v216
      %v292 = vunpack.c.l.b16 %v217
      %v293 = vunpack.c.l.b16 %v218
      %v294 = vunpack.c.l.b16 %v219
      %v295 = vunpack.c.l.b16 %v220
      %v296 = vunpack.c.l.b16 %v221
      %v297 = vunpack.c.l.b16 %v222
      %v298 = vunpack.c.l.b16 %v223
      %v299 = vunpack.c.l.b16 %v224
      %v300 = vunpack.c.l.b16 %v225
      %v301 = vunpack.c.l.b16 %v226
      %v302 = vunpack.c.l.b16 %v227
      %v303 = vunpack.c.l.b16 %v228
      %v304 = vunpack.c.l.b16 %v229
      %v305 = vunpack.c.l.b16 %v230
      %v306 = vunpack.c.l.b16 %v231
      %v307 = vunpack.c.l.b16 %v232
      %v308 = vunpack.c.l.b16 %v233
      %v309 = vunpack.c.l.b16 %v234
      %v310 = vunpack.c.l.b16 %v235
      %v311 = vunpack.c.l.b16 %v236
      %v312 = vunpack.c.l.b16 %v237
      %v313 = vunpack.c.l.b16 %v238
      %v314 = vunpack.c.l.b16 %v239
      %v315 = vunpack.c.l.b16 %v240
      %v316 = vunpack.c.l.b16 %v241
      %v317 = vunpack.c.l.b16 %v242
      %v318 = vpack.c.b16 %v287, %v286
      %v319 = vpack.c.b16 %v289, %v288
      %v320 = vpack.c.b16 %v291, %v290
      %v321 = vpack.c.b16 %v293, %v292
      %v322 = vpack.c.b16 %v295, %v294
      %v323 = vpack.c.b16 %v297, %v296
      %v324 = vpack.c.b16 %v299, %v298
      %v325 = vpack.c.b16 %v301, %v300
      %v326 = vpack.c.b16 %v303, %v302
      %v327 = vpack.c.b16 %v305, %v304
      %v328 = vpack.c.b16 %v307, %v306
      %v329 = vpack.c.b16 %v309, %v308
      %v330 = vpack.c.b16 %v311, %v310
      %v331 = vpack.c.b16 %v313, %v312
      %v332 = vpack.c.b16 %v315, %v314
      %v333 = vpack.c.b16 %v317, %v316
      %v338 = vunpack.c.l.b16 %v243
      %v339 = vunpack.c.l.b16 %v244
      %v340 = vunpack.c.l.b16 %v245
      %v341 = vunpack.c.l.b16 %v246
      %v342 = vpack.c.b16 %v339, %v338
      %v343 = vpack.c.b16 %v341, %v340
      %vm345 = vcmask 220160
      %v347 = vsel %vm345, %v318, 0
      %v350 = vsel %vm345, %v319, 0
      %v353 = vsel %vm345, %v320, 0
      %v356 = vsel %vm345, %v321, 0
      %v359 = vsel %vm345, %v322, 0
      %v362 = vsel %vm345, %v323, 0
      %v365 = vsel %vm345, %v324, 0
      %v368 = vsel %vm345, %v325, 0
      %v371 = vsel %vm345, %v326, 0
      %v374 = vsel %vm345, %v327, 0
      %v377 = vsel %vm345, %v328, 0
      %v380 = vsel %vm345, %v329, 0
      %v383 = vsel %vm345, %v330, 0
      %v386 = vsel %vm345, %v331, 0
      %v389 = vsel %vm345, %v332, 0
      %v392 = vsel %vm345, %v333, 0
      %vm394 = vcmask 1044480
      %vm395 = vcmask 1045504
      %v396 = vsel %vm394, 4294967295, 65535
      %v397 = vsel %vm395, %v396, 0
      %v399 = vand.u32 %v343, %v397
      %401 = vmatprep.subr.bf16.mxu0 0
      %402 = vmatpush1.bf16.msra.mxu0 %v342
      %403 = vmatprep.subr.bf16.mxu0 0
      %404 = vmatpush1.bf16.msra.mxu0 %v399
      %405 = vmatprep.subr.bf16.mxu0 0
      %406 = vmatpush1.bf16.msra.mxu0 0
      %407 = vmatprep.subr.bf16.mxu0 0
      %408 = vmatpush1.bf16.msra.mxu0 0
      %409 = vmatprep.subr.bf16.mxu0 0
      %410 = vmatpush1.bf16.msra.mxu0 0
      %411 = vmatprep.subr.bf16.mxu0 0
      %412 = vmatpush1.bf16.msra.mxu0 0
      %413 = vmatprep.subr.bf16.mxu0 0
      %414 = vmatpush1.bf16.msra.mxu0 0
      %415 = vmatprep.subr.bf16.mxu0 0
      %416 = vmatpush1.bf16.msra.mxu0 0
      %417 = vmatprep.subr.bf16.mxu0 0
      %418 = vmatpush1.bf16.msra.mxu0 0
      %419 = vmatprep.subr.bf16.mxu0 0
      %420 = vmatpush1.bf16.msra.mxu0 0
      %421 = vmatprep.subr.bf16.mxu0 0
      %422 = vmatpush1.bf16.msra.mxu0 0
      %423 = vmatprep.subr.bf16.mxu0 0
      %424 = vmatpush1.bf16.msra.mxu0 0
      %425 = vmatprep.subr.bf16.mxu0 0
      %426 = vmatpush1.bf16.msra.mxu0 0
      %427 = vmatprep.subr.bf16.mxu0 0
      %428 = vmatpush1.bf16.msra.mxu0 0
      %429 = vmatprep.subr.bf16.mxu0 0
      %430 = vmatpush1.bf16.msra.mxu0 0
      %431 = vmatprep.subr.bf16.mxu0 0
      %432 = vmatpush1.bf16.msra.mxu0 0
      %433 = vmatprep.mubr.bf16.mxu0 0
      %434 = vmatmul.mubr.bf16.gmra.mrb[0].mxu0 %v347
      %v435 = vpop.f32.mrb[0].mxu0
      %v436 = vadd.f32 %v252, %v435
      %v437 = vpop.f32.mrb[0].mxu0
      %v438 = vpop.f32.mrb[0].mxu0
      %v439 = vadd.f32 %v252, %v438
      %v440 = vpop.f32.mrb[0].mxu0
      %441 = vmatprep.mubr.bf16.mxu0 0
      %442 = vmatmul.mubr.bf16.gmra.mrb[0].mxu0 %v350
      %v443 = vpop.f32.mrb[0].mxu0
      %v444 = vadd.f32 %v252, %v443
      %v445 = vpop.f32.mrb[0].mxu0
      %v446 = vpop.f32.mrb[0].mxu0
      %v447 = vadd.f32 %v252, %v446
      %v448 = vpop.f32.mrb[0].mxu0
      %449 = vmatprep.mubr.bf16.mxu0 0
      %450 = vmatmul.mubr.bf16.gmra.mrb[0].mxu0 %v353
      %v451 = vpop.f32.mrb[0].mxu0
      %v452 = vadd.f32 %v252, %v451
      %v453 = vpop.f32.mrb[0].mxu0
      %v454 = vpop.f32.mrb[0].mxu0
      %v455 = vadd.f32 %v252, %v454
      %v456 = vpop.f32.mrb[0].mxu0
      %457 = vmatprep.mubr.bf16.mxu0 0
      %458 = vmatmul.mubr.bf16.gmra.mrb[0].mxu0 %v356
      %v459 = vpop.f32.mrb[0].mxu0
      %v460 = vadd.f32 %v252, %v459
      %v461 = vpop.f32.mrb[0].mxu0
      %v462 = vpop.f32.mrb[0].mxu0
      %v463 = vadd.f32 %v252, %v462
      %v464 = vpop.f32.mrb[0].mxu0
      %465 = vmatprep.mubr.bf16.mxu0 0
      %466 = vmatmul.mubr.bf16.gmra.mrb[0].mxu0 %v359
      %v467 = vpop.f32.mrb[0].mxu0
      %v468 = vadd.f32 %v252, %v467
      %v469 = vpop.f32.mrb[0].mxu0
      %v470 = vpop.f32.mrb[0].mxu0
      %v471 = vadd.f32 %v252, %v470
      %v472 = vpop.f32.mrb[0].mxu0
      %473 = vmatprep.mubr.bf16.mxu0 0
      %474 = vmatmul.mubr.bf16.gmra.mrb[0].mxu0 %v362
      %v475 = vpop.f32.mrb[0].mxu0
      %v476 = vadd.f32 %v252, %v475
      %v477 = vpop.f32.mrb[0].mxu0
      %v478 = vpop.f32.mrb[0].mxu0
      %v479 = vadd.f32 %v252, %v478
      %v480 = vpop.f32.mrb[0].mxu0
      %481 = vmatprep.mubr.bf16.mxu0 0
      %482 = vmatmul.mubr.bf16.gmra.mrb[0].mxu0 %v365
      %v483 = vpop.f32.mrb[0].mxu0
      %v484 = vadd.f32 %v252, %v483
      %v485 = vpop.f32.mrb[0].mxu0
      %v486 = vpop.f32.mrb[0].mxu0
      %v487 = vadd.f32 %v252, %v486
      %v488 = vpop.f32.mrb[0].mxu0
      %489 = vmatprep.mubr.bf16.mxu0 0
      %490 = vmatmul.mubr.bf16.gmra.mrb[0].mxu0 %v368
      %v491 = vpop.f32.mrb[0].mxu0
      %v492 = vadd.f32 %v252, %v491
      %v493 = vpop.f32.mrb[0].mxu0
      %v494 = vpop.f32.mrb[0].mxu0
      %v495 = vadd.f32 %v252, %v494
      %v496 = vpop.f32.mrb[0].mxu0
      %497 = vmatprep.mubr.bf16.mxu0 0
      %498 = vmatmul.mubr.bf16.gmra.mrb[0].mxu0 %v371
      %v499 = vpop.f32.mrb[0].mxu0
      %v500 = vadd.f32 %v252, %v499
      %v501 = vpop.f32.mrb[0].mxu0
      %v502 = vpop.f32.mrb[0].mxu0
      %v503 = vadd.f32 %v252, %v502
      %v504 = vpop.f32.mrb[0].mxu0
      %505 = vmatprep.mubr.bf16.mxu0 0
      %506 = vmatmul.mubr.bf16.gmra.mrb[0].mxu0 %v374
      %v507 = vpop.f32.mrb[0].mxu0
      %v508 = vadd.f32 %v252, %v507
      %v509 = vpop.f32.mrb[0].mxu0
      %v510 = vpop.f32.mrb[0].mxu0
      %v511 = vadd.f32 %v252, %v510
      %v512 = vpop.f32.mrb[0].mxu0
      %513 = vmatprep.mubr.bf16.mxu0 0
      %514 = vmatmul.mubr.bf16.gmra.mrb[0].mxu0 %v377
      %v515 = vpop.f32.mrb[0].mxu0
      %v516 = vadd.f32 %v252, %v515
      %v517 = vpop.f32.mrb[0].mxu0
      %v518 = vpop.f32.mrb[0].mxu0
      %v519 = vadd.f32 %v252, %v518
      %v520 = vpop.f32.mrb[0].mxu0
      %521 = vmatprep.mubr.bf16.mxu0 0
      %522 = vmatmul.mubr.bf16.gmra.mrb[0].mxu0 %v380
      %v523 = vpop.f32.mrb[0].mxu0
      %v524 = vadd.f32 %v252, %v523
      %v525 = vpop.f32.mrb[0].mxu0
      %v526 = vpop.f32.mrb[0].mxu0
      %v527 = vadd.f32 %v252, %v526
      %v528 = vpop.f32.mrb[0].mxu0
      %529 = vmatprep.mubr.bf16.mxu0 0
      %530 = vmatmul.mubr.bf16.gmra.mrb[0].mxu0 %v383
      %v531 = vpop.f32.mrb[0].mxu0
      %v532 = vadd.f32 %v252, %v531
      %v533 = vpop.f32.mrb[0].mxu0
      %v534 = vpop.f32.mrb[0].mxu0
      %v535 = vadd.f32 %v252, %v534
      %v536 = vpop.f32.mrb[0].mxu0
      %537 = vmatprep.mubr.bf16.mxu0 0
      %538 = vmatmul.mubr.bf16.gmra.mrb[0].mxu0 %v386
      %v539 = vpop.f32.mrb[0].mxu0
      %v540 = vadd.f32 %v252, %v539
      %v541 = vpop.f32.mrb[0].mxu0
      %v542 = vpop.f32.mrb[0].mxu0
      %v543 = vadd.f32 %v252, %v542
      %v544 = vpop.f32.mrb[0].mxu0
      %545 = vmatprep.mubr.bf16.mxu0 0
      %546 = vmatmul.mubr.bf16.gmra.mrb[0].mxu0 %v389
      %v547 = vpop.f32.mrb[0].mxu0
      %v548 = vadd.f32 %v252, %v547
      %v549 = vpop.f32.mrb[0].mxu0
      %v550 = vpop.f32.mrb[0].mxu0
      %v551 = vadd.f32 %v252, %v550
      %v552 = vpop.f32.mrb[0].mxu0
      %553 = vmatprep.mubr.bf16.mxu0 0
      %554 = vmatmul.mubr.bf16.gmra.mrb[0].mxu0 %v392
      %v555 = vpop.f32.mrb[0].mxu0
      %v556 = vadd.f32 %v252, %v555
      %v557 = vpop.f32.mrb[0].mxu0
      %v558 = vpop.f32.mrb[0].mxu0
      %v559 = vadd.f32 %v252, %v558
      %v560 = vpop.f32.mrb[0].mxu0
      %561 = vdwg.mxu0
      %v562 = vadd.f32 %v436, 3.0
      %v563 = vadd.f32 %v439, 3.0
      %v564 = vadd.f32 %v444, 3.0
      %v565 = vadd.f32 %v447, 3.0
      %v566 = vadd.f32 %v452, 3.0
      %v567 = vadd.f32 %v455, 3.0
      %v568 = vadd.f32 %v460, 3.0
      %v569 = vadd.f32 %v463, 3.0
      %v570 = vadd.f32 %v468, 3.0
      %v571 = vadd.f32 %v471, 3.0
      %v572 = vadd.f32 %v476, 3.0
      %v573 = vadd.f32 %v479, 3.0
      %v574 = vadd.f32 %v484, 3.0
      %v575 = vadd.f32 %v487, 3.0
      %v576 = vadd.f32 %v492, 3.0
      %v577 = vadd.f32 %v495, 3.0
      %v578 = vadd.f32 %v500, 3.0
      %v579 = vadd.f32 %v503, 3.0
      %v580 = vadd.f32 %v508, 3.0
      %v581 = vadd.f32 %v511, 3.0
      %v582 = vadd.f32 %v516, 3.0
      %v583 = vadd.f32 %v519, 3.0
      %v584 = vadd.f32 %v524, 3.0
      %v585 = vadd.f32 %v527, 3.0
      %v586 = vadd.f32 %v532, 3.0
      %v587 = vadd.f32 %v535, 3.0
      %v588 = vadd.f32 %v540, 3.0
      %v589 = vadd.f32 %v543, 3.0
      %v590 = vadd.f32 %v548, 3.0
      %v591 = vadd.f32 %v551, 3.0
      %v592 = vadd.f32 %v556, 3.0
      %v593 = vadd.f32 %v559, 3.0
      %v594 = vmax.f32 %v562, 0.0
      %v595 = vmax.f32 %v563, 0.0
      %v596 = vmax.f32 %v564, 0.0
      %v597 = vmax.f32 %v565, 0.0
      %v598 = vmax.f32 %v566, 0.0
      %v599 = vmax.f32 %v567, 0.0
      %v600 = vmax.f32 %v568, 0.0
      %v601 = vmax.f32 %v569, 0.0
      %v602 = vmax.f32 %v570, 0.0
      %v603 = vmax.f32 %v571, 0.0
      %v604 = vmax.f32 %v572, 0.0
      %v605 = vmax.f32 %v573, 0.0
      %v606 = vmax.f32 %v574, 0.0
      %v607 = vmax.f32 %v575, 0.0
      %v608 = vmax.f32 %v576, 0.0
      %v609 = vmax.f32 %v577, 0.0
      %v610 = vmax.f32 %v578, 0.0
      %v611 = vmax.f32 %v579, 0.0
      %v612 = vmax.f32 %v580, 0.0
      %v613 = vmax.f32 %v581, 0.0
      %v614 = vmax.f32 %v582, 0.0
      %v615 = vmax.f32 %v583, 0.0
      %v616 = vmax.f32 %v584, 0.0
      %v617 = vmax.f32 %v585, 0.0
      %v618 = vmax.f32 %v586, 0.0
      %v619 = vmax.f32 %v587, 0.0
      %v620 = vmax.f32 %v588, 0.0
      %v621 = vmax.f32 %v589, 0.0
      %v622 = vmax.f32 %v590, 0.0
      %v623 = vmax.f32 %v591, 0.0
      %v624 = vmax.f32 %v592, 0.0
      %v625 = vmax.f32 %v593, 0.0
      %v626 = vmin.f32 %v594, 6.0
      %v627 = vmin.f32 %v595, 6.0
      %v628 = vmin.f32 %v596, 6.0
      %v629 = vmin.f32 %v597, 6.0
      %v630 = vmin.f32 %v598, 6.0
      %v631 = vmin.f32 %v599, 6.0
      %v632 = vmin.f32 %v600, 6.0
      %v633 = vmin.f32 %v601, 6.0
      %v634 = vmin.f32 %v602, 6.0
      %v635 = vmin.f32 %v603, 6.0
      %v636 = vmin.f32 %v604, 6.0
      %v637 = vmin.f32 %v605, 6.0
      %v638 = vmin.f32 %v606, 6.0
      %v639 = vmin.f32 %v607, 6.0
      %v640 = vmin.f32 %v608, 6.0
      %v641 = vmin.f32 %v609, 6.0
      %v642 = vmin.f32 %v610, 6.0
      %v643 = vmin.f32 %v611, 6.0
      %v644 = vmin.f32 %v612, 6.0
      %v645 = vmin.f32 %v613, 6.0
      %v646 = vmin.f32 %v614, 6.0
      %v647 = vmin.f32 %v615, 6.0
      %v648 = vmin.f32 %v616, 6.0
      %v649 = vmin.f32 %v617, 6.0
      %v650 = vmin.f32 %v618, 6.0
      %v651 = vmin.f32 %v619, 6.0
      %v652 = vmin.f32 %v620, 6.0
      %v653 = vmin.f32 %v621, 6.0
      %v654 = vmin.f32 %v622, 6.0
      %v655 = vmin.f32 %v623, 6.0
      %v656 = vmin.f32 %v624, 6.0
      %v657 = vmin.f32 %v625, 6.0
      %v658 = vrcp.pop 6.0
      %v659 = vmul.f32 %v626, %v658
      %v660 = vmul.f32 %v627, %v658
      %v661 = vmul.f32 %v628, %v658
      %v662 = vmul.f32 %v629, %v658
      %v663 = vmul.f32 %v630, %v658
      %v664 = vmul.f32 %v631, %v658
      %v665 = vmul.f32 %v632, %v658
      %v666 = vmul.f32 %v633, %v658
      %v667 = vmul.f32 %v634, %v658
      %v668 = vmul.f32 %v635, %v658
      %v669 = vmul.f32 %v636, %v658
      %v670 = vmul.f32 %v637, %v658
      %v671 = vmul.f32 %v638, %v658
      %v672 = vmul.f32 %v639, %v658
      %v673 = vmul.f32 %v640, %v658
      %v674 = vmul.f32 %v641, %v658
      %v675 = vmul.f32 %v642, %v658
      %v676 = vmul.f32 %v643, %v658
      %v677 = vmul.f32 %v644, %v658
      %v678 = vmul.f32 %v645, %v658
      %v679 = vmul.f32 %v646, %v658
      %v680 = vmul.f32 %v647, %v658
      %v681 = vmul.f32 %v648, %v658
      %v682 = vmul.f32 %v649, %v658
      %v683 = vmul.f32 %v650, %v658
      %v684 = vmul.f32 %v651, %v658
      %v685 = vmul.f32 %v652, %v658
      %v686 = vmul.f32 %v653, %v658
      %v687 = vmul.f32 %v654, %v658
      %v688 = vmul.f32 %v655, %v658
      %v689 = vmul.f32 %v656, %v658
      %v690 = vmul.f32 %v657, %v658
      %v691 = vmul.f32 %v436, %v659
      %v692 = vmul.f32 %v439, %v660
      %v693 = vmul.f32 %v444, %v661
      %v694 = vmul.f32 %v447, %v662
      %v695 = vmul.f32 %v452, %v663
      %v696 = vmul.f32 %v455, %v664
      %v697 = vmul.f32 %v460, %v665
      %v698 = vmul.f32 %v463, %v666
      %v699 = vmul.f32 %v468, %v667
      %v700 = vmul.f32 %v471, %v668
      %v701 = vmul.f32 %v476, %v669
      %v702 = vmul.f32 %v479, %v670
      %v703 = vmul.f32 %v484, %v671
      %v704 = vmul.f32 %v487, %v672
      %v705 = vmul.f32 %v492, %v673
      %v706 = vmul.f32 %v495, %v674
      %v707 = vmul.f32 %v500, %v675
      %v708 = vmul.f32 %v503, %v676
      %v709 = vmul.f32 %v508, %v677
      %v710 = vmul.f32 %v511, %v678
      %v711 = vmul.f32 %v516, %v679
      %v712 = vmul.f32 %v519, %v680
      %v713 = vmul.f32 %v524, %v681
      %v714 = vmul.f32 %v527, %v682
      %v715 = vmul.f32 %v532, %v683
      %v716 = vmul.f32 %v535, %v684
      %v717 = vmul.f32 %v540, %v685
      %v718 = vmul.f32 %v543, %v686
      %v719 = vmul.f32 %v548, %v687
      %v720 = vmul.f32 %v551, %v688
      %v721 = vmul.f32 %v556, %v689
      %v722 = vmul.f32 %v559, %v690
      %v723 = vpack.c.bf16 %v692, %v691
      %v724 = vpack.c.bf16 %v694, %v693
      %v725 = vpack.c.bf16 %v696, %v695
      %v726 = vpack.c.bf16 %v698, %v697
      %v727 = vpack.c.bf16 %v700, %v699
      %v728 = vpack.c.bf16 %v702, %v701
      %v729 = vpack.c.bf16 %v704, %v703
      %v730 = vpack.c.bf16 %v706, %v705
      %v731 = vpack.c.bf16 %v708, %v707
      %v732 = vpack.c.bf16 %v710, %v709
      %v733 = vpack.c.bf16 %v712, %v711
      %v734 = vpack.c.bf16 %v714, %v713
      %v735 = vpack.c.bf16 %v716, %v715
      %v736 = vpack.c.bf16 %v718, %v717
      %v737 = vpack.c.bf16 %v720, %v719
      %v738 = vpack.c.bf16 %v722, %v721
      %v755 = vunpack.c.l.b16 %v723
      %v756 = vunpack.c.h.b16 %v723
      %v757 = vunpack.c.l.b16 %v724
      %v758 = vunpack.c.h.b16 %v724
      %v759 = vunpack.c.l.b16 %v725
      %v760 = vunpack.c.h.b16 %v725
      %v761 = vunpack.c.l.b16 %v726
      %v762 = vunpack.c.h.b16 %v726
      %v763 = vunpack.c.l.b16 %v727
      %v764 = vunpack.c.h.b16 %v727
      %v765 = vunpack.c.l.b16 %v728
      %v766 = vunpack.c.h.b16 %v728
      %v767 = vunpack.c.l.b16 %v729
      %v768 = vunpack.c.h.b16 %v729
      %v769 = vunpack.c.l.b16 %v730
      %v770 = vunpack.c.h.b16 %v730
      %v771 = vunpack.c.l.b16 %v731
      %v772 = vunpack.c.h.b16 %v731
      %v773 = vunpack.c.l.b16 %v732
      %v774 = vunpack.c.h.b16 %v732
      %v775 = vunpack.c.l.b16 %v733
      %v776 = vunpack.c.h.b16 %v733
      %v777 = vunpack.c.l.b16 %v734
      %v778 = vunpack.c.h.b16 %v734
      %v779 = vunpack.c.l.b16 %v735
      %v780 = vunpack.c.h.b16 %v735
      %v781 = vunpack.c.l.b16 %v736
      %v782 = vunpack.c.h.b16 %v736
      %v783 = vunpack.c.l.b16 %v737
      %v784 = vunpack.c.h.b16 %v737
      %v785 = vunpack.c.l.b16 %v738
      %v786 = vunpack.c.h.b16 %v738
      %v787 = vpack.c.b16 %v755, %v755
      %v788 = vpack.c.b16 %v756, %v756
      %v789 = vpack.c.b16 %v757, %v757
      %v790 = vpack.c.b16 %v758, %v758
      %v791 = vpack.c.b16 %v759, %v759
      %v792 = vpack.c.b16 %v760, %v760
      %v793 = vpack.c.b16 %v761, %v761
      %v794 = vpack.c.b16 %v762, %v762
      %v795 = vpack.c.b16 %v763, %v763
      %v796 = vpack.c.b16 %v764, %v764
      %v797 = vpack.c.b16 %v765, %v765
      %v798 = vpack.c.b16 %v766, %v766
      %v799 = vpack.c.b16 %v767, %v767
      %v800 = vpack.c.b16 %v768, %v768
      %v801 = vpack.c.b16 %v769, %v769
      %v802 = vpack.c.b16 %v770, %v770
      %v803 = vpack.c.b16 %v771, %v771
      %v804 = vpack.c.b16 %v772, %v772
      %v805 = vpack.c.b16 %v773, %v773
      %v806 = vpack.c.b16 %v774, %v774
      %v807 = vpack.c.b16 %v775, %v775
      %v808 = vpack.c.b16 %v776, %v776
      %v809 = vpack.c.b16 %v777, %v777
      %v810 = vpack.c.b16 %v778, %v778
      %v811 = vpack.c.b16 %v779, %v779
      %v812 = vpack.c.b16 %v780, %v780
      %v813 = vpack.c.b16 %v781, %v781
      %v814 = vpack.c.b16 %v782, %v782
      %v815 = vpack.c.b16 %v783, %v783
      %v816 = vpack.c.b16 %v784, %v784
      %v817 = vpack.c.b16 %v785, %v785
      %v818 = vpack.c.b16 %v786, %v786
      %vm851 = vcmask 125952
      %852 = vst.msk [vmem:[%s208] sm:$0xf] %vm851, %v787
      %853 = vst.msk [vmem:[%s208 + $0x4] sm:$0xf] %vm851, %v788
      %854 = vst.msk [vmem:[%s208 + $0x8] sm:$0xf] %vm851, %v789
      %855 = vst.msk [vmem:[%s208 + $0xc] sm:$0xf] %vm851, %v790
      %856 = vst.msk [vmem:[%s208 + $0x10] sm:$0xf] %vm851, %v791
      %857 = vst.msk [vmem:[%s208 + $0x14] sm:$0xf] %vm851, %v792
      %858 = vst.msk [vmem:[%s208 + $0x18] sm:$0xf] %vm851, %v793
      %859 = vst.msk [vmem:[%s208 + $0x1c] sm:$0xf] %vm851, %v794
      %860 = vst.msk [vmem:[%s208 + $0x20] sm:$0xf] %vm851, %v795
      %861 = vst.msk [vmem:[%s208 + $0x24] sm:$0xf] %vm851, %v796
      %862 = vst.msk [vmem:[%s208 + $0x28] sm:$0xf] %vm851, %v797
      %863 = vst.msk [vmem:[%s208 + $0x2c] sm:$0xf] %vm851, %v798
      %864 = vst.msk [vmem:[%s208 + $0x30] sm:$0xf] %vm851, %v799
      %865 = vst.msk [vmem:[%s208 + $0x34] sm:$0xf] %vm851, %v800
      %866 = vst.msk [vmem:[%s208 + $0x38] sm:$0xf] %vm851, %v801
      %867 = vst.msk [vmem:[%s208 + $0x3c] sm:$0xf] %vm851, %v802
      %868 = vst.msk [vmem:[%s208 + $0x40] sm:$0xf] %vm851, %v803
      %869 = vst.msk [vmem:[%s208 + $0x44] sm:$0xf] %vm851, %v804
      %870 = vst.msk [vmem:[%s208 + $0x48] sm:$0xf] %vm851, %v805
      %871 = vst.msk [vmem:[%s208 + $0x4c] sm:$0xf] %vm851, %v806
      %872 = vst.msk [vmem:[%s208 + $0x50] sm:$0xf] %vm851, %v807
      %873 = vst.msk [vmem:[%s208 + $0x54] sm:$0xf] %vm851, %v808
      %874 = vst.msk [vmem:[%s208 + $0x58] sm:$0xf] %vm851, %v809
      %875 = vst.msk [vmem:[%s208 + $0x5c] sm:$0xf] %vm851, %v810
      %876 = vst.msk [vmem:[%s208 + $0x60] sm:$0xf] %vm851, %v811
      %877 = vst.msk [vmem:[%s208 + $0x64] sm:$0xf] %vm851, %v812
      %878 = vst.msk [vmem:[%s208 + $0x68] sm:$0xf] %vm851, %v813
      %879 = vst.msk [vmem:[%s208 + $0x6c] sm:$0xf] %vm851, %v814
      %880 = vst.msk [vmem:[%s208 + $0x70] sm:$0xf] %vm851, %v815
      %881 = vst.msk [vmem:[%s208 + $0x74] sm:$0xf] %vm851, %v816
      %882 = vst.msk [vmem:[%s208 + $0x78] sm:$0xf] %vm851, %v817
      %883 = vst.msk [vmem:[%s208 + $0x7c] sm:$0xf] %vm851, %v818
      %s884 = smul.u32 32, %s19
      %p885 = scmp.lt.s32.totalorder %s18, 1
      %s886 = scalar_select %p885, %s18, 1
      %p887 = scmp.lt.s32.totalorder %s884, 31
      %s888 = scalar_select %p887, %s884, 31
      %s889 = smul.addr %s886, 32
      %s890 = sadd.s32 %s888, %s889
      %s891 = smul.addr %s890, 4
      %s892 = scalar_lea.vmem %s3, %s891
      // Predicated region
      $region33: #{a_call__.18} parent=31 // pred_check
        %p893 = pneg %p116
      $region34: #{a_call__.18} parent=31 // pred_check_branch
        %895 = sbr.rel (%p893) target = $region36
      $region35: #{a_call__.18} parent=31 // pred_region
        %s896 = smul.u32 32, %s19
      $region36: #{a_call__.18} parent=31 // pred_fallthru
        _
    $region32: #{a_call__.18} parent=5 // pred_fallthru
      _
    %p897 = scmp.le.s32.totalorder 2, %s9
    // Predicated region
    $region37: #{a_call__.18} parent=5 // pred_check
      %p898 = pneg %p897
    $region38: #{a_call__.18} parent=5 // pred_check_branch
      %900 = sbr.rel (%p898) target = $region40
    $region39: #{a_call__.18} parent=5 // pred_region
      %s901 = ssub.s32 %s9, 2
      // Predicated region
      $region41: #{a_call__.18} parent=39 // pred_check
        %p902 = pneg %p122
      $region42: #{a_call__.18} parent=39 // pred_check_branch
        %904 = sbr.rel (%p902) target = $region44
      $region43: #{a_call__.18} parent=39 // pred_region
        %s905 = smul.u32 32, %s21
        %p906 = scmp.lt.s32.totalorder %s20, 1
        %s907 = scalar_select %p906, %s20, 1
        %p908 = scmp.lt.s32.totalorder %s905, 31
        %s909 = scalar_select %p908, %s905, 31
        %s910 = smul.addr %s907, 32
        %s911 = sadd.s32 %s909, %s910
        %s912 = smul.addr %s911, 4
        %s913 = scalar_lea.vmem %s3, %s912
      $region44: #{a_call__.18} parent=39 // pred_fallthru
        _
    $region40: #{a_call__.18} parent=5 // pred_fallthru
      _
  $region6: #{a_call__.18} parent=0 // loop_footer
    %s13 = sadd.s32 1, %s9
  $region7: #{a_call__.18} parent=0 // loop_footer_branch
    %8 = sbr.rel target = $region3
  $region8: #{a_call__.18} parent=0 // loop_exit
    _

// kernel: a_call__.20
$region0: #{a_call__.20}
  #allocation0 [shape = 'u32[]', space=smem, size = 0x4, offset = 0x4, fixed_abs, tag = 'smem constant byte address 0x4 - core index']
  #allocation1 [shape = 'u32[144,128]{1,0:T(1,128)}', space=vmem, size = 0x12000, scoped, tag = 'internal scratch']
  %s0 = inlined_call_operand.vmem [shape: f32[2,16], index: 0, kind: input, shape index: {}]
  %s1 = inlined_call_operand.vmem [shape: f32[16,8], index: 1, kind: input, shape index: {}]
  %s2 = inlined_call_operand.vmem [shape: f32[1,8], index: 2, kind: input, shape index: {}]
  %s3 = inlined_call_operand.vmem [shape: f32[8,16], index: 3, kind: input, shape index: {}]
  %s4 = inlined_call_operand.vmem [shape: f32[1,16], index: 4, kind: input, shape index: {}]
  %s5 = inlined_call_operand.vmem [shape: f32[2,16], index: 5, kind: output, shape index: {}]
  %s6 = sld [smem:[#allocation0]]
  $region30: #{a_call__.20} parent=0
    _
  %s8 = ssub.s32 1, %s6
  %s9 = scalar_select 0, %s8, %s6
  // Predicated region
  $region2: #{a_call__.20} parent=0 // pred_check
    _
  $region3: #{a_call__.20} parent=0 // pred_check_branch
    %11 = sbr.rel (0) target = $region5
  $region4: #{a_call__.20} parent=0 // pred_region
    _
  $region5: #{a_call__.20} parent=0 // pred_fallthru
    _
  // Predicated region
  $region6: #{a_call__.20} parent=0 // pred_check
    _
  $region7: #{a_call__.20} parent=0 // pred_check_branch
    %13 = sbr.rel (0) target = $region9
  $region8: #{a_call__.20} parent=0 // pred_region
    _
  $region9: #{a_call__.20} parent=0 // pred_fallthru
    _
  // Predicated region
  $region10: #{a_call__.20} parent=0 // pred_check
    _
  $region11: #{a_call__.20} parent=0 // pred_check_branch
    %15 = sbr.rel (0) target = $region13
  $region12: #{a_call__.20} parent=0 // pred_region
    _
  $region13: #{a_call__.20} parent=0 // pred_fallthru
    _
  // Predicated region
  $region14: #{a_call__.20} parent=0 // pred_check
    _
  $region15: #{a_call__.20} parent=0 // pred_check_branch
    %17 = sbr.rel (0) target = $region17
  $region16: #{a_call__.20} parent=0 // pred_region
    _
  $region17: #{a_call__.20} parent=0 // pred_fallthru
    _
  // Predicated region
  $region18: #{a_call__.20} parent=0 // pred_check
    _
  $region19: #{a_call__.20} parent=0 // pred_check_branch
    %19 = sbr.rel (0) target = $region21
  $region20: #{a_call__.20} parent=0 // pred_region
    _
  $region21: #{a_call__.20} parent=0 // pred_fallthru
    _
  %v20 = vld [vmem:[%s0] sm:$0x3]
  %v21 = vld [vmem:[%s1] sm:$0xff]
  %v22 = vld [vmem:[%s1 + $0x8] sm:$0xff]
  %v23 = vld [vmem:[%s2] sm:$0x1]
  %v25 = vlaneseq
  %v26 = vshrl.u32 %v25, 7
  %v27 = vsub.s32 0, %v26
  %v28 = vrot.slane %v23, %v27
  %vm30 = vcmask 130048
  %v32 = vsel %vm30, %v20, 0
  %34 = vmatprep.subr.mxu0 0.0
  %35 = vmatpush1.msra.mxu0 %v21
  %36 = vmatprep.subr.mxu0 0.0
  %37 = vmatpush1.msra.mxu0 %v22
  %38 = vmatprep.subr.mxu0 0.0
  %39 = vmatpush1.msra.mxu0 0.0
  %40 = vmatprep.subr.mxu0 0.0
  %41 = vmatpush1.msra.mxu0 0.0
  %42 = vmatprep.subr.mxu0 0.0
  %43 = vmatpush1.msra.mxu0 0.0
  %44 = vmatprep.subr.mxu0 0.0
  %45 = vmatpush1.msra.mxu0 0.0
  %46 = vmatprep.subr.mxu0 0.0
  %47 = vmatpush1.msra.mxu0 0.0
  %48 = vmatprep.subr.mxu0 0.0
  %49 = vmatpush1.msra.mxu0 0.0
  %50 = vmatprep.subr.mxu0 0.0
  %51 = vmatpush1.msra.mxu0 0.0
  %52 = vmatprep.subr.mxu0 0.0
  %53 = vmatpush1.msra.mxu0 0.0
  %54 = vmatprep.subr.mxu0 0.0
  %55 = vmatpush1.msra.mxu0 0.0
  %56 = vmatprep.subr.mxu0 0.0
  %57 = vmatpush1.msra.mxu0 0.0
  %58 = vmatprep.subr.mxu0 0.0
  %59 = vmatpush1.msra.mxu0 0.0
  %60 = vmatprep.subr.mxu0 0.0
  %61 = vmatpush1.msra.mxu0 0.0
  %62 = vmatprep.subr.mxu0 0.0
  %63 = vmatpush1.msra.mxu0 0.0
  %64 = vmatprep.subr.mxu0 0.0
  %65 = vmatpush1.msra.mxu0 0.0
  %66 = vmatprep.subr.mxu0 0.0
  %67 = vmatpush1.msra.mxu0 0.0
  %68 = vmatprep.subr.mxu0 0.0
  %69 = vmatpush1.msra.mxu0 0.0
  %70 = vmatprep.subr.mxu0 0.0
  %71 = vmatpush1.msra.mxu0 0.0
  %72 = vmatprep.subr.mxu0 0.0
  %73 = vmatpush1.msra.mxu0 0.0
  %74 = vmatprep.subr.mxu0 0.0
  %75 = vmatpush1.msra.mxu0 0.0
  %76 = vmatprep.subr.mxu0 0.0
  %77 = vmatpush1.msra.mxu0 0.0
  %78 = vmatprep.subr.mxu0 0.0
  %79 = vmatpush1.msra.mxu0 0.0
  %80 = vmatprep.subr.mxu0 0.0
  %81 = vmatpush1.msra.mxu0 0.0
  %82 = vmatprep.subr.mxu0 0.0
  %83 = vmatpush1.msra.mxu0 0.0
  %84 = vmatprep.subr.mxu0 0.0
  %85 = vmatpush1.msra.mxu0 0.0
  %86 = vmatprep.subr.mxu0 0.0
  %87 = vmatpush1.msra.mxu0 0.0
  %88 = vmatprep.subr.mxu0 0.0
  %89 = vmatpush1.msra.mxu0 0.0
  %90 = vmatprep.subr.mxu0 0.0
  %91 = vmatpush1.msra.mxu0 0.0
  %92 = vmatprep.subr.mxu0 0.0
  %93 = vmatpush1.msra.mxu0 0.0
  %94 = vmatprep.subr.mxu0 0.0
  %95 = vmatpush1.msra.mxu0 0.0
  %96 = vmatprep.subr.mxu0 0.0
  %97 = vmatpush1.msra.mxu0 0.0
  %98 = vmatprep.mubr.f32.mxu0 0.0
  %99 = vmatmul.mubr.f32.gmra.mrb[0].mxu0 %v32
  %v100 = vpop.f32.mrb[0].mxu0
  %v101 = vadd.f32 %v28, %v100
  %v102 = vpop.f32.mrb[0].mxu0
  %103 = vdwg.mxu0
  %v104 = vmax.f32 %v101, 0.0
  %v105 = vld [vmem:[%s3] sm:$0xff]
  %v106 = vld [vmem:[%s4] sm:$0x1]
  %v108 = vlaneseq
  %v109 = vshrl.u32 %v108, 7
  %v110 = vsub.s32 0, %v109
  %v111 = vrot.slane %v106, %v110
  %vm113 = vcmask 64512
  %v115 = vsel %vm113, %v104, 0
  %117 = vmatprep.subr.mxu0 0.0
  %118 = vmatpush1.msra.mxu0 %v105
  %119 = vmatprep.subr.mxu0 0.0
  %120 = vmatpush1.msra.mxu0 0.0
  %121 = vmatprep.subr.mxu0 0.0
  %122 = vmatpush1.msra.mxu0 0.0
  %123 = vmatprep.subr.mxu0 0.0
  %124 = vmatpush1.msra.mxu0 0.0
  %125 = vmatprep.subr.mxu0 0.0
  %126 = vmatpush1.msra.mxu0 0.0
  %127 = vmatprep.subr.mxu0 0.0
  %128 = vmatpush1.msra.mxu0 0.0
  %129 = vmatprep.subr.mxu0 0.0
  %130 = vmatpush1.msra.mxu0 0.0
  %131 = vmatprep.subr.mxu0 0.0
  %132 = vmatpush1.msra.mxu0 0.0
  %133 = vmatprep.subr.mxu0 0.0
  %134 = vmatpush1.msra.mxu0 0.0
  %135 = vmatprep.subr.mxu0 0.0
  %136 = vmatpush1.msra.mxu0 0.0
  %137 = vmatprep.subr.mxu0 0.0
  %138 = vmatpush1.msra.mxu0 0.0
  %139 = vmatprep.subr.mxu0 0.0
  %140 = vmatpush1.msra.mxu0 0.0
  %141 = vmatprep.subr.mxu0 0.0
  %142 = vmatpush1.msra.mxu0 0.0
  %143 = vmatprep.subr.mxu0 0.0
  %144 = vmatpush1.msra.mxu0 0.0
  %145 = vmatprep.subr.mxu0 0.0
  %146 = vmatpush1.msra.mxu0 0.0
  %147 = vmatprep.subr.mxu0 0.0
  %148 = vmatpush1.msra.mxu0 0.0
  %149 = vmatprep.subr.mxu0 0.0
  %150 = vmatpush1.msra.mxu0 0.0
  %151 = vmatprep.subr.mxu0 0.0
  %152 = vmatpush1.msra.mxu0 0.0
  %153 = vmatprep.subr.mxu0 0.0
  %154 = vmatpush1.msra.mxu0 0.0
  %155 = vmatprep.subr.mxu0 0.0
  %156 = vmatpush1.msra.mxu0 0.0
  %157 = vmatprep.subr.mxu0 0.0
  %158 = vmatpush1.msra.mxu0 0.0
  %159 = vmatprep.subr.mxu0 0.0
  %160 = vmatpush1.msra.mxu0 0.0
  %161 = vmatprep.subr.mxu0 0.0
  %162 = vmatpush1.msra.mxu0 0.0
  %163 = vmatprep.subr.mxu0 0.0
  %164 = vmatpush1.msra.mxu0 0.0
  %165 = vmatprep.subr.mxu0 0.0
  %166 = vmatpush1.msra.mxu0 0.0
  %167 = vmatprep.subr.mxu0 0.0
  %168 = vmatpush1.msra.mxu0 0.0
  %169 = vmatprep.subr.mxu0 0.0
  %170 = vmatpush1.msra.mxu0 0.0
  %171 = vmatprep.subr.mxu0 0.0
  %172 = vmatpush1.msra.mxu0 0.0
  %173 = vmatprep.subr.mxu0 0.0
  %174 = vmatpush1.msra.mxu0 0.0
  %175 = vmatprep.subr.mxu0 0.0
  %176 = vmatpush1.msra.mxu0 0.0
  %177 = vmatprep.subr.mxu0 0.0
  %178 = vmatpush1.msra.mxu0 0.0
  %179 = vmatprep.subr.mxu0 0.0
  %180 = vmatpush1.msra.mxu0 0.0
  %181 = vmatprep.mubr.f32.mxu0 0.0
  %182 = vmatmul.mubr.f32.gmra.mrb[0].mxu0 %v115
  %v183 = vpop.f32.mrb[0].mxu0
  %v184 = vadd.f32 %v111, %v183
  %v185 = vpop.f32.mrb[0].mxu0
  %186 = vdwg.mxu0
  %v187 = vadd.f32 %v184, 3.0
  %v188 = vmax.f32 %v187, 0.0
  %v189 = vmin.f32 %v188, 6.0
  %v190 = vrcp.pop 6.0
  %v191 = vmul.f32 %v189, %v190
  %vm192 = vcmask 123904
  %193 = vst.msk [vmem:[%s5] sm:$0x3] %vm192, %v191
  // Predicated region
  $region22: #{a_call__.20} parent=0 // pred_check
    _
  $region23: #{a_call__.20} parent=0 // pred_check_branch
    %195 = sbr.rel (0) target = $region25
  $region24: #{a_call__.20} parent=0 // pred_region
    _
  $region25: #{a_call__.20} parent=0 // pred_fallthru
    _
  // Predicated region
  $region26: #{a_call__.20} parent=0 // pred_check
    _
  $region27: #{a_call__.20} parent=0 // pred_check_branch
    %197 = sbr.rel (0) target = $region29
  $region28: #{a_call__.20} parent=0 // pred_region
    _
  $region29: #{a_call__.20} parent=0 // pred_fallthru
    _

// kernel: a_call__.21
$region0: #{a_call__.21}
  #allocation0 [shape = 'u32[]', space=smem, size = 0x4, offset = 0x4, fixed_abs, tag = 'smem constant byte address 0x4 - core index']
  #allocation1 [shape = 'u32[144,128]{1,0:T(1,128)}', space=vmem, size = 0x12000, scoped, tag = 'internal scratch']
  %s0 = inlined_call_operand.vmem [shape: bf16[2,64,16], index: 0, kind: input, shape index: {}]
  %s1 = inlined_call_operand.vmem [shape: f32[2,1,16], index: 1, kind: input, shape index: {}]
  %s2 = inlined_call_operand.vmem [shape: bf16[16,16], index: 2, kind: input, shape index: {}]
  %s3 = inlined_call_operand.vmem [shape: f32[1,16], index: 3, kind: input, shape index: {}]
  %s4 = inlined_call_operand.vmem [shape: bf16[2,64,16], index: 4, kind: output, shape index: {}]
  %s5 = sld [smem:[#allocation0]]
  $region49: #{a_call__.21} parent=0
    _
  %s7 = ssub.s32 1, %s5
  %s8 = scalar_select 0, %s7, %s5
  loop: start=0, step=1, limit=4
  $region2: #{a_call__.21} parent=0 // loop_pre_header
    _
  $region3: #{a_call__.21} parent=0 // loop_header
    %s10 = sphi 0, %s14
    %p11 = scmp.ge.s32.totalorder %s10, 4
    %s17 = sphi 0, %s29
    %s18 = sphi 0, %s25
    %s19 = sphi 0, %s17
    %s20 = sphi 0, %s18
    %s21 = sphi 0, %s19
    %s22 = sphi 0, %s20
    %s34 = sphi 0, %s36
    %s37 = sphi 0, %s34
    %s38 = sphi 0, %s37
    %s54 = sphi 0, %s38
    %s60 = sphi 0, %s62
    %s63 = sphi 0, %s60
    %s64 = sphi 0, %s63
    %s80 = sphi 0, %s64
    %s84 = sphi 0, %s84
    %s86 = sphi 0, %s84
    %s87 = sphi 0, %s86
    %s101 = sphi 0, %s87
    %s105 = sphi 0, %s105
    %s107 = sphi 0, %s105
    %s108 = sphi 0, %s107
    %s122 = sphi 0, %s108
    %s130 = sphi 0, %s132
    %s133 = sphi 0, %s130
    %s134 = sphi 0, %s133
    %s150 = sphi 0, %s134
  $region4: #{a_call__.21} parent=0 // loop_header_branch
    %13 = sbr.rel (%p11) target = $region8
  $region5: #{a_call__.21} parent=0 // loop_body
    %s15 = ssub.s32 %s10, 1
    %s16 = ssub.s32 %s10, 2
    %s23 = sadd.s32 1, %s18
    %p24 = scmp.ge.s32.totalorder %s23, 1
    %s25 = scalar_select %p24, 0, %s23
    %s26 = sadd.s32 1, %s17
    %s27 = scalar_select %p24, %s26, %s17
    %p28 = scmp.ge.s32.totalorder %s27, 2
    %s29 = scalar_select %p28, 0, %s27
    %s30 = ssub.s32 %s17, %s29
    %s31 = ssub.s32 %s18, %s25
    %s32 = sor.u32 %s30, %s31
    %p33 = scmp.eq.s32.totalorder %s32, 0
    %s35 = sadd.s32 %s34, 1
    %s36 = scalar_select %p33, %s34, %s35
    %p39 = pneg %p33
    %p40 = scmp.eq.s32.totalorder %s10, 1
    %p41 = por %p39, %p40
    %p42 = scmp.ne.s32.totalorder %s34, %s37
    %p43 = scmp.eq.s32.totalorder %s10, 0
    %p44 = por %p42, %p43
    %p45 = scmp.ne.s32.totalorder %s34, %s37
    %p46 = scmp.eq.s32.totalorder %s15, 1
    %p47 = por %p45, %p46
    %p48 = scmp.ne.s32.totalorder %s37, %s38
    %p49 = scmp.eq.s32.totalorder %s15, 0
    %p50 = por %p48, %p49
    %p51 = scmp.ne.s32.totalorder %s37, %s38
    %p52 = scmp.eq.s32.totalorder %s16, 1
    %p53 = por %p51, %p52
    %p55 = scmp.ne.s32.totalorder %s38, %s54
    %p56 = scmp.eq.s32.totalorder %s16, 0
    %p57 = por %p55, %p56
    %s58 = ssub.s32 %s17, %s29
    %p59 = scmp.eq.s32.totalorder %s58, 0
    %s61 = sadd.s32 %s60, 1
    %s62 = scalar_select %p59, %s60, %s61
    %p65 = pneg %p59
    %p66 = scmp.eq.s32.totalorder %s10, 1
    %p67 = por %p65, %p66
    %p68 = scmp.ne.s32.totalorder %s60, %s63
    %p69 = scmp.eq.s32.totalorder %s10, 0
    %p70 = por %p68, %p69
    %p71 = scmp.ne.s32.totalorder %s60, %s63
    %p72 = scmp.eq.s32.totalorder %s15, 1
    %p73 = por %p71, %p72
    %p74 = scmp.ne.s32.totalorder %s63, %s64
    %p75 = scmp.eq.s32.totalorder %s15, 0
    %p76 = por %p74, %p75
    %p77 = scmp.ne.s32.totalorder %s63, %s64
    %p78 = scmp.eq.s32.totalorder %s16, 1
    %p79 = por %p77, %p78
    %p81 = scmp.ne.s32.totalorder %s64, %s80
    %p82 = scmp.eq.s32.totalorder %s16, 0
    %p83 = por %p81, %p82
    %s85 = sadd.s32 %s84, 1
    %p88 = scmp.eq.s32.totalorder %s10, 1
    %p89 = scmp.ne.s32.totalorder %s84, %s86
    %p90 = scmp.eq.s32.totalorder %s10, 0
    %p91 = por %p89, %p90
    %p92 = scmp.ne.s32.totalorder %s84, %s86
    %p93 = scmp.eq.s32.totalorder %s15, 1
    %p94 = por %p92, %p93
    %p95 = scmp.ne.s32.totalorder %s86, %s87
    %p96 = scmp.eq.s32.totalorder %s15, 0
    %p97 = por %p95, %p96
    %p98 = scmp.ne.s32.totalorder %s86, %s87
    %p99 = scmp.eq.s32.totalorder %s16, 1
    %p100 = por %p98, %p99
    %p102 = scmp.ne.s32.totalorder %s87, %s101
    %p103 = scmp.eq.s32.totalorder %s16, 0
    %p104 = por %p102, %p103
    %s106 = sadd.s32 %s105, 1
    %p109 = scmp.eq.s32.totalorder %s10, 1
    %p110 = scmp.ne.s32.totalorder %s105, %s107
    %p111 = scmp.eq.s32.totalorder %s10, 0
    %p112 = por %p110, %p111
    %p113 = scmp.ne.s32.totalorder %s105, %s107
    %p114 = scmp.eq.s32.totalorder %s15, 1
    %p115 = por %p113, %p114
    %p116 = scmp.ne.s32.totalorder %s107, %s108
    %p117 = scmp.eq.s32.totalorder %s15, 0
    %p118 = por %p116, %p117
    %p119 = scmp.ne.s32.totalorder %s107, %s108
    %p120 = scmp.eq.s32.totalorder %s16, 1
    %p121 = por %p119, %p120
    %p123 = scmp.ne.s32.totalorder %s108, %s122
    %p124 = scmp.eq.s32.totalorder %s16, 0
    %p125 = por %p123, %p124
    %s126 = ssub.s32 %s17, %s29
    %s127 = ssub.s32 %s18, %s25
    %s128 = sor.u32 %s126, %s127
    %p129 = scmp.eq.s32.totalorder %s128, 0
    %s131 = sadd.s32 %s130, 1
    %s132 = scalar_select %p129, %s130, %s131
    %p135 = pneg %p129
    %p136 = scmp.eq.s32.totalorder %s10, 1
    %p137 = por %p135, %p136
    %p138 = scmp.ne.s32.totalorder %s130, %s133
    %p139 = scmp.eq.s32.totalorder %s10, 0
    %p140 = por %p138, %p139
    %p141 = scmp.ne.s32.totalorder %s130, %s133
    %p142 = scmp.eq.s32.totalorder %s15, 1
    %p143 = por %p141, %p142
    %p144 = scmp.ne.s32.totalorder %s133, %s134
    %p145 = scmp.eq.s32.totalorder %s15, 0
    %p146 = por %p144, %p145
    %p147 = scmp.ne.s32.totalorder %s133, %s134
    %p148 = scmp.eq.s32.totalorder %s16, 1
    %p149 = por %p147, %p148
    %p151 = scmp.ne.s32.totalorder %s134, %s150
    %p152 = scmp.eq.s32.totalorder %s16, 0
    %p153 = por %p151, %p152
    %p154 = scmp.le.s32.totalorder 1, %s10
    %p155 = scmp.lt.s32.totalorder %s10, 3
    %p156 = pnand %p154, %p155
    %p157 = pneg %p156
    // Predicated region
    $region9: #{a_call__.21} parent=5 // pred_check
      _
    $region10: #{a_call__.21} parent=5 // pred_check_branch
      %159 = sbr.rel (%p156) target = $region12
    $region11: #{a_call__.21} parent=5 // pred_region
      %s160 = ssub.s32 %s10, 1
      // Predicated region
      $region13: #{a_call__.21} parent=11 // pred_check
        %p161 = pneg %p97
      $region14: #{a_call__.21} parent=11 // pred_check_branch
        %163 = sbr.rel (%p161) target = $region16
      $region15: #{a_call__.21} parent=11 // pred_region
        _
      $region16: #{a_call__.21} parent=11 // pred_fallthru
        _
      // Predicated region
      $region17: #{a_call__.21} parent=11 // pred_check
        %p164 = pneg %p118
      $region18: #{a_call__.21} parent=11 // pred_check_branch
        %166 = sbr.rel (%p164) target = $region20
      $region19: #{a_call__.21} parent=11 // pred_region
        _
      $region20: #{a_call__.21} parent=11 // pred_fallthru
        _
    $region12: #{a_call__.21} parent=5 // pred_fallthru
      _
    %p167 = scmp.lt.s32.totalorder %s10, 2
    // Predicated region
    $region21: #{a_call__.21} parent=5 // pred_check
      %p168 = pneg %p167
    $region22: #{a_call__.21} parent=5 // pred_check_branch
      %170 = sbr.rel (%p168) target = $region24
    $region23: #{a_call__.21} parent=5 // pred_region
      // Predicated region
      $region25: #{a_call__.21} parent=23 // pred_check
        %p171 = pneg %p44
      $region26: #{a_call__.21} parent=23 // pred_check_branch
        %173 = sbr.rel (%p171) target = $region28
      $region27: #{a_call__.21} parent=23 // pred_region
        %s174 = smul.u32 8, %s18
        %p175 = scmp.lt.s32.totalorder %s17, 1
        %s176 = scalar_select %p175, %s17, 1
        %p177 = scmp.lt.s32.totalorder %s174, 7
        %s178 = scalar_select %p177, %s174, 7
        %s179 = smul.addr %s176, 8
        %s180 = sadd.s32 %s178, %s179
        %s181 = smul.addr %s180, 4
        %s182 = scalar_lea.vmem %s0, %s181
        %s183 = smul.u32 8, %s18
      $region28: #{a_call__.21} parent=23 // pred_fallthru
        _
      // Predicated region
      $region29: #{a_call__.21} parent=23 // pred_check
        %p184 = pneg %p70
      $region30: #{a_call__.21} parent=23 // pred_check_branch
        %186 = sbr.rel (%p184) target = $region32
      $region31: #{a_call__.21} parent=23 // pred_region
        %p187 = scmp.lt.s32.totalorder %s17, 1
        %s188 = scalar_select %p187, %s17, 1
        %s189 = scalar_lea.vmem %s1, %s188
      $region32: #{a_call__.21} parent=23 // pred_fallthru
        _
    $region24: #{a_call__.21} parent=5 // pred_fallthru
      _
    %p190 = scmp.le.s32.totalorder 1, %s10
    %p191 = scmp.lt.s32.totalorder %s10, 3
    %p192 = pnand %p190, %p191
    %p193 = pneg %p192
    // Predicated region
    $region33: #{a_call__.21} parent=5 // pred_check
      _
    $region34: #{a_call__.21} parent=5 // pred_check_branch
      %195 = sbr.rel (%p192) target = $region36
    $region35: #{a_call__.21} parent=5 // pred_region
      %s196 = ssub.s32 %s10, 1
      %s197 = smul.u32 8, %s20
      %p198 = scmp.lt.s32.totalorder %s19, 1
      %s199 = scalar_select %p198, %s19, 1
      %p200 = scmp.lt.s32.totalorder %s197, 7
      %s201 = scalar_select %p200, %s197, 7
      %s202 = smul.addr %s199, 8
      %s203 = sadd.s32 %s201, %s202
      %s204 = smul.addr %s203, 4
      %s205 = scalar_lea.vmem %s0, %s204
      %p206 = pneg %p50
      %p207 = pneg %p47
      %p208 = scmp.lt.s32.totalorder %s19, 1
      %s209 = scalar_select %p208, %s19, 1
      %s210 = scalar_lea.vmem %s1, %s209
      %p211 = pneg %p76
      %p212 = pneg %p73
      %p213 = pneg %p97
      %p214 = pneg %p94
      %p215 = pneg %p118
      %p216 = pneg %p115
      %p217 = pneg %p146
      %p218 = pneg %p143
      %s219 = smul.u32 8, %s20
      %p220 = scmp.lt.s32.totalorder %s19, 1
      %s221 = scalar_select %p220, %s19, 1
      %p222 = scmp.lt.s32.totalorder %s219, 7
      %s223 = scalar_select %p222, %s219, 7
      %s224 = smul.addr %s221, 8
      %s225 = sadd.s32 %s223, %s224
      %s226 = smul.addr %s225, 4
      %s227 = scalar_lea.vmem %s4, %s226
      %s228 = smul.u32 8, %s20
      %p229 = scmp.lt.s32.totalorder %s19, 1
      %s230 = scalar_select %p229, %s19, 1
      %p231 = scmp.lt.s32.totalorder %s228, 7
      %s232 = scalar_select %p231, %s228, 7
      %s233 = smul.addr %s230, 8
      %s234 = sadd.s32 %s232, %s233
      %s235 = smul.addr %s234, 4
      %s236 = scalar_lea.vmem %s0, %s235
      %s237 = smul.u32 8, %s20
      %p238 = scmp.lt.s32.totalorder %s19, 1
      %s239 = scalar_select %p238, %s19, 1
      %s240 = scalar_lea.vmem %s1, %s239
      %s241 = smul.u32 8, %s20
      %p242 = scmp.lt.s32.totalorder %s19, 1
      %s243 = scalar_select %p242, %s19, 1
      %p244 = scmp.lt.s32.totalorder %s241, 7
      %s245 = scalar_select %p244, %s241, 7
      %s246 = smul.addr %s243, 8
      %s247 = sadd.s32 %s245, %s246
      %s248 = smul.addr %s247, 4
      %s249 = scalar_lea.vmem %s4, %s248
      %s250 = smul.u32 8, %s20
      %v252 = vld [vmem:[%s236] sm:$0xf]
      %v253 = vld [vmem:[%s236 + $0x4] sm:$0xf]
      %v254 = vld [vmem:[%s236 + $0x8] sm:$0xf]
      %v255 = vld [vmem:[%s236 + $0xc] sm:$0xf]
      %v256 = vld [vmem:[%s236 + $0x10] sm:$0xf]
      %v257 = vld [vmem:[%s236 + $0x14] sm:$0xf]
      %v258 = vld [vmem:[%s236 + $0x18] sm:$0xf]
      %v259 = vld [vmem:[%s236 + $0x1c] sm:$0xf]
      %v260 = vunpack.c.l.bf16 %v252
      %v261 = vunpack.c.l.bf16 %v253
      %v262 = vunpack.c.l.bf16 %v254
      %v263 = vunpack.c.l.bf16 %v255
      %v264 = vunpack.c.l.bf16 %v256
      %v265 = vunpack.c.l.bf16 %v257
      %v266 = vunpack.c.l.bf16 %v258
      %v267 = vunpack.c.l.bf16 %v259
      %v268 = vld [vmem:[%s240] sm:$0x1]
      %v270 = vlaneseq
      %v271 = vshrl.u32 %v270, 7
      %v272 = vsub.s32 0, %v271
      %v273 = vrot.slane %v268, %v272
      %v275 = vmul.f32 %v260, %v273
      %v276 = vmul.f32 %v261, %v273
      %v277 = vmul.f32 %v262, %v273
      %v278 = vmul.f32 %v263, %v273
      %v279 = vmul.f32 %v264, %v273
      %v280 = vmul.f32 %v265, %v273
      %v281 = vmul.f32 %v266, %v273
      %v282 = vmul.f32 %v267, %v273
      %v283 = vpack.c.bf16 %v276, %v275
      %v284 = vpack.c.bf16 %v278, %v277
      %v285 = vpack.c.bf16 %v280, %v279
      %v286 = vpack.c.bf16 %v282, %v281
      %v287 = vld [vmem:[%s2] sm:$0xf]
      %v288 = vld [vmem:[%s2 + $0x4] sm:$0xf]
      %v289 = vld [vmem:[%s3] sm:$0x1]
      %v291 = vlaneseq
      %v292 = vshrl.u32 %v291, 7
      %v293 = vsub.s32 0, %v292
      %v294 = vrot.slane %v289, %v293
      %v298 = vunpack.c.l.b16 %v287
      %v299 = vunpack.c.l.b16 %v288
      %v300 = vpack.c.b16 %v299, %v298
      %vm302 = vcmask 130048
      %v304 = vsel %vm302, %v283, 0
      %v307 = vsel %vm302, %v284, 0
      %v310 = vsel %vm302, %v285, 0
      %v313 = vsel %vm302, %v286, 0
      %315 = vmatprep.subr.bf16.mxu0 0
      %316 = vmatpush1.bf16.msra.mxu0 %v300
      %317 = vmatprep.subr.bf16.mxu0 0
      %318 = vmatpush1.bf16.msra.mxu0 0
      %319 = vmatprep.subr.bf16.mxu0 0
      %320 = vmatpush1.bf16.msra.mxu0 0
      %321 = vmatprep.subr.bf16.mxu0 0
      %322 = vmatpush1.bf16.msra.mxu0 0
      %323 = vmatprep.subr.bf16.mxu0 0
      %324 = vmatpush1.bf16.msra.mxu0 0
      %325 = vmatprep.subr.bf16.mxu0 0
      %326 = vmatpush1.bf16.msra.mxu0 0
      %327 = vmatprep.subr.bf16.mxu0 0
      %328 = vmatpush1.bf16.msra.mxu0 0
      %329 = vmatprep.subr.bf16.mxu0 0
      %330 = vmatpush1.bf16.msra.mxu0 0
      %331 = vmatprep.subr.bf16.mxu0 0
      %332 = vmatpush1.bf16.msra.mxu0 0
      %333 = vmatprep.subr.bf16.mxu0 0
      %334 = vmatpush1.bf16.msra.mxu0 0
      %335 = vmatprep.subr.bf16.mxu0 0
      %336 = vmatpush1.bf16.msra.mxu0 0
      %337 = vmatprep.subr.bf16.mxu0 0
      %338 = vmatpush1.bf16.msra.mxu0 0
      %339 = vmatprep.subr.bf16.mxu0 0
      %340 = vmatpush1.bf16.msra.mxu0 0
      %341 = vmatprep.subr.bf16.mxu0 0
      %342 = vmatpush1.bf16.msra.mxu0 0
      %343 = vmatprep.subr.bf16.mxu0 0
      %344 = vmatpush1.bf16.msra.mxu0 0
      %345 = vmatprep.subr.bf16.mxu0 0
      %346 = vmatpush1.bf16.msra.mxu0 0
      %347 = vmatprep.mubr.bf16.mxu0 0
      %348 = vmatmul.mubr.bf16.gmra.mrb[0].mxu0 %v304
      %v349 = vpop.f32.mrb[0].mxu0
      %v350 = vadd.f32 %v294, %v349
      %v351 = vpop.f32.mrb[0].mxu0
      %v352 = vpop.f32.mrb[0].mxu0
      %v353 = vadd.f32 %v294, %v352
      %v354 = vpop.f32.mrb[0].mxu0
      %355 = vmatprep.mubr.bf16.mxu0 0
      %356 = vmatmul.mubr.bf16.gmra.mrb[0].mxu0 %v307
      %v357 = vpop.f32.mrb[0].mxu0
      %v358 = vadd.f32 %v294, %v357
      %v359 = vpop.f32.mrb[0].mxu0
      %v360 = vpop.f32.mrb[0].mxu0
      %v361 = vadd.f32 %v294, %v360
      %v362 = vpop.f32.mrb[0].mxu0
      %363 = vmatprep.mubr.bf16.mxu0 0
      %364 = vmatmul.mubr.bf16.gmra.mrb[0].mxu0 %v310
      %v365 = vpop.f32.mrb[0].mxu0
      %v366 = vadd.f32 %v294, %v365
      %v367 = vpop.f32.mrb[0].mxu0
      %v368 = vpop.f32.mrb[0].mxu0
      %v369 = vadd.f32 %v294, %v368
      %v370 = vpop.f32.mrb[0].mxu0
      %371 = vmatprep.mubr.bf16.mxu0 0
      %372 = vmatmul.mubr.bf16.gmra.mrb[0].mxu0 %v313
      %v373 = vpop.f32.mrb[0].mxu0
      %v374 = vadd.f32 %v294, %v373
      %v375 = vpop.f32.mrb[0].mxu0
      %v376 = vpop.f32.mrb[0].mxu0
      %v377 = vadd.f32 %v294, %v376
      %v378 = vpop.f32.mrb[0].mxu0
      %379 = vdwg.mxu0
      %v380 = vpack.c.bf16 %v353, %v350
      %v381 = vpack.c.bf16 %v361, %v358
      %v382 = vpack.c.bf16 %v369, %v366
      %v383 = vpack.c.bf16 %v377, %v374
      %v388 = vunpack.c.l.b16 %v380
      %v389 = vunpack.c.h.b16 %v380
      %v390 = vunpack.c.l.b16 %v381
      %v391 = vunpack.c.h.b16 %v381
      %v392 = vunpack.c.l.b16 %v382
      %v393 = vunpack.c.h.b16 %v382
      %v394 = vunpack.c.l.b16 %v383
      %v395 = vunpack.c.h.b16 %v383
      %v396 = vpack.c.b16 %v388, %v388
      %v397 = vpack.c.b16 %v389, %v389
      %v398 = vpack.c.b16 %v390, %v390
      %v399 = vpack.c.b16 %v391, %v391
      %v400 = vpack.c.b16 %v392, %v392
      %v401 = vpack.c.b16 %v393, %v393
      %v402 = vpack.c.b16 %v394, %v394
      %v403 = vpack.c.b16 %v395, %v395
      %vm412 = vcmask 125952
      %413 = vst.msk [vmem:[%s249] sm:$0xf] %vm412, %v396
      %414 = vst.msk [vmem:[%s249 + $0x4] sm:$0xf] %vm412, %v397
      %415 = vst.msk [vmem:[%s249 + $0x8] sm:$0xf] %vm412, %v398
      %416 = vst.msk [vmem:[%s249 + $0xc] sm:$0xf] %vm412, %v399
      %417 = vst.msk [vmem:[%s249 + $0x10] sm:$0xf] %vm412, %v400
      %418 = vst.msk [vmem:[%s249 + $0x14] sm:$0xf] %vm412, %v401
      %419 = vst.msk [vmem:[%s249 + $0x18] sm:$0xf] %vm412, %v402
      %420 = vst.msk [vmem:[%s249 + $0x1c] sm:$0xf] %vm412, %v403
      %s421 = smul.u32 8, %s20
      %p422 = scmp.lt.s32.totalorder %s19, 1
      %s423 = scalar_select %p422, %s19, 1
      %p424 = scmp.lt.s32.totalorder %s421, 7
      %s425 = scalar_select %p424, %s421, 7
      %s426 = smul.addr %s423, 8
      %s427 = sadd.s32 %s425, %s426
      %s428 = smul.addr %s427, 4
      %s429 = scalar_lea.vmem %s4, %s428
      // Predicated region
      $region37: #{a_call__.21} parent=35 // pred_check
        %p430 = pneg %p143
      $region38: #{a_call__.21} parent=35 // pred_check_branch
        %432 = sbr.rel (%p430) target = $region40
      $region39: #{a_call__.21} parent=35 // pred_region
        %s433 = smul.u32 8, %s20
      $region40: #{a_call__.21} parent=35 // pred_fallthru
        _
    $region36: #{a_call__.21} parent=5 // pred_fallthru
      _
    %p434 = scmp.le.s32.totalorder 2, %s10
    // Predicated region
    $region41: #{a_call__.21} parent=5 // pred_check
      %p435 = pneg %p434
    $region42: #{a_call__.21} parent=5 // pred_check_branch
      %437 = sbr.rel (%p435) target = $region44
    $region43: #{a_call__.21} parent=5 // pred_region
      %s438 = ssub.s32 %s10, 2
      // Predicated region
      $region45: #{a_call__.21} parent=43 // pred_check
        %p439 = pneg %p149
      $region46: #{a_call__.21} parent=43 // pred_check_branch
        %441 = sbr.rel (%p439) target = $region48
      $region47: #{a_call__.21} parent=43 // pred_region
        %s442 = smul.u32 8, %s22
        %p443 = scmp.lt.s32.totalorder %s21, 1
        %s444 = scalar_select %p443, %s21, 1
        %p445 = scmp.lt.s32.totalorder %s442, 7
        %s446 = scalar_select %p445, %s442, 7
        %s447 = smul.addr %s444, 8
        %s448 = sadd.s32 %s446, %s447
        %s449 = smul.addr %s448, 4
        %s450 = scalar_lea.vmem %s4, %s449
      $region48: #{a_call__.21} parent=43 // pred_fallthru
        _
    $region44: #{a_call__.21} parent=5 // pred_fallthru
      _
  $region6: #{a_call__.21} parent=0 // loop_footer
    %s14 = sadd.s32 1, %s10
  $region7: #{a_call__.21} parent=0 // loop_footer_branch
    %9 = sbr.rel target = $region3
  $region8: #{a_call__.21} parent=0 // loop_exit
    _

// kernel: a_call__.19
$region0: #{a_call__.19}
  #allocation0 [shape = 'u32[]', space=smem, size = 0x4, offset = 0x4, fixed_abs, tag = 'smem constant byte address 0x4 - core index']
  #allocation1 [shape = 'u32[144,128]{1,0:T(1,128)}', space=vmem, size = 0x12000, scoped, tag = 'internal scratch']
  %s0 = inlined_call_operand.vmem [shape: bf16[2,36,9,16], index: 0, kind: input, shape index: {}]
  %s1 = inlined_call_operand.vmem [shape: f32[9,1,16], index: 1, kind: input, shape index: {}]
  %s2 = inlined_call_operand.vmem [shape: f32[1,1,16], index: 2, kind: input, shape index: {}]
  %s3 = inlined_call_operand.vmem [shape: bf16[2,8,8,16], index: 3, kind: output, shape index: {0}]
  %s4 = inlined_call_operand.vmem [shape: f32[2,1,16], index: 4, kind: output, shape index: {1}]
  %5 = xla_tuple %s3, %s4
  %s6 = sld [smem:[#allocation0]]
  $region53: #{a_call__.19} parent=0
    _
  %s8 = ssub.s32 1, %s6
  %s9 = scalar_select 0, %s8, %s6
  loop: start=0, step=1, limit=4
  $region2: #{a_call__.19} parent=0 // loop_pre_header
    _
  $region3: #{a_call__.19} parent=0 // loop_header
    %s11 = sphi 0, %s15
    %p12 = scmp.ge.s32.totalorder %s11, 4
    %s21 = sphi 0, %s23
    %s24 = sphi 0, %s21
    %s25 = sphi 0, %s24
    %s41 = sphi 0, %s25
    %s45 = sphi 0, %s45
    %s47 = sphi 0, %s45
    %s48 = sphi 0, %s47
    %s62 = sphi 0, %s48
    %s66 = sphi 0, %s66
    %s68 = sphi 0, %s66
    %s69 = sphi 0, %s68
    %s83 = sphi 0, %s69
    %s89 = sphi 0, %s91
    %s92 = sphi 0, %s89
    %s93 = sphi 0, %s92
    %s109 = sphi 0, %s93
    %s115 = sphi 0, %s117
    %s118 = sphi 0, %s115
    %s119 = sphi 0, %s118
    %s135 = sphi 0, %s119
  $region4: #{a_call__.19} parent=0 // loop_header_branch
    %14 = sbr.rel (%p12) target = $region8
  $region5: #{a_call__.19} parent=0 // loop_body
    %s16 = ssub.s32 %s11, 1
    %s17 = ssub.s32 %s11, 2
    %s18 = sadd.s32 %s11, 1
    %s19 = ssub.s32 %s11, %s18
    %p20 = scmp.eq.s32.totalorder %s19, 0
    %s22 = sadd.s32 %s21, 1
    %s23 = scalar_select %p20, %s21, %s22
    %p26 = pneg %p20
    %p27 = scmp.eq.s32.totalorder %s11, 1
    %p28 = por %p26, %p27
    %p29 = scmp.ne.s32.totalorder %s21, %s24
    %p30 = scmp.eq.s32.totalorder %s11, 0
    %p31 = por %p29, %p30
    %p32 = scmp.ne.s32.totalorder %s21, %s24
    %p33 = scmp.eq.s32.totalorder %s16, 1
    %p34 = por %p32, %p33
    %p35 = scmp.ne.s32.totalorder %s24, %s25
    %p36 = scmp.eq.s32.totalorder %s16, 0
    %p37 = por %p35, %p36
    %p38 = scmp.ne.s32.totalorder %s24, %s25
    %p39 = scmp.eq.s32.totalorder %s17, 1
    %p40 = por %p38, %p39
    %p42 = scmp.ne.s32.totalorder %s25, %s41
    %p43 = scmp.eq.s32.totalorder %s17, 0
    %p44 = por %p42, %p43
    %s46 = sadd.s32 %s45, 1
    %p49 = scmp.eq.s32.totalorder %s11, 1
    %p50 = scmp.ne.s32.totalorder %s45, %s47
    %p51 = scmp.eq.s32.totalorder %s11, 0
    %p52 = por %p50, %p51
    %p53 = scmp.ne.s32.totalorder %s45, %s47
    %p54 = scmp.eq.s32.totalorder %s16, 1
    %p55 = por %p53, %p54
    %p56 = scmp.ne.s32.totalorder %s47, %s48
    %p57 = scmp.eq.s32.totalorder %s16, 0
    %p58 = por %p56, %p57
    %p59 = scmp.ne.s32.totalorder %s47, %s48
    %p60 = scmp.eq.s32.totalorder %s17, 1
    %p61 = por %p59, %p60
    %p63 = scmp.ne.s32.totalorder %s48, %s62
    %p64 = scmp.eq.s32.totalorder %s17, 0
    %p65 = por %p63, %p64
    %s67 = sadd.s32 %s66, 1
    %p70 = scmp.eq.s32.totalorder %s11, 1
    %p71 = scmp.ne.s32.totalorder %s66, %s68
    %p72 = scmp.eq.s32.totalorder %s11, 0
    %p73 = por %p71, %p72
    %p74 = scmp.ne.s32.totalorder %s66, %s68
    %p75 = scmp.eq.s32.totalorder %s16, 1
    %p76 = por %p74, %p75
    %p77 = scmp.ne.s32.totalorder %s68, %s69
    %p78 = scmp.eq.s32.totalorder %s16, 0
    %p79 = por %p77, %p78
    %p80 = scmp.ne.s32.totalorder %s68, %s69
    %p81 = scmp.eq.s32.totalorder %s17, 1
    %p82 = por %p80, %p81
    %p84 = scmp.ne.s32.totalorder %s69, %s83
    %p85 = scmp.eq.s32.totalorder %s17, 0
    %p86 = por %p84, %p85
    %s87 = ssub.s32 %s11, %s18
    %p88 = scmp.eq.s32.totalorder %s87, 0
    %s90 = sadd.s32 %s89, 1
    %s91 = scalar_select %p88, %s89, %s90
    %p94 = pneg %p88
    %p95 = scmp.eq.s32.totalorder %s11, 1
    %p96 = por %p94, %p95
    %p97 = scmp.ne.s32.totalorder %s89, %s92
    %p98 = scmp.eq.s32.totalorder %s11, 0
    %p99 = por %p97, %p98
    %p100 = scmp.ne.s32.totalorder %s89, %s92
    %p101 = scmp.eq.s32.totalorder %s16, 1
    %p102 = por %p100, %p101
    %p103 = scmp.ne.s32.totalorder %s92, %s93
    %p104 = scmp.eq.s32.totalorder %s16, 0
    %p105 = por %p103, %p104
    %p106 = scmp.ne.s32.totalorder %s92, %s93
    %p107 = scmp.eq.s32.totalorder %s17, 1
    %p108 = por %p106, %p107
    %p110 = scmp.ne.s32.totalorder %s93, %s109
    %p111 = scmp.eq.s32.totalorder %s17, 0
    %p112 = por %p110, %p111
    %s113 = ssub.s32 %s11, %s18
    %p114 = scmp.eq.s32.totalorder %s113, 0
    %s116 = sadd.s32 %s115, 1
    %s117 = scalar_select %p114, %s115, %s116
    %p120 = pneg %p114
    %p121 = scmp.eq.s32.totalorder %s11, 1
    %p122 = por %p120, %p121
    %p123 = scmp.ne.s32.totalorder %s115, %s118
    %p124 = scmp.eq.s32.totalorder %s11, 0
    %p125 = por %p123, %p124
    %p126 = scmp.ne.s32.totalorder %s115, %s118
    %p127 = scmp.eq.s32.totalorder %s16, 1
    %p128 = por %p126, %p127
    %p129 = scmp.ne.s32.totalorder %s118, %s119
    %p130 = scmp.eq.s32.totalorder %s16, 0
    %p131 = por %p129, %p130
    %p132 = scmp.ne.s32.totalorder %s118, %s119
    %p133 = scmp.eq.s32.totalorder %s17, 1
    %p134 = por %p132, %p133
    %p136 = scmp.ne.s32.totalorder %s119, %s135
    %p137 = scmp.eq.s32.totalorder %s17, 0
    %p138 = por %p136, %p137
    %p139 = scmp.le.s32.totalorder 1, %s11
    %p140 = scmp.lt.s32.totalorder %s11, 3
    %p141 = pnand %p139, %p140
    %p142 = pneg %p141
    // Predicated region
    $region9: #{a_call__.19} parent=5 // pred_check
      _
    $region10: #{a_call__.19} parent=5 // pred_check_branch
      %144 = sbr.rel (%p141) target = $region12
    $region11: #{a_call__.19} parent=5 // pred_region
      %s145 = ssub.s32 %s11, 1
      // Predicated region
      $region13: #{a_call__.19} parent=11 // pred_check
        %p146 = pneg %p58
      $region14: #{a_call__.19} parent=11 // pred_check_branch
        %148 = sbr.rel (%p146) target = $region16
      $region15: #{a_call__.19} parent=11 // pred_region
        _
      $region16: #{a_call__.19} parent=11 // pred_fallthru
        _
      // Predicated region
      $region17: #{a_call__.19} parent=11 // pred_check
        %p149 = pneg %p79
      $region18: #{a_call__.19} parent=11 // pred_check_branch
        %151 = sbr.rel (%p149) target = $region20
      $region19: #{a_call__.19} parent=11 // pred_region
        _
      $region20: #{a_call__.19} parent=11 // pred_fallthru
        _
    $region12: #{a_call__.19} parent=5 // pred_fallthru
      _
    %p152 = scmp.lt.s32.totalorder %s11, 2
    // Predicated region
    $region21: #{a_call__.19} parent=5 // pred_check
      %p153 = pneg %p152
    $region22: #{a_call__.19} parent=5 // pred_check_branch
      %155 = sbr.rel (%p153) target = $region24
    $region23: #{a_call__.19} parent=5 // pred_region
      // Predicated region
      $region25: #{a_call__.19} parent=23 // pred_check
        %p156 = pneg %p31
      $region26: #{a_call__.19} parent=23 // pred_check_branch
        %158 = sbr.rel (%p156) target = $region28
      $region27: #{a_call__.19} parent=23 // pred_region
        %p159 = scmp.lt.s32.totalorder %s11, 1
        %s160 = scalar_select %p159, %s11, 1
        %s161 = smul.addr %s160, 72
        %s162 = smul.addr %s161, 4
        %s163 = scalar_lea.vmem %s0, %s162
      $region28: #{a_call__.19} parent=23 // pred_fallthru
        _
    $region24: #{a_call__.19} parent=5 // pred_fallthru
      _
    %p164 = scmp.le.s32.totalorder 1, %s11
    %p165 = scmp.lt.s32.totalorder %s11, 3
    %p166 = pnand %p164, %p165
    %p167 = pneg %p166
    // Predicated region
    $region29: #{a_call__.19} parent=5 // pred_check
      _
    $region30: #{a_call__.19} parent=5 // pred_check_branch
      %169 = sbr.rel (%p166) target = $region32
    $region31: #{a_call__.19} parent=5 // pred_region
      %s170 = ssub.s32 %s11, 1
      %p171 = scmp.lt.s32.totalorder %s16, 1
      %s172 = scalar_select %p171, %s16, 1
      %s173 = smul.addr %s172, 72
      %s174 = smul.addr %s173, 4
      %s175 = scalar_lea.vmem %s0, %s174
      %p176 = pneg %p37
      %p177 = pneg %p34
      %p178 = pneg %p58
      %p179 = pneg %p55
      %p180 = pneg %p79
      %p181 = pneg %p76
      %p182 = pneg %p105
      %p183 = pneg %p102
      %p184 = scmp.lt.s32.totalorder %s16, 1
      %s185 = scalar_select %p184, %s16, 1
      %s186 = smul.addr %s185, 8
      %s187 = smul.addr %s186, 4
      %s188 = scalar_lea.vmem %s3, %s187
      %p189 = pneg %p131
      %p190 = pneg %p128
      %p191 = scmp.lt.s32.totalorder %s16, 1
      %s192 = scalar_select %p191, %s16, 1
      %s193 = scalar_lea.vmem %s4, %s192
      %p194 = scmp.lt.s32.totalorder %s16, 1
      %s195 = scalar_select %p194, %s16, 1
      %s196 = smul.addr %s195, 72
      %s197 = smul.addr %s196, 4
      %s198 = scalar_lea.vmem %s0, %s197
      %p199 = scmp.lt.s32.totalorder %s16, 1
      %s200 = scalar_select %p199, %s16, 1
      %s201 = smul.addr %s200, 8
      %s202 = smul.addr %s201, 4
      %s203 = scalar_lea.vmem %s3, %s202
      %p204 = scmp.lt.s32.totalorder %s16, 1
      %s205 = scalar_select %p204, %s16, 1
      %s206 = scalar_lea.vmem %s4, %s205
      %v207 = vld [vmem:[%s198] sm:$0xf]
      %v208 = vld [vmem:[%s198 + $0x8] sm:$0xf]
      %v209 = vld [vmem:[%s198 + $0x10] sm:$0xf]
      %v210 = vld [vmem:[%s198 + $0x18] sm:$0xf]
      %v211 = vld [vmem:[%s198 + $0x20] sm:$0xf]
      %v212 = vld [vmem:[%s198 + $0x28] sm:$0xf]
      %v213 = vld [vmem:[%s198 + $0x30] sm:$0xf]
      %v214 = vld [vmem:[%s198 + $0x38] sm:$0xf]
      %v215 = vunpack.c.l.bf16 %v207
      %v216 = vunpack.c.l.bf16 %v208
      %v217 = vunpack.c.l.bf16 %v209
      %v218 = vunpack.c.l.bf16 %v210
      %v219 = vunpack.c.l.bf16 %v211
      %v220 = vunpack.c.l.bf16 %v212
      %v221 = vunpack.c.l.bf16 %v213
      %v222 = vunpack.c.l.bf16 %v214
      %v223 = vld [vmem:[%s1] sm:$0x1]
      %v225 = vlaneseq
      %v226 = vshrl.u32 %v225, 7
      %v227 = vsub.s32 0, %v226
      %v228 = vrot.slane %v223, %v227
      %v230 = vmul.f32 %v215, %v228
      %v231 = vmul.f32 %v216, %v228
      %v232 = vmul.f32 %v217, %v228
      %v233 = vmul.f32 %v218, %v228
      %v234 = vmul.f32 %v219, %v228
      %v235 = vmul.f32 %v220, %v228
      %v236 = vmul.f32 %v221, %v228
      %v237 = vmul.f32 %v222, %v228
      %v238 = vadd.f32 %v230, 0.0
      %v239 = vadd.f32 %v231, 0.0
      %v240 = vadd.f32 %v232, 0.0
      %v241 = vadd.f32 %v233, 0.0
      %v242 = vadd.f32 %v234, 0.0
      %v243 = vadd.f32 %v235, 0.0
      %v244 = vadd.f32 %v236, 0.0
      %v245 = vadd.f32 %v237, 0.0
      %s246 = scalar_lea.vmem %s198, 72
      %v247 = vld [vmem:[%s246] sm:$0xf]
      %v248 = vld [vmem:[%s246 + $0x8] sm:$0xf]
      %v249 = vld [vmem:[%s246 + $0x10] sm:$0xf]
      %v250 = vld [vmem:[%s246 + $0x18] sm:$0xf]
      %v251 = vld [vmem:[%s246 + $0x20] sm:$0xf]
      %v252 = vld [vmem:[%s246 + $0x28] sm:$0xf]
      %v253 = vld [vmem:[%s246 + $0x30] sm:$0xf]
      %v254 = vld [vmem:[%s246 + $0x38] sm:$0xf]
      %v255 = vunpack.c.l.bf16 %v247
      %v256 = vunpack.c.l.bf16 %v248
      %v257 = vunpack.c.l.bf16 %v249
      %v258 = vunpack.c.l.bf16 %v250
      %v259 = vunpack.c.l.bf16 %v251
      %v260 = vunpack.c.l.bf16 %v252
      %v261 = vunpack.c.l.bf16 %v253
      %v262 = vunpack.c.l.bf16 %v254
      %s263 = scalar_lea.vmem %s1, 1
      %v264 = vld [vmem:[%s263] sm:$0x1]
      %v266 = vlaneseq
      %v267 = vshrl.u32 %v266, 7
      %v268 = vsub.s32 0, %v267
      %v269 = vrot.slane %v264, %v268
      %v271 = vmul.f32 %v255, %v269
      %v272 = vmul.f32 %v256, %v269
      %v273 = vmul.f32 %v257, %v269
      %v274 = vmul.f32 %v258, %v269
      %v275 = vmul.f32 %v259, %v269
      %v276 = vmul.f32 %v260, %v269
      %v277 = vmul.f32 %v261, %v269
      %v278 = vmul.f32 %v262, %v269
      %v279 = vadd.f32 %v238, %v271
      %v280 = vadd.f32 %v239, %v272
      %v281 = vadd.f32 %v240, %v273
      %v282 = vadd.f32 %v241, %v274
      %v283 = vadd.f32 %v242, %v275
      %v284 = vadd.f32 %v243, %v276
      %v285 = vadd.f32 %v244, %v277
      %v286 = vadd.f32 %v245, %v278
      %v287 = vld [vmem:[%s198 + $0x4] sm:$0x1]
      %v288 = vld [vmem:[%s198 + $0xc] sm:$0x1]
      %v289 = vld [vmem:[%s198 + $0x14] sm:$0x1]
      %v290 = vld [vmem:[%s198 + $0x1c] sm:$0x1]
      %v291 = vld [vmem:[%s198 + $0x24] sm:$0x1]
      %v292 = vld [vmem:[%s198 + $0x2c] sm:$0x1]
      %v293 = vld [vmem:[%s198 + $0x34] sm:$0x1]
      %v294 = vld [vmem:[%s198 + $0x3c] sm:$0x1]
      %v295 = vunpack.c.l.bf16 %v287
      %v296 = vunpack.c.l.bf16 %v288
      %v297 = vunpack.c.l.bf16 %v289
      %v298 = vunpack.c.l.bf16 %v290
      %v299 = vunpack.c.l.bf16 %v291
      %v300 = vunpack.c.l.bf16 %v292
      %v301 = vunpack.c.l.bf16 %v293
      %v302 = vunpack.c.l.bf16 %v294
      %s303 = scalar_lea.vmem %s1, 2
      %v304 = vld [vmem:[%s303] sm:$0x1]
      %v306 = vlaneseq
      %v307 = vshrl.u32 %v306, 7
      %v308 = vsub.s32 0, %v307
      %v309 = vrot.slane %v304, %v308
      %v311 = vmul.f32 %v215, %v309
      %v312 = vmul.f32 %v295, %v309
      %v313 = vmul.f32 %v216, %v309
      %v314 = vmul.f32 %v296, %v309
      %v315 = vmul.f32 %v217, %v309
      %v316 = vmul.f32 %v297, %v309
      %v317 = vmul.f32 %v218, %v309
      %v318 = vmul.f32 %v298, %v309
      %v319 = vmul.f32 %v219, %v309
      %v320 = vmul.f32 %v299, %v309
      %v321 = vmul.f32 %v220, %v309
      %v322 = vmul.f32 %v300, %v309
      %v323 = vmul.f32 %v221, %v309
      %v324 = vmul.f32 %v301, %v309
      %v325 = vmul.f32 %v222, %v309
      %v326 = vmul.f32 %v302, %v309
      %vm343 = vcmask 1046528
      %v344 = vrot.slane %v311, 1
      %v345 = vrot.slane %v312, 1
      %v346 = vsel %vm343, %v344, %v345
      %v347 = vrot.slane %v313, 1
      %v348 = vrot.slane %v314, 1
      %v349 = vsel %vm343, %v347, %v348
      %v350 = vrot.slane %v315, 1
      %v351 = vrot.slane %v316, 1
      %v352 = vsel %vm343, %v350, %v351
      %v353 = vrot.slane %v317, 1
      %v354 = vrot.slane %v318, 1
      %v355 = vsel %vm343, %v353, %v354
      %v356 = vrot.slane %v319, 1
      %v357 = vrot.slane %v320, 1
      %v358 = vsel %vm343, %v356, %v357
      %v359 = vrot.slane %v321, 1
      %v360 = vrot.slane %v322, 1
      %v361 = vsel %vm343, %v359, %v360
      %v362 = vrot.slane %v323, 1
      %v363 = vrot.slane %v324, 1
      %v364 = vsel %vm343, %v362, %v363
      %v365 = vrot.slane %v325, 1
      %v366 = vrot.slane %v326, 1
      %v367 = vsel %vm343, %v365, %v366
      %v376 = vadd.f32 %v279, %v346
      %v377 = vadd.f32 %v280, %v349
      %v378 = vadd.f32 %v281, %v352
      %v379 = vadd.f32 %v282, %v355
      %v380 = vadd.f32 %v283, %v358
      %v381 = vadd.f32 %v284, %v361
      %v382 = vadd.f32 %v285, %v364
      %v383 = vadd.f32 %v286, %v367
      %s384 = scalar_lea.vmem %s198, 144
      %v385 = vld [vmem:[%s384] sm:$0xf]
      %v386 = vld [vmem:[%s384 + $0x8] sm:$0xf]
      %v387 = vld [vmem:[%s384 + $0x10] sm:$0xf]
      %v388 = vld [vmem:[%s384 + $0x18] sm:$0xf]
      %v389 = vld [vmem:[%s384 + $0x20] sm:$0xf]
      %v390 = vld [vmem:[%s384 + $0x28] sm:$0xf]
      %v391 = vld [vmem:[%s384 + $0x30] sm:$0xf]
      %v392 = vld [vmem:[%s384 + $0x38] sm:$0xf]
      %v393 = vunpack.c.l.bf16 %v385
      %v394 = vunpack.c.l.bf16 %v386
      %v395 = vunpack.c.l.bf16 %v387
      %v396 = vunpack.c.l.bf16 %v388
      %v397 = vunpack.c.l.bf16 %v389
      %v398 = vunpack.c.l.bf16 %v390
      %v399 = vunpack.c.l.bf16 %v391
      %v400 = vunpack.c.l.bf16 %v392
      %s401 = scalar_lea.vmem %s1, 3
      %v402 = vld [vmem:[%s401] sm:$0x1]
      %v404 = vlaneseq
      %v405 = vshrl.u32 %v404, 7
      %v406 = vsub.s32 0, %v405
      %v407 = vrot.slane %v402, %v406
      %v409 = vmul.f32 %v393, %v407
      %v410 = vmul.f32 %v394, %v407
      %v411 = vmul.f32 %v395, %v407
      %v412 = vmul.f32 %v396, %v407
      %v413 = vmul.f32 %v397, %v407
      %v414 = vmul.f32 %v398, %v407
      %v415 = vmul.f32 %v399, %v407
      %v416 = vmul.f32 %v400, %v407
      %v417 = vadd.f32 %v376, %v409
      %v418 = vadd.f32 %v377, %v410
      %v419 = vadd.f32 %v378, %v411
      %v420 = vadd.f32 %v379, %v412
      %v421 = vadd.f32 %v380, %v413
      %v422 = vadd.f32 %v381, %v414
      %v423 = vadd.f32 %v382, %v415
      %v424 = vadd.f32 %v383, %v416
      %s425 = scalar_lea.vmem %s198, 216
      %v426 = vld [vmem:[%s425] sm:$0xf]
      %v427 = vld [vmem:[%s425 + $0x8] sm:$0xf]
      %v428 = vld [vmem:[%s425 + $0x10] sm:$0xf]
      %v429 = vld [vmem:[%s425 + $0x18] sm:$0xf]
      %v430 = vld [vmem:[%s425 + $0x20] sm:$0xf]
      %v431 = vld [vmem:[%s425 + $0x28] sm:$0xf]
      %v432 = vld [vmem:[%s425 + $0x30] sm:$0xf]
      %v433 = vld [vmem:[%s425 + $0x38] sm:$0xf]
      %v434 = vunpack.c.l.bf16 %v426
      %v435 = vunpack.c.l.bf16 %v427
      %v436 = vunpack.c.l.bf16 %v428
      %v437 = vunpack.c.l.bf16 %v429
      %v438 = vunpack.c.l.bf16 %v430
      %v439 = vunpack.c.l.bf16 %v431
      %v440 = vunpack.c.l.bf16 %v432
      %v441 = vunpack.c.l.bf16 %v433
      %s442 = scalar_lea.vmem %s1, 4
      %v443 = vld [vmem:[%s442] sm:$0x1]
      %v445 = vlaneseq
      %v446 = vshrl.u32 %v445, 7
      %v447 = vsub.s32 0, %v446
      %v448 = vrot.slane %v443, %v447
      %v450 = vmul.f32 %v434, %v448
      %v451 = vmul.f32 %v435, %v448
      %v452 = vmul.f32 %v436, %v448
      %v453 = vmul.f32 %v437, %v448
      %v454 = vmul.f32 %v438, %v448
      %v455 = vmul.f32 %v439, %v448
      %v456 = vmul.f32 %v440, %v448
      %v457 = vmul.f32 %v441, %v448
      %v458 = vadd.f32 %v417, %v450
      %v459 = vadd.f32 %v418, %v451
      %v460 = vadd.f32 %v419, %v452
      %v461 = vadd.f32 %v420, %v453
      %v462 = vadd.f32 %v421, %v454
      %v463 = vadd.f32 %v422, %v455
      %v464 = vadd.f32 %v423, %v456
      %v465 = vadd.f32 %v424, %v457
      %v466 = vld [vmem:[%s384 + $0x4] sm:$0x1]
      %v467 = vld [vmem:[%s384 + $0xc] sm:$0x1]
      %v468 = vld [vmem:[%s384 + $0x14] sm:$0x1]
      %v469 = vld [vmem:[%s384 + $0x1c] sm:$0x1]
      %v470 = vld [vmem:[%s384 + $0x24] sm:$0x1]
      %v471 = vld [vmem:[%s384 + $0x2c] sm:$0x1]
      %v472 = vld [vmem:[%s384 + $0x34] sm:$0x1]
      %v473 = vld [vmem:[%s384 + $0x3c] sm:$0x1]
      %v474 = vunpack.c.l.bf16 %v466
      %v475 = vunpack.c.l.bf16 %v467
      %v476 = vunpack.c.l.bf16 %v468
      %v477 = vunpack.c.l.bf16 %v469
      %v478 = vunpack.c.l.bf16 %v470
      %v479 = vunpack.c.l.bf16 %v471
      %v480 = vunpack.c.l.bf16 %v472
      %v481 = vunpack.c.l.bf16 %v473
      %s482 = scalar_lea.vmem %s1, 5
      %v483 = vld [vmem:[%s482] sm:$0x1]
      %v485 = vlaneseq
      %v486 = vshrl.u32 %v485, 7
      %v487 = vsub.s32 0, %v486
      %v488 = vrot.slane %v483, %v487
      %v490 = vmul.f32 %v393, %v488
      %v491 = vmul.f32 %v474, %v488
      %v492 = vmul.f32 %v394, %v488
      %v493 = vmul.f32 %v475, %v488
      %v494 = vmul.f32 %v395, %v488
      %v495 = vmul.f32 %v476, %v488
      %v496 = vmul.f32 %v396, %v488
      %v497 = vmul.f32 %v477, %v488
      %v498 = vmul.f32 %v397, %v488
      %v499 = vmul.f32 %v478, %v488
      %v500 = vmul.f32 %v398, %v488
      %v501 = vmul.f32 %v479, %v488
      %v502 = vmul.f32 %v399, %v488
      %v503 = vmul.f32 %v480, %v488
      %v504 = vmul.f32 %v400, %v488
      %v505 = vmul.f32 %v481, %v488
      %v522 = vrot.slane %v490, 1
      %v523 = vrot.slane %v491, 1
      %v524 = vsel %vm343, %v522, %v523
      %v525 = vrot.slane %v492, 1
      %v526 = vrot.slane %v493, 1
      %v527 = vsel %vm343, %v525, %v526
      %v528 = vrot.slane %v494, 1
      %v529 = vrot.slane %v495, 1
      %v530 = vsel %vm343, %v528, %v529
      %v531 = vrot.slane %v496, 1
      %v532 = vrot.slane %v497, 1
      %v533 = vsel %vm343, %v531, %v532
      %v534 = vrot.slane %v498, 1
      %v535 = vrot.slane %v499, 1
      %v536 = vsel %vm343, %v534, %v535
      %v537 = vrot.slane %v500, 1
      %v538 = vrot.slane %v501, 1
      %v539 = vsel %vm343, %v537, %v538
      %v540 = vrot.slane %v502, 1
      %v541 = vrot.slane %v503, 1
      %v542 = vsel %vm343, %v540, %v541
      %v543 = vrot.slane %v504, 1
      %v544 = vrot.slane %v505, 1
      %v545 = vsel %vm343, %v543, %v544
      %v554 = vadd.f32 %v458, %v524
      %v555 = vadd.f32 %v459, %v527
      %v556 = vadd.f32 %v460, %v530
      %v557 = vadd.f32 %v461, %v533
      %v558 = vadd.f32 %v462, %v536
      %v559 = vadd.f32 %v463, %v539
      %v560 = vadd.f32 %v464, %v542
      %v561 = vadd.f32 %v465, %v545
      %s562 = scalar_lea.vmem %s198, 8
      %v563 = vld [vmem:[%s562] sm:$0xf]
      %v564 = vld [vmem:[%s562 + $0x8] sm:$0xf]
      %v565 = vld [vmem:[%s562 + $0x10] sm:$0xf]
      %v566 = vld [vmem:[%s562 + $0x18] sm:$0xf]
      %v567 = vld [vmem:[%s562 + $0x20] sm:$0xf]
      %v568 = vld [vmem:[%s562 + $0x28] sm:$0xf]
      %v569 = vld [vmem:[%s562 + $0x30] sm:$0xf]
      %v570 = vld [vmem:[%s562 + $0x38] sm:$0xf]
      %v571 = vunpack.c.l.bf16 %v563
      %v572 = vunpack.c.l.bf16 %v564
      %v573 = vunpack.c.l.bf16 %v565
      %v574 = vunpack.c.l.bf16 %v566
      %v575 = vunpack.c.l.bf16 %v567
      %v576 = vunpack.c.l.bf16 %v568
      %v577 = vunpack.c.l.bf16 %v569
      %v578 = vunpack.c.l.bf16 %v570
      %s579 = scalar_lea.vmem %s1, 6
      %v580 = vld [vmem:[%s579] sm:$0x1]
      %v582 = vlaneseq
      %v583 = vshrl.u32 %v582, 7
      %v584 = vsub.s32 0, %v583
      %v585 = vrot.slane %v580, %v584
      %v587 = vmul.f32 %v571, %v585
      %v588 = vmul.f32 %v572, %v585
      %v589 = vmul.f32 %v573, %v585
      %v590 = vmul.f32 %v574, %v585
      %v591 = vmul.f32 %v575, %v585
      %v592 = vmul.f32 %v576, %v585
      %v593 = vmul.f32 %v577, %v585
      %v594 = vmul.f32 %v578, %v585
      %v595 = vadd.f32 %v554, %v587
      %v596 = vadd.f32 %v555, %v588
      %v597 = vadd.f32 %v556, %v589
      %v598 = vadd.f32 %v557, %v590
      %v599 = vadd.f32 %v558, %v591
      %v600 = vadd.f32 %v559, %v592
      %v601 = vadd.f32 %v560, %v593
      %v602 = vadd.f32 %v561, %v594
      %s603 = scalar_lea.vmem %s198, 80
      %v604 = vld [vmem:[%s603] sm:$0xf]
      %v605 = vld [vmem:[%s603 + $0x8] sm:$0xf]
      %v606 = vld [vmem:[%s603 + $0x10] sm:$0xf]
      %v607 = vld [vmem:[%s603 + $0x18] sm:$0xf]
      %v608 = vld [vmem:[%s603 + $0x20] sm:$0xf]
      %v609 = vld [vmem:[%s603 + $0x28] sm:$0xf]
      %v610 = vld [vmem:[%s603 + $0x30] sm:$0xf]
      %v611 = vld [vmem:[%s603 + $0x38] sm:$0xf]
      %v612 = vunpack.c.l.bf16 %v604
      %v613 = vunpack.c.l.bf16 %v605
      %v614 = vunpack.c.l.bf16 %v606
      %v615 = vunpack.c.l.bf16 %v607
      %v616 = vunpack.c.l.bf16 %v608
      %v617 = vunpack.c.l.bf16 %v609
      %v618 = vunpack.c.l.bf16 %v610
      %v619 = vunpack.c.l.bf16 %v611
      %s620 = scalar_lea.vmem %s1, 7
      %v621 = vld [vmem:[%s620] sm:$0x1]
      %v623 = vlaneseq
      %v624 = vshrl.u32 %v623, 7
      %v625 = vsub.s32 0, %v624
      %v626 = vrot.slane %v621, %v625
      %v628 = vmul.f32 %v612, %v626
      %v629 = vmul.f32 %v613, %v626
      %v630 = vmul.f32 %v614, %v626
      %v631 = vmul.f32 %v615, %v626
      %v632 = vmul.f32 %v616, %v626
      %v633 = vmul.f32 %v617, %v626
      %v634 = vmul.f32 %v618, %v626
      %v635 = vmul.f32 %v619, %v626
      %v636 = vadd.f32 %v595, %v628
      %v637 = vadd.f32 %v596, %v629
      %v638 = vadd.f32 %v597, %v630
      %v639 = vadd.f32 %v598, %v631
      %v640 = vadd.f32 %v599, %v632
      %v641 = vadd.f32 %v600, %v633
      %v642 = vadd.f32 %v601, %v634
      %v643 = vadd.f32 %v602, %v635
      %v644 = vld [vmem:[%s562 + $0x4] sm:$0x1]
      %v645 = vld [vmem:[%s562 + $0xc] sm:$0x1]
      %v646 = vld [vmem:[%s562 + $0x14] sm:$0x1]
      %v647 = vld [vmem:[%s562 + $0x1c] sm:$0x1]
      %v648 = vld [vmem:[%s562 + $0x24] sm:$0x1]
      %v649 = vld [vmem:[%s562 + $0x2c] sm:$0x1]
      %v650 = vld [vmem:[%s562 + $0x34] sm:$0x1]
      %v651 = vld [vmem:[%s562 + $0x3c] sm:$0x1]
      %v652 = vunpack.c.l.bf16 %v644
      %v653 = vunpack.c.l.bf16 %v645
      %v654 = vunpack.c.l.bf16 %v646
      %v655 = vunpack.c.l.bf16 %v647
      %v656 = vunpack.c.l.bf16 %v648
      %v657 = vunpack.c.l.bf16 %v649
      %v658 = vunpack.c.l.bf16 %v650
      %v659 = vunpack.c.l.bf16 %v651
      %s660 = scalar_lea.vmem %s1, 8
      %v661 = vld [vmem:[%s660] sm:$0x1]
      %v663 = vlaneseq
      %v664 = vshrl.u32 %v663, 7
      %v665 = vsub.s32 0, %v664
      %v666 = vrot.slane %v661, %v665
      %v668 = vmul.f32 %v571, %v666
      %v669 = vmul.f32 %v652, %v666
      %v670 = vmul.f32 %v572, %v666
      %v671 = vmul.f32 %v653, %v666
      %v672 = vmul.f32 %v573, %v666
      %v673 = vmul.f32 %v654, %v666
      %v674 = vmul.f32 %v574, %v666
      %v675 = vmul.f32 %v655, %v666
      %v676 = vmul.f32 %v575, %v666
      %v677 = vmul.f32 %v656, %v666
      %v678 = vmul.f32 %v576, %v666
      %v679 = vmul.f32 %v657, %v666
      %v680 = vmul.f32 %v577, %v666
      %v681 = vmul.f32 %v658, %v666
      %v682 = vmul.f32 %v578, %v666
      %v683 = vmul.f32 %v659, %v666
      %v700 = vrot.slane %v668, 1
      %v701 = vrot.slane %v669, 1
      %v702 = vsel %vm343, %v700, %v701
      %v703 = vrot.slane %v670, 1
      %v704 = vrot.slane %v671, 1
      %v705 = vsel %vm343, %v703, %v704
      %v706 = vrot.slane %v672, 1
      %v707 = vrot.slane %v673, 1
      %v708 = vsel %vm343, %v706, %v707
      %v709 = vrot.slane %v674, 1
      %v710 = vrot.slane %v675, 1
      %v711 = vsel %vm343, %v709, %v710
      %v712 = vrot.slane %v676, 1
      %v713 = vrot.slane %v677, 1
      %v714 = vsel %vm343, %v712, %v713
      %v715 = vrot.slane %v678, 1
      %v716 = vrot.slane %v679, 1
      %v717 = vsel %vm343, %v715, %v716
      %v718 = vrot.slane %v680, 1
      %v719 = vrot.slane %v681, 1
      %v720 = vsel %vm343, %v718, %v719
      %v721 = vrot.slane %v682, 1
      %v722 = vrot.slane %v683, 1
      %v723 = vsel %vm343, %v721, %v722
      %v732 = vadd.f32 %v636, %v702
      %v733 = vadd.f32 %v637, %v705
      %v734 = vadd.f32 %v638, %v708
      %v735 = vadd.f32 %v639, %v711
      %v736 = vadd.f32 %v640, %v714
      %v737 = vadd.f32 %v641, %v717
      %v738 = vadd.f32 %v642, %v720
      %v739 = vadd.f32 %v643, %v723
      %v740 = vld [vmem:[%s2] sm:$0x1]
      %v742 = vlaneseq
      %v743 = vshrl.u32 %v742, 7
      %v744 = vsub.s32 0, %v743
      %v745 = vrot.slane %v740, %v744
      %v747 = vadd.f32 %v732, %v745
      %v748 = vadd.f32 %v733, %v745
      %v749 = vadd.f32 %v734, %v745
      %v750 = vadd.f32 %v735, %v745
      %v751 = vadd.f32 %v736, %v745
      %v752 = vadd.f32 %v737, %v745
      %v753 = vadd.f32 %v738, %v745
      %v754 = vadd.f32 %v739, %v745
      %v755 = vmax.f32 %v747, 0.0
      %v756 = vmax.f32 %v748, 0.0
      %v757 = vmax.f32 %v749, 0.0
      %v758 = vmax.f32 %v750, 0.0
      %v759 = vmax.f32 %v751, 0.0
      %v760 = vmax.f32 %v752, 0.0
      %v761 = vmax.f32 %v753, 0.0
      %v762 = vmax.f32 %v754, 0.0
      %v763 = vpack.c.bf16 %v755, %v755
      %v764 = vpack.c.bf16 %v756, %v756
      %v765 = vpack.c.bf16 %v757, %v757
      %v766 = vpack.c.bf16 %v758, %v758
      %v767 = vpack.c.bf16 %v759, %v759
      %v768 = vpack.c.bf16 %v760, %v760
      %v769 = vpack.c.bf16 %v761, %v761
      %v770 = vpack.c.bf16 %v762, %v762
      %vm771 = vcmask 125952
      %772 = vst.msk [vmem:[%s203] sm:$0xf] %vm771, %v763
      %773 = vst.msk [vmem:[%s203 + $0x4] sm:$0xf] %vm771, %v764
      %774 = vst.msk [vmem:[%s203 + $0x8] sm:$0xf] %vm771, %v765
      %775 = vst.msk [vmem:[%s203 + $0xc] sm:$0xf] %vm771, %v766
      %776 = vst.msk [vmem:[%s203 + $0x10] sm:$0xf] %vm771, %v767
      %777 = vst.msk [vmem:[%s203 + $0x14] sm:$0xf] %vm771, %v768
      %778 = vst.msk [vmem:[%s203 + $0x18] sm:$0xf] %vm771, %v769
      %779 = vst.msk [vmem:[%s203 + $0x1c] sm:$0xf] %vm771, %v770
      %vm780 = vcmask 130048
      %v781 = vsel %vm780, %v755, 0.0
      %v782 = vsel %vm780, %v756, 0.0
      %v783 = vadd.f32 %v781, %v782
      %v784 = vsel %vm780, %v757, 0.0
      %v785 = vadd.f32 %v783, %v784
      %v786 = vsel %vm780, %v758, 0.0
      %v787 = vadd.f32 %v785, %v786
      %v788 = vsel %vm780, %v759, 0.0
      %v789 = vadd.f32 %v787, %v788
      %v790 = vsel %vm780, %v760, 0.0
      %v791 = vadd.f32 %v789, %v790
      %v792 = vsel %vm780, %v761, 0.0
      %v793 = vadd.f32 %v791, %v792
      %v794 = vsel %vm780, %v762, 0.0
      %v795 = vadd.f32 %v793, %v794
      %v796 = vrot.slane %v795, 4
      %v797 = vadd.f32 %v795, %v796
      %v798 = vrot.slane %v797, 2
      %v799 = vadd.f32 %v797, %v798
      %v800 = vrot.slane %v799, 1
      %v801 = vadd.f32 %v799, %v800
      %v802 = vrcp.pop 64.0
      %v803 = vmul.f32 %v801, %v802
      %vm804 = vcmask 122880
      %805 = vst.msk [vmem:[%s206] sm:$0x1] %vm804, %v803
      %p806 = scmp.lt.s32.totalorder %s16, 1
      %s807 = scalar_select %p806, %s16, 1
      %s808 = smul.addr %s807, 8
      %s809 = smul.addr %s808, 4
      %s810 = scalar_lea.vmem %s3, %s809
      %p811 = scmp.lt.s32.totalorder %s16, 1
      %s812 = scalar_select %p811, %s16, 1
      %s813 = scalar_lea.vmem %s4, %s812
      // Predicated region
      $region33: #{a_call__.19} parent=31 // pred_check
        %p814 = pneg %p102
      $region34: #{a_call__.19} parent=31 // pred_check_branch
        %816 = sbr.rel (%p814) target = $region36
      $region35: #{a_call__.19} parent=31 // pred_region
        _
      $region36: #{a_call__.19} parent=31 // pred_fallthru
        _
      // Predicated region
      $region37: #{a_call__.19} parent=31 // pred_check
        %p817 = pneg %p128
      $region38: #{a_call__.19} parent=31 // pred_check_branch
        %819 = sbr.rel (%p817) target = $region40
      $region39: #{a_call__.19} parent=31 // pred_region
        _
      $region40: #{a_call__.19} parent=31 // pred_fallthru
        _
    $region32: #{a_call__.19} parent=5 // pred_fallthru
      _
    %p820 = scmp.le.s32.totalorder 2, %s11
    // Predicated region
    $region41: #{a_call__.19} parent=5 // pred_check
      %p821 = pneg %p820
    $region42: #{a_call__.19} parent=5 // pred_check_branch
      %823 = sbr.rel (%p821) target = $region44
    $region43: #{a_call__.19} parent=5 // pred_region
      %s824 = ssub.s32 %s11, 2
      // Predicated region
      $region45: #{a_call__.19} parent=43 // pred_check
        %p825 = pneg %p108
      $region46: #{a_call__.19} parent=43 // pred_check_branch
        %827 = sbr.rel (%p825) target = $region48
      $region47: #{a_call__.19} parent=43 // pred_region
        %p828 = scmp.lt.s32.totalorder %s17, 1
        %s829 = scalar_select %p828, %s17, 1
        %s830 = smul.addr %s829, 8
        %s831 = smul.addr %s830, 4
        %s832 = scalar_lea.vmem %s3, %s831
      $region48: #{a_call__.19} parent=43 // pred_fallthru
        _
      // Predicated region
      $region49: #{a_call__.19} parent=43 // pred_check
        %p833 = pneg %p134
      $region50: #{a_call__.19} parent=43 // pred_check_branch
        %835 = sbr.rel (%p833) target = $region52
      $region51: #{a_call__.19} parent=43 // pred_region
        %p836 = scmp.lt.s32.totalorder %s17, 1
        %s837 = scalar_select %p836, %s17, 1
        %s838 = scalar_lea.vmem %s4, %s837
      $region52: #{a_call__.19} parent=43 // pred_fallthru
        _
    $region44: #{a_call__.19} parent=5 // pred_fallthru
      _
  $region6: #{a_call__.19} parent=0 // loop_footer
    %s15 = sadd.s32 1, %s11
  $region7: #{a_call__.19} parent=0 // loop_footer_branch
    %10 = sbr.rel target = $region3
  $region8: #{a_call__.19} parent=0 // loop_exit
    _

// kernel: a_call__.22
$region0: #{a_call__.22}
  #allocation0 [shape = 'u32[]', space=smem, size = 0x4, offset = 0x4, fixed_abs, tag = 'smem constant byte address 0x4 - core index']
  #allocation1 [shape = 'u32[144,128]{1,0:T(1,128)}', space=vmem, size = 0x12000, scoped, tag = 'internal scratch']
  %s0 = inlined_call_operand.vmem [shape: bf16[2,64,16], index: 0, kind: input, shape index: {}]
  %s1 = inlined_call_operand.vmem [shape: bf16[16,72], index: 1, kind: input, shape index: {}]
  %s2 = inlined_call_operand.vmem [shape: f32[1,72], index: 2, kind: input, shape index: {}]
  %s3 = inlined_call_operand.vmem [shape: bf16[2,64,72], index: 3, kind: output, shape index: {}]
  %s4 = sld [smem:[#allocation0]]
  $region45: #{a_call__.22} parent=0
    _
  %s6 = ssub.s32 1, %s4
  %s7 = scalar_select 0, %s6, %s4
  loop: start=0, step=1, limit=4
  $region2: #{a_call__.22} parent=0 // loop_pre_header
    _
  $region3: #{a_call__.22} parent=0 // loop_header
    %s9 = sphi 0, %s13
    %p10 = scmp.ge.s32.totalorder %s9, 4
    %s16 = sphi 0, %s28
    %s17 = sphi 0, %s24
    %s18 = sphi 0, %s16
    %s19 = sphi 0, %s17
    %s20 = sphi 0, %s18
    %s21 = sphi 0, %s19
    %s33 = sphi 0, %s35
    %s36 = sphi 0, %s33
    %s37 = sphi 0, %s36
    %s53 = sphi 0, %s37
    %s57 = sphi 0, %s57
    %s59 = sphi 0, %s57
    %s60 = sphi 0, %s59
    %s74 = sphi 0, %s60
    %s78 = sphi 0, %s78
    %s80 = sphi 0, %s78
    %s81 = sphi 0, %s80
    %s95 = sphi 0, %s81
    %s103 = sphi 0, %s105
    %s106 = sphi 0, %s103
    %s107 = sphi 0, %s106
    %s123 = sphi 0, %s107
  $region4: #{a_call__.22} parent=0 // loop_header_branch
    %12 = sbr.rel (%p10) target = $region8
  $region5: #{a_call__.22} parent=0 // loop_body
    %s14 = ssub.s32 %s9, 1
    %s15 = ssub.s32 %s9, 2
    %s22 = sadd.s32 1, %s17
    %p23 = scmp.ge.s32.totalorder %s22, 1
    %s24 = scalar_select %p23, 0, %s22
    %s25 = sadd.s32 1, %s16
    %s26 = scalar_select %p23, %s25, %s16
    %p27 = scmp.ge.s32.totalorder %s26, 2
    %s28 = scalar_select %p27, 0, %s26
    %s29 = ssub.s32 %s16, %s28
    %s30 = ssub.s32 %s17, %s24
    %s31 = sor.u32 %s29, %s30
    %p32 = scmp.eq.s32.totalorder %s31, 0
    %s34 = sadd.s32 %s33, 1
    %s35 = scalar_select %p32, %s33, %s34
    %p38 = pneg %p32
    %p39 = scmp.eq.s32.totalorder %s9, 1
    %p40 = por %p38, %p39
    %p41 = scmp.ne.s32.totalorder %s33, %s36
    %p42 = scmp.eq.s32.totalorder %s9, 0
    %p43 = por %p41, %p42
    %p44 = scmp.ne.s32.totalorder %s33, %s36
    %p45 = scmp.eq.s32.totalorder %s14, 1
    %p46 = por %p44, %p45
    %p47 = scmp.ne.s32.totalorder %s36, %s37
    %p48 = scmp.eq.s32.totalorder %s14, 0
    %p49 = por %p47, %p48
    %p50 = scmp.ne.s32.totalorder %s36, %s37
    %p51 = scmp.eq.s32.totalorder %s15, 1
    %p52 = por %p50, %p51
    %p54 = scmp.ne.s32.totalorder %s37, %s53
    %p55 = scmp.eq.s32.totalorder %s15, 0
    %p56 = por %p54, %p55
    %s58 = sadd.s32 %s57, 1
    %p61 = scmp.eq.s32.totalorder %s9, 1
    %p62 = scmp.ne.s32.totalorder %s57, %s59
    %p63 = scmp.eq.s32.totalorder %s9, 0
    %p64 = por %p62, %p63
    %p65 = scmp.ne.s32.totalorder %s57, %s59
    %p66 = scmp.eq.s32.totalorder %s14, 1
    %p67 = por %p65, %p66
    %p68 = scmp.ne.s32.totalorder %s59, %s60
    %p69 = scmp.eq.s32.totalorder %s14, 0
    %p70 = por %p68, %p69
    %p71 = scmp.ne.s32.totalorder %s59, %s60
    %p72 = scmp.eq.s32.totalorder %s15, 1
    %p73 = por %p71, %p72
    %p75 = scmp.ne.s32.totalorder %s60, %s74
    %p76 = scmp.eq.s32.totalorder %s15, 0
    %p77 = por %p75, %p76
    %s79 = sadd.s32 %s78, 1
    %p82 = scmp.eq.s32.totalorder %s9, 1
    %p83 = scmp.ne.s32.totalorder %s78, %s80
    %p84 = scmp.eq.s32.totalorder %s9, 0
    %p85 = por %p83, %p84
    %p86 = scmp.ne.s32.totalorder %s78, %s80
    %p87 = scmp.eq.s32.totalorder %s14, 1
    %p88 = por %p86, %p87
    %p89 = scmp.ne.s32.totalorder %s80, %s81
    %p90 = scmp.eq.s32.totalorder %s14, 0
    %p91 = por %p89, %p90
    %p92 = scmp.ne.s32.totalorder %s80, %s81
    %p93 = scmp.eq.s32.totalorder %s15, 1
    %p94 = por %p92, %p93
    %p96 = scmp.ne.s32.totalorder %s81, %s95
    %p97 = scmp.eq.s32.totalorder %s15, 0
    %p98 = por %p96, %p97
    %s99 = ssub.s32 %s16, %s28
    %s100 = ssub.s32 %s17, %s24
    %s101 = sor.u32 %s99, %s100
    %p102 = scmp.eq.s32.totalorder %s101, 0
    %s104 = sadd.s32 %s103, 1
    %s105 = scalar_select %p102, %s103, %s104
    %p108 = pneg %p102
    %p109 = scmp.eq.s32.totalorder %s9, 1
    %p110 = por %p108, %p109
    %p111 = scmp.ne.s32.totalorder %s103, %s106
    %p112 = scmp.eq.s32.totalorder %s9, 0
    %p113 = por %p111, %p112
    %p114 = scmp.ne.s32.totalorder %s103, %s106
    %p115 = scmp.eq.s32.totalorder %s14, 1
    %p116 = por %p114, %p115
    %p117 = scmp.ne.s32.totalorder %s106, %s107
    %p118 = scmp.eq.s32.totalorder %s14, 0
    %p119 = por %p117, %p118
    %p120 = scmp.ne.s32.totalorder %s106, %s107
    %p121 = scmp.eq.s32.totalorder %s15, 1
    %p122 = por %p120, %p121
    %p124 = scmp.ne.s32.totalorder %s107, %s123
    %p125 = scmp.eq.s32.totalorder %s15, 0
    %p126 = por %p124, %p125
    %p127 = scmp.le.s32.totalorder 1, %s9
    %p128 = scmp.lt.s32.totalorder %s9, 3
    %p129 = pnand %p127, %p128
    %p130 = pneg %p129
    // Predicated region
    $region9: #{a_call__.22} parent=5 // pred_check
      _
    $region10: #{a_call__.22} parent=5 // pred_check_branch
      %132 = sbr.rel (%p129) target = $region12
    $region11: #{a_call__.22} parent=5 // pred_region
      %s133 = ssub.s32 %s9, 1
      // Predicated region
      $region13: #{a_call__.22} parent=11 // pred_check
        %p134 = pneg %p70
      $region14: #{a_call__.22} parent=11 // pred_check_branch
        %136 = sbr.rel (%p134) target = $region16
      $region15: #{a_call__.22} parent=11 // pred_region
        _
      $region16: #{a_call__.22} parent=11 // pred_fallthru
        _
      // Predicated region
      $region17: #{a_call__.22} parent=11 // pred_check
        %p137 = pneg %p91
      $region18: #{a_call__.22} parent=11 // pred_check_branch
        %139 = sbr.rel (%p137) target = $region20
      $region19: #{a_call__.22} parent=11 // pred_region
        _
      $region20: #{a_call__.22} parent=11 // pred_fallthru
        _
    $region12: #{a_call__.22} parent=5 // pred_fallthru
      _
    %p140 = scmp.lt.s32.totalorder %s9, 2
    // Predicated region
    $region21: #{a_call__.22} parent=5 // pred_check
      %p141 = pneg %p140
    $region22: #{a_call__.22} parent=5 // pred_check_branch
      %143 = sbr.rel (%p141) target = $region24
    $region23: #{a_call__.22} parent=5 // pred_region
      // Predicated region
      $region25: #{a_call__.22} parent=23 // pred_check
        %p144 = pneg %p43
      $region26: #{a_call__.22} parent=23 // pred_check_branch
        %146 = sbr.rel (%p144) target = $region28
      $region27: #{a_call__.22} parent=23 // pred_region
        %s147 = smul.u32 8, %s17
        %p148 = scmp.lt.s32.totalorder %s16, 1
        %s149 = scalar_select %p148, %s16, 1
        %p150 = scmp.lt.s32.totalorder %s147, 7
        %s151 = scalar_select %p150, %s147, 7
        %s152 = smul.addr %s149, 8
        %s153 = sadd.s32 %s151, %s152
        %s154 = smul.addr %s153, 4
        %s155 = scalar_lea.vmem %s0, %s154
        %s156 = smul.u32 8, %s17
      $region28: #{a_call__.22} parent=23 // pred_fallthru
        _
    $region24: #{a_call__.22} parent=5 // pred_fallthru
      _
    %p157 = scmp.le.s32.totalorder 1, %s9
    %p158 = scmp.lt.s32.totalorder %s9, 3
    %p159 = pnand %p157, %p158
    %p160 = pneg %p159
    // Predicated region
    $region29: #{a_call__.22} parent=5 // pred_check
      _
    $region30: #{a_call__.22} parent=5 // pred_check_branch
      %162 = sbr.rel (%p159) target = $region32
    $region31: #{a_call__.22} parent=5 // pred_region
      %s163 = ssub.s32 %s9, 1
      %s164 = smul.u32 8, %s19
      %p165 = scmp.lt.s32.totalorder %s18, 1
      %s166 = scalar_select %p165, %s18, 1
      %p167 = scmp.lt.s32.totalorder %s164, 7
      %s168 = scalar_select %p167, %s164, 7
      %s169 = smul.addr %s166, 8
      %s170 = sadd.s32 %s168, %s169
      %s171 = smul.addr %s170, 4
      %s172 = scalar_lea.vmem %s0, %s171
      %p173 = pneg %p49
      %p174 = pneg %p46
      %p175 = pneg %p70
      %p176 = pneg %p67
      %p177 = pneg %p91
      %p178 = pneg %p88
      %p179 = pneg %p119
      %p180 = pneg %p116
      %s181 = smul.u32 8, %s19
      %p182 = scmp.lt.s32.totalorder %s18, 1
      %s183 = scalar_select %p182, %s18, 1
      %p184 = scmp.lt.s32.totalorder %s181, 7
      %s185 = scalar_select %p184, %s181, 7
      %s186 = smul.addr %s183, 8
      %s187 = sadd.s32 %s185, %s186
      %s188 = smul.addr %s187, 4
      %s189 = scalar_lea.vmem %s3, %s188
      %s190 = smul.u32 8, %s19
      %p191 = scmp.lt.s32.totalorder %s18, 1
      %s192 = scalar_select %p191, %s18, 1
      %p193 = scmp.lt.s32.totalorder %s190, 7
      %s194 = scalar_select %p193, %s190, 7
      %s195 = smul.addr %s192, 8
      %s196 = sadd.s32 %s194, %s195
      %s197 = smul.addr %s196, 4
      %s198 = scalar_lea.vmem %s0, %s197
      %s199 = smul.u32 8, %s19
      %s200 = smul.u32 8, %s19
      %p201 = scmp.lt.s32.totalorder %s18, 1
      %s202 = scalar_select %p201, %s18, 1
      %p203 = scmp.lt.s32.totalorder %s200, 7
      %s204 = scalar_select %p203, %s200, 7
      %s205 = smul.addr %s202, 8
      %s206 = sadd.s32 %s204, %s205
      %s207 = smul.addr %s206, 4
      %s208 = scalar_lea.vmem %s3, %s207
      %s209 = smul.u32 8, %s19
      %v211 = vld [vmem:[%s198] sm:$0xf]
      %v212 = vld [vmem:[%s198 + $0x4] sm:$0xf]
      %v213 = vld [vmem:[%s198 + $0x8] sm:$0xf]
      %v214 = vld [vmem:[%s198 + $0xc] sm:$0xf]
      %v215 = vld [vmem:[%s198 + $0x10] sm:$0xf]
      %v216 = vld [vmem:[%s198 + $0x14] sm:$0xf]
      %v217 = vld [vmem:[%s198 + $0x18] sm:$0xf]
      %v218 = vld [vmem:[%s198 + $0x1c] sm:$0xf]
      %v219 = vld [vmem:[%s1] sm:$0xf]
      %v220 = vld [vmem:[%s1 + $0x4] sm:$0xf]
      %v221 = vld [vmem:[%s2] sm:$0x1]
      %v223 = vlaneseq
      %v224 = vshrl.u32 %v223, 7
      %v225 = vsub.s32 0, %v224
      %v226 = vrot.slane %v221, %v225
      %v236 = vunpack.c.l.b16 %v211
      %v237 = vunpack.c.l.b16 %v212
      %v238 = vunpack.c.l.b16 %v213
      %v239 = vunpack.c.l.b16 %v214
      %v240 = vunpack.c.l.b16 %v215
      %v241 = vunpack.c.l.b16 %v216
      %v242 = vunpack.c.l.b16 %v217
      %v243 = vunpack.c.l.b16 %v218
      %v244 = vpack.c.b16 %v237, %v236
      %v245 = vpack.c.b16 %v239, %v238
      %v246 = vpack.c.b16 %v241, %v240
      %v247 = vpack.c.b16 %v243, %v242
      %v250 = vunpack.c.l.b16 %v219
      %v251 = vunpack.c.l.b16 %v220
      %v252 = vpack.c.b16 %v251, %v250
      %vm254 = vcmask 130048
      %v256 = vsel %vm254, %v244, 0
      %v259 = vsel %vm254, %v245, 0
      %v262 = vsel %vm254, %v246, 0
      %v265 = vsel %vm254, %v247, 0
      %267 = vmatprep.subr.bf16.mxu0 0
      %268 = vmatpush1.bf16.msra.mxu0 %v252
      %269 = vmatprep.subr.bf16.mxu0 0
      %270 = vmatpush1.bf16.msra.mxu0 0
      %271 = vmatprep.subr.bf16.mxu0 0
      %272 = vmatpush1.bf16.msra.mxu0 0
      %273 = vmatprep.subr.bf16.mxu0 0
      %274 = vmatpush1.bf16.msra.mxu0 0
      %275 = vmatprep.subr.bf16.mxu0 0
      %276 = vmatpush1.bf16.msra.mxu0 0
      %277 = vmatprep.subr.bf16.mxu0 0
      %278 = vmatpush1.bf16.msra.mxu0 0
      %279 = vmatprep.subr.bf16.mxu0 0
      %280 = vmatpush1.bf16.msra.mxu0 0
      %281 = vmatprep.subr.bf16.mxu0 0
      %282 = vmatpush1.bf16.msra.mxu0 0
      %283 = vmatprep.subr.bf16.mxu0 0
      %284 = vmatpush1.bf16.msra.mxu0 0
      %285 = vmatprep.subr.bf16.mxu0 0
      %286 = vmatpush1.bf16.msra.mxu0 0
      %287 = vmatprep.subr.bf16.mxu0 0
      %288 = vmatpush1.bf16.msra.mxu0 0
      %289 = vmatprep.subr.bf16.mxu0 0
      %290 = vmatpush1.bf16.msra.mxu0 0
      %291 = vmatprep.subr.bf16.mxu0 0
      %292 = vmatpush1.bf16.msra.mxu0 0
      %293 = vmatprep.subr.bf16.mxu0 0
      %294 = vmatpush1.bf16.msra.mxu0 0
      %295 = vmatprep.subr.bf16.mxu0 0
      %296 = vmatpush1.bf16.msra.mxu0 0
      %297 = vmatprep.subr.bf16.mxu0 0
      %298 = vmatpush1.bf16.msra.mxu0 0
      %299 = vmatprep.mubr.bf16.mxu0 0
      %300 = vmatmul.mubr.bf16.gmra.mrb[0].mxu0 %v256
      %v301 = vpop.f32.mrb[0].mxu0
      %v302 = vadd.f32 %v226, %v301
      %v303 = vpop.f32.mrb[0].mxu0
      %v304 = vpop.f32.mrb[0].mxu0
      %v305 = vadd.f32 %v226, %v304
      %v306 = vpop.f32.mrb[0].mxu0
      %307 = vmatprep.mubr.bf16.mxu0 0
      %308 = vmatmul.mubr.bf16.gmra.mrb[0].mxu0 %v259
      %v309 = vpop.f32.mrb[0].mxu0
      %v310 = vadd.f32 %v226, %v309
      %v311 = vpop.f32.mrb[0].mxu0
      %v312 = vpop.f32.mrb[0].mxu0
      %v313 = vadd.f32 %v226, %v312
      %v314 = vpop.f32.mrb[0].mxu0
      %315 = vmatprep.mubr.bf16.mxu0 0
      %316 = vmatmul.mubr.bf16.gmra.mrb[0].mxu0 %v262
      %v317 = vpop.f32.mrb[0].mxu0
      %v318 = vadd.f32 %v226, %v317
      %v319 = vpop.f32.mrb[0].mxu0
      %v320 = vpop.f32.mrb[0].mxu0
      %v321 = vadd.f32 %v226, %v320
      %v322 = vpop.f32.mrb[0].mxu0
      %323 = vmatprep.mubr.bf16.mxu0 0
      %324 = vmatmul.mubr.bf16.gmra.mrb[0].mxu0 %v265
      %v325 = vpop.f32.mrb[0].mxu0
      %v326 = vadd.f32 %v226, %v325
      %v327 = vpop.f32.mrb[0].mxu0
      %v328 = vpop.f32.mrb[0].mxu0
      %v329 = vadd.f32 %v226, %v328
      %v330 = vpop.f32.mrb[0].mxu0
      %331 = vdwg.mxu0
      %v332 = vmax.f32 %v302, 0.0
      %v333 = vmax.f32 %v305, 0.0
      %v334 = vmax.f32 %v310, 0.0
      %v335 = vmax.f32 %v313, 0.0
      %v336 = vmax.f32 %v318, 0.0
      %v337 = vmax.f32 %v321, 0.0
      %v338 = vmax.f32 %v326, 0.0
      %v339 = vmax.f32 %v329, 0.0
      %v340 = vpack.c.bf16 %v333, %v332
      %v341 = vpack.c.bf16 %v335, %v334
      %v342 = vpack.c.bf16 %v337, %v336
      %v343 = vpack.c.bf16 %v339, %v338
      %v348 = vunpack.c.l.b16 %v340
      %v349 = vunpack.c.h.b16 %v340
      %v350 = vunpack.c.l.b16 %v341
      %v351 = vunpack.c.h.b16 %v341
      %v352 = vunpack.c.l.b16 %v342
      %v353 = vunpack.c.h.b16 %v342
      %v354 = vunpack.c.l.b16 %v343
      %v355 = vunpack.c.h.b16 %v343
      %v356 = vpack.c.b16 %v348, %v348
      %v357 = vpack.c.b16 %v349, %v349
      %v358 = vpack.c.b16 %v350, %v350
      %v359 = vpack.c.b16 %v351, %v351
      %v360 = vpack.c.b16 %v352, %v352
      %v361 = vpack.c.b16 %v353, %v353
      %v362 = vpack.c.b16 %v354, %v354
      %v363 = vpack.c.b16 %v355, %v355
      %vm372 = vcmask 584704
      %373 = vst.msk [vmem:[%s208] sm:$0xf] %vm372, %v356
      %374 = vst.msk [vmem:[%s208 + $0x4] sm:$0xf] %vm372, %v357
      %375 = vst.msk [vmem:[%s208 + $0x8] sm:$0xf] %vm372, %v358
      %376 = vst.msk [vmem:[%s208 + $0xc] sm:$0xf] %vm372, %v359
      %377 = vst.msk [vmem:[%s208 + $0x10] sm:$0xf] %vm372, %v360
      %378 = vst.msk [vmem:[%s208 + $0x14] sm:$0xf] %vm372, %v361
      %379 = vst.msk [vmem:[%s208 + $0x18] sm:$0xf] %vm372, %v362
      %380 = vst.msk [vmem:[%s208 + $0x1c] sm:$0xf] %vm372, %v363
      %s381 = smul.u32 8, %s19
      %p382 = scmp.lt.s32.totalorder %s18, 1
      %s383 = scalar_select %p382, %s18, 1
      %p384 = scmp.lt.s32.totalorder %s381, 7
      %s385 = scalar_select %p384, %s381, 7
      %s386 = smul.addr %s383, 8
      %s387 = sadd.s32 %s385, %s386
      %s388 = smul.addr %s387, 4
      %s389 = scalar_lea.vmem %s3, %s388
      // Predicated region
      $region33: #{a_call__.22} parent=31 // pred_check
        %p390 = pneg %p116
      $region34: #{a_call__.22} parent=31 // pred_check_branch
        %392 = sbr.rel (%p390) target = $region36
      $region35: #{a_call__.22} parent=31 // pred_region
        %s393 = smul.u32 8, %s19
      $region36: #{a_call__.22} parent=31 // pred_fallthru
        _
    $region32: #{a_call__.22} parent=5 // pred_fallthru
      _
    %p394 = scmp.le.s32.totalorder 2, %s9
    // Predicated region
    $region37: #{a_call__.22} parent=5 // pred_check
      %p395 = pneg %p394
    $region38: #{a_call__.22} parent=5 // pred_check_branch
      %397 = sbr.rel (%p395) target = $region40
    $region39: #{a_call__.22} parent=5 // pred_region
      %s398 = ssub.s32 %s9, 2
      // Predicated region
      $region41: #{a_call__.22} parent=39 // pred_check
        %p399 = pneg %p122
      $region42: #{a_call__.22} parent=39 // pred_check_branch
        %401 = sbr.rel (%p399) target = $region44
      $region43: #{a_call__.22} parent=39 // pred_region
        %s402 = smul.u32 8, %s21
        %p403 = scmp.lt.s32.totalorder %s20, 1
        %s404 = scalar_select %p403, %s20, 1
        %p405 = scmp.lt.s32.totalorder %s402, 7
        %s406 = scalar_select %p405, %s402, 7
        %s407 = smul.addr %s404, 8
        %s408 = sadd.s32 %s406, %s407
        %s409 = smul.addr %s408, 4
        %s410 = scalar_lea.vmem %s3, %s409
      $region44: #{a_call__.22} parent=39 // pred_fallthru
        _
    $region40: #{a_call__.22} parent=5 // pred_fallthru
      _
  $region6: #{a_call__.22} parent=0 // loop_footer
    %s13 = sadd.s32 1, %s9
  $region7: #{a_call__.22} parent=0 // loop_footer_branch
    %8 = sbr.rel target = $region3
  $region8: #{a_call__.22} parent=0 // loop_exit
    _

// kernel: a_call__.23
$region0: #{a_call__.23}
  #allocation0 [shape = 'u32[]', space=smem, size = 0x4, offset = 0x4, fixed_abs, tag = 'smem constant byte address 0x4 - core index']
  #allocation1 [shape = 'u32[144,128]{1,0:T(1,128)}', space=vmem, size = 0x12000, scoped, tag = 'internal scratch']
  %s0 = inlined_call_operand.vmem [shape: bf16[2,20,5,72], index: 0, kind: input, shape index: {}]
  %s1 = inlined_call_operand.vmem [shape: f32[9,1,72], index: 1, kind: input, shape index: {}]
  %s2 = inlined_call_operand.vmem [shape: f32[1,1,72], index: 2, kind: input, shape index: {}]
  %s3 = inlined_call_operand.vmem [shape: bf16[2,4,4,72], index: 3, kind: output, shape index: {}]
  %s4 = sld [smem:[#allocation0]]
  $region45: #{a_call__.23} parent=0
    _
  %s6 = ssub.s32 1, %s4
  %s7 = scalar_select 0, %s6, %s4
  loop: start=0, step=1, limit=4
  $region2: #{a_call__.23} parent=0 // loop_pre_header
    _
  $region3: #{a_call__.23} parent=0 // loop_header
    %s9 = sphi 0, %s13
    %p10 = scmp.ge.s32.totalorder %s9, 4
    %s19 = sphi 0, %s21
    %s22 = sphi 0, %s19
    %s23 = sphi 0, %s22
    %s39 = sphi 0, %s23
    %s43 = sphi 0, %s43
    %s45 = sphi 0, %s43
    %s46 = sphi 0, %s45
    %s60 = sphi 0, %s46
    %s64 = sphi 0, %s64
    %s66 = sphi 0, %s64
    %s67 = sphi 0, %s66
    %s81 = sphi 0, %s67
    %s87 = sphi 0, %s89
    %s90 = sphi 0, %s87
    %s91 = sphi 0, %s90
    %s107 = sphi 0, %s91
  $region4: #{a_call__.23} parent=0 // loop_header_branch
    %12 = sbr.rel (%p10) target = $region8
  $region5: #{a_call__.23} parent=0 // loop_body
    %s14 = ssub.s32 %s9, 1
    %s15 = ssub.s32 %s9, 2
    %s16 = sadd.s32 %s9, 1
    %s17 = ssub.s32 %s9, %s16
    %p18 = scmp.eq.s32.totalorder %s17, 0
    %s20 = sadd.s32 %s19, 1
    %s21 = scalar_select %p18, %s19, %s20
    %p24 = pneg %p18
    %p25 = scmp.eq.s32.totalorder %s9, 1
    %p26 = por %p24, %p25
    %p27 = scmp.ne.s32.totalorder %s19, %s22
    %p28 = scmp.eq.s32.totalorder %s9, 0
    %p29 = por %p27, %p28
    %p30 = scmp.ne.s32.totalorder %s19, %s22
    %p31 = scmp.eq.s32.totalorder %s14, 1
    %p32 = por %p30, %p31
    %p33 = scmp.ne.s32.totalorder %s22, %s23
    %p34 = scmp.eq.s32.totalorder %s14, 0
    %p35 = por %p33, %p34
    %p36 = scmp.ne.s32.totalorder %s22, %s23
    %p37 = scmp.eq.s32.totalorder %s15, 1
    %p38 = por %p36, %p37
    %p40 = scmp.ne.s32.totalorder %s23, %s39
    %p41 = scmp.eq.s32.totalorder %s15, 0
    %p42 = por %p40, %p41
    %s44 = sadd.s32 %s43, 1
    %p47 = scmp.eq.s32.totalorder %s9, 1
    %p48 = scmp.ne.s32.totalorder %s43, %s45
    %p49 = scmp.eq.s32.totalorder %s9, 0
    %p50 = por %p48, %p49
    %p51 = scmp.ne.s32.totalorder %s43, %s45
    %p52 = scmp.eq.s32.totalorder %s14, 1
    %p53 = por %p51, %p52
    %p54 = scmp.ne.s32.totalorder %s45, %s46
    %p55 = scmp.eq.s32.totalorder %s14, 0
    %p56 = por %p54, %p55
    %p57 = scmp.ne.s32.totalorder %s45, %s46
    %p58 = scmp.eq.s32.totalorder %s15, 1
    %p59 = por %p57, %p58
    %p61 = scmp.ne.s32.totalorder %s46, %s60
    %p62 = scmp.eq.s32.totalorder %s15, 0
    %p63 = por %p61, %p62
    %s65 = sadd.s32 %s64, 1
    %p68 = scmp.eq.s32.totalorder %s9, 1
    %p69 = scmp.ne.s32.totalorder %s64, %s66
    %p70 = scmp.eq.s32.totalorder %s9, 0
    %p71 = por %p69, %p70
    %p72 = scmp.ne.s32.totalorder %s64, %s66
    %p73 = scmp.eq.s32.totalorder %s14, 1
    %p74 = por %p72, %p73
    %p75 = scmp.ne.s32.totalorder %s66, %s67
    %p76 = scmp.eq.s32.totalorder %s14, 0
    %p77 = por %p75, %p76
    %p78 = scmp.ne.s32.totalorder %s66, %s67
    %p79 = scmp.eq.s32.totalorder %s15, 1
    %p80 = por %p78, %p79
    %p82 = scmp.ne.s32.totalorder %s67, %s81
    %p83 = scmp.eq.s32.totalorder %s15, 0
    %p84 = por %p82, %p83
    %s85 = ssub.s32 %s9, %s16
    %p86 = scmp.eq.s32.totalorder %s85, 0
    %s88 = sadd.s32 %s87, 1
    %s89 = scalar_select %p86, %s87, %s88
    %p92 = pneg %p86
    %p93 = scmp.eq.s32.totalorder %s9, 1
    %p94 = por %p92, %p93
    %p95 = scmp.ne.s32.totalorder %s87, %s90
    %p96 = scmp.eq.s32.totalorder %s9, 0
    %p97 = por %p95, %p96
    %p98 = scmp.ne.s32.totalorder %s87, %s90
    %p99 = scmp.eq.s32.totalorder %s14, 1
    %p100 = por %p98, %p99
    %p101 = scmp.ne.s32.totalorder %s90, %s91
    %p102 = scmp.eq.s32.totalorder %s14, 0
    %p103 = por %p101, %p102
    %p104 = scmp.ne.s32.totalorder %s90, %s91
    %p105 = scmp.eq.s32.totalorder %s15, 1
    %p106 = por %p104, %p105
    %p108 = scmp.ne.s32.totalorder %s91, %s107
    %p109 = scmp.eq.s32.totalorder %s15, 0
    %p110 = por %p108, %p109
    %p111 = scmp.le.s32.totalorder 1, %s9
    %p112 = scmp.lt.s32.totalorder %s9, 3
    %p113 = pnand %p111, %p112
    %p114 = pneg %p113
    // Predicated region
    $region9: #{a_call__.23} parent=5 // pred_check
      _
    $region10: #{a_call__.23} parent=5 // pred_check_branch
      %116 = sbr.rel (%p113) target = $region12
    $region11: #{a_call__.23} parent=5 // pred_region
      %s117 = ssub.s32 %s9, 1
      // Predicated region
      $region13: #{a_call__.23} parent=11 // pred_check
        %p118 = pneg %p56
      $region14: #{a_call__.23} parent=11 // pred_check_branch
        %120 = sbr.rel (%p118) target = $region16
      $region15: #{a_call__.23} parent=11 // pred_region
        _
      $region16: #{a_call__.23} parent=11 // pred_fallthru
        _
      // Predicated region
      $region17: #{a_call__.23} parent=11 // pred_check
        %p121 = pneg %p77
      $region18: #{a_call__.23} parent=11 // pred_check_branch
        %123 = sbr.rel (%p121) target = $region20
      $region19: #{a_call__.23} parent=11 // pred_region
        _
      $region20: #{a_call__.23} parent=11 // pred_fallthru
        _
    $region12: #{a_call__.23} parent=5 // pred_fallthru
      _
    %p124 = scmp.lt.s32.totalorder %s9, 2
    // Predicated region
    $region21: #{a_call__.23} parent=5 // pred_check
      %p125 = pneg %p124
    $region22: #{a_call__.23} parent=5 // pred_check_branch
      %127 = sbr.rel (%p125) target = $region24
    $region23: #{a_call__.23} parent=5 // pred_region
      // Predicated region
      $region25: #{a_call__.23} parent=23 // pred_check
        %p128 = pneg %p29
      $region26: #{a_call__.23} parent=23 // pred_check_branch
        %130 = sbr.rel (%p128) target = $region28
      $region27: #{a_call__.23} parent=23 // pred_region
        %p131 = scmp.lt.s32.totalorder %s9, 1
        %s132 = scalar_select %p131, %s9, 1
        %s133 = smul.addr %s132, 20
        %s134 = smul.addr %s133, 4
        %s135 = scalar_lea.vmem %s0, %s134
      $region28: #{a_call__.23} parent=23 // pred_fallthru
        _
    $region24: #{a_call__.23} parent=5 // pred_fallthru
      _
    %p136 = scmp.le.s32.totalorder 1, %s9
    %p137 = scmp.lt.s32.totalorder %s9, 3
    %p138 = pnand %p136, %p137
    %p139 = pneg %p138
    // Predicated region
    $region29: #{a_call__.23} parent=5 // pred_check
      _
    $region30: #{a_call__.23} parent=5 // pred_check_branch
      %141 = sbr.rel (%p138) target = $region32
    $region31: #{a_call__.23} parent=5 // pred_region
      %s142 = ssub.s32 %s9, 1
      %p143 = scmp.lt.s32.totalorder %s14, 1
      %s144 = scalar_select %p143, %s14, 1
      %s145 = smul.addr %s144, 20
      %s146 = smul.addr %s145, 4
      %s147 = scalar_lea.vmem %s0, %s146
      %p148 = pneg %p35
      %p149 = pneg %p32
      %p150 = pneg %p56
      %p151 = pneg %p53
      %p152 = pneg %p77
      %p153 = pneg %p74
      %p154 = pneg %p103
      %p155 = pneg %p100
      %p156 = scmp.lt.s32.totalorder %s14, 1
      %s157 = scalar_select %p156, %s14, 1
      %s158 = smul.addr %s157, 4
      %s159 = smul.addr %s158, 2
      %s160 = scalar_lea.vmem %s3, %s159
      %p161 = scmp.lt.s32.totalorder %s14, 1
      %s162 = scalar_select %p161, %s14, 1
      %s163 = smul.addr %s162, 20
      %s164 = smul.addr %s163, 4
      %s165 = scalar_lea.vmem %s0, %s164
      %p166 = scmp.lt.s32.totalorder %s14, 1
      %s167 = scalar_select %p166, %s14, 1
      %s168 = smul.addr %s167, 4
      %s169 = smul.addr %s168, 2
      %s170 = scalar_lea.vmem %s3, %s169
      %v171 = vld [vmem:[%s165] sm:$0x3]
      %v172 = vld [vmem:[%s165 + $0x4] sm:$0x3]
      %v173 = vld [vmem:[%s165 + $0x8] sm:$0x3]
      %v174 = vld [vmem:[%s165 + $0xc] sm:$0x3]
      %v175 = vunpack.c.l.bf16 %v171
      %v176 = vunpack.c.l.bf16 %v172
      %v177 = vunpack.c.l.bf16 %v173
      %v178 = vunpack.c.l.bf16 %v174
      %v179 = vld [vmem:[%s1] sm:$0x1]
      %v181 = vlaneseq
      %v182 = vshrl.u32 %v181, 7
      %v183 = vsub.s32 0, %v182
      %v184 = vrot.slane %v179, %v183
      %v186 = vmul.f32 %v175, %v184
      %v187 = vmul.f32 %v176, %v184
      %v188 = vmul.f32 %v177, %v184
      %v189 = vmul.f32 %v178, %v184
      %v190 = vadd.f32 %v186, 0.0
      %v191 = vadd.f32 %v187, 0.0
      %v192 = vadd.f32 %v188, 0.0
      %v193 = vadd.f32 %v189, 0.0
      %s194 = scalar_lea.vmem %s165, 20
      %v195 = vld [vmem:[%s194] sm:$0x3]
      %v196 = vld [vmem:[%s194 + $0x4] sm:$0x3]
      %v197 = vld [vmem:[%s194 + $0x8] sm:$0x3]
      %v198 = vld [vmem:[%s194 + $0xc] sm:$0x3]
      %v199 = vunpack.c.l.bf16 %v195
      %v200 = vunpack.c.l.bf16 %v196
      %v201 = vunpack.c.l.bf16 %v197
      %v202 = vunpack.c.l.bf16 %v198
      %s203 = scalar_lea.vmem %s1, 1
      %v204 = vld [vmem:[%s203] sm:$0x1]
      %v206 = vlaneseq
      %v207 = vshrl.u32 %v206, 7
      %v208 = vsub.s32 0, %v207
      %v209 = vrot.slane %v204, %v208
      %v211 = vmul.f32 %v199, %v209
      %v212 = vmul.f32 %v200, %v209
      %v213 = vmul.f32 %v201, %v209
      %v214 = vmul.f32 %v202, %v209
      %v215 = vadd.f32 %v190, %v211
      %v216 = vadd.f32 %v191, %v212
      %v217 = vadd.f32 %v192, %v213
      %v218 = vadd.f32 %v193, %v214
      %v219 = vld [vmem:[%s165] sm:$0x7]
      %v220 = vld [vmem:[%s165 + $0x4] sm:$0x7]
      %v221 = vld [vmem:[%s165 + $0x8] sm:$0x7]
      %v222 = vld [vmem:[%s165 + $0xc] sm:$0x7]
      %v223 = vunpack.c.l.bf16 %v219
      %v224 = vunpack.c.l.bf16 %v220
      %v225 = vunpack.c.l.bf16 %v221
      %v226 = vunpack.c.l.bf16 %v222
      %s227 = scalar_lea.vmem %s1, 2
      %v228 = vld [vmem:[%s227] sm:$0x1]
      %v230 = vlaneseq
      %v231 = vshrl.u32 %v230, 7
      %v232 = vsub.s32 0, %v231
      %v233 = vrot.slane %v228, %v232
      %v235 = vmul.f32 %v223, %v233
      %v236 = vmul.f32 %v224, %v233
      %v237 = vmul.f32 %v225, %v233
      %v238 = vmul.f32 %v226, %v233
      %v243 = vrot.slane %v235, 1
      %v244 = vrot.slane %v236, 1
      %v245 = vrot.slane %v237, 1
      %v246 = vrot.slane %v238, 1
      %v251 = vadd.f32 %v215, %v243
      %v252 = vadd.f32 %v216, %v244
      %v253 = vadd.f32 %v217, %v245
      %v254 = vadd.f32 %v218, %v246
      %s255 = scalar_lea.vmem %s165, 40
      %v256 = vld [vmem:[%s255] sm:$0x3]
      %v257 = vld [vmem:[%s255 + $0x4] sm:$0x3]
      %v258 = vld [vmem:[%s255 + $0x8] sm:$0x3]
      %v259 = vld [vmem:[%s255 + $0xc] sm:$0x3]
      %v260 = vunpack.c.l.bf16 %v256
      %v261 = vunpack.c.l.bf16 %v257
      %v262 = vunpack.c.l.bf16 %v258
      %v263 = vunpack.c.l.bf16 %v259
      %s264 = scalar_lea.vmem %s1, 3
      %v265 = vld [vmem:[%s264] sm:$0x1]
      %v267 = vlaneseq
      %v268 = vshrl.u32 %v267, 7
      %v269 = vsub.s32 0, %v268
      %v270 = vrot.slane %v265, %v269
      %v272 = vmul.f32 %v260, %v270
      %v273 = vmul.f32 %v261, %v270
      %v274 = vmul.f32 %v262, %v270
      %v275 = vmul.f32 %v263, %v270
      %v276 = vadd.f32 %v251, %v272
      %v277 = vadd.f32 %v252, %v273
      %v278 = vadd.f32 %v253, %v274
      %v279 = vadd.f32 %v254, %v275
      %s280 = scalar_lea.vmem %s165, 60
      %v281 = vld [vmem:[%s280] sm:$0x3]
      %v282 = vld [vmem:[%s280 + $0x4] sm:$0x3]
      %v283 = vld [vmem:[%s280 + $0x8] sm:$0x3]
      %v284 = vld [vmem:[%s280 + $0xc] sm:$0x3]
      %v285 = vunpack.c.l.bf16 %v281
      %v286 = vunpack.c.l.bf16 %v282
      %v287 = vunpack.c.l.bf16 %v283
      %v288 = vunpack.c.l.bf16 %v284
      %s289 = scalar_lea.vmem %s1, 4
      %v290 = vld [vmem:[%s289] sm:$0x1]
      %v292 = vlaneseq
      %v293 = vshrl.u32 %v292, 7
      %v294 = vsub.s32 0, %v293
      %v295 = vrot.slane %v290, %v294
      %v297 = vmul.f32 %v285, %v295
      %v298 = vmul.f32 %v286, %v295
      %v299 = vmul.f32 %v287, %v295
      %v300 = vmul.f32 %v288, %v295
      %v301 = vadd.f32 %v276, %v297
      %v302 = vadd.f32 %v277, %v298
      %v303 = vadd.f32 %v278, %v299
      %v304 = vadd.f32 %v279, %v300
      %v305 = vld [vmem:[%s255] sm:$0x7]
      %v306 = vld [vmem:[%s255 + $0x4] sm:$0x7]
      %v307 = vld [vmem:[%s255 + $0x8] sm:$0x7]
      %v308 = vld [vmem:[%s255 + $0xc] sm:$0x7]
      %v309 = vunpack.c.l.bf16 %v305
      %v310 = vunpack.c.l.bf16 %v306
      %v311 = vunpack.c.l.bf16 %v307
      %v312 = vunpack.c.l.bf16 %v308
      %s313 = scalar_lea.vmem %s1, 5
      %v314 = vld [vmem:[%s313] sm:$0x1]
      %v316 = vlaneseq
      %v317 = vshrl.u32 %v316, 7
      %v318 = vsub.s32 0, %v317
      %v319 = vrot.slane %v314, %v318
      %v321 = vmul.f32 %v309, %v319
      %v322 = vmul.f32 %v310, %v319
      %v323 = vmul.f32 %v311, %v319
      %v324 = vmul.f32 %v312, %v319
      %v329 = vrot.slane %v321, 1
      %v330 = vrot.slane %v322, 1
      %v331 = vrot.slane %v323, 1
      %v332 = vrot.slane %v324, 1
      %v337 = vadd.f32 %v301, %v329
      %v338 = vadd.f32 %v302, %v330
      %v339 = vadd.f32 %v303, %v331
      %v340 = vadd.f32 %v304, %v332
      %s341 = scalar_lea.vmem %s165, 4
      %v342 = vld [vmem:[%s341] sm:$0x3]
      %v343 = vld [vmem:[%s341 + $0x4] sm:$0x3]
      %v344 = vld [vmem:[%s341 + $0x8] sm:$0x3]
      %v345 = vld [vmem:[%s341 + $0xc] sm:$0x3]
      %v346 = vunpack.c.l.bf16 %v342
      %v347 = vunpack.c.l.bf16 %v343
      %v348 = vunpack.c.l.bf16 %v344
      %v349 = vunpack.c.l.bf16 %v345
      %s350 = scalar_lea.vmem %s1, 6
      %v351 = vld [vmem:[%s350] sm:$0x1]
      %v353 = vlaneseq
      %v354 = vshrl.u32 %v353, 7
      %v355 = vsub.s32 0, %v354
      %v356 = vrot.slane %v351, %v355
      %v358 = vmul.f32 %v346, %v356
      %v359 = vmul.f32 %v347, %v356
      %v360 = vmul.f32 %v348, %v356
      %v361 = vmul.f32 %v349, %v356
      %v362 = vadd.f32 %v337, %v358
      %v363 = vadd.f32 %v338, %v359
      %v364 = vadd.f32 %v339, %v360
      %v365 = vadd.f32 %v340, %v361
      %s366 = scalar_lea.vmem %s165, 24
      %v367 = vld [vmem:[%s366] sm:$0x3]
      %v368 = vld [vmem:[%s366 + $0x4] sm:$0x3]
      %v369 = vld [vmem:[%s366 + $0x8] sm:$0x3]
      %v370 = vld [vmem:[%s366 + $0xc] sm:$0x3]
      %v371 = vunpack.c.l.bf16 %v367
      %v372 = vunpack.c.l.bf16 %v368
      %v373 = vunpack.c.l.bf16 %v369
      %v374 = vunpack.c.l.bf16 %v370
      %s375 = scalar_lea.vmem %s1, 7
      %v376 = vld [vmem:[%s375] sm:$0x1]
      %v378 = vlaneseq
      %v379 = vshrl.u32 %v378, 7
      %v380 = vsub.s32 0, %v379
      %v381 = vrot.slane %v376, %v380
      %v383 = vmul.f32 %v371, %v381
      %v384 = vmul.f32 %v372, %v381
      %v385 = vmul.f32 %v373, %v381
      %v386 = vmul.f32 %v374, %v381
      %v387 = vadd.f32 %v362, %v383
      %v388 = vadd.f32 %v363, %v384
      %v389 = vadd.f32 %v364, %v385
      %v390 = vadd.f32 %v365, %v386
      %v391 = vld [vmem:[%s341] sm:$0x7]
      %v392 = vld [vmem:[%s341 + $0x4] sm:$0x7]
      %v393 = vld [vmem:[%s341 + $0x8] sm:$0x7]
      %v394 = vld [vmem:[%s341 + $0xc] sm:$0x7]
      %v395 = vunpack.c.l.bf16 %v391
      %v396 = vunpack.c.l.bf16 %v392
      %v397 = vunpack.c.l.bf16 %v393
      %v398 = vunpack.c.l.bf16 %v394
      %s399 = scalar_lea.vmem %s1, 8
      %v400 = vld [vmem:[%s399] sm:$0x1]
      %v402 = vlaneseq
      %v403 = vshrl.u32 %v402, 7
      %v404 = vsub.s32 0, %v403
      %v405 = vrot.slane %v400, %v404
      %v407 = vmul.f32 %v395, %v405
      %v408 = vmul.f32 %v396, %v405
      %v409 = vmul.f32 %v397, %v405
      %v410 = vmul.f32 %v398, %v405
      %v415 = vrot.slane %v407, 1
      %v416 = vrot.slane %v408, 1
      %v417 = vrot.slane %v409, 1
      %v418 = vrot.slane %v410, 1
      %v423 = vadd.f32 %v387, %v415
      %v424 = vadd.f32 %v388, %v416
      %v425 = vadd.f32 %v389, %v417
      %v426 = vadd.f32 %v390, %v418
      %v427 = vld [vmem:[%s2] sm:$0x1]
      %v429 = vlaneseq
      %v430 = vshrl.u32 %v429, 7
      %v431 = vsub.s32 0, %v430
      %v432 = vrot.slane %v427, %v431
      %v434 = vadd.f32 %v423, %v432
      %v435 = vadd.f32 %v424, %v432
      %v436 = vadd.f32 %v425, %v432
      %v437 = vadd.f32 %v426, %v432
      %v438 = vmax.f32 %v434, 0.0
      %v439 = vmax.f32 %v435, 0.0
      %v440 = vmax.f32 %v436, 0.0
      %v441 = vmax.f32 %v437, 0.0
      %v442 = vpack.c.bf16 %v438, %v438
      %v443 = vpack.c.bf16 %v439, %v439
      %v444 = vpack.c.bf16 %v440, %v440
      %v445 = vpack.c.bf16 %v441, %v441
      %vm446 = vcmask 582656
      %447 = vst.msk [vmem:[%s170] sm:$0x3] %vm446, %v442
      %448 = vst.msk [vmem:[%s170 + $0x2] sm:$0x3] %vm446, %v443
      %449 = vst.msk [vmem:[%s170 + $0x4] sm:$0x3] %vm446, %v444
      %450 = vst.msk [vmem:[%s170 + $0x6] sm:$0x3] %vm446, %v445
      %p451 = scmp.lt.s32.totalorder %s14, 1
      %s452 = scalar_select %p451, %s14, 1
      %s453 = smul.addr %s452, 4
      %s454 = smul.addr %s453, 2
      %s455 = scalar_lea.vmem %s3, %s454
      // Predicated region
      $region33: #{a_call__.23} parent=31 // pred_check
        %p456 = pneg %p100
      $region34: #{a_call__.23} parent=31 // pred_check_branch
        %458 = sbr.rel (%p456) target = $region36
      $region35: #{a_call__.23} parent=31 // pred_region
        _
      $region36: #{a_call__.23} parent=31 // pred_fallthru
        _
    $region32: #{a_call__.23} parent=5 // pred_fallthru
      _
    %p459 = scmp.le.s32.totalorder 2, %s9
    // Predicated region
    $region37: #{a_call__.23} parent=5 // pred_check
      %p460 = pneg %p459
    $region38: #{a_call__.23} parent=5 // pred_check_branch
      %462 = sbr.rel (%p460) target = $region40
    $region39: #{a_call__.23} parent=5 // pred_region
      %s463 = ssub.s32 %s9, 2
      // Predicated region
      $region41: #{a_call__.23} parent=39 // pred_check
        %p464 = pneg %p106
      $region42: #{a_call__.23} parent=39 // pred_check_branch
        %466 = sbr.rel (%p464) target = $region44
      $region43: #{a_call__.23} parent=39 // pred_region
        %p467 = scmp.lt.s32.totalorder %s15, 1
        %s468 = scalar_select %p467, %s15, 1
        %s469 = smul.addr %s468, 4
        %s470 = smul.addr %s469, 2
        %s471 = scalar_lea.vmem %s3, %s470
      $region44: #{a_call__.23} parent=39 // pred_fallthru
        _
    $region40: #{a_call__.23} parent=5 // pred_fallthru
      _
  $region6: #{a_call__.23} parent=0 // loop_footer
    %s13 = sadd.s32 1, %s9
  $region7: #{a_call__.23} parent=0 // loop_footer_branch
    %8 = sbr.rel target = $region3
  $region8: #{a_call__.23} parent=0 // loop_exit
    _

// kernel: a_call__.24
$region0: #{a_call__.24}
  #allocation0 [shape = 'u32[]', space=smem, size = 0x4, offset = 0x4, fixed_abs, tag = 'smem constant byte address 0x4 - core index']
  #allocation1 [shape = 'u32[144,128]{1,0:T(1,128)}', space=vmem, size = 0x12000, scoped, tag = 'internal scratch']
  %s0 = inlined_call_operand.vmem [shape: bf16[2,16,72], index: 0, kind: input, shape index: {}]
  %s1 = inlined_call_operand.vmem [shape: bf16[72,24], index: 1, kind: input, shape index: {}]
  %s2 = inlined_call_operand.vmem [shape: f32[1,24], index: 2, kind: input, shape index: {}]
  %s3 = inlined_call_operand.vmem [shape: bf16[2,16,24], index: 3, kind: output, shape index: {}]
  %s4 = sld [smem:[#allocation0]]
  $region45: #{a_call__.24} parent=0
    _
  %s6 = ssub.s32 1, %s4
  %s7 = scalar_select 0, %s6, %s4
  loop: start=0, step=1, limit=4
  $region2: #{a_call__.24} parent=0 // loop_pre_header
    _
  $region3: #{a_call__.24} parent=0 // loop_header
    %s9 = sphi 0, %s13
    %p10 = scmp.ge.s32.totalorder %s9, 4
    %s16 = sphi 0, %s28
    %s17 = sphi 0, %s24
    %s18 = sphi 0, %s16
    %s19 = sphi 0, %s17
    %s20 = sphi 0, %s18
    %s21 = sphi 0, %s19
    %s33 = sphi 0, %s35
    %s36 = sphi 0, %s33
    %s37 = sphi 0, %s36
    %s53 = sphi 0, %s37
    %s57 = sphi 0, %s57
    %s59 = sphi 0, %s57
    %s60 = sphi 0, %s59
    %s74 = sphi 0, %s60
    %s78 = sphi 0, %s78
    %s80 = sphi 0, %s78
    %s81 = sphi 0, %s80
    %s95 = sphi 0, %s81
    %s103 = sphi 0, %s105
    %s106 = sphi 0, %s103
    %s107 = sphi 0, %s106
    %s123 = sphi 0, %s107
  $region4: #{a_call__.24} parent=0 // loop_header_branch
    %12 = sbr.rel (%p10) target = $region8
  $region5: #{a_call__.24} parent=0 // loop_body
    %s14 = ssub.s32 %s9, 1
    %s15 = ssub.s32 %s9, 2
    %s22 = sadd.s32 1, %s17
    %p23 = scmp.ge.s32.totalorder %s22, 1
    %s24 = scalar_select %p23, 0, %s22
    %s25 = sadd.s32 1, %s16
    %s26 = scalar_select %p23, %s25, %s16
    %p27 = scmp.ge.s32.totalorder %s26, 2
    %s28 = scalar_select %p27, 0, %s26
    %s29 = ssub.s32 %s16, %s28
    %s30 = ssub.s32 %s17, %s24
    %s31 = sor.u32 %s29, %s30
    %p32 = scmp.eq.s32.totalorder %s31, 0
    %s34 = sadd.s32 %s33, 1
    %s35 = scalar_select %p32, %s33, %s34
    %p38 = pneg %p32
    %p39 = scmp.eq.s32.totalorder %s9, 1
    %p40 = por %p38, %p39
    %p41 = scmp.ne.s32.totalorder %s33, %s36
    %p42 = scmp.eq.s32.totalorder %s9, 0
    %p43 = por %p41, %p42
    %p44 = scmp.ne.s32.totalorder %s33, %s36
    %p45 = scmp.eq.s32.totalorder %s14, 1
    %p46 = por %p44, %p45
    %p47 = scmp.ne.s32.totalorder %s36, %s37
    %p48 = scmp.eq.s32.totalorder %s14, 0
    %p49 = por %p47, %p48
    %p50 = scmp.ne.s32.totalorder %s36, %s37
    %p51 = scmp.eq.s32.totalorder %s15, 1
    %p52 = por %p50, %p51
    %p54 = scmp.ne.s32.totalorder %s37, %s53
    %p55 = scmp.eq.s32.totalorder %s15, 0
    %p56 = por %p54, %p55
    %s58 = sadd.s32 %s57, 1
    %p61 = scmp.eq.s32.totalorder %s9, 1
    %p62 = scmp.ne.s32.totalorder %s57, %s59
    %p63 = scmp.eq.s32.totalorder %s9, 0
    %p64 = por %p62, %p63
    %p65 = scmp.ne.s32.totalorder %s57, %s59
    %p66 = scmp.eq.s32.totalorder %s14, 1
    %p67 = por %p65, %p66
    %p68 = scmp.ne.s32.totalorder %s59, %s60
    %p69 = scmp.eq.s32.totalorder %s14, 0
    %p70 = por %p68, %p69
    %p71 = scmp.ne.s32.totalorder %s59, %s60
    %p72 = scmp.eq.s32.totalorder %s15, 1
    %p73 = por %p71, %p72
    %p75 = scmp.ne.s32.totalorder %s60, %s74
    %p76 = scmp.eq.s32.totalorder %s15, 0
    %p77 = por %p75, %p76
    %s79 = sadd.s32 %s78, 1
    %p82 = scmp.eq.s32.totalorder %s9, 1
    %p83 = scmp.ne.s32.totalorder %s78, %s80
    %p84 = scmp.eq.s32.totalorder %s9, 0
    %p85 = por %p83, %p84
    %p86 = scmp.ne.s32.totalorder %s78, %s80
    %p87 = scmp.eq.s32.totalorder %s14, 1
    %p88 = por %p86, %p87
    %p89 = scmp.ne.s32.totalorder %s80, %s81
    %p90 = scmp.eq.s32.totalorder %s14, 0
    %p91 = por %p89, %p90
    %p92 = scmp.ne.s32.totalorder %s80, %s81
    %p93 = scmp.eq.s32.totalorder %s15, 1
    %p94 = por %p92, %p93
    %p96 = scmp.ne.s32.totalorder %s81, %s95
    %p97 = scmp.eq.s32.totalorder %s15, 0
    %p98 = por %p96, %p97
    %s99 = ssub.s32 %s16, %s28
    %s100 = ssub.s32 %s17, %s24
    %s101 = sor.u32 %s99, %s100
    %p102 = scmp.eq.s32.totalorder %s101, 0
    %s104 = sadd.s32 %s103, 1
    %s105 = scalar_select %p102, %s103, %s104
    %p108 = pneg %p102
    %p109 = scmp.eq.s32.totalorder %s9, 1
    %p110 = por %p108, %p109
    %p111 = scmp.ne.s32.totalorder %s103, %s106
    %p112 = scmp.eq.s32.totalorder %s9, 0
    %p113 = por %p111, %p112
    %p114 = scmp.ne.s32.totalorder %s103, %s106
    %p115 = scmp.eq.s32.totalorder %s14, 1
    %p116 = por %p114, %p115
    %p117 = scmp.ne.s32.totalorder %s106, %s107
    %p118 = scmp.eq.s32.totalorder %s14, 0
    %p119 = por %p117, %p118
    %p120 = scmp.ne.s32.totalorder %s106, %s107
    %p121 = scmp.eq.s32.totalorder %s15, 1
    %p122 = por %p120, %p121
    %p124 = scmp.ne.s32.totalorder %s107, %s123
    %p125 = scmp.eq.s32.totalorder %s15, 0
    %p126 = por %p124, %p125
    %p127 = scmp.le.s32.totalorder 1, %s9
    %p128 = scmp.lt.s32.totalorder %s9, 3
    %p129 = pnand %p127, %p128
    %p130 = pneg %p129
    // Predicated region
    $region9: #{a_call__.24} parent=5 // pred_check
      _
    $region10: #{a_call__.24} parent=5 // pred_check_branch
      %132 = sbr.rel (%p129) target = $region12
    $region11: #{a_call__.24} parent=5 // pred_region
      %s133 = ssub.s32 %s9, 1
      // Predicated region
      $region13: #{a_call__.24} parent=11 // pred_check
        %p134 = pneg %p70
      $region14: #{a_call__.24} parent=11 // pred_check_branch
        %136 = sbr.rel (%p134) target = $region16
      $region15: #{a_call__.24} parent=11 // pred_region
        _
      $region16: #{a_call__.24} parent=11 // pred_fallthru
        _
      // Predicated region
      $region17: #{a_call__.24} parent=11 // pred_check
        %p137 = pneg %p91
      $region18: #{a_call__.24} parent=11 // pred_check_branch
        %139 = sbr.rel (%p137) target = $region20
      $region19: #{a_call__.24} parent=11 // pred_region
        _
      $region20: #{a_call__.24} parent=11 // pred_fallthru
        _
    $region12: #{a_call__.24} parent=5 // pred_fallthru
      _
    %p140 = scmp.lt.s32.totalorder %s9, 2
    // Predicated region
    $region21: #{a_call__.24} parent=5 // pred_check
      %p141 = pneg %p140
    $region22: #{a_call__.24} parent=5 // pred_check_branch
      %143 = sbr.rel (%p141) target = $region24
    $region23: #{a_call__.24} parent=5 // pred_region
      // Predicated region
      $region25: #{a_call__.24} parent=23 // pred_check
        %p144 = pneg %p43
      $region26: #{a_call__.24} parent=23 // pred_check_branch
        %146 = sbr.rel (%p144) target = $region28
      $region27: #{a_call__.24} parent=23 // pred_region
        %s147 = smul.u32 2, %s17
        %p148 = scmp.lt.s32.totalorder %s16, 1
        %s149 = scalar_select %p148, %s16, 1
        %p150 = scmp.lt.s32.totalorder %s147, 1
        %s151 = scalar_select %p150, %s147, 1
        %s152 = smul.addr %s149, 2
        %s153 = sadd.s32 %s151, %s152
        %s154 = smul.addr %s153, 4
        %s155 = scalar_lea.vmem %s0, %s154
        %s156 = smul.u32 2, %s17
      $region28: #{a_call__.24} parent=23 // pred_fallthru
        _
    $region24: #{a_call__.24} parent=5 // pred_fallthru
      _
    %p157 = scmp.le.s32.totalorder 1, %s9
    %p158 = scmp.lt.s32.totalorder %s9, 3
    %p159 = pnand %p157, %p158
    %p160 = pneg %p159
    // Predicated region
    $region29: #{a_call__.24} parent=5 // pred_check
      _
    $region30: #{a_call__.24} parent=5 // pred_check_branch
      %162 = sbr.rel (%p159) target = $region32
    $region31: #{a_call__.24} parent=5 // pred_region
      %s163 = ssub.s32 %s9, 1
      %s164 = smul.u32 2, %s19
      %p165 = scmp.lt.s32.totalorder %s18, 1
      %s166 = scalar_select %p165, %s18, 1
      %p167 = scmp.lt.s32.totalorder %s164, 1
      %s168 = scalar_select %p167, %s164, 1
      %s169 = smul.addr %s166, 2
      %s170 = sadd.s32 %s168, %s169
      %s171 = smul.addr %s170, 4
      %s172 = scalar_lea.vmem %s0, %s171
      %p173 = pneg %p49
      %p174 = pneg %p46
      %p175 = pneg %p70
      %p176 = pneg %p67
      %p177 = pneg %p91
      %p178 = pneg %p88
      %p179 = pneg %p119
      %p180 = pneg %p116
      %s181 = smul.u32 2, %s19
      %p182 = scmp.lt.s32.totalorder %s18, 1
      %s183 = scalar_select %p182, %s18, 1
      %p184 = scmp.lt.s32.totalorder %s181, 1
      %s185 = scalar_select %p184, %s181, 1
      %s186 = smul.addr %s183, 2
      %s187 = sadd.s32 %s185, %s186
      %s188 = smul.addr %s187, 4
      %s189 = scalar_lea.vmem %s3, %s188
      %s190 = smul.u32 2, %s19
      %p191 = scmp.lt.s32.totalorder %s18, 1
      %s192 = scalar_select %p191, %s18, 1
      %p193 = scmp.lt.s32.totalorder %s190, 1
      %s194 = scalar_select %p193, %s190, 1
      %s195 = smul.addr %s192, 2
      %s196 = sadd.s32 %s194, %s195
      %s197 = smul.addr %s196, 4
      %s198 = scalar_lea.vmem %s0, %s197
      %s199 = smul.u32 2, %s19
      %s200 = smul.u32 2, %s19
      %p201 = scmp.lt.s32.totalorder %s18, 1
      %s202 = scalar_select %p201, %s18, 1
      %p203 = scmp.lt.s32.totalorder %s200, 1
      %s204 = scalar_select %p203, %s200, 1
      %s205 = smul.addr %s202, 2
      %s206 = sadd.s32 %s204, %s205
      %s207 = smul.addr %s206, 4
      %s208 = scalar_lea.vmem %s3, %s207
      %s209 = smul.u32 2, %s19
      %v211 = vld [vmem:[%s198] sm:$0xf]
      %v212 = vld [vmem:[%s198 + $0x4] sm:$0xf]
      %v213 = vld [vmem:[%s1] sm:$0xf]
      %v214 = vld [vmem:[%s1 + $0x4] sm:$0xf]
      %v215 = vld [vmem:[%s1 + $0x8] sm:$0xf]
      %v216 = vld [vmem:[%s1 + $0xc] sm:$0xf]
      %v217 = vld [vmem:[%s1 + $0x10] sm:$0xf]
      %v218 = vld [vmem:[%s1 + $0x14] sm:$0xf]
      %v219 = vld [vmem:[%s1 + $0x18] sm:$0xf]
      %v220 = vld [vmem:[%s1 + $0x1c] sm:$0xf]
      %v221 = vld [vmem:[%s1 + $0x20] sm:$0xf]
      %v222 = vld [vmem:[%s2] sm:$0x1]
      %v224 = vlaneseq
      %v225 = vshrl.u32 %v224, 7
      %v226 = vsub.s32 0, %v225
      %v227 = vrot.slane %v222, %v226
      %v231 = vunpack.c.l.b16 %v211
      %v232 = vunpack.c.l.b16 %v212
      %v233 = vpack.c.b16 %v232, %v231
      %v243 = vunpack.c.l.b16 %v213
      %v244 = vunpack.c.l.b16 %v214
      %v245 = vunpack.c.l.b16 %v215
      %v246 = vunpack.c.l.b16 %v216
      %v247 = vunpack.c.l.b16 %v217
      %v248 = vunpack.c.l.b16 %v218
      %v249 = vunpack.c.l.b16 %v219
      %v250 = vunpack.c.l.b16 %v220
      %v251 = vunpack.c.l.b16 %v221
      %v252 = vpack.c.b16 %v244, %v243
      %v253 = vpack.c.b16 %v246, %v245
      %v254 = vpack.c.b16 %v248, %v247
      %v255 = vpack.c.b16 %v250, %v249
      %v256 = vpack.c.b16 %v251, %v251
      %vm261 = vcmask 588800
      %v263 = vsel %vm261, %v233, 0
      %vm265 = vcmask 1043456
      %v267 = vsel %vm265, %v256, 0
      %269 = vmatprep.subr.bf16.mxu0 0
      %270 = vmatpush1.bf16.msra.mxu0 %v252
      %271 = vmatprep.subr.bf16.mxu0 0
      %272 = vmatpush1.bf16.msra.mxu0 %v253
      %273 = vmatprep.subr.bf16.mxu0 0
      %274 = vmatpush1.bf16.msra.mxu0 %v254
      %275 = vmatprep.subr.bf16.mxu0 0
      %276 = vmatpush1.bf16.msra.mxu0 %v255
      %277 = vmatprep.subr.bf16.mxu0 0
      %278 = vmatpush1.bf16.msra.mxu0 %v267
      %279 = vmatprep.subr.bf16.mxu0 0
      %280 = vmatpush1.bf16.msra.mxu0 0
      %281 = vmatprep.subr.bf16.mxu0 0
      %282 = vmatpush1.bf16.msra.mxu0 0
      %283 = vmatprep.subr.bf16.mxu0 0
      %284 = vmatpush1.bf16.msra.mxu0 0
      %285 = vmatprep.subr.bf16.mxu0 0
      %286 = vmatpush1.bf16.msra.mxu0 0
      %287 = vmatprep.subr.bf16.mxu0 0
      %288 = vmatpush1.bf16.msra.mxu0 0
      %289 = vmatprep.subr.bf16.mxu0 0
      %290 = vmatpush1.bf16.msra.mxu0 0
      %291 = vmatprep.subr.bf16.mxu0 0
      %292 = vmatpush1.bf16.msra.mxu0 0
      %293 = vmatprep.subr.bf16.mxu0 0
      %294 = vmatpush1.bf16.msra.mxu0 0
      %295 = vmatprep.subr.bf16.mxu0 0
      %296 = vmatpush1.bf16.msra.mxu0 0
      %297 = vmatprep.subr.bf16.mxu0 0
      %298 = vmatpush1.bf16.msra.mxu0 0
      %299 = vmatprep.subr.bf16.mxu0 0
      %300 = vmatpush1.bf16.msra.mxu0 0
      %301 = vmatprep.mubr.bf16.mxu0 0
      %302 = vmatmul.mubr.bf16.gmra.mrb[0].mxu0 %v263
      %v303 = vpop.f32.mrb[0].mxu0
      %v304 = vadd.f32 %v227, %v303
      %v305 = vpop.f32.mrb[0].mxu0
      %v306 = vpop.f32.mrb[0].mxu0
      %v307 = vadd.f32 %v227, %v306
      %v308 = vpop.f32.mrb[0].mxu0
      %309 = vdwg.mxu0
      %v310 = vpack.c.bf16 %v307, %v304
      %v312 = vunpack.c.l.b16 %v310
      %v313 = vunpack.c.h.b16 %v310
      %v314 = vpack.c.b16 %v312, %v312
      %v315 = vpack.c.b16 %v313, %v313
      %vm318 = vcmask 191488
      %319 = vst.msk [vmem:[%s208] sm:$0xf] %vm318, %v314
      %320 = vst.msk [vmem:[%s208 + $0x4] sm:$0xf] %vm318, %v315
      %s321 = smul.u32 2, %s19
      %p322 = scmp.lt.s32.totalorder %s18, 1
      %s323 = scalar_select %p322, %s18, 1
      %p324 = scmp.lt.s32.totalorder %s321, 1
      %s325 = scalar_select %p324, %s321, 1
      %s326 = smul.addr %s323, 2
      %s327 = sadd.s32 %s325, %s326
      %s328 = smul.addr %s327, 4
      %s329 = scalar_lea.vmem %s3, %s328
      // Predicated region
      $region33: #{a_call__.24} parent=31 // pred_check
        %p330 = pneg %p116
      $region34: #{a_call__.24} parent=31 // pred_check_branch
        %332 = sbr.rel (%p330) target = $region36
      $region35: #{a_call__.24} parent=31 // pred_region
        %s333 = smul.u32 2, %s19
      $region36: #{a_call__.24} parent=31 // pred_fallthru
        _
    $region32: #{a_call__.24} parent=5 // pred_fallthru
      _
    %p334 = scmp.le.s32.totalorder 2, %s9
    // Predicated region
    $region37: #{a_call__.24} parent=5 // pred_check
      %p335 = pneg %p334
    $region38: #{a_call__.24} parent=5 // pred_check_branch
      %337 = sbr.rel (%p335) target = $region40
    $region39: #{a_call__.24} parent=5 // pred_region
      %s338 = ssub.s32 %s9, 2
      // Predicated region
      $region41: #{a_call__.24} parent=39 // pred_check
        %p339 = pneg %p122
      $region42: #{a_call__.24} parent=39 // pred_check_branch
        %341 = sbr.rel (%p339) target = $region44
      $region43: #{a_call__.24} parent=39 // pred_region
        %s342 = smul.u32 2, %s21
        %p343 = scmp.lt.s32.totalorder %s20, 1
        %s344 = scalar_select %p343, %s20, 1
        %p345 = scmp.lt.s32.totalorder %s342, 1
        %s346 = scalar_select %p345, %s342, 1
        %s347 = smul.addr %s344, 2
        %s348 = sadd.s32 %s346, %s347
        %s349 = smul.addr %s348, 4
        %s350 = scalar_lea.vmem %s3, %s349
      $region44: #{a_call__.24} parent=39 // pred_fallthru
        _
    $region40: #{a_call__.24} parent=5 // pred_fallthru
      _
  $region6: #{a_call__.24} parent=0 // loop_footer
    %s13 = sadd.s32 1, %s9
  $region7: #{a_call__.24} parent=0 // loop_footer_branch
    %8 = sbr.rel target = $region3
  $region8: #{a_call__.24} parent=0 // loop_exit
    _

// kernel: a_call__.25
$region0: #{a_call__.25}
  #allocation0 [shape = 'u32[]', space=smem, size = 0x4, offset = 0x4, fixed_abs, tag = 'smem constant byte address 0x4 - core index']
  #allocation1 [shape = 'u32[144,128]{1,0:T(1,128)}', space=vmem, size = 0x12000, scoped, tag = 'internal scratch']
  %s0 = inlined_call_operand.vmem [shape: bf16[2,16,24], index: 0, kind: input, shape index: {}]
  %s1 = inlined_call_operand.vmem [shape: bf16[24,88], index: 1, kind: input, shape index: {}]
  %s2 = inlined_call_operand.vmem [shape: f32[1,88], index: 2, kind: input, shape index: {}]
  %s3 = inlined_call_operand.vmem [shape: bf16[2,16,88], index: 3, kind: output, shape index: {}]
  %s4 = sld [smem:[#allocation0]]
  $region45: #{a_call__.25} parent=0
    _
  %s6 = ssub.s32 1, %s4
  %s7 = scalar_select 0, %s6, %s4
  loop: start=0, step=1, limit=4
  $region2: #{a_call__.25} parent=0 // loop_pre_header
    _
  $region3: #{a_call__.25} parent=0 // loop_header
    %s9 = sphi 0, %s13
    %p10 = scmp.ge.s32.totalorder %s9, 4
    %s16 = sphi 0, %s28
    %s17 = sphi 0, %s24
    %s18 = sphi 0, %s16
    %s19 = sphi 0, %s17
    %s20 = sphi 0, %s18
    %s21 = sphi 0, %s19
    %s33 = sphi 0, %s35
    %s36 = sphi 0, %s33
    %s37 = sphi 0, %s36
    %s53 = sphi 0, %s37
    %s57 = sphi 0, %s57
    %s59 = sphi 0, %s57
    %s60 = sphi 0, %s59
    %s74 = sphi 0, %s60
    %s78 = sphi 0, %s78
    %s80 = sphi 0, %s78
    %s81 = sphi 0, %s80
    %s95 = sphi 0, %s81
    %s103 = sphi 0, %s105
    %s106 = sphi 0, %s103
    %s107 = sphi 0, %s106
    %s123 = sphi 0, %s107
  $region4: #{a_call__.25} parent=0 // loop_header_branch
    %12 = sbr.rel (%p10) target = $region8
  $region5: #{a_call__.25} parent=0 // loop_body
    %s14 = ssub.s32 %s9, 1
    %s15 = ssub.s32 %s9, 2
    %s22 = sadd.s32 1, %s17
    %p23 = scmp.ge.s32.totalorder %s22, 1
    %s24 = scalar_select %p23, 0, %s22
    %s25 = sadd.s32 1, %s16
    %s26 = scalar_select %p23, %s25, %s16
    %p27 = scmp.ge.s32.totalorder %s26, 2
    %s28 = scalar_select %p27, 0, %s26
    %s29 = ssub.s32 %s16, %s28
    %s30 = ssub.s32 %s17, %s24
    %s31 = sor.u32 %s29, %s30
    %p32 = scmp.eq.s32.totalorder %s31, 0
    %s34 = sadd.s32 %s33, 1
    %s35 = scalar_select %p32, %s33, %s34
    %p38 = pneg %p32
    %p39 = scmp.eq.s32.totalorder %s9, 1
    %p40 = por %p38, %p39
    %p41 = scmp.ne.s32.totalorder %s33, %s36
    %p42 = scmp.eq.s32.totalorder %s9, 0
    %p43 = por %p41, %p42
    %p44 = scmp.ne.s32.totalorder %s33, %s36
    %p45 = scmp.eq.s32.totalorder %s14, 1
    %p46 = por %p44, %p45
    %p47 = scmp.ne.s32.totalorder %s36, %s37
    %p48 = scmp.eq.s32.totalorder %s14, 0
    %p49 = por %p47, %p48
    %p50 = scmp.ne.s32.totalorder %s36, %s37
    %p51 = scmp.eq.s32.totalorder %s15, 1
    %p52 = por %p50, %p51
    %p54 = scmp.ne.s32.totalorder %s37, %s53
    %p55 = scmp.eq.s32.totalorder %s15, 0
    %p56 = por %p54, %p55
    %s58 = sadd.s32 %s57, 1
    %p61 = scmp.eq.s32.totalorder %s9, 1
    %p62 = scmp.ne.s32.totalorder %s57, %s59
    %p63 = scmp.eq.s32.totalorder %s9, 0
    %p64 = por %p62, %p63
    %p65 = scmp.ne.s32.totalorder %s57, %s59
    %p66 = scmp.eq.s32.totalorder %s14, 1
    %p67 = por %p65, %p66
    %p68 = scmp.ne.s32.totalorder %s59, %s60
    %p69 = scmp.eq.s32.totalorder %s14, 0
    %p70 = por %p68, %p69
    %p71 = scmp.ne.s32.totalorder %s59, %s60
    %p72 = scmp.eq.s32.totalorder %s15, 1
    %p73 = por %p71, %p72
    %p75 = scmp.ne.s32.totalorder %s60, %s74
    %p76 = scmp.eq.s32.totalorder %s15, 0
    %p77 = por %p75, %p76
    %s79 = sadd.s32 %s78, 1
    %p82 = scmp.eq.s32.totalorder %s9, 1
    %p83 = scmp.ne.s32.totalorder %s78, %s80
    %p84 = scmp.eq.s32.totalorder %s9, 0
    %p85 = por %p83, %p84
    %p86 = scmp.ne.s32.totalorder %s78, %s80
    %p87 = scmp.eq.s32.totalorder %s14, 1
    %p88 = por %p86, %p87
    %p89 = scmp.ne.s32.totalorder %s80, %s81
    %p90 = scmp.eq.s32.totalorder %s14, 0
    %p91 = por %p89, %p90
    %p92 = scmp.ne.s32.totalorder %s80, %s81
    %p93 = scmp.eq.s32.totalorder %s15, 1
    %p94 = por %p92, %p93
    %p96 = scmp.ne.s32.totalorder %s81, %s95
    %p97 = scmp.eq.s32.totalorder %s15, 0
    %p98 = por %p96, %p97
    %s99 = ssub.s32 %s16, %s28
    %s100 = ssub.s32 %s17, %s24
    %s101 = sor.u32 %s99, %s100
    %p102 = scmp.eq.s32.totalorder %s101, 0
    %s104 = sadd.s32 %s103, 1
    %s105 = scalar_select %p102, %s103, %s104
    %p108 = pneg %p102
    %p109 = scmp.eq.s32.totalorder %s9, 1
    %p110 = por %p108, %p109
    %p111 = scmp.ne.s32.totalorder %s103, %s106
    %p112 = scmp.eq.s32.totalorder %s9, 0
    %p113 = por %p111, %p112
    %p114 = scmp.ne.s32.totalorder %s103, %s106
    %p115 = scmp.eq.s32.totalorder %s14, 1
    %p116 = por %p114, %p115
    %p117 = scmp.ne.s32.totalorder %s106, %s107
    %p118 = scmp.eq.s32.totalorder %s14, 0
    %p119 = por %p117, %p118
    %p120 = scmp.ne.s32.totalorder %s106, %s107
    %p121 = scmp.eq.s32.totalorder %s15, 1
    %p122 = por %p120, %p121
    %p124 = scmp.ne.s32.totalorder %s107, %s123
    %p125 = scmp.eq.s32.totalorder %s15, 0
    %p126 = por %p124, %p125
    %p127 = scmp.le.s32.totalorder 1, %s9
    %p128 = scmp.lt.s32.totalorder %s9, 3
    %p129 = pnand %p127, %p128
    %p130 = pneg %p129
    // Predicated region
    $region9: #{a_call__.25} parent=5 // pred_check
      _
    $region10: #{a_call__.25} parent=5 // pred_check_branch
      %132 = sbr.rel (%p129) target = $region12
    $region11: #{a_call__.25} parent=5 // pred_region
      %s133 = ssub.s32 %s9, 1
      // Predicated region
      $region13: #{a_call__.25} parent=11 // pred_check
        %p134 = pneg %p70
      $region14: #{a_call__.25} parent=11 // pred_check_branch
        %136 = sbr.rel (%p134) target = $region16
      $region15: #{a_call__.25} parent=11 // pred_region
        _
      $region16: #{a_call__.25} parent=11 // pred_fallthru
        _
      // Predicated region
      $region17: #{a_call__.25} parent=11 // pred_check
        %p137 = pneg %p91
      $region18: #{a_call__.25} parent=11 // pred_check_branch
        %139 = sbr.rel (%p137) target = $region20
      $region19: #{a_call__.25} parent=11 // pred_region
        _
      $region20: #{a_call__.25} parent=11 // pred_fallthru
        _
    $region12: #{a_call__.25} parent=5 // pred_fallthru
      _
    %p140 = scmp.lt.s32.totalorder %s9, 2
    // Predicated region
    $region21: #{a_call__.25} parent=5 // pred_check
      %p141 = pneg %p140
    $region22: #{a_call__.25} parent=5 // pred_check_branch
      %143 = sbr.rel (%p141) target = $region24
    $region23: #{a_call__.25} parent=5 // pred_region
      // Predicated region
      $region25: #{a_call__.25} parent=23 // pred_check
        %p144 = pneg %p43
      $region26: #{a_call__.25} parent=23 // pred_check_branch
        %146 = sbr.rel (%p144) target = $region28
      $region27: #{a_call__.25} parent=23 // pred_region
        %s147 = smul.u32 2, %s17
        %p148 = scmp.lt.s32.totalorder %s16, 1
        %s149 = scalar_select %p148, %s16, 1
        %p150 = scmp.lt.s32.totalorder %s147, 1
        %s151 = scalar_select %p150, %s147, 1
        %s152 = smul.addr %s149, 2
        %s153 = sadd.s32 %s151, %s152
        %s154 = smul.addr %s153, 4
        %s155 = scalar_lea.vmem %s0, %s154
        %s156 = smul.u32 2, %s17
      $region28: #{a_call__.25} parent=23 // pred_fallthru
        _
    $region24: #{a_call__.25} parent=5 // pred_fallthru
      _
    %p157 = scmp.le.s32.totalorder 1, %s9
    %p158 = scmp.lt.s32.totalorder %s9, 3
    %p159 = pnand %p157, %p158
    %p160 = pneg %p159
    // Predicated region
    $region29: #{a_call__.25} parent=5 // pred_check
      _
    $region30: #{a_call__.25} parent=5 // pred_check_branch
      %162 = sbr.rel (%p159) target = $region32
    $region31: #{a_call__.25} parent=5 // pred_region
      %s163 = ssub.s32 %s9, 1
      %s164 = smul.u32 2, %s19
      %p165 = scmp.lt.s32.totalorder %s18, 1
      %s166 = scalar_select %p165, %s18, 1
      %p167 = scmp.lt.s32.totalorder %s164, 1
      %s168 = scalar_select %p167, %s164, 1
      %s169 = smul.addr %s166, 2
      %s170 = sadd.s32 %s168, %s169
      %s171 = smul.addr %s170, 4
      %s172 = scalar_lea.vmem %s0, %s171
      %p173 = pneg %p49
      %p174 = pneg %p46
      %p175 = pneg %p70
      %p176 = pneg %p67
      %p177 = pneg %p91
      %p178 = pneg %p88
      %p179 = pneg %p119
      %p180 = pneg %p116
      %s181 = smul.u32 2, %s19
      %p182 = scmp.lt.s32.totalorder %s18, 1
      %s183 = scalar_select %p182, %s18, 1
      %p184 = scmp.lt.s32.totalorder %s181, 1
      %s185 = scalar_select %p184, %s181, 1
      %s186 = smul.addr %s183, 2
      %s187 = sadd.s32 %s185, %s186
      %s188 = smul.addr %s187, 4
      %s189 = scalar_lea.vmem %s3, %s188
      %s190 = smul.u32 2, %s19
      %p191 = scmp.lt.s32.totalorder %s18, 1
      %s192 = scalar_select %p191, %s18, 1
      %p193 = scmp.lt.s32.totalorder %s190, 1
      %s194 = scalar_select %p193, %s190, 1
      %s195 = smul.addr %s192, 2
      %s196 = sadd.s32 %s194, %s195
      %s197 = smul.addr %s196, 4
      %s198 = scalar_lea.vmem %s0, %s197
      %s199 = smul.u32 2, %s19
      %s200 = smul.u32 2, %s19
      %p201 = scmp.lt.s32.totalorder %s18, 1
      %s202 = scalar_select %p201, %s18, 1
      %p203 = scmp.lt.s32.totalorder %s200, 1
      %s204 = scalar_select %p203, %s200, 1
      %s205 = smul.addr %s202, 2
      %s206 = sadd.s32 %s204, %s205
      %s207 = smul.addr %s206, 4
      %s208 = scalar_lea.vmem %s3, %s207
      %s209 = smul.u32 2, %s19
      %v211 = vld [vmem:[%s198] sm:$0xf]
      %v212 = vld [vmem:[%s198 + $0x4] sm:$0xf]
      %v213 = vld [vmem:[%s1] sm:$0xf]
      %v214 = vld [vmem:[%s1 + $0x4] sm:$0xf]
      %v215 = vld [vmem:[%s1 + $0x8] sm:$0xf]
      %v216 = vld [vmem:[%s2] sm:$0x1]
      %v218 = vlaneseq
      %v219 = vshrl.u32 %v218, 7
      %v220 = vsub.s32 0, %v219
      %v221 = vrot.slane %v216, %v220
      %v225 = vunpack.c.l.b16 %v211
      %v226 = vunpack.c.l.b16 %v212
      %v227 = vpack.c.b16 %v226, %v225
      %v231 = vunpack.c.l.b16 %v213
      %v232 = vunpack.c.l.b16 %v214
      %v233 = vunpack.c.l.b16 %v215
      %v234 = vpack.c.b16 %v232, %v231
      %v235 = vpack.c.b16 %v233, %v233
      %vm237 = vcmask 195584
      %v239 = vsel %vm237, %v227, 0
      %vm241 = vcmask 1043456
      %v243 = vsel %vm241, %v235, 0
      %245 = vmatprep.subr.bf16.mxu0 0
      %246 = vmatpush1.bf16.msra.mxu0 %v234
      %247 = vmatprep.subr.bf16.mxu0 0
      %248 = vmatpush1.bf16.msra.mxu0 %v243
      %249 = vmatprep.subr.bf16.mxu0 0
      %250 = vmatpush1.bf16.msra.mxu0 0
      %251 = vmatprep.subr.bf16.mxu0 0
      %252 = vmatpush1.bf16.msra.mxu0 0
      %253 = vmatprep.subr.bf16.mxu0 0
      %254 = vmatpush1.bf16.msra.mxu0 0
      %255 = vmatprep.subr.bf16.mxu0 0
      %256 = vmatpush1.bf16.msra.mxu0 0
      %257 = vmatprep.subr.bf16.mxu0 0
      %258 = vmatpush1.bf16.msra.mxu0 0
      %259 = vmatprep.subr.bf16.mxu0 0
      %260 = vmatpush1.bf16.msra.mxu0 0
      %261 = vmatprep.subr.bf16.mxu0 0
      %262 = vmatpush1.bf16.msra.mxu0 0
      %263 = vmatprep.subr.bf16.mxu0 0
      %264 = vmatpush1.bf16.msra.mxu0 0
      %265 = vmatprep.subr.bf16.mxu0 0
      %266 = vmatpush1.bf16.msra.mxu0 0
      %267 = vmatprep.subr.bf16.mxu0 0
      %268 = vmatpush1.bf16.msra.mxu0 0
      %269 = vmatprep.subr.bf16.mxu0 0
      %270 = vmatpush1.bf16.msra.mxu0 0
      %271 = vmatprep.subr.bf16.mxu0 0
      %272 = vmatpush1.bf16.msra.mxu0 0
      %273 = vmatprep.subr.bf16.mxu0 0
      %274 = vmatpush1.bf16.msra.mxu0 0
      %275 = vmatprep.subr.bf16.mxu0 0
      %276 = vmatpush1.bf16.msra.mxu0 0
      %277 = vmatprep.mubr.bf16.mxu0 0
      %278 = vmatmul.mubr.bf16.gmra.mrb[0].mxu0 %v239
      %v279 = vpop.f32.mrb[0].mxu0
      %v280 = vadd.f32 %v221, %v279
      %v281 = vpop.f32.mrb[0].mxu0
      %v282 = vpop.f32.mrb[0].mxu0
      %v283 = vadd.f32 %v221, %v282
      %v284 = vpop.f32.mrb[0].mxu0
      %285 = vdwg.mxu0
      %v286 = vmax.f32 %v280, 0.0
      %v287 = vmax.f32 %v283, 0.0
      %v288 = vpack.c.bf16 %v287, %v286
      %v290 = vunpack.c.l.b16 %v288
      %v291 = vunpack.c.h.b16 %v288
      %v292 = vpack.c.b16 %v290, %v290
      %v293 = vpack.c.b16 %v291, %v291
      %vm296 = vcmask 715776
      %297 = vst.msk [vmem:[%s208] sm:$0xf] %vm296, %v292
      %298 = vst.msk [vmem:[%s208 + $0x4] sm:$0xf] %vm296, %v293
      %s299 = smul.u32 2, %s19
      %p300 = scmp.lt.s32.totalorder %s18, 1
      %s301 = scalar_select %p300, %s18, 1
      %p302 = scmp.lt.s32.totalorder %s299, 1
      %s303 = scalar_select %p302, %s299, 1
      %s304 = smul.addr %s301, 2
      %s305 = sadd.s32 %s303, %s304
      %s306 = smul.addr %s305, 4
      %s307 = scalar_lea.vmem %s3, %s306
      // Predicated region
      $region33: #{a_call__.25} parent=31 // pred_check
        %p308 = pneg %p116
      $region34: #{a_call__.25} parent=31 // pred_check_branch
        %310 = sbr.rel (%p308) target = $region36
      $region35: #{a_call__.25} parent=31 // pred_region
        %s311 = smul.u32 2, %s19
      $region36: #{a_call__.25} parent=31 // pred_fallthru
        _
    $region32: #{a_call__.25} parent=5 // pred_fallthru
      _
    %p312 = scmp.le.s32.totalorder 2, %s9
    // Predicated region
    $region37: #{a_call__.25} parent=5 // pred_check
      %p313 = pneg %p312
    $region38: #{a_call__.25} parent=5 // pred_check_branch
      %315 = sbr.rel (%p313) target = $region40
    $region39: #{a_call__.25} parent=5 // pred_region
      %s316 = ssub.s32 %s9, 2
      // Predicated region
      $region41: #{a_call__.25} parent=39 // pred_check
        %p317 = pneg %p122
      $region42: #{a_call__.25} parent=39 // pred_check_branch
        %319 = sbr.rel (%p317) target = $region44
      $region43: #{a_call__.25} parent=39 // pred_region
        %s320 = smul.u32 2, %s21
        %p321 = scmp.lt.s32.totalorder %s20, 1
        %s322 = scalar_select %p321, %s20, 1
        %p323 = scmp.lt.s32.totalorder %s320, 1
        %s324 = scalar_select %p323, %s320, 1
        %s325 = smul.addr %s322, 2
        %s326 = sadd.s32 %s324, %s325
        %s327 = smul.addr %s326, 4
        %s328 = scalar_lea.vmem %s3, %s327
      $region44: #{a_call__.25} parent=39 // pred_fallthru
        _
    $region40: #{a_call__.25} parent=5 // pred_fallthru
      _
  $region6: #{a_call__.25} parent=0 // loop_footer
    %s13 = sadd.s32 1, %s9
  $region7: #{a_call__.25} parent=0 // loop_footer_branch
    %8 = sbr.rel target = $region3
  $region8: #{a_call__.25} parent=0 // loop_exit
    _

// kernel: a_call__.28
$region0: #{a_call__.28}
  #allocation0 [shape = 'u32[]', space=smem, size = 0x4, offset = 0x4, fixed_abs, tag = 'smem constant byte address 0x4 - core index']
  #allocation1 [shape = 'u32[144,128]{1,0:T(1,128)}', space=vmem, size = 0x12000, scoped, tag = 'internal scratch']
  %s0 = inlined_call_operand.vmem [shape: bf16[2,16,24], index: 0, kind: input, shape index: {}]
  %s1 = inlined_call_operand.vmem [shape: bf16[24,96], index: 1, kind: input, shape index: {}]
  %s2 = inlined_call_operand.vmem [shape: f32[1,96], index: 2, kind: input, shape index: {}]
  %s3 = inlined_call_operand.vmem [shape: bf16[2,16,96], index: 3, kind: output, shape index: {}]
  %s4 = sld [smem:[#allocation0]]
  $region45: #{a_call__.28} parent=0
    _
  %s6 = ssub.s32 1, %s4
  %s7 = scalar_select 0, %s6, %s4
  loop: start=0, step=1, limit=4
  $region2: #{a_call__.28} parent=0 // loop_pre_header
    _
  $region3: #{a_call__.28} parent=0 // loop_header
    %s9 = sphi 0, %s13
    %p10 = scmp.ge.s32.totalorder %s9, 4
    %s16 = sphi 0, %s28
    %s17 = sphi 0, %s24
    %s18 = sphi 0, %s16
    %s19 = sphi 0, %s17
    %s20 = sphi 0, %s18
    %s21 = sphi 0, %s19
    %s33 = sphi 0, %s35
    %s36 = sphi 0, %s33
    %s37 = sphi 0, %s36
    %s53 = sphi 0, %s37
    %s57 = sphi 0, %s57
    %s59 = sphi 0, %s57
    %s60 = sphi 0, %s59
    %s74 = sphi 0, %s60
    %s78 = sphi 0, %s78
    %s80 = sphi 0, %s78
    %s81 = sphi 0, %s80
    %s95 = sphi 0, %s81
    %s103 = sphi 0, %s105
    %s106 = sphi 0, %s103
    %s107 = sphi 0, %s106
    %s123 = sphi 0, %s107
  $region4: #{a_call__.28} parent=0 // loop_header_branch
    %12 = sbr.rel (%p10) target = $region8
  $region5: #{a_call__.28} parent=0 // loop_body
    %s14 = ssub.s32 %s9, 1
    %s15 = ssub.s32 %s9, 2
    %s22 = sadd.s32 1, %s17
    %p23 = scmp.ge.s32.totalorder %s22, 1
    %s24 = scalar_select %p23, 0, %s22
    %s25 = sadd.s32 1, %s16
    %s26 = scalar_select %p23, %s25, %s16
    %p27 = scmp.ge.s32.totalorder %s26, 2
    %s28 = scalar_select %p27, 0, %s26
    %s29 = ssub.s32 %s16, %s28
    %s30 = ssub.s32 %s17, %s24
    %s31 = sor.u32 %s29, %s30
    %p32 = scmp.eq.s32.totalorder %s31, 0
    %s34 = sadd.s32 %s33, 1
    %s35 = scalar_select %p32, %s33, %s34
    %p38 = pneg %p32
    %p39 = scmp.eq.s32.totalorder %s9, 1
    %p40 = por %p38, %p39
    %p41 = scmp.ne.s32.totalorder %s33, %s36
    %p42 = scmp.eq.s32.totalorder %s9, 0
    %p43 = por %p41, %p42
    %p44 = scmp.ne.s32.totalorder %s33, %s36
    %p45 = scmp.eq.s32.totalorder %s14, 1
    %p46 = por %p44, %p45
    %p47 = scmp.ne.s32.totalorder %s36, %s37
    %p48 = scmp.eq.s32.totalorder %s14, 0
    %p49 = por %p47, %p48
    %p50 = scmp.ne.s32.totalorder %s36, %s37
    %p51 = scmp.eq.s32.totalorder %s15, 1
    %p52 = por %p50, %p51
    %p54 = scmp.ne.s32.totalorder %s37, %s53
    %p55 = scmp.eq.s32.totalorder %s15, 0
    %p56 = por %p54, %p55
    %s58 = sadd.s32 %s57, 1
    %p61 = scmp.eq.s32.totalorder %s9, 1
    %p62 = scmp.ne.s32.totalorder %s57, %s59
    %p63 = scmp.eq.s32.totalorder %s9, 0
    %p64 = por %p62, %p63
    %p65 = scmp.ne.s32.totalorder %s57, %s59
    %p66 = scmp.eq.s32.totalorder %s14, 1
    %p67 = por %p65, %p66
    %p68 = scmp.ne.s32.totalorder %s59, %s60
    %p69 = scmp.eq.s32.totalorder %s14, 0
    %p70 = por %p68, %p69
    %p71 = scmp.ne.s32.totalorder %s59, %s60
    %p72 = scmp.eq.s32.totalorder %s15, 1
    %p73 = por %p71, %p72
    %p75 = scmp.ne.s32.totalorder %s60, %s74
    %p76 = scmp.eq.s32.totalorder %s15, 0
    %p77 = por %p75, %p76
    %s79 = sadd.s32 %s78, 1
    %p82 = scmp.eq.s32.totalorder %s9, 1
    %p83 = scmp.ne.s32.totalorder %s78, %s80
    %p84 = scmp.eq.s32.totalorder %s9, 0
    %p85 = por %p83, %p84
    %p86 = scmp.ne.s32.totalorder %s78, %s80
    %p87 = scmp.eq.s32.totalorder %s14, 1
    %p88 = por %p86, %p87
    %p89 = scmp.ne.s32.totalorder %s80, %s81
    %p90 = scmp.eq.s32.totalorder %s14, 0
    %p91 = por %p89, %p90
    %p92 = scmp.ne.s32.totalorder %s80, %s81
    %p93 = scmp.eq.s32.totalorder %s15, 1
    %p94 = por %p92, %p93
    %p96 = scmp.ne.s32.totalorder %s81, %s95
    %p97 = scmp.eq.s32.totalorder %s15, 0
    %p98 = por %p96, %p97
    %s99 = ssub.s32 %s16, %s28
    %s100 = ssub.s32 %s17, %s24
    %s101 = sor.u32 %s99, %s100
    %p102 = scmp.eq.s32.totalorder %s101, 0
    %s104 = sadd.s32 %s103, 1
    %s105 = scalar_select %p102, %s103, %s104
    %p108 = pneg %p102
    %p109 = scmp.eq.s32.totalorder %s9, 1
    %p110 = por %p108, %p109
    %p111 = scmp.ne.s32.totalorder %s103, %s106
    %p112 = scmp.eq.s32.totalorder %s9, 0
    %p113 = por %p111, %p112
    %p114 = scmp.ne.s32.totalorder %s103, %s106
    %p115 = scmp.eq.s32.totalorder %s14, 1
    %p116 = por %p114, %p115
    %p117 = scmp.ne.s32.totalorder %s106, %s107
    %p118 = scmp.eq.s32.totalorder %s14, 0
    %p119 = por %p117, %p118
    %p120 = scmp.ne.s32.totalorder %s106, %s107
    %p121 = scmp.eq.s32.totalorder %s15, 1
    %p122 = por %p120, %p121
    %p124 = scmp.ne.s32.totalorder %s107, %s123
    %p125 = scmp.eq.s32.totalorder %s15, 0
    %p126 = por %p124, %p125
    %p127 = scmp.le.s32.totalorder 1, %s9
    %p128 = scmp.lt.s32.totalorder %s9, 3
    %p129 = pnand %p127, %p128
    %p130 = pneg %p129
    // Predicated region
    $region9: #{a_call__.28} parent=5 // pred_check
      _
    $region10: #{a_call__.28} parent=5 // pred_check_branch
      %132 = sbr.rel (%p129) target = $region12
    $region11: #{a_call__.28} parent=5 // pred_region
      %s133 = ssub.s32 %s9, 1
      // Predicated region
      $region13: #{a_call__.28} parent=11 // pred_check
        %p134 = pneg %p70
      $region14: #{a_call__.28} parent=11 // pred_check_branch
        %136 = sbr.rel (%p134) target = $region16
      $region15: #{a_call__.28} parent=11 // pred_region
        _
      $region16: #{a_call__.28} parent=11 // pred_fallthru
        _
      // Predicated region
      $region17: #{a_call__.28} parent=11 // pred_check
        %p137 = pneg %p91
      $region18: #{a_call__.28} parent=11 // pred_check_branch
        %139 = sbr.rel (%p137) target = $region20
      $region19: #{a_call__.28} parent=11 // pred_region
        _
      $region20: #{a_call__.28} parent=11 // pred_fallthru
        _
    $region12: #{a_call__.28} parent=5 // pred_fallthru
      _
    %p140 = scmp.lt.s32.totalorder %s9, 2
    // Predicated region
    $region21: #{a_call__.28} parent=5 // pred_check
      %p141 = pneg %p140
    $region22: #{a_call__.28} parent=5 // pred_check_branch
      %143 = sbr.rel (%p141) target = $region24
    $region23: #{a_call__.28} parent=5 // pred_region
      // Predicated region
      $region25: #{a_call__.28} parent=23 // pred_check
        %p144 = pneg %p43
      $region26: #{a_call__.28} parent=23 // pred_check_branch
        %146 = sbr.rel (%p144) target = $region28
      $region27: #{a_call__.28} parent=23 // pred_region
        %s147 = smul.u32 2, %s17
        %p148 = scmp.lt.s32.totalorder %s16, 1
        %s149 = scalar_select %p148, %s16, 1
        %p150 = scmp.lt.s32.totalorder %s147, 1
        %s151 = scalar_select %p150, %s147, 1
        %s152 = smul.addr %s149, 2
        %s153 = sadd.s32 %s151, %s152
        %s154 = smul.addr %s153, 4
        %s155 = scalar_lea.vmem %s0, %s154
        %s156 = smul.u32 2, %s17
      $region28: #{a_call__.28} parent=23 // pred_fallthru
        _
    $region24: #{a_call__.28} parent=5 // pred_fallthru
      _
    %p157 = scmp.le.s32.totalorder 1, %s9
    %p158 = scmp.lt.s32.totalorder %s9, 3
    %p159 = pnand %p157, %p158
    %p160 = pneg %p159
    // Predicated region
    $region29: #{a_call__.28} parent=5 // pred_check
      _
    $region30: #{a_call__.28} parent=5 // pred_check_branch
      %162 = sbr.rel (%p159) target = $region32
    $region31: #{a_call__.28} parent=5 // pred_region
      %s163 = ssub.s32 %s9, 1
      %s164 = smul.u32 2, %s19
      %p165 = scmp.lt.s32.totalorder %s18, 1
      %s166 = scalar_select %p165, %s18, 1
      %p167 = scmp.lt.s32.totalorder %s164, 1
      %s168 = scalar_select %p167, %s164, 1
      %s169 = smul.addr %s166, 2
      %s170 = sadd.s32 %s168, %s169
      %s171 = smul.addr %s170, 4
      %s172 = scalar_lea.vmem %s0, %s171
      %p173 = pneg %p49
      %p174 = pneg %p46
      %p175 = pneg %p70
      %p176 = pneg %p67
      %p177 = pneg %p91
      %p178 = pneg %p88
      %p179 = pneg %p119
      %p180 = pneg %p116
      %s181 = smul.u32 2, %s19
      %p182 = scmp.lt.s32.totalorder %s18, 1
      %s183 = scalar_select %p182, %s18, 1
      %p184 = scmp.lt.s32.totalorder %s181, 1
      %s185 = scalar_select %p184, %s181, 1
      %s186 = smul.addr %s183, 2
      %s187 = sadd.s32 %s185, %s186
      %s188 = smul.addr %s187, 4
      %s189 = scalar_lea.vmem %s3, %s188
      %s190 = smul.u32 2, %s19
      %p191 = scmp.lt.s32.totalorder %s18, 1
      %s192 = scalar_select %p191, %s18, 1
      %p193 = scmp.lt.s32.totalorder %s190, 1
      %s194 = scalar_select %p193, %s190, 1
      %s195 = smul.addr %s192, 2
      %s196 = sadd.s32 %s194, %s195
      %s197 = smul.addr %s196, 4
      %s198 = scalar_lea.vmem %s0, %s197
      %s199 = smul.u32 2, %s19
      %s200 = smul.u32 2, %s19
      %p201 = scmp.lt.s32.totalorder %s18, 1
      %s202 = scalar_select %p201, %s18, 1
      %p203 = scmp.lt.s32.totalorder %s200, 1
      %s204 = scalar_select %p203, %s200, 1
      %s205 = smul.addr %s202, 2
      %s206 = sadd.s32 %s204, %s205
      %s207 = smul.addr %s206, 4
      %s208 = scalar_lea.vmem %s3, %s207
      %s209 = smul.u32 2, %s19
      %v211 = vld [vmem:[%s198] sm:$0xf]
      %v212 = vld [vmem:[%s198 + $0x4] sm:$0xf]
      %v213 = vld [vmem:[%s1] sm:$0xf]
      %v214 = vld [vmem:[%s1 + $0x4] sm:$0xf]
      %v215 = vld [vmem:[%s1 + $0x8] sm:$0xf]
      %v216 = vld [vmem:[%s2] sm:$0x1]
      %v218 = vlaneseq
      %v219 = vshrl.u32 %v218, 7
      %v220 = vsub.s32 0, %v219
      %v221 = vrot.slane %v216, %v220
      %v225 = vunpack.c.l.b16 %v211
      %v226 = vunpack.c.l.b16 %v212
      %v227 = vpack.c.b16 %v226, %v225
      %v231 = vunpack.c.l.b16 %v213
      %v232 = vunpack.c.l.b16 %v214
      %v233 = vunpack.c.l.b16 %v215
      %v234 = vpack.c.b16 %v232, %v231
      %v235 = vpack.c.b16 %v233, %v233
      %vm237 = vcmask 195584
      %v239 = vsel %vm237, %v227, 0
      %vm241 = vcmask 1043456
      %v243 = vsel %vm241, %v235, 0
      %245 = vmatprep.subr.bf16.mxu0 0
      %246 = vmatpush1.bf16.msra.mxu0 %v234
      %247 = vmatprep.subr.bf16.mxu0 0
      %248 = vmatpush1.bf16.msra.mxu0 %v243
      %249 = vmatprep.subr.bf16.mxu0 0
      %250 = vmatpush1.bf16.msra.mxu0 0
      %251 = vmatprep.subr.bf16.mxu0 0
      %252 = vmatpush1.bf16.msra.mxu0 0
      %253 = vmatprep.subr.bf16.mxu0 0
      %254 = vmatpush1.bf16.msra.mxu0 0
      %255 = vmatprep.subr.bf16.mxu0 0
      %256 = vmatpush1.bf16.msra.mxu0 0
      %257 = vmatprep.subr.bf16.mxu0 0
      %258 = vmatpush1.bf16.msra.mxu0 0
      %259 = vmatprep.subr.bf16.mxu0 0
      %260 = vmatpush1.bf16.msra.mxu0 0
      %261 = vmatprep.subr.bf16.mxu0 0
      %262 = vmatpush1.bf16.msra.mxu0 0
      %263 = vmatprep.subr.bf16.mxu0 0
      %264 = vmatpush1.bf16.msra.mxu0 0
      %265 = vmatprep.subr.bf16.mxu0 0
      %266 = vmatpush1.bf16.msra.mxu0 0
      %267 = vmatprep.subr.bf16.mxu0 0
      %268 = vmatpush1.bf16.msra.mxu0 0
      %269 = vmatprep.subr.bf16.mxu0 0
      %270 = vmatpush1.bf16.msra.mxu0 0
      %271 = vmatprep.subr.bf16.mxu0 0
      %272 = vmatpush1.bf16.msra.mxu0 0
      %273 = vmatprep.subr.bf16.mxu0 0
      %274 = vmatpush1.bf16.msra.mxu0 0
      %275 = vmatprep.subr.bf16.mxu0 0
      %276 = vmatpush1.bf16.msra.mxu0 0
      %277 = vmatprep.mubr.bf16.mxu0 0
      %278 = vmatmul.mubr.bf16.gmra.mrb[0].mxu0 %v239
      %v279 = vpop.f32.mrb[0].mxu0
      %v280 = vadd.f32 %v221, %v279
      %v281 = vpop.f32.mrb[0].mxu0
      %v282 = vpop.f32.mrb[0].mxu0
      %v283 = vadd.f32 %v221, %v282
      %v284 = vpop.f32.mrb[0].mxu0
      %285 = vdwg.mxu0
      %v286 = vadd.f32 %v280, 3.0
      %v287 = vadd.f32 %v283, 3.0
      %v288 = vmax.f32 %v286, 0.0
      %v289 = vmax.f32 %v287, 0.0
      %v290 = vmin.f32 %v288, 6.0
      %v291 = vmin.f32 %v289, 6.0
      %v292 = vrcp.pop 6.0
      %v293 = vmul.f32 %v290, %v292
      %v294 = vmul.f32 %v291, %v292
      %v295 = vmul.f32 %v280, %v293
      %v296 = vmul.f32 %v283, %v294
      %v297 = vpack.c.bf16 %v296, %v295
      %v299 = vunpack.c.l.b16 %v297
      %v300 = vunpack.c.h.b16 %v297
      %v301 = vpack.c.b16 %v299, %v299
      %v302 = vpack.c.b16 %v300, %v300
      %vm305 = vcmask 781312
      %306 = vst.msk [vmem:[%s208] sm:$0xf] %vm305, %v301
      %307 = vst.msk [vmem:[%s208 + $0x4] sm:$0xf] %vm305, %v302
      %s308 = smul.u32 2, %s19
      %p309 = scmp.lt.s32.totalorder %s18, 1
      %s310 = scalar_select %p309, %s18, 1
      %p311 = scmp.lt.s32.totalorder %s308, 1
      %s312 = scalar_select %p311, %s308, 1
      %s313 = smul.addr %s310, 2
      %s314 = sadd.s32 %s312, %s313
      %s315 = smul.addr %s314, 4
      %s316 = scalar_lea.vmem %s3, %s315
      // Predicated region
      $region33: #{a_call__.28} parent=31 // pred_check
        %p317 = pneg %p116
      $region34: #{a_call__.28} parent=31 // pred_check_branch
        %319 = sbr.rel (%p317) target = $region36
      $region35: #{a_call__.28} parent=31 // pred_region
        %s320 = smul.u32 2, %s19
      $region36: #{a_call__.28} parent=31 // pred_fallthru
        _
    $region32: #{a_call__.28} parent=5 // pred_fallthru
      _
    %p321 = scmp.le.s32.totalorder 2, %s9
    // Predicated region
    $region37: #{a_call__.28} parent=5 // pred_check
      %p322 = pneg %p321
    $region38: #{a_call__.28} parent=5 // pred_check_branch
      %324 = sbr.rel (%p322) target = $region40
    $region39: #{a_call__.28} parent=5 // pred_region
      %s325 = ssub.s32 %s9, 2
      // Predicated region
      $region41: #{a_call__.28} parent=39 // pred_check
        %p326 = pneg %p122
      $region42: #{a_call__.28} parent=39 // pred_check_branch
        %328 = sbr.rel (%p326) target = $region44
      $region43: #{a_call__.28} parent=39 // pred_region
        %s329 = smul.u32 2, %s21
        %p330 = scmp.lt.s32.totalorder %s20, 1
        %s331 = scalar_select %p330, %s20, 1
        %p332 = scmp.lt.s32.totalorder %s329, 1
        %s333 = scalar_select %p332, %s329, 1
        %s334 = smul.addr %s331, 2
        %s335 = sadd.s32 %s333, %s334
        %s336 = smul.addr %s335, 4
        %s337 = scalar_lea.vmem %s3, %s336
      $region44: #{a_call__.28} parent=39 // pred_fallthru
        _
    $region40: #{a_call__.28} parent=5 // pred_fallthru
      _
  $region6: #{a_call__.28} parent=0 // loop_footer
    %s13 = sadd.s32 1, %s9
  $region7: #{a_call__.28} parent=0 // loop_footer_branch
    %8 = sbr.rel target = $region3
  $region8: #{a_call__.28} parent=0 // loop_exit
    _

// kernel: a_call__.27
$region0: #{a_call__.27}
  #allocation0 [shape = 'u32[]', space=smem, size = 0x4, offset = 0x4, fixed_abs, tag = 'smem constant byte address 0x4 - core index']
  #allocation1 [shape = 'u32[144,128]{1,0:T(1,128)}', space=vmem, size = 0x12000, scoped, tag = 'internal scratch']
  %s0 = inlined_call_operand.vmem [shape: bf16[2,16,88], index: 0, kind: input, shape index: {}]
  %s1 = inlined_call_operand.vmem [shape: bf16[88,24], index: 1, kind: input, shape index: {}]
  %s2 = inlined_call_operand.vmem [shape: f32[1,24], index: 2, kind: input, shape index: {}]
  %s3 = inlined_call_operand.vmem [shape: bf16[2,16,24], index: 3, kind: input, shape index: {}]
  %s4 = inlined_call_operand.vmem [shape: bf16[2,16,24], index: 4, kind: output, shape index: {}]
  %s5 = sld [smem:[#allocation0]]
  $region49: #{a_call__.27} parent=0
    _
  %s7 = ssub.s32 1, %s5
  %s8 = scalar_select 0, %s7, %s5
  loop: start=0, step=1, limit=4
  $region2: #{a_call__.27} parent=0 // loop_pre_header
    _
  $region3: #{a_call__.27} parent=0 // loop_header
    %s10 = sphi 0, %s14
    %p11 = scmp.ge.s32.totalorder %s10, 4
    %s17 = sphi 0, %s29
    %s18 = sphi 0, %s25
    %s19 = sphi 0, %s17
    %s20 = sphi 0, %s18
    %s21 = sphi 0, %s19
    %s22 = sphi 0, %s20
    %s34 = sphi 0, %s36
    %s37 = sphi 0, %s34
    %s38 = sphi 0, %s37
    %s54 = sphi 0, %s38
    %s58 = sphi 0, %s58
    %s60 = sphi 0, %s58
    %s61 = sphi 0, %s60
    %s75 = sphi 0, %s61
    %s79 = sphi 0, %s79
    %s81 = sphi 0, %s79
    %s82 = sphi 0, %s81
    %s96 = sphi 0, %s82
    %s104 = sphi 0, %s106
    %s107 = sphi 0, %s104
    %s108 = sphi 0, %s107
    %s124 = sphi 0, %s108
    %s132 = sphi 0, %s134
    %s135 = sphi 0, %s132
    %s136 = sphi 0, %s135
    %s152 = sphi 0, %s136
  $region4: #{a_call__.27} parent=0 // loop_header_branch
    %13 = sbr.rel (%p11) target = $region8
  $region5: #{a_call__.27} parent=0 // loop_body
    %s15 = ssub.s32 %s10, 1
    %s16 = ssub.s32 %s10, 2
    %s23 = sadd.s32 1, %s18
    %p24 = scmp.ge.s32.totalorder %s23, 1
    %s25 = scalar_select %p24, 0, %s23
    %s26 = sadd.s32 1, %s17
    %s27 = scalar_select %p24, %s26, %s17
    %p28 = scmp.ge.s32.totalorder %s27, 2
    %s29 = scalar_select %p28, 0, %s27
    %s30 = ssub.s32 %s17, %s29
    %s31 = ssub.s32 %s18, %s25
    %s32 = sor.u32 %s30, %s31
    %p33 = scmp.eq.s32.totalorder %s32, 0
    %s35 = sadd.s32 %s34, 1
    %s36 = scalar_select %p33, %s34, %s35
    %p39 = pneg %p33
    %p40 = scmp.eq.s32.totalorder %s10, 1
    %p41 = por %p39, %p40
    %p42 = scmp.ne.s32.totalorder %s34, %s37
    %p43 = scmp.eq.s32.totalorder %s10, 0
    %p44 = por %p42, %p43
    %p45 = scmp.ne.s32.totalorder %s34, %s37
    %p46 = scmp.eq.s32.totalorder %s15, 1
    %p47 = por %p45, %p46
    %p48 = scmp.ne.s32.totalorder %s37, %s38
    %p49 = scmp.eq.s32.totalorder %s15, 0
    %p50 = por %p48, %p49
    %p51 = scmp.ne.s32.totalorder %s37, %s38
    %p52 = scmp.eq.s32.totalorder %s16, 1
    %p53 = por %p51, %p52
    %p55 = scmp.ne.s32.totalorder %s38, %s54
    %p56 = scmp.eq.s32.totalorder %s16, 0
    %p57 = por %p55, %p56
    %s59 = sadd.s32 %s58, 1
    %p62 = scmp.eq.s32.totalorder %s10, 1
    %p63 = scmp.ne.s32.totalorder %s58, %s60
    %p64 = scmp.eq.s32.totalorder %s10, 0
    %p65 = por %p63, %p64
    %p66 = scmp.ne.s32.totalorder %s58, %s60
    %p67 = scmp.eq.s32.totalorder %s15, 1
    %p68 = por %p66, %p67
    %p69 = scmp.ne.s32.totalorder %s60, %s61
    %p70 = scmp.eq.s32.totalorder %s15, 0
    %p71 = por %p69, %p70
    %p72 = scmp.ne.s32.totalorder %s60, %s61
    %p73 = scmp.eq.s32.totalorder %s16, 1
    %p74 = por %p72, %p73
    %p76 = scmp.ne.s32.totalorder %s61, %s75
    %p77 = scmp.eq.s32.totalorder %s16, 0
    %p78 = por %p76, %p77
    %s80 = sadd.s32 %s79, 1
    %p83 = scmp.eq.s32.totalorder %s10, 1
    %p84 = scmp.ne.s32.totalorder %s79, %s81
    %p85 = scmp.eq.s32.totalorder %s10, 0
    %p86 = por %p84, %p85
    %p87 = scmp.ne.s32.totalorder %s79, %s81
    %p88 = scmp.eq.s32.totalorder %s15, 1
    %p89 = por %p87, %p88
    %p90 = scmp.ne.s32.totalorder %s81, %s82
    %p91 = scmp.eq.s32.totalorder %s15, 0
    %p92 = por %p90, %p91
    %p93 = scmp.ne.s32.totalorder %s81, %s82
    %p94 = scmp.eq.s32.totalorder %s16, 1
    %p95 = por %p93, %p94
    %p97 = scmp.ne.s32.totalorder %s82, %s96
    %p98 = scmp.eq.s32.totalorder %s16, 0
    %p99 = por %p97, %p98
    %s100 = ssub.s32 %s17, %s29
    %s101 = ssub.s32 %s18, %s25
    %s102 = sor.u32 %s100, %s101
    %p103 = scmp.eq.s32.totalorder %s102, 0
    %s105 = sadd.s32 %s104, 1
    %s106 = scalar_select %p103, %s104, %s105
    %p109 = pneg %p103
    %p110 = scmp.eq.s32.totalorder %s10, 1
    %p111 = por %p109, %p110
    %p112 = scmp.ne.s32.totalorder %s104, %s107
    %p113 = scmp.eq.s32.totalorder %s10, 0
    %p114 = por %p112, %p113
    %p115 = scmp.ne.s32.totalorder %s104, %s107
    %p116 = scmp.eq.s32.totalorder %s15, 1
    %p117 = por %p115, %p116
    %p118 = scmp.ne.s32.totalorder %s107, %s108
    %p119 = scmp.eq.s32.totalorder %s15, 0
    %p120 = por %p118, %p119
    %p121 = scmp.ne.s32.totalorder %s107, %s108
    %p122 = scmp.eq.s32.totalorder %s16, 1
    %p123 = por %p121, %p122
    %p125 = scmp.ne.s32.totalorder %s108, %s124
    %p126 = scmp.eq.s32.totalorder %s16, 0
    %p127 = por %p125, %p126
    %s128 = ssub.s32 %s17, %s29
    %s129 = ssub.s32 %s18, %s25
    %s130 = sor.u32 %s128, %s129
    %p131 = scmp.eq.s32.totalorder %s130, 0
    %s133 = sadd.s32 %s132, 1
    %s134 = scalar_select %p131, %s132, %s133
    %p137 = pneg %p131
    %p138 = scmp.eq.s32.totalorder %s10, 1
    %p139 = por %p137, %p138
    %p140 = scmp.ne.s32.totalorder %s132, %s135
    %p141 = scmp.eq.s32.totalorder %s10, 0
    %p142 = por %p140, %p141
    %p143 = scmp.ne.s32.totalorder %s132, %s135
    %p144 = scmp.eq.s32.totalorder %s15, 1
    %p145 = por %p143, %p144
    %p146 = scmp.ne.s32.totalorder %s135, %s136
    %p147 = scmp.eq.s32.totalorder %s15, 0
    %p148 = por %p146, %p147
    %p149 = scmp.ne.s32.totalorder %s135, %s136
    %p150 = scmp.eq.s32.totalorder %s16, 1
    %p151 = por %p149, %p150
    %p153 = scmp.ne.s32.totalorder %s136, %s152
    %p154 = scmp.eq.s32.totalorder %s16, 0
    %p155 = por %p153, %p154
    %p156 = scmp.le.s32.totalorder 1, %s10
    %p157 = scmp.lt.s32.totalorder %s10, 3
    %p158 = pnand %p156, %p157
    %p159 = pneg %p158
    // Predicated region
    $region9: #{a_call__.27} parent=5 // pred_check
      _
    $region10: #{a_call__.27} parent=5 // pred_check_branch
      %161 = sbr.rel (%p158) target = $region12
    $region11: #{a_call__.27} parent=5 // pred_region
      %s162 = ssub.s32 %s10, 1
      // Predicated region
      $region13: #{a_call__.27} parent=11 // pred_check
        %p163 = pneg %p71
      $region14: #{a_call__.27} parent=11 // pred_check_branch
        %165 = sbr.rel (%p163) target = $region16
      $region15: #{a_call__.27} parent=11 // pred_region
        _
      $region16: #{a_call__.27} parent=11 // pred_fallthru
        _
      // Predicated region
      $region17: #{a_call__.27} parent=11 // pred_check
        %p166 = pneg %p92
      $region18: #{a_call__.27} parent=11 // pred_check_branch
        %168 = sbr.rel (%p166) target = $region20
      $region19: #{a_call__.27} parent=11 // pred_region
        _
      $region20: #{a_call__.27} parent=11 // pred_fallthru
        _
    $region12: #{a_call__.27} parent=5 // pred_fallthru
      _
    %p169 = scmp.lt.s32.totalorder %s10, 2
    // Predicated region
    $region21: #{a_call__.27} parent=5 // pred_check
      %p170 = pneg %p169
    $region22: #{a_call__.27} parent=5 // pred_check_branch
      %172 = sbr.rel (%p170) target = $region24
    $region23: #{a_call__.27} parent=5 // pred_region
      // Predicated region
      $region25: #{a_call__.27} parent=23 // pred_check
        %p173 = pneg %p44
      $region26: #{a_call__.27} parent=23 // pred_check_branch
        %175 = sbr.rel (%p173) target = $region28
      $region27: #{a_call__.27} parent=23 // pred_region
        %s176 = smul.u32 2, %s18
        %p177 = scmp.lt.s32.totalorder %s17, 1
        %s178 = scalar_select %p177, %s17, 1
        %p179 = scmp.lt.s32.totalorder %s176, 1
        %s180 = scalar_select %p179, %s176, 1
        %s181 = smul.addr %s178, 2
        %s182 = sadd.s32 %s180, %s181
        %s183 = smul.addr %s182, 4
        %s184 = scalar_lea.vmem %s0, %s183
        %s185 = smul.u32 2, %s18
      $region28: #{a_call__.27} parent=23 // pred_fallthru
        _
      // Predicated region
      $region29: #{a_call__.27} parent=23 // pred_check
        %p186 = pneg %p114
      $region30: #{a_call__.27} parent=23 // pred_check_branch
        %188 = sbr.rel (%p186) target = $region32
      $region31: #{a_call__.27} parent=23 // pred_region
        %s189 = smul.u32 2, %s18
        %p190 = scmp.lt.s32.totalorder %s17, 1
        %s191 = scalar_select %p190, %s17, 1
        %p192 = scmp.lt.s32.totalorder %s189, 1
        %s193 = scalar_select %p192, %s189, 1
        %s194 = smul.addr %s191, 2
        %s195 = sadd.s32 %s193, %s194
        %s196 = smul.addr %s195, 4
        %s197 = scalar_lea.vmem %s3, %s196
        %s198 = smul.u32 2, %s18
      $region32: #{a_call__.27} parent=23 // pred_fallthru
        _
    $region24: #{a_call__.27} parent=5 // pred_fallthru
      _
    %p199 = scmp.le.s32.totalorder 1, %s10
    %p200 = scmp.lt.s32.totalorder %s10, 3
    %p201 = pnand %p199, %p200
    %p202 = pneg %p201
    // Predicated region
    $region33: #{a_call__.27} parent=5 // pred_check
      _
    $region34: #{a_call__.27} parent=5 // pred_check_branch
      %204 = sbr.rel (%p201) target = $region36
    $region35: #{a_call__.27} parent=5 // pred_region
      %s205 = ssub.s32 %s10, 1
      %s206 = smul.u32 2, %s20
      %p207 = scmp.lt.s32.totalorder %s19, 1
      %s208 = scalar_select %p207, %s19, 1
      %p209 = scmp.lt.s32.totalorder %s206, 1
      %s210 = scalar_select %p209, %s206, 1
      %s211 = smul.addr %s208, 2
      %s212 = sadd.s32 %s210, %s211
      %s213 = smul.addr %s212, 4
      %s214 = scalar_lea.vmem %s0, %s213
      %p215 = pneg %p50
      %p216 = pneg %p47
      %p217 = pneg %p71
      %p218 = pneg %p68
      %p219 = pneg %p92
      %p220 = pneg %p89
      %s221 = smul.u32 2, %s20
      %p222 = scmp.lt.s32.totalorder %s19, 1
      %s223 = scalar_select %p222, %s19, 1
      %p224 = scmp.lt.s32.totalorder %s221, 1
      %s225 = scalar_select %p224, %s221, 1
      %s226 = smul.addr %s223, 2
      %s227 = sadd.s32 %s225, %s226
      %s228 = smul.addr %s227, 4
      %s229 = scalar_lea.vmem %s3, %s228
      %p230 = pneg %p120
      %p231 = pneg %p117
      %p232 = pneg %p148
      %p233 = pneg %p145
      %s234 = smul.u32 2, %s20
      %p235 = scmp.lt.s32.totalorder %s19, 1
      %s236 = scalar_select %p235, %s19, 1
      %p237 = scmp.lt.s32.totalorder %s234, 1
      %s238 = scalar_select %p237, %s234, 1
      %s239 = smul.addr %s236, 2
      %s240 = sadd.s32 %s238, %s239
      %s241 = smul.addr %s240, 4
      %s242 = scalar_lea.vmem %s4, %s241
      %s243 = smul.u32 2, %s20
      %p244 = scmp.lt.s32.totalorder %s19, 1
      %s245 = scalar_select %p244, %s19, 1
      %p246 = scmp.lt.s32.totalorder %s243, 1
      %s247 = scalar_select %p246, %s243, 1
      %s248 = smul.addr %s245, 2
      %s249 = sadd.s32 %s247, %s248
      %s250 = smul.addr %s249, 4
      %s251 = scalar_lea.vmem %s0, %s250
      %s252 = smul.u32 2, %s20
      %s253 = smul.u32 2, %s20
      %p254 = scmp.lt.s32.totalorder %s19, 1
      %s255 = scalar_select %p254, %s19, 1
      %p256 = scmp.lt.s32.totalorder %s253, 1
      %s257 = scalar_select %p256, %s253, 1
      %s258 = smul.addr %s255, 2
      %s259 = sadd.s32 %s257, %s258
      %s260 = smul.addr %s259, 4
      %s261 = scalar_lea.vmem %s3, %s260
      %s262 = smul.u32 2, %s20
      %s263 = smul.u32 2, %s20
      %p264 = scmp.lt.s32.totalorder %s19, 1
      %s265 = scalar_select %p264, %s19, 1
      %p266 = scmp.lt.s32.totalorder %s263, 1
      %s267 = scalar_select %p266, %s263, 1
      %s268 = smul.addr %s265, 2
      %s269 = sadd.s32 %s267, %s268
      %s270 = smul.addr %s269, 4
      %s271 = scalar_lea.vmem %s4, %s270
      %s272 = smul.u32 2, %s20
      %v274 = vld [vmem:[%s251] sm:$0xf]
      %v275 = vld [vmem:[%s251 + $0x4] sm:$0xf]
      %v276 = vld [vmem:[%s1] sm:$0xf]
      %v277 = vld [vmem:[%s1 + $0x4] sm:$0xf]
      %v278 = vld [vmem:[%s1 + $0x8] sm:$0xf]
      %v279 = vld [vmem:[%s1 + $0xc] sm:$0xf]
      %v280 = vld [vmem:[%s1 + $0x10] sm:$0xf]
      %v281 = vld [vmem:[%s1 + $0x14] sm:$0xf]
      %v282 = vld [vmem:[%s1 + $0x18] sm:$0xf]
      %v283 = vld [vmem:[%s1 + $0x1c] sm:$0xf]
      %v284 = vld [vmem:[%s1 + $0x20] sm:$0xf]
      %v285 = vld [vmem:[%s1 + $0x24] sm:$0xf]
      %v286 = vld [vmem:[%s1 + $0x28] sm:$0xf]
      %v287 = vld [vmem:[%s2] sm:$0x1]
      %v289 = vlaneseq
      %v290 = vshrl.u32 %v289, 7
      %v291 = vsub.s32 0, %v290
      %v292 = vrot.slane %v287, %v291
      %v296 = vunpack.c.l.b16 %v274
      %v297 = vunpack.c.l.b16 %v275
      %v298 = vpack.c.b16 %v297, %v296
      %v310 = vunpack.c.l.b16 %v276
      %v311 = vunpack.c.l.b16 %v277
      %v312 = vunpack.c.l.b16 %v278
      %v313 = vunpack.c.l.b16 %v279
      %v314 = vunpack.c.l.b16 %v280
      %v315 = vunpack.c.l.b16 %v281
      %v316 = vunpack.c.l.b16 %v282
      %v317 = vunpack.c.l.b16 %v283
      %v318 = vunpack.c.l.b16 %v284
      %v319 = vunpack.c.l.b16 %v285
      %v320 = vunpack.c.l.b16 %v286
      %v321 = vpack.c.b16 %v311, %v310
      %v322 = vpack.c.b16 %v313, %v312
      %v323 = vpack.c.b16 %v315, %v314
      %v324 = vpack.c.b16 %v317, %v316
      %v325 = vpack.c.b16 %v319, %v318
      %v326 = vpack.c.b16 %v320, %v320
      %vm332 = vcmask 719872
      %v334 = vsel %vm332, %v298, 0
      %vm336 = vcmask 1043456
      %v338 = vsel %vm336, %v326, 0
      %340 = vmatprep.subr.bf16.mxu0 0
      %341 = vmatpush1.bf16.msra.mxu0 %v321
      %342 = vmatprep.subr.bf16.mxu0 0
      %343 = vmatpush1.bf16.msra.mxu0 %v322
      %344 = vmatprep.subr.bf16.mxu0 0
      %345 = vmatpush1.bf16.msra.mxu0 %v323
      %346 = vmatprep.subr.bf16.mxu0 0
      %347 = vmatpush1.bf16.msra.mxu0 %v324
      %348 = vmatprep.subr.bf16.mxu0 0
      %349 = vmatpush1.bf16.msra.mxu0 %v325
      %350 = vmatprep.subr.bf16.mxu0 0
      %351 = vmatpush1.bf16.msra.mxu0 %v338
      %352 = vmatprep.subr.bf16.mxu0 0
      %353 = vmatpush1.bf16.msra.mxu0 0
      %354 = vmatprep.subr.bf16.mxu0 0
      %355 = vmatpush1.bf16.msra.mxu0 0
      %356 = vmatprep.subr.bf16.mxu0 0
      %357 = vmatpush1.bf16.msra.mxu0 0
      %358 = vmatprep.subr.bf16.mxu0 0
      %359 = vmatpush1.bf16.msra.mxu0 0
      %360 = vmatprep.subr.bf16.mxu0 0
      %361 = vmatpush1.bf16.msra.mxu0 0
      %362 = vmatprep.subr.bf16.mxu0 0
      %363 = vmatpush1.bf16.msra.mxu0 0
      %364 = vmatprep.subr.bf16.mxu0 0
      %365 = vmatpush1.bf16.msra.mxu0 0
      %366 = vmatprep.subr.bf16.mxu0 0
      %367 = vmatpush1.bf16.msra.mxu0 0
      %368 = vmatprep.subr.bf16.mxu0 0
      %369 = vmatpush1.bf16.msra.mxu0 0
      %370 = vmatprep.subr.bf16.mxu0 0
      %371 = vmatpush1.bf16.msra.mxu0 0
      %372 = vmatprep.mubr.bf16.mxu0 0
      %373 = vmatmul.mubr.bf16.gmra.mrb[0].mxu0 %v334
      %v374 = vpop.f32.mrb[0].mxu0
      %v375 = vadd.f32 %v292, %v374
      %v376 = vpop.f32.mrb[0].mxu0
      %v377 = vpop.f32.mrb[0].mxu0
      %v378 = vadd.f32 %v292, %v377
      %v379 = vpop.f32.mrb[0].mxu0
      %380 = vdwg.mxu0
      %v381 = vld [vmem:[%s261] sm:$0xf]
      %v382 = vld [vmem:[%s261 + $0x4] sm:$0xf]
      %v383 = vunpack.c.l.bf16 %v381
      %v384 = vunpack.c.l.bf16 %v382
      %v385 = vadd.f32 %v375, %v383
      %v386 = vadd.f32 %v378, %v384
      %v387 = vpack.c.bf16 %v386, %v385
      %v389 = vunpack.c.l.b16 %v387
      %v390 = vunpack.c.h.b16 %v387
      %v391 = vpack.c.b16 %v389, %v389
      %v392 = vpack.c.b16 %v390, %v390
      %vm395 = vcmask 191488
      %396 = vst.msk [vmem:[%s271] sm:$0xf] %vm395, %v391
      %397 = vst.msk [vmem:[%s271 + $0x4] sm:$0xf] %vm395, %v392
      %s398 = smul.u32 2, %s20
      %p399 = scmp.lt.s32.totalorder %s19, 1
      %s400 = scalar_select %p399, %s19, 1
      %p401 = scmp.lt.s32.totalorder %s398, 1
      %s402 = scalar_select %p401, %s398, 1
      %s403 = smul.addr %s400, 2
      %s404 = sadd.s32 %s402, %s403
      %s405 = smul.addr %s404, 4
      %s406 = scalar_lea.vmem %s4, %s405
      // Predicated region
      $region37: #{a_call__.27} parent=35 // pred_check
        %p407 = pneg %p145
      $region38: #{a_call__.27} parent=35 // pred_check_branch
        %409 = sbr.rel (%p407) target = $region40
      $region39: #{a_call__.27} parent=35 // pred_region
        %s410 = smul.u32 2, %s20
      $region40: #{a_call__.27} parent=35 // pred_fallthru
        _
    $region36: #{a_call__.27} parent=5 // pred_fallthru
      _
    %p411 = scmp.le.s32.totalorder 2, %s10
    // Predicated region
    $region41: #{a_call__.27} parent=5 // pred_check
      %p412 = pneg %p411
    $region42: #{a_call__.27} parent=5 // pred_check_branch
      %414 = sbr.rel (%p412) target = $region44
    $region43: #{a_call__.27} parent=5 // pred_region
      %s415 = ssub.s32 %s10, 2
      // Predicated region
      $region45: #{a_call__.27} parent=43 // pred_check
        %p416 = pneg %p151
      $region46: #{a_call__.27} parent=43 // pred_check_branch
        %418 = sbr.rel (%p416) target = $region48
      $region47: #{a_call__.27} parent=43 // pred_region
        %s419 = smul.u32 2, %s22
        %p420 = scmp.lt.s32.totalorder %s21, 1
        %s421 = scalar_select %p420, %s21, 1
        %p422 = scmp.lt.s32.totalorder %s419, 1
        %s423 = scalar_select %p422, %s419, 1
        %s424 = smul.addr %s421, 2
        %s425 = sadd.s32 %s423, %s424
        %s426 = smul.addr %s425, 4
        %s427 = scalar_lea.vmem %s4, %s426
      $region48: #{a_call__.27} parent=43 // pred_fallthru
        _
    $region44: #{a_call__.27} parent=5 // pred_fallthru
      _
  $region6: #{a_call__.27} parent=0 // loop_footer
    %s14 = sadd.s32 1, %s10
  $region7: #{a_call__.27} parent=0 // loop_footer_branch
    %9 = sbr.rel target = $region3
  $region8: #{a_call__.27} parent=0 // loop_exit
    _

// kernel: a_call__.26
$region0: #{a_call__.26}
  #allocation0 [shape = 'u32[]', space=smem, size = 0x4, offset = 0x4, fixed_abs, tag = 'smem constant byte address 0x4 - core index']
  #allocation1 [shape = 'u32[144,128]{1,0:T(1,128)}', space=vmem, size = 0x12000, scoped, tag = 'internal scratch']
  #allocation2 [shape = 'bf16[6,13,88]{2,1,0:T(8,128)(2,1)}', space=vmem, size = 0x6000, scoped, tag = 'scratch operand']
  %s0 = inlined_call_operand.vmem [shape: bf16[2,4,4,88], index: 0, kind: input, shape index: {}]
  %s1 = inlined_call_operand.vmem [shape: f32[9,1,88], index: 1, kind: input, shape index: {}]
  %s2 = inlined_call_operand.vmem [shape: f32[1,1,88], index: 2, kind: input, shape index: {}]
  %s3 = inlined_call_operand.vmem [shape: bf16[2,4,4,88], index: 3, kind: output, shape index: {}]
  %s4 = sld [smem:[#allocation0]]
  $region45: #{a_call__.26} parent=0
    _
  %s6 = ssub.s32 1, %s4
  %s7 = scalar_select 0, %s6, %s4
  loop: start=0, step=1, limit=4
  $region2: #{a_call__.26} parent=0 // loop_pre_header
    _
  $region3: #{a_call__.26} parent=0 // loop_header
    %s9 = sphi 0, %s13
    %p10 = scmp.ge.s32.totalorder %s9, 4
    %s19 = sphi 0, %s21
    %s22 = sphi 0, %s19
    %s23 = sphi 0, %s22
    %s39 = sphi 0, %s23
    %s43 = sphi 0, %s43
    %s45 = sphi 0, %s43
    %s46 = sphi 0, %s45
    %s60 = sphi 0, %s46
    %s64 = sphi 0, %s64
    %s66 = sphi 0, %s64
    %s67 = sphi 0, %s66
    %s81 = sphi 0, %s67
    %s87 = sphi 0, %s89
    %s90 = sphi 0, %s87
    %s91 = sphi 0, %s90
    %s107 = sphi 0, %s91
  $region4: #{a_call__.26} parent=0 // loop_header_branch
    %12 = sbr.rel (%p10) target = $region8
  $region5: #{a_call__.26} parent=0 // loop_body
    %s14 = ssub.s32 %s9, 1
    %s15 = ssub.s32 %s9, 2
    %s16 = sadd.s32 %s9, 1
    %s17 = ssub.s32 %s9, %s16
    %p18 = scmp.eq.s32.totalorder %s17, 0
    %s20 = sadd.s32 %s19, 1
    %s21 = scalar_select %p18, %s19, %s20
    %p24 = pneg %p18
    %p25 = scmp.eq.s32.totalorder %s9, 1
    %p26 = por %p24, %p25
    %p27 = scmp.ne.s32.totalorder %s19, %s22
    %p28 = scmp.eq.s32.totalorder %s9, 0
    %p29 = por %p27, %p28
    %p30 = scmp.ne.s32.totalorder %s19, %s22
    %p31 = scmp.eq.s32.totalorder %s14, 1
    %p32 = por %p30, %p31
    %p33 = scmp.ne.s32.totalorder %s22, %s23
    %p34 = scmp.eq.s32.totalorder %s14, 0
    %p35 = por %p33, %p34
    %p36 = scmp.ne.s32.totalorder %s22, %s23
    %p37 = scmp.eq.s32.totalorder %s15, 1
    %p38 = por %p36, %p37
    %p40 = scmp.ne.s32.totalorder %s23, %s39
    %p41 = scmp.eq.s32.totalorder %s15, 0
    %p42 = por %p40, %p41
    %s44 = sadd.s32 %s43, 1
    %p47 = scmp.eq.s32.totalorder %s9, 1
    %p48 = scmp.ne.s32.totalorder %s43, %s45
    %p49 = scmp.eq.s32.totalorder %s9, 0
    %p50 = por %p48, %p49
    %p51 = scmp.ne.s32.totalorder %s43, %s45
    %p52 = scmp.eq.s32.totalorder %s14, 1
    %p53 = por %p51, %p52
    %p54 = scmp.ne.s32.totalorder %s45, %s46
    %p55 = scmp.eq.s32.totalorder %s14, 0
    %p56 = por %p54, %p55
    %p57 = scmp.ne.s32.totalorder %s45, %s46
    %p58 = scmp.eq.s32.totalorder %s15, 1
    %p59 = por %p57, %p58
    %p61 = scmp.ne.s32.totalorder %s46, %s60
    %p62 = scmp.eq.s32.totalorder %s15, 0
    %p63 = por %p61, %p62
    %s65 = sadd.s32 %s64, 1
    %p68 = scmp.eq.s32.totalorder %s9, 1
    %p69 = scmp.ne.s32.totalorder %s64, %s66
    %p70 = scmp.eq.s32.totalorder %s9, 0
    %p71 = por %p69, %p70
    %p72 = scmp.ne.s32.totalorder %s64, %s66
    %p73 = scmp.eq.s32.totalorder %s14, 1
    %p74 = por %p72, %p73
    %p75 = scmp.ne.s32.totalorder %s66, %s67
    %p76 = scmp.eq.s32.totalorder %s14, 0
    %p77 = por %p75, %p76
    %p78 = scmp.ne.s32.totalorder %s66, %s67
    %p79 = scmp.eq.s32.totalorder %s15, 1
    %p80 = por %p78, %p79
    %p82 = scmp.ne.s32.totalorder %s67, %s81
    %p83 = scmp.eq.s32.totalorder %s15, 0
    %p84 = por %p82, %p83
    %s85 = ssub.s32 %s9, %s16
    %p86 = scmp.eq.s32.totalorder %s85, 0
    %s88 = sadd.s32 %s87, 1
    %s89 = scalar_select %p86, %s87, %s88
    %p92 = pneg %p86
    %p93 = scmp.eq.s32.totalorder %s9, 1
    %p94 = por %p92, %p93
    %p95 = scmp.ne.s32.totalorder %s87, %s90
    %p96 = scmp.eq.s32.totalorder %s9, 0
    %p97 = por %p95, %p96
    %p98 = scmp.ne.s32.totalorder %s87, %s90
    %p99 = scmp.eq.s32.totalorder %s14, 1
    %p100 = por %p98, %p99
    %p101 = scmp.ne.s32.totalorder %s90, %s91
    %p102 = scmp.eq.s32.totalorder %s14, 0
    %p103 = por %p101, %p102
    %p104 = scmp.ne.s32.totalorder %s90, %s91
    %p105 = scmp.eq.s32.totalorder %s15, 1
    %p106 = por %p104, %p105
    %p108 = scmp.ne.s32.totalorder %s91, %s107
    %p109 = scmp.eq.s32.totalorder %s15, 0
    %p110 = por %p108, %p109
    %p111 = scmp.le.s32.totalorder 1, %s9
    %p112 = scmp.lt.s32.totalorder %s9, 3
    %p113 = pnand %p111, %p112
    %p114 = pneg %p113
    // Predicated region
    $region9: #{a_call__.26} parent=5 // pred_check
      _
    $region10: #{a_call__.26} parent=5 // pred_check_branch
      %116 = sbr.rel (%p113) target = $region12
    $region11: #{a_call__.26} parent=5 // pred_region
      %s117 = ssub.s32 %s9, 1
      // Predicated region
      $region13: #{a_call__.26} parent=11 // pred_check
        %p118 = pneg %p56
      $region14: #{a_call__.26} parent=11 // pred_check_branch
        %120 = sbr.rel (%p118) target = $region16
      $region15: #{a_call__.26} parent=11 // pred_region
        _
      $region16: #{a_call__.26} parent=11 // pred_fallthru
        _
      // Predicated region
      $region17: #{a_call__.26} parent=11 // pred_check
        %p121 = pneg %p77
      $region18: #{a_call__.26} parent=11 // pred_check_branch
        %123 = sbr.rel (%p121) target = $region20
      $region19: #{a_call__.26} parent=11 // pred_region
        _
      $region20: #{a_call__.26} parent=11 // pred_fallthru
        _
    $region12: #{a_call__.26} parent=5 // pred_fallthru
      _
    %p124 = scmp.lt.s32.totalorder %s9, 2
    // Predicated region
    $region21: #{a_call__.26} parent=5 // pred_check
      %p125 = pneg %p124
    $region22: #{a_call__.26} parent=5 // pred_check_branch
      %127 = sbr.rel (%p125) target = $region24
    $region23: #{a_call__.26} parent=5 // pred_region
      // Predicated region
      $region25: #{a_call__.26} parent=23 // pred_check
        %p128 = pneg %p29
      $region26: #{a_call__.26} parent=23 // pred_check_branch
        %130 = sbr.rel (%p128) target = $region28
      $region27: #{a_call__.26} parent=23 // pred_region
        %p131 = scmp.lt.s32.totalorder %s9, 1
        %s132 = scalar_select %p131, %s9, 1
        %s133 = smul.addr %s132, 4
        %s134 = smul.addr %s133, 2
        %s135 = scalar_lea.vmem %s0, %s134
      $region28: #{a_call__.26} parent=23 // pred_fallthru
        _
    $region24: #{a_call__.26} parent=5 // pred_fallthru
      _
    %p136 = scmp.le.s32.totalorder 1, %s9
    %p137 = scmp.lt.s32.totalorder %s9, 3
    %p138 = pnand %p136, %p137
    %p139 = pneg %p138
    // Predicated region
    $region29: #{a_call__.26} parent=5 // pred_check
      _
    $region30: #{a_call__.26} parent=5 // pred_check_branch
      %141 = sbr.rel (%p138) target = $region32
    $region31: #{a_call__.26} parent=5 // pred_region
      %s142 = ssub.s32 %s9, 1
      %p143 = scmp.lt.s32.totalorder %s14, 1
      %s144 = scalar_select %p143, %s14, 1
      %s145 = smul.addr %s144, 4
      %s146 = smul.addr %s145, 2
      %s147 = scalar_lea.vmem %s0, %s146
      %p148 = pneg %p35
      %p149 = pneg %p32
      %p150 = pneg %p56
      %p151 = pneg %p53
      %p152 = pneg %p77
      %p153 = pneg %p74
      %p154 = pneg %p103
      %p155 = pneg %p100
      %p156 = scmp.lt.s32.totalorder %s14, 1
      %s157 = scalar_select %p156, %s14, 1
      %s158 = smul.addr %s157, 4
      %s159 = smul.addr %s158, 2
      %s160 = scalar_lea.vmem %s3, %s159
      %p161 = scmp.lt.s32.totalorder %s14, 1
      %s162 = scalar_select %p161, %s14, 1
      %s163 = smul.addr %s162, 4
      %s164 = smul.addr %s163, 2
      %s165 = scalar_lea.vmem %s0, %s164
      %p166 = scmp.lt.s32.totalorder %s14, 1
      %s167 = scalar_select %p166, %s14, 1
      %s168 = smul.addr %s167, 4
      %s169 = smul.addr %s168, 2
      %s170 = scalar_lea.vmem %s3, %s169
      %vm172 = vcmask 715776
      %173 = vst.msk [vmem:[#allocation2] sm:$0xf] %vm172, 0
      %vm174 = vcmask 714752
      %vm175 = vsmask.f32 2304
      %vm176 = vmand %vm174, %vm175
      %v177 = vld [vmem:[#allocation2 + $0x4] sm:$0x7]
      %v178 = vsel %vm176, 0, %v177
      %179 = vst [vmem:[#allocation2 + $0x4] sm:$0x7] %v178
      %180 = vst.msk [vmem:[#allocation2 + $0x8] sm:$0xf] %vm172, 0
      %v181 = vld [vmem:[#allocation2 + $0xc] sm:$0x7]
      %v182 = vsel %vm176, 0, %v181
      %183 = vst [vmem:[#allocation2 + $0xc] sm:$0x7] %v182
      %184 = vst.msk [vmem:[#allocation2 + $0x10] sm:$0xf] %vm172, 0
      %v185 = vld [vmem:[#allocation2 + $0x14] sm:$0x7]
      %v186 = vsel %vm176, 0, %v185
      %187 = vst [vmem:[#allocation2 + $0x14] sm:$0x7] %v186
      %188 = vst.msk [vmem:[#allocation2 + $0x18] sm:$0xf] %vm172, 0
      %v189 = vld [vmem:[#allocation2 + $0x1c] sm:$0x7]
      %v190 = vsel %vm176, 0, %v189
      %191 = vst [vmem:[#allocation2 + $0x1c] sm:$0x7] %v190
      %192 = vst.msk [vmem:[#allocation2 + $0x20] sm:$0xf] %vm172, 0
      %v193 = vld [vmem:[#allocation2 + $0x24] sm:$0x7]
      %v194 = vsel %vm176, 0, %v193
      %195 = vst [vmem:[#allocation2 + $0x24] sm:$0x7] %v194
      %196 = vst.msk [vmem:[#allocation2 + $0x28] sm:$0xf] %vm172, 0
      %v197 = vld [vmem:[#allocation2 + $0x2c] sm:$0x7]
      %v198 = vsel %vm176, 0, %v197
      %199 = vst [vmem:[#allocation2 + $0x2c] sm:$0x7] %v198
      %v200 = vld [vmem:[%s165] sm:$0x3]
      %v201 = vld [vmem:[%s165 + $0x2] sm:$0x3]
      %v202 = vld [vmem:[%s165 + $0x4] sm:$0x3]
      %v203 = vld [vmem:[%s165 + $0x6] sm:$0x3]
      %s204 = scalar_lea.vmem [#allocation2], 8
      %vm205 = vcmask 713728
      %206 = vst.msk [vmem:[%s204 + $0x4] sm:$0x3] %vm205, %v200
      %207 = vst.msk [vmem:[%s204 + $0xc] sm:$0x3] %vm205, %v201
      %208 = vst.msk [vmem:[%s204 + $0x14] sm:$0x3] %vm205, %v202
      %209 = vst.msk [vmem:[%s204 + $0x1c] sm:$0x3] %vm205, %v203
      %v210 = vld [vmem:[#allocation2] sm:$0x8]
      %v211 = vld [vmem:[#allocation2 + $0x4] sm:$0x3]
      %v212 = vld [vmem:[#allocation2 + $0x8] sm:$0x8]
      %v213 = vld [vmem:[#allocation2 + $0xc] sm:$0x3]
      %v214 = vld [vmem:[#allocation2 + $0x10] sm:$0x8]
      %v215 = vld [vmem:[#allocation2 + $0x14] sm:$0x3]
      %v216 = vld [vmem:[#allocation2 + $0x18] sm:$0x8]
      %v217 = vld [vmem:[#allocation2 + $0x1c] sm:$0x3]
      %v218 = vunpack.c.l.bf16 %v210
      %v219 = vunpack.c.l.bf16 %v211
      %v220 = vunpack.c.l.bf16 %v212
      %v221 = vunpack.c.l.bf16 %v213
      %v222 = vunpack.c.l.bf16 %v214
      %v223 = vunpack.c.l.bf16 %v215
      %v224 = vunpack.c.l.bf16 %v216
      %v225 = vunpack.c.l.bf16 %v217
      %v226 = vld [vmem:[%s1] sm:$0x1]
      %v228 = vlaneseq
      %v229 = vshrl.u32 %v228, 7
      %v230 = vsub.s32 0, %v229
      %v231 = vrot.slane %v226, %v230
      %v233 = vmul.f32 %v218, %v231
      %v234 = vmul.f32 %v219, %v231
      %v235 = vmul.f32 %v220, %v231
      %v236 = vmul.f32 %v221, %v231
      %v237 = vmul.f32 %v222, %v231
      %v238 = vmul.f32 %v223, %v231
      %v239 = vmul.f32 %v224, %v231
      %v240 = vmul.f32 %v225, %v231
      %v241 = vadd.f32 %v233, 0.0
      %v242 = vadd.f32 %v234, 0.0
      %v243 = vadd.f32 %v235, 0.0
      %v244 = vadd.f32 %v236, 0.0
      %v245 = vadd.f32 %v237, 0.0
      %v246 = vadd.f32 %v238, 0.0
      %v247 = vadd.f32 %v239, 0.0
      %v248 = vadd.f32 %v240, 0.0
      %s249 = scalar_lea.vmem %s1, 1
      %v250 = vld [vmem:[%s249] sm:$0x1]
      %v252 = vlaneseq
      %v253 = vshrl.u32 %v252, 7
      %v254 = vsub.s32 0, %v253
      %v255 = vrot.slane %v250, %v254
      %v257 = vmul.f32 %v219, %v255
      %v258 = vmul.f32 %v221, %v255
      %v259 = vmul.f32 %v223, %v255
      %v260 = vmul.f32 %v225, %v255
      %v265 = vrot.slane %v257, 1
      %v266 = vrot.slane %v258, 1
      %v267 = vrot.slane %v259, 1
      %v268 = vrot.slane %v260, 1
      %v273 = vadd.f32 %v241, %v265
      %v274 = vadd.f32 %v242, %v265
      %v275 = vadd.f32 %v243, %v266
      %v276 = vadd.f32 %v244, %v266
      %v277 = vadd.f32 %v245, %v267
      %v278 = vadd.f32 %v246, %v267
      %v279 = vadd.f32 %v247, %v268
      %v280 = vadd.f32 %v248, %v268
      %v281 = vld [vmem:[#allocation2 + $0x4] sm:$0x7]
      %v282 = vld [vmem:[#allocation2 + $0xc] sm:$0x7]
      %v283 = vld [vmem:[#allocation2 + $0x14] sm:$0x7]
      %v284 = vld [vmem:[#allocation2 + $0x1c] sm:$0x7]
      %v285 = vunpack.c.l.bf16 %v281
      %v286 = vunpack.c.l.bf16 %v282
      %v287 = vunpack.c.l.bf16 %v283
      %v288 = vunpack.c.l.bf16 %v284
      %s289 = scalar_lea.vmem %s1, 2
      %v290 = vld [vmem:[%s289] sm:$0x1]
      %v292 = vlaneseq
      %v293 = vshrl.u32 %v292, 7
      %v294 = vsub.s32 0, %v293
      %v295 = vrot.slane %v290, %v294
      %v297 = vmul.f32 %v285, %v295
      %v298 = vmul.f32 %v286, %v295
      %v299 = vmul.f32 %v287, %v295
      %v300 = vmul.f32 %v288, %v295
      %v305 = vrot.slane %v297, 2
      %v306 = vrot.slane %v298, 2
      %v307 = vrot.slane %v299, 2
      %v308 = vrot.slane %v300, 2
      %v313 = vadd.f32 %v273, %v305
      %v314 = vadd.f32 %v274, %v305
      %v315 = vadd.f32 %v275, %v306
      %v316 = vadd.f32 %v276, %v306
      %v317 = vadd.f32 %v277, %v307
      %v318 = vadd.f32 %v278, %v307
      %v319 = vadd.f32 %v279, %v308
      %v320 = vadd.f32 %v280, %v308
      %v321 = vld [vmem:[%s204] sm:$0x8]
      %v322 = vld [vmem:[%s204 + $0x4] sm:$0x3]
      %v323 = vld [vmem:[%s204 + $0x8] sm:$0x8]
      %v324 = vld [vmem:[%s204 + $0xc] sm:$0x3]
      %v325 = vld [vmem:[%s204 + $0x10] sm:$0x8]
      %v326 = vld [vmem:[%s204 + $0x14] sm:$0x3]
      %v327 = vld [vmem:[%s204 + $0x18] sm:$0x8]
      %v328 = vld [vmem:[%s204 + $0x1c] sm:$0x3]
      %v329 = vunpack.c.l.bf16 %v321
      %v330 = vunpack.c.l.bf16 %v322
      %v331 = vunpack.c.l.bf16 %v323
      %v332 = vunpack.c.l.bf16 %v324
      %v333 = vunpack.c.l.bf16 %v325
      %v334 = vunpack.c.l.bf16 %v326
      %v335 = vunpack.c.l.bf16 %v327
      %v336 = vunpack.c.l.bf16 %v328
      %s337 = scalar_lea.vmem %s1, 3
      %v338 = vld [vmem:[%s337] sm:$0x1]
      %v340 = vlaneseq
      %v341 = vshrl.u32 %v340, 7
      %v342 = vsub.s32 0, %v341
      %v343 = vrot.slane %v338, %v342
      %v345 = vmul.f32 %v329, %v343
      %v346 = vmul.f32 %v330, %v343
      %v347 = vmul.f32 %v331, %v343
      %v348 = vmul.f32 %v332, %v343
      %v349 = vmul.f32 %v333, %v343
      %v350 = vmul.f32 %v334, %v343
      %v351 = vmul.f32 %v335, %v343
      %v352 = vmul.f32 %v336, %v343
      %v353 = vadd.f32 %v313, %v345
      %v354 = vadd.f32 %v314, %v346
      %v355 = vadd.f32 %v315, %v347
      %v356 = vadd.f32 %v316, %v348
      %v357 = vadd.f32 %v317, %v349
      %v358 = vadd.f32 %v318, %v350
      %v359 = vadd.f32 %v319, %v351
      %v360 = vadd.f32 %v320, %v352
      %s361 = scalar_lea.vmem %s1, 4
      %v362 = vld [vmem:[%s361] sm:$0x1]
      %v364 = vlaneseq
      %v365 = vshrl.u32 %v364, 7
      %v366 = vsub.s32 0, %v365
      %v367 = vrot.slane %v362, %v366
      %v369 = vmul.f32 %v330, %v367
      %v370 = vmul.f32 %v332, %v367
      %v371 = vmul.f32 %v334, %v367
      %v372 = vmul.f32 %v336, %v367
      %v377 = vrot.slane %v369, 1
      %v378 = vrot.slane %v370, 1
      %v379 = vrot.slane %v371, 1
      %v380 = vrot.slane %v372, 1
      %v385 = vadd.f32 %v353, %v377
      %v386 = vadd.f32 %v354, %v377
      %v387 = vadd.f32 %v355, %v378
      %v388 = vadd.f32 %v356, %v378
      %v389 = vadd.f32 %v357, %v379
      %v390 = vadd.f32 %v358, %v379
      %v391 = vadd.f32 %v359, %v380
      %v392 = vadd.f32 %v360, %v380
      %v393 = vld [vmem:[%s204 + $0x4] sm:$0x7]
      %v394 = vld [vmem:[%s204 + $0xc] sm:$0x7]
      %v395 = vld [vmem:[%s204 + $0x14] sm:$0x7]
      %v396 = vld [vmem:[%s204 + $0x1c] sm:$0x7]
      %v397 = vunpack.c.l.bf16 %v393
      %v398 = vunpack.c.l.bf16 %v394
      %v399 = vunpack.c.l.bf16 %v395
      %v400 = vunpack.c.l.bf16 %v396
      %s401 = scalar_lea.vmem %s1, 5
      %v402 = vld [vmem:[%s401] sm:$0x1]
      %v404 = vlaneseq
      %v405 = vshrl.u32 %v404, 7
      %v406 = vsub.s32 0, %v405
      %v407 = vrot.slane %v402, %v406
      %v409 = vmul.f32 %v397, %v407
      %v410 = vmul.f32 %v398, %v407
      %v411 = vmul.f32 %v399, %v407
      %v412 = vmul.f32 %v400, %v407
      %v417 = vrot.slane %v409, 2
      %v418 = vrot.slane %v410, 2
      %v419 = vrot.slane %v411, 2
      %v420 = vrot.slane %v412, 2
      %v425 = vadd.f32 %v385, %v417
      %v426 = vadd.f32 %v386, %v417
      %v427 = vadd.f32 %v387, %v418
      %v428 = vadd.f32 %v388, %v418
      %v429 = vadd.f32 %v389, %v419
      %v430 = vadd.f32 %v390, %v419
      %v431 = vadd.f32 %v391, %v420
      %v432 = vadd.f32 %v392, %v420
      %s433 = scalar_lea.vmem [#allocation2], 16
      %v434 = vld [vmem:[%s433] sm:$0x8]
      %v435 = vld [vmem:[%s433 + $0x4] sm:$0x3]
      %v436 = vld [vmem:[%s433 + $0x8] sm:$0x8]
      %v437 = vld [vmem:[%s433 + $0xc] sm:$0x3]
      %v438 = vld [vmem:[%s433 + $0x10] sm:$0x8]
      %v439 = vld [vmem:[%s433 + $0x14] sm:$0x3]
      %v440 = vld [vmem:[%s433 + $0x18] sm:$0x8]
      %v441 = vld [vmem:[%s433 + $0x1c] sm:$0x3]
      %v442 = vunpack.c.l.bf16 %v434
      %v443 = vunpack.c.l.bf16 %v435
      %v444 = vunpack.c.l.bf16 %v436
      %v445 = vunpack.c.l.bf16 %v437
      %v446 = vunpack.c.l.bf16 %v438
      %v447 = vunpack.c.l.bf16 %v439
      %v448 = vunpack.c.l.bf16 %v440
      %v449 = vunpack.c.l.bf16 %v441
      %s450 = scalar_lea.vmem %s1, 6
      %v451 = vld [vmem:[%s450] sm:$0x1]
      %v453 = vlaneseq
      %v454 = vshrl.u32 %v453, 7
      %v455 = vsub.s32 0, %v454
      %v456 = vrot.slane %v451, %v455
      %v458 = vmul.f32 %v442, %v456
      %v459 = vmul.f32 %v443, %v456
      %v460 = vmul.f32 %v444, %v456
      %v461 = vmul.f32 %v445, %v456
      %v462 = vmul.f32 %v446, %v456
      %v463 = vmul.f32 %v447, %v456
      %v464 = vmul.f32 %v448, %v456
      %v465 = vmul.f32 %v449, %v456
      %v466 = vadd.f32 %v425, %v458
      %v467 = vadd.f32 %v426, %v459
      %v468 = vadd.f32 %v427, %v460
      %v469 = vadd.f32 %v428, %v461
      %v470 = vadd.f32 %v429, %v462
      %v471 = vadd.f32 %v430, %v463
      %v472 = vadd.f32 %v431, %v464
      %v473 = vadd.f32 %v432, %v465
      %s474 = scalar_lea.vmem %s1, 7
      %v475 = vld [vmem:[%s474] sm:$0x1]
      %v477 = vlaneseq
      %v478 = vshrl.u32 %v477, 7
      %v479 = vsub.s32 0, %v478
      %v480 = vrot.slane %v475, %v479
      %v482 = vmul.f32 %v443, %v480
      %v483 = vmul.f32 %v445, %v480
      %v484 = vmul.f32 %v447, %v480
      %v485 = vmul.f32 %v449, %v480
      %v490 = vrot.slane %v482, 1
      %v491 = vrot.slane %v483, 1
      %v492 = vrot.slane %v484, 1
      %v493 = vrot.slane %v485, 1
      %v498 = vadd.f32 %v466, %v490
      %v499 = vadd.f32 %v467, %v490
      %v500 = vadd.f32 %v468, %v491
      %v501 = vadd.f32 %v469, %v491
      %v502 = vadd.f32 %v470, %v492
      %v503 = vadd.f32 %v471, %v492
      %v504 = vadd.f32 %v472, %v493
      %v505 = vadd.f32 %v473, %v493
      %v506 = vld [vmem:[%s433 + $0x4] sm:$0x7]
      %v507 = vld [vmem:[%s433 + $0xc] sm:$0x7]
      %v508 = vld [vmem:[%s433 + $0x14] sm:$0x7]
      %v509 = vld [vmem:[%s433 + $0x1c] sm:$0x7]
      %v510 = vunpack.c.l.bf16 %v506
      %v511 = vunpack.c.l.bf16 %v507
      %v512 = vunpack.c.l.bf16 %v508
      %v513 = vunpack.c.l.bf16 %v509
      %s514 = scalar_lea.vmem %s1, 8
      %v515 = vld [vmem:[%s514] sm:$0x1]
      %v517 = vlaneseq
      %v518 = vshrl.u32 %v517, 7
      %v519 = vsub.s32 0, %v518
      %v520 = vrot.slane %v515, %v519
      %v522 = vmul.f32 %v510, %v520
      %v523 = vmul.f32 %v511, %v520
      %v524 = vmul.f32 %v512, %v520
      %v525 = vmul.f32 %v513, %v520
      %v530 = vrot.slane %v522, 2
      %v531 = vrot.slane %v523, 2
      %v532 = vrot.slane %v524, 2
      %v533 = vrot.slane %v525, 2
      %v538 = vadd.f32 %v498, %v530
      %v539 = vadd.f32 %v499, %v530
      %v540 = vadd.f32 %v500, %v531
      %v541 = vadd.f32 %v501, %v531
      %v542 = vadd.f32 %v502, %v532
      %v543 = vadd.f32 %v503, %v532
      %v544 = vadd.f32 %v504, %v533
      %v545 = vadd.f32 %v505, %v533
      %v546 = vld [vmem:[%s2] sm:$0x1]
      %v548 = vlaneseq
      %v549 = vshrl.u32 %v548, 7
      %v550 = vsub.s32 0, %v549
      %v551 = vrot.slane %v546, %v550
      %v553 = vadd.f32 %v538, %v551
      %v554 = vadd.f32 %v539, %v551
      %v555 = vadd.f32 %v540, %v551
      %v556 = vadd.f32 %v541, %v551
      %v557 = vadd.f32 %v542, %v551
      %v558 = vadd.f32 %v543, %v551
      %v559 = vadd.f32 %v544, %v551
      %v560 = vadd.f32 %v545, %v551
      %v561 = vmax.f32 %v553, 0.0
      %v562 = vmax.f32 %v554, 0.0
      %v563 = vmax.f32 %v555, 0.0
      %v564 = vmax.f32 %v556, 0.0
      %v565 = vmax.f32 %v557, 0.0
      %v566 = vmax.f32 %v558, 0.0
      %v567 = vmax.f32 %v559, 0.0
      %v568 = vmax.f32 %v560, 0.0
      %v569 = vpack.c.bf16 %v562, %v561
      %v570 = vpack.c.bf16 %v564, %v563
      %v571 = vpack.c.bf16 %v566, %v565
      %v572 = vpack.c.bf16 %v568, %v567
      %v577 = vcombine.high %v569, %v569
      %v579 = vunpack.c.l.s4 1983009808
      %v580 = vunpack.c.0.s8 %v579
      %v581 = vlaneseq
      %v582 = vshrl.u32 %v581, 7
      %v583 = vsub.s32 %v580, %v582
      %v584 = vrot.slane %v569, %v583
      %v586 = vunpack.c.l.s4 1983009808
      %v587 = vunpack.c.0.s8 %v586
      %v588 = vlaneseq
      %v589 = vshrl.u32 %v588, 7
      %v590 = vsub.s32 %v587, %v589
      %v591 = vrot.slane %v577, %v590
      %v592 = vcombine.high %v584, %v584
      %v593 = vcombine.high %v570, %v570
      %v595 = vunpack.c.l.s4 1983009808
      %v596 = vunpack.c.0.s8 %v595
      %v597 = vlaneseq
      %v598 = vshrl.u32 %v597, 7
      %v599 = vsub.s32 %v596, %v598
      %v600 = vrot.slane %v570, %v599
      %v602 = vunpack.c.l.s4 1983009808
      %v603 = vunpack.c.0.s8 %v602
      %v604 = vlaneseq
      %v605 = vshrl.u32 %v604, 7
      %v606 = vsub.s32 %v603, %v605
      %v607 = vrot.slane %v593, %v606
      %v608 = vcombine.high %v600, %v600
      %v609 = vcombine.high %v571, %v571
      %v611 = vunpack.c.l.s4 1983009808
      %v612 = vunpack.c.0.s8 %v611
      %v613 = vlaneseq
      %v614 = vshrl.u32 %v613, 7
      %v615 = vsub.s32 %v612, %v614
      %v616 = vrot.slane %v571, %v615
      %v618 = vunpack.c.l.s4 1983009808
      %v619 = vunpack.c.0.s8 %v618
      %v620 = vlaneseq
      %v621 = vshrl.u32 %v620, 7
      %v622 = vsub.s32 %v619, %v621
      %v623 = vrot.slane %v609, %v622
      %v624 = vcombine.high %v616, %v616
      %v625 = vcombine.high %v572, %v572
      %v627 = vunpack.c.l.s4 1983009808
      %v628 = vunpack.c.0.s8 %v627
      %v629 = vlaneseq
      %v630 = vshrl.u32 %v629, 7
      %v631 = vsub.s32 %v628, %v630
      %v632 = vrot.slane %v572, %v631
      %v634 = vunpack.c.l.s4 1983009808
      %v635 = vunpack.c.0.s8 %v634
      %v636 = vlaneseq
      %v637 = vshrl.u32 %v636, 7
      %v638 = vsub.s32 %v635, %v637
      %v639 = vrot.slane %v625, %v638
      %v640 = vcombine.high %v632, %v632
      %vm641 = vsmask.f32 256
      %vm642 = vsmask.f32 2312
      %vm643 = vmor %vm641, %vm642
      %vm644 = vsmask.f32 4368
      %vm645 = vmor %vm643, %vm644
      %vm646 = vsmask.f32 6424
      %vm647 = vmor %vm645, %vm646
      %v649 = vshrl.u32 %v592, 16
      %v651 = vrot.slane %v649, 7
      %v652 = vrot.slane %v651, 2
      %v654 = vshrl.u32 %v591, 16
      %v656 = vrot.slane %v654, 7
      %v657 = vshll.u32 %v591, 16
      %v659 = vor.u32 %v656, %v657
      %v660 = vsel %vm647, %v652, %v659
      %v662 = vshrl.u32 %v608, 16
      %v664 = vrot.slane %v662, 7
      %v665 = vrot.slane %v664, 2
      %v667 = vshrl.u32 %v607, 16
      %v669 = vrot.slane %v667, 7
      %v670 = vshll.u32 %v607, 16
      %v672 = vor.u32 %v669, %v670
      %v673 = vsel %vm647, %v665, %v672
      %v675 = vshrl.u32 %v624, 16
      %v677 = vrot.slane %v675, 7
      %v678 = vrot.slane %v677, 2
      %v680 = vshrl.u32 %v623, 16
      %v682 = vrot.slane %v680, 7
      %v683 = vshll.u32 %v623, 16
      %v685 = vor.u32 %v682, %v683
      %v686 = vsel %vm647, %v678, %v685
      %v688 = vshrl.u32 %v640, 16
      %v690 = vrot.slane %v688, 7
      %v691 = vrot.slane %v690, 2
      %v693 = vshrl.u32 %v639, 16
      %v695 = vrot.slane %v693, 7
      %v696 = vshll.u32 %v639, 16
      %v698 = vor.u32 %v695, %v696
      %v699 = vsel %vm647, %v691, %v698
      %704 = vst.msk [vmem:[%s170] sm:$0x3] %vm205, %v660
      %705 = vst.msk [vmem:[%s170 + $0x2] sm:$0x3] %vm205, %v673
      %706 = vst.msk [vmem:[%s170 + $0x4] sm:$0x3] %vm205, %v686
      %707 = vst.msk [vmem:[%s170 + $0x6] sm:$0x3] %vm205, %v699
      %p708 = scmp.lt.s32.totalorder %s14, 1
      %s709 = scalar_select %p708, %s14, 1
      %s710 = smul.addr %s709, 4
      %s711 = smul.addr %s710, 2
      %s712 = scalar_lea.vmem %s3, %s711
      // Predicated region
      $region33: #{a_call__.26} parent=31 // pred_check
        %p713 = pneg %p100
      $region34: #{a_call__.26} parent=31 // pred_check_branch
        %715 = sbr.rel (%p713) target = $region36
      $region35: #{a_call__.26} parent=31 // pred_region
        _
      $region36: #{a_call__.26} parent=31 // pred_fallthru
        _
    $region32: #{a_call__.26} parent=5 // pred_fallthru
      _
    %p716 = scmp.le.s32.totalorder 2, %s9
    // Predicated region
    $region37: #{a_call__.26} parent=5 // pred_check
      %p717 = pneg %p716
    $region38: #{a_call__.26} parent=5 // pred_check_branch
      %719 = sbr.rel (%p717) target = $region40
    $region39: #{a_call__.26} parent=5 // pred_region
      %s720 = ssub.s32 %s9, 2
      // Predicated region
      $region41: #{a_call__.26} parent=39 // pred_check
        %p721 = pneg %p106
      $region42: #{a_call__.26} parent=39 // pred_check_branch
        %723 = sbr.rel (%p721) target = $region44
      $region43: #{a_call__.26} parent=39 // pred_region
        %p724 = scmp.lt.s32.totalorder %s15, 1
        %s725 = scalar_select %p724, %s15, 1
        %s726 = smul.addr %s725, 4
        %s727 = smul.addr %s726, 2
        %s728 = scalar_lea.vmem %s3, %s727
      $region44: #{a_call__.26} parent=39 // pred_fallthru
        _
    $region40: #{a_call__.26} parent=5 // pred_fallthru
      _
  $region6: #{a_call__.26} parent=0 // loop_footer
    %s13 = sadd.s32 1, %s9
  $region7: #{a_call__.26} parent=0 // loop_footer_branch
    %8 = sbr.rel target = $region3
  $region8: #{a_call__.26} parent=0 // loop_exit
    _

// kernel: a_call__.30
$region0: #{a_call__.30}
  #allocation0 [shape = 'u32[]', space=smem, size = 0x4, offset = 0x4, fixed_abs, tag = 'smem constant byte address 0x4 - core index']
  #allocation1 [shape = 'u32[144,128]{1,0:T(1,128)}', space=vmem, size = 0x12000, scoped, tag = 'internal scratch']
  %s0 = inlined_call_operand.vmem [shape: f32[2,96], index: 0, kind: input, shape index: {}]
  %s1 = inlined_call_operand.vmem [shape: f32[96,24], index: 1, kind: input, shape index: {}]
  %s2 = inlined_call_operand.vmem [shape: f32[1,24], index: 2, kind: input, shape index: {}]
  %s3 = inlined_call_operand.vmem [shape: f32[24,96], index: 3, kind: input, shape index: {}]
  %s4 = inlined_call_operand.vmem [shape: f32[1,96], index: 4, kind: input, shape index: {}]
  %s5 = inlined_call_operand.vmem [shape: f32[2,96], index: 5, kind: output, shape index: {}]
  %s6 = sld [smem:[#allocation0]]
  $region30: #{a_call__.30} parent=0
    _
  %s8 = ssub.s32 1, %s6
  %s9 = scalar_select 0, %s8, %s6
  // Predicated region
  $region2: #{a_call__.30} parent=0 // pred_check
    _
  $region3: #{a_call__.30} parent=0 // pred_check_branch
    %11 = sbr.rel (0) target = $region5
  $region4: #{a_call__.30} parent=0 // pred_region
    _
  $region5: #{a_call__.30} parent=0 // pred_fallthru
    _
  // Predicated region
  $region6: #{a_call__.30} parent=0 // pred_check
    _
  $region7: #{a_call__.30} parent=0 // pred_check_branch
    %13 = sbr.rel (0) target = $region9
  $region8: #{a_call__.30} parent=0 // pred_region
    _
  $region9: #{a_call__.30} parent=0 // pred_fallthru
    _
  // Predicated region
  $region10: #{a_call__.30} parent=0 // pred_check
    _
  $region11: #{a_call__.30} parent=0 // pred_check_branch
    %15 = sbr.rel (0) target = $region13
  $region12: #{a_call__.30} parent=0 // pred_region
    _
  $region13: #{a_call__.30} parent=0 // pred_fallthru
    _
  // Predicated region
  $region14: #{a_call__.30} parent=0 // pred_check
    _
  $region15: #{a_call__.30} parent=0 // pred_check_branch
    %17 = sbr.rel (0) target = $region17
  $region16: #{a_call__.30} parent=0 // pred_region
    _
  $region17: #{a_call__.30} parent=0 // pred_fallthru
    _
  // Predicated region
  $region18: #{a_call__.30} parent=0 // pred_check
    _
  $region19: #{a_call__.30} parent=0 // pred_check_branch
    %19 = sbr.rel (0) target = $region21
  $region20: #{a_call__.30} parent=0 // pred_region
    _
  $region21: #{a_call__.30} parent=0 // pred_fallthru
    _
  %v20 = vld [vmem:[%s0] sm:$0x3]
  %v21 = vld [vmem:[%s1] sm:$0xff]
  %v22 = vld [vmem:[%s1 + $0x8] sm:$0xff]
  %v23 = vld [vmem:[%s1 + $0x10] sm:$0xff]
  %v24 = vld [vmem:[%s1 + $0x18] sm:$0xff]
  %v25 = vld [vmem:[%s1 + $0x20] sm:$0xff]
  %v26 = vld [vmem:[%s1 + $0x28] sm:$0xff]
  %v27 = vld [vmem:[%s1 + $0x30] sm:$0xff]
  %v28 = vld [vmem:[%s1 + $0x38] sm:$0xff]
  %v29 = vld [vmem:[%s1 + $0x40] sm:$0xff]
  %v30 = vld [vmem:[%s1 + $0x48] sm:$0xff]
  %v31 = vld [vmem:[%s1 + $0x50] sm:$0xff]
  %v32 = vld [vmem:[%s1 + $0x58] sm:$0xff]
  %v33 = vld [vmem:[%s2] sm:$0x1]
  %v35 = vlaneseq
  %v36 = vshrl.u32 %v35, 7
  %v37 = vsub.s32 0, %v36
  %v38 = vrot.slane %v33, %v37
  %vm40 = vcmask 785408
  %v42 = vsel %vm40, %v20, 0
  %44 = vmatprep.subr.mxu0 0.0
  %45 = vmatpush1.msra.mxu0 %v21
  %46 = vmatprep.subr.mxu0 0.0
  %47 = vmatpush1.msra.mxu0 %v22
  %48 = vmatprep.subr.mxu0 0.0
  %49 = vmatpush1.msra.mxu0 %v23
  %50 = vmatprep.subr.mxu0 0.0
  %51 = vmatpush1.msra.mxu0 %v24
  %52 = vmatprep.subr.mxu0 0.0
  %53 = vmatpush1.msra.mxu0 %v25
  %54 = vmatprep.subr.mxu0 0.0
  %55 = vmatpush1.msra.mxu0 %v26
  %56 = vmatprep.subr.mxu0 0.0
  %57 = vmatpush1.msra.mxu0 %v27
  %58 = vmatprep.subr.mxu0 0.0
  %59 = vmatpush1.msra.mxu0 %v28
  %60 = vmatprep.subr.mxu0 0.0
  %61 = vmatpush1.msra.mxu0 %v29
  %62 = vmatprep.subr.mxu0 0.0
  %63 = vmatpush1.msra.mxu0 %v30
  %64 = vmatprep.subr.mxu0 0.0
  %65 = vmatpush1.msra.mxu0 %v31
  %66 = vmatprep.subr.mxu0 0.0
  %67 = vmatpush1.msra.mxu0 %v32
  %68 = vmatprep.subr.mxu0 0.0
  %69 = vmatpush1.msra.mxu0 0.0
  %70 = vmatprep.subr.mxu0 0.0
  %71 = vmatpush1.msra.mxu0 0.0
  %72 = vmatprep.subr.mxu0 0.0
  %73 = vmatpush1.msra.mxu0 0.0
  %74 = vmatprep.subr.mxu0 0.0
  %75 = vmatpush1.msra.mxu0 0.0
  %76 = vmatprep.subr.mxu0 0.0
  %77 = vmatpush1.msra.mxu0 0.0
  %78 = vmatprep.subr.mxu0 0.0
  %79 = vmatpush1.msra.mxu0 0.0
  %80 = vmatprep.subr.mxu0 0.0
  %81 = vmatpush1.msra.mxu0 0.0
  %82 = vmatprep.subr.mxu0 0.0
  %83 = vmatpush1.msra.mxu0 0.0
  %84 = vmatprep.subr.mxu0 0.0
  %85 = vmatpush1.msra.mxu0 0.0
  %86 = vmatprep.subr.mxu0 0.0
  %87 = vmatpush1.msra.mxu0 0.0
  %88 = vmatprep.subr.mxu0 0.0
  %89 = vmatpush1.msra.mxu0 0.0
  %90 = vmatprep.subr.mxu0 0.0
  %91 = vmatpush1.msra.mxu0 0.0
  %92 = vmatprep.subr.mxu0 0.0
  %93 = vmatpush1.msra.mxu0 0.0
  %94 = vmatprep.subr.mxu0 0.0
  %95 = vmatpush1.msra.mxu0 0.0
  %96 = vmatprep.subr.mxu0 0.0
  %97 = vmatpush1.msra.mxu0 0.0
  %98 = vmatprep.subr.mxu0 0.0
  %99 = vmatpush1.msra.mxu0 0.0
  %100 = vmatprep.subr.mxu0 0.0
  %101 = vmatpush1.msra.mxu0 0.0
  %102 = vmatprep.subr.mxu0 0.0
  %103 = vmatpush1.msra.mxu0 0.0
  %104 = vmatprep.subr.mxu0 0.0
  %105 = vmatpush1.msra.mxu0 0.0
  %106 = vmatprep.subr.mxu0 0.0
  %107 = vmatpush1.msra.mxu0 0.0
  %108 = vmatprep.mubr.f32.mxu0 0.0
  %109 = vmatmul.mubr.f32.gmra.mrb[0].mxu0 %v42
  %v110 = vpop.f32.mrb[0].mxu0
  %v111 = vadd.f32 %v38, %v110
  %v112 = vpop.f32.mrb[0].mxu0
  %113 = vdwg.mxu0
  %v114 = vmax.f32 %v111, 0.0
  %v115 = vld [vmem:[%s3] sm:$0xff]
  %v116 = vld [vmem:[%s3 + $0x8] sm:$0xff]
  %v117 = vld [vmem:[%s3 + $0x10] sm:$0xff]
  %v118 = vld [vmem:[%s4] sm:$0x1]
  %v120 = vlaneseq
  %v121 = vshrl.u32 %v120, 7
  %v122 = vsub.s32 0, %v121
  %v123 = vrot.slane %v118, %v122
  %vm125 = vcmask 195584
  %v127 = vsel %vm125, %v114, 0
  %129 = vmatprep.subr.mxu0 0.0
  %130 = vmatpush1.msra.mxu0 %v115
  %131 = vmatprep.subr.mxu0 0.0
  %132 = vmatpush1.msra.mxu0 %v116
  %133 = vmatprep.subr.mxu0 0.0
  %134 = vmatpush1.msra.mxu0 %v117
  %135 = vmatprep.subr.mxu0 0.0
  %136 = vmatpush1.msra.mxu0 0.0
  %137 = vmatprep.subr.mxu0 0.0
  %138 = vmatpush1.msra.mxu0 0.0
  %139 = vmatprep.subr.mxu0 0.0
  %140 = vmatpush1.msra.mxu0 0.0
  %141 = vmatprep.subr.mxu0 0.0
  %142 = vmatpush1.msra.mxu0 0.0
  %143 = vmatprep.subr.mxu0 0.0
  %144 = vmatpush1.msra.mxu0 0.0
  %145 = vmatprep.subr.mxu0 0.0
  %146 = vmatpush1.msra.mxu0 0.0
  %147 = vmatprep.subr.mxu0 0.0
  %148 = vmatpush1.msra.mxu0 0.0
  %149 = vmatprep.subr.mxu0 0.0
  %150 = vmatpush1.msra.mxu0 0.0
  %151 = vmatprep.subr.mxu0 0.0
  %152 = vmatpush1.msra.mxu0 0.0
  %153 = vmatprep.subr.mxu0 0.0
  %154 = vmatpush1.msra.mxu0 0.0
  %155 = vmatprep.subr.mxu0 0.0
  %156 = vmatpush1.msra.mxu0 0.0
  %157 = vmatprep.subr.mxu0 0.0
  %158 = vmatpush1.msra.mxu0 0.0
  %159 = vmatprep.subr.mxu0 0.0
  %160 = vmatpush1.msra.mxu0 0.0
  %161 = vmatprep.subr.mxu0 0.0
  %162 = vmatpush1.msra.mxu0 0.0
  %163 = vmatprep.subr.mxu0 0.0
  %164 = vmatpush1.msra.mxu0 0.0
  %165 = vmatprep.subr.mxu0 0.0
  %166 = vmatpush1.msra.mxu0 0.0
  %167 = vmatprep.subr.mxu0 0.0
  %168 = vmatpush1.msra.mxu0 0.0
  %169 = vmatprep.subr.mxu0 0.0
  %170 = vmatpush1.msra.mxu0 0.0
  %171 = vmatprep.subr.mxu0 0.0
  %172 = vmatpush1.msra.mxu0 0.0
  %173 = vmatprep.subr.mxu0 0.0
  %174 = vmatpush1.msra.mxu0 0.0
  %175 = vmatprep.subr.mxu0 0.0
  %176 = vmatpush1.msra.mxu0 0.0
  %177 = vmatprep.subr.mxu0 0.0
  %178 = vmatpush1.msra.mxu0 0.0
  %179 = vmatprep.subr.mxu0 0.0
  %180 = vmatpush1.msra.mxu0 0.0
  %181 = vmatprep.subr.mxu0 0.0
  %182 = vmatpush1.msra.mxu0 0.0
  %183 = vmatprep.subr.mxu0 0.0
  %184 = vmatpush1.msra.mxu0 0.0
  %185 = vmatprep.subr.mxu0 0.0
  %186 = vmatpush1.msra.mxu0 0.0
  %187 = vmatprep.subr.mxu0 0.0
  %188 = vmatpush1.msra.mxu0 0.0
  %189 = vmatprep.subr.mxu0 0.0
  %190 = vmatpush1.msra.mxu0 0.0
  %191 = vmatprep.subr.mxu0 0.0
  %192 = vmatpush1.msra.mxu0 0.0
  %193 = vmatprep.mubr.f32.mxu0 0.0
  %194 = vmatmul.mubr.f32.gmra.mrb[0].mxu0 %v127
  %v195 = vpop.f32.mrb[0].mxu0
  %v196 = vadd.f32 %v123, %v195
  %v197 = vpop.f32.mrb[0].mxu0
  %198 = vdwg.mxu0
  %v199 = vadd.f32 %v196, 3.0
  %v200 = vmax.f32 %v199, 0.0
  %v201 = vmin.f32 %v200, 6.0
  %v202 = vrcp.pop 6.0
  %v203 = vmul.f32 %v201, %v202
  %vm204 = vcmask 779264
  %205 = vst.msk [vmem:[%s5] sm:$0x3] %vm204, %v203
  // Predicated region
  $region22: #{a_call__.30} parent=0 // pred_check
    _
  $region23: #{a_call__.30} parent=0 // pred_check_branch
    %207 = sbr.rel (0) target = $region25
  $region24: #{a_call__.30} parent=0 // pred_region
    _
  $region25: #{a_call__.30} parent=0 // pred_fallthru
    _
  // Predicated region
  $region26: #{a_call__.30} parent=0 // pred_check
    _
  $region27: #{a_call__.30} parent=0 // pred_check_branch
    %209 = sbr.rel (0) target = $region29
  $region28: #{a_call__.30} parent=0 // pred_region
    _
  $region29: #{a_call__.30} parent=0 // pred_fallthru
    _

// kernel: a_call__.31
$region0: #{a_call__.31}
  #allocation0 [shape = 'u32[]', space=smem, size = 0x4, offset = 0x4, fixed_abs, tag = 'smem constant byte address 0x4 - core index']
  #allocation1 [shape = 'u32[144,128]{1,0:T(1,128)}', space=vmem, size = 0x12000, scoped, tag = 'internal scratch']
  %s0 = inlined_call_operand.vmem [shape: bf16[2,4,96], index: 0, kind: input, shape index: {}]
  %s1 = inlined_call_operand.vmem [shape: f32[2,1,96], index: 1, kind: input, shape index: {}]
  %s2 = inlined_call_operand.vmem [shape: bf16[96,40], index: 2, kind: input, shape index: {}]
  %s3 = inlined_call_operand.vmem [shape: f32[1,40], index: 3, kind: input, shape index: {}]
  %s4 = inlined_call_operand.vmem [shape: bf16[2,4,40], index: 4, kind: output, shape index: {}]
  %s5 = sld [smem:[#allocation0]]
  $region49: #{a_call__.31} parent=0
    _
  %s7 = ssub.s32 1, %s5
  %s8 = scalar_select 0, %s7, %s5
  loop: start=0, step=1, limit=4
  $region2: #{a_call__.31} parent=0 // loop_pre_header
    _
  $region3: #{a_call__.31} parent=0 // loop_header
    %s10 = sphi 0, %s14
    %p11 = scmp.ge.s32.totalorder %s10, 4
    %s17 = sphi 0, %s29
    %s18 = sphi 0, %s25
    %s19 = sphi 0, %s17
    %s20 = sphi 0, %s18
    %s21 = sphi 0, %s19
    %s22 = sphi 0, %s20
    %s34 = sphi 0, %s36
    %s37 = sphi 0, %s34
    %s38 = sphi 0, %s37
    %s54 = sphi 0, %s38
    %s60 = sphi 0, %s62
    %s63 = sphi 0, %s60
    %s64 = sphi 0, %s63
    %s80 = sphi 0, %s64
    %s84 = sphi 0, %s84
    %s86 = sphi 0, %s84
    %s87 = sphi 0, %s86
    %s101 = sphi 0, %s87
    %s105 = sphi 0, %s105
    %s107 = sphi 0, %s105
    %s108 = sphi 0, %s107
    %s122 = sphi 0, %s108
    %s130 = sphi 0, %s132
    %s133 = sphi 0, %s130
    %s134 = sphi 0, %s133
    %s150 = sphi 0, %s134
  $region4: #{a_call__.31} parent=0 // loop_header_branch
    %13 = sbr.rel (%p11) target = $region8
  $region5: #{a_call__.31} parent=0 // loop_body
    %s15 = ssub.s32 %s10, 1
    %s16 = ssub.s32 %s10, 2
    %s23 = sadd.s32 1, %s18
    %p24 = scmp.ge.s32.totalorder %s23, 1
    %s25 = scalar_select %p24, 0, %s23
    %s26 = sadd.s32 1, %s17
    %s27 = scalar_select %p24, %s26, %s17
    %p28 = scmp.ge.s32.totalorder %s27, 2
    %s29 = scalar_select %p28, 0, %s27
    %s30 = ssub.s32 %s17, %s29
    %s31 = ssub.s32 %s18, %s25
    %s32 = sor.u32 %s30, %s31
    %p33 = scmp.eq.s32.totalorder %s32, 0
    %s35 = sadd.s32 %s34, 1
    %s36 = scalar_select %p33, %s34, %s35
    %p39 = pneg %p33
    %p40 = scmp.eq.s32.totalorder %s10, 1
    %p41 = por %p39, %p40
    %p42 = scmp.ne.s32.totalorder %s34, %s37
    %p43 = scmp.eq.s32.totalorder %s10, 0
    %p44 = por %p42, %p43
    %p45 = scmp.ne.s32.totalorder %s34, %s37
    %p46 = scmp.eq.s32.totalorder %s15, 1
    %p47 = por %p45, %p46
    %p48 = scmp.ne.s32.totalorder %s37, %s38
    %p49 = scmp.eq.s32.totalorder %s15, 0
    %p50 = por %p48, %p49
    %p51 = scmp.ne.s32.totalorder %s37, %s38
    %p52 = scmp.eq.s32.totalorder %s16, 1
    %p53 = por %p51, %p52
    %p55 = scmp.ne.s32.totalorder %s38, %s54
    %p56 = scmp.eq.s32.totalorder %s16, 0
    %p57 = por %p55, %p56
    %s58 = ssub.s32 %s17, %s29
    %p59 = scmp.eq.s32.totalorder %s58, 0
    %s61 = sadd.s32 %s60, 1
    %s62 = scalar_select %p59, %s60, %s61
    %p65 = pneg %p59
    %p66 = scmp.eq.s32.totalorder %s10, 1
    %p67 = por %p65, %p66
    %p68 = scmp.ne.s32.totalorder %s60, %s63
    %p69 = scmp.eq.s32.totalorder %s10, 0
    %p70 = por %p68, %p69
    %p71 = scmp.ne.s32.totalorder %s60, %s63
    %p72 = scmp.eq.s32.totalorder %s15, 1
    %p73 = por %p71, %p72
    %p74 = scmp.ne.s32.totalorder %s63, %s64
    %p75 = scmp.eq.s32.totalorder %s15, 0
    %p76 = por %p74, %p75
    %p77 = scmp.ne.s32.totalorder %s63, %s64
    %p78 = scmp.eq.s32.totalorder %s16, 1
    %p79 = por %p77, %p78
    %p81 = scmp.ne.s32.totalorder %s64, %s80
    %p82 = scmp.eq.s32.totalorder %s16, 0
    %p83 = por %p81, %p82
    %s85 = sadd.s32 %s84, 1
    %p88 = scmp.eq.s32.totalorder %s10, 1
    %p89 = scmp.ne.s32.totalorder %s84, %s86
    %p90 = scmp.eq.s32.totalorder %s10, 0
    %p91 = por %p89, %p90
    %p92 = scmp.ne.s32.totalorder %s84, %s86
    %p93 = scmp.eq.s32.totalorder %s15, 1
    %p94 = por %p92, %p93
    %p95 = scmp.ne.s32.totalorder %s86, %s87
    %p96 = scmp.eq.s32.totalorder %s15, 0
    %p97 = por %p95, %p96
    %p98 = scmp.ne.s32.totalorder %s86, %s87
    %p99 = scmp.eq.s32.totalorder %s16, 1
    %p100 = por %p98, %p99
    %p102 = scmp.ne.s32.totalorder %s87, %s101
    %p103 = scmp.eq.s32.totalorder %s16, 0
    %p104 = por %p102, %p103
    %s106 = sadd.s32 %s105, 1
    %p109 = scmp.eq.s32.totalorder %s10, 1
    %p110 = scmp.ne.s32.totalorder %s105, %s107
    %p111 = scmp.eq.s32.totalorder %s10, 0
    %p112 = por %p110, %p111
    %p113 = scmp.ne.s32.totalorder %s105, %s107
    %p114 = scmp.eq.s32.totalorder %s15, 1
    %p115 = por %p113, %p114
    %p116 = scmp.ne.s32.totalorder %s107, %s108
    %p117 = scmp.eq.s32.totalorder %s15, 0
    %p118 = por %p116, %p117
    %p119 = scmp.ne.s32.totalorder %s107, %s108
    %p120 = scmp.eq.s32.totalorder %s16, 1
    %p121 = por %p119, %p120
    %p123 = scmp.ne.s32.totalorder %s108, %s122
    %p124 = scmp.eq.s32.totalorder %s16, 0
    %p125 = por %p123, %p124
    %s126 = ssub.s32 %s17, %s29
    %s127 = ssub.s32 %s18, %s25
    %s128 = sor.u32 %s126, %s127
    %p129 = scmp.eq.s32.totalorder %s128, 0
    %s131 = sadd.s32 %s130, 1
    %s132 = scalar_select %p129, %s130, %s131
    %p135 = pneg %p129
    %p136 = scmp.eq.s32.totalorder %s10, 1
    %p137 = por %p135, %p136
    %p138 = scmp.ne.s32.totalorder %s130, %s133
    %p139 = scmp.eq.s32.totalorder %s10, 0
    %p140 = por %p138, %p139
    %p141 = scmp.ne.s32.totalorder %s130, %s133
    %p142 = scmp.eq.s32.totalorder %s15, 1
    %p143 = por %p141, %p142
    %p144 = scmp.ne.s32.totalorder %s133, %s134
    %p145 = scmp.eq.s32.totalorder %s15, 0
    %p146 = por %p144, %p145
    %p147 = scmp.ne.s32.totalorder %s133, %s134
    %p148 = scmp.eq.s32.totalorder %s16, 1
    %p149 = por %p147, %p148
    %p151 = scmp.ne.s32.totalorder %s134, %s150
    %p152 = scmp.eq.s32.totalorder %s16, 0
    %p153 = por %p151, %p152
    %p154 = scmp.le.s32.totalorder 1, %s10
    %p155 = scmp.lt.s32.totalorder %s10, 3
    %p156 = pnand %p154, %p155
    %p157 = pneg %p156
    // Predicated region
    $region9: #{a_call__.31} parent=5 // pred_check
      _
    $region10: #{a_call__.31} parent=5 // pred_check_branch
      %159 = sbr.rel (%p156) target = $region12
    $region11: #{a_call__.31} parent=5 // pred_region
      %s160 = ssub.s32 %s10, 1
      // Predicated region
      $region13: #{a_call__.31} parent=11 // pred_check
        %p161 = pneg %p97
      $region14: #{a_call__.31} parent=11 // pred_check_branch
        %163 = sbr.rel (%p161) target = $region16
      $region15: #{a_call__.31} parent=11 // pred_region
        _
      $region16: #{a_call__.31} parent=11 // pred_fallthru
        _
      // Predicated region
      $region17: #{a_call__.31} parent=11 // pred_check
        %p164 = pneg %p118
      $region18: #{a_call__.31} parent=11 // pred_check_branch
        %166 = sbr.rel (%p164) target = $region20
      $region19: #{a_call__.31} parent=11 // pred_region
        _
      $region20: #{a_call__.31} parent=11 // pred_fallthru
        _
    $region12: #{a_call__.31} parent=5 // pred_fallthru
      _
    %p167 = scmp.lt.s32.totalorder %s10, 2
    // Predicated region
    $region21: #{a_call__.31} parent=5 // pred_check
      %p168 = pneg %p167
    $region22: #{a_call__.31} parent=5 // pred_check_branch
      %170 = sbr.rel (%p168) target = $region24
    $region23: #{a_call__.31} parent=5 // pred_region
      // Predicated region
      $region25: #{a_call__.31} parent=23 // pred_check
        %p171 = pneg %p44
      $region26: #{a_call__.31} parent=23 // pred_check_branch
        %173 = sbr.rel (%p171) target = $region28
      $region27: #{a_call__.31} parent=23 // pred_region
        %p174 = scmp.lt.s32.totalorder %s17, 1
        %s175 = scalar_select %p174, %s17, 1
        %p176 = scmp.lt.s32.totalorder %s18, 0
        %s177 = scalar_select %p176, %s18, 0
        %s178 = sadd.s32 %s177, %s175
        %s179 = smul.addr %s178, 2
        %s180 = scalar_lea.vmem %s0, %s179
      $region28: #{a_call__.31} parent=23 // pred_fallthru
        _
      // Predicated region
      $region29: #{a_call__.31} parent=23 // pred_check
        %p181 = pneg %p70
      $region30: #{a_call__.31} parent=23 // pred_check_branch
        %183 = sbr.rel (%p181) target = $region32
      $region31: #{a_call__.31} parent=23 // pred_region
        %p184 = scmp.lt.s32.totalorder %s17, 1
        %s185 = scalar_select %p184, %s17, 1
        %s186 = scalar_lea.vmem %s1, %s185
      $region32: #{a_call__.31} parent=23 // pred_fallthru
        _
    $region24: #{a_call__.31} parent=5 // pred_fallthru
      _
    %p187 = scmp.le.s32.totalorder 1, %s10
    %p188 = scmp.lt.s32.totalorder %s10, 3
    %p189 = pnand %p187, %p188
    %p190 = pneg %p189
    // Predicated region
    $region33: #{a_call__.31} parent=5 // pred_check
      _
    $region34: #{a_call__.31} parent=5 // pred_check_branch
      %192 = sbr.rel (%p189) target = $region36
    $region35: #{a_call__.31} parent=5 // pred_region
      %s193 = ssub.s32 %s10, 1
      %p194 = scmp.lt.s32.totalorder %s19, 1
      %s195 = scalar_select %p194, %s19, 1
      %p196 = scmp.lt.s32.totalorder %s20, 0
      %s197 = scalar_select %p196, %s20, 0
      %s198 = sadd.s32 %s197, %s195
      %s199 = smul.addr %s198, 2
      %s200 = scalar_lea.vmem %s0, %s199
      %p201 = pneg %p50
      %p202 = pneg %p47
      %p203 = scmp.lt.s32.totalorder %s19, 1
      %s204 = scalar_select %p203, %s19, 1
      %s205 = scalar_lea.vmem %s1, %s204
      %p206 = pneg %p76
      %p207 = pneg %p73
      %p208 = pneg %p97
      %p209 = pneg %p94
      %p210 = pneg %p118
      %p211 = pneg %p115
      %p212 = pneg %p146
      %p213 = pneg %p143
      %p214 = scmp.lt.s32.totalorder %s19, 1
      %s215 = scalar_select %p214, %s19, 1
      %p216 = scmp.lt.s32.totalorder %s20, 0
      %s217 = scalar_select %p216, %s20, 0
      %s218 = sadd.s32 %s217, %s215
      %s219 = smul.addr %s218, 2
      %s220 = scalar_lea.vmem %s4, %s219
      %p221 = scmp.lt.s32.totalorder %s19, 1
      %s222 = scalar_select %p221, %s19, 1
      %p223 = scmp.lt.s32.totalorder %s20, 0
      %s224 = scalar_select %p223, %s20, 0
      %s225 = sadd.s32 %s224, %s222
      %s226 = smul.addr %s225, 2
      %s227 = scalar_lea.vmem %s0, %s226
      %p228 = scmp.lt.s32.totalorder %s19, 1
      %s229 = scalar_select %p228, %s19, 1
      %s230 = scalar_lea.vmem %s1, %s229
      %p231 = scmp.lt.s32.totalorder %s19, 1
      %s232 = scalar_select %p231, %s19, 1
      %p233 = scmp.lt.s32.totalorder %s20, 0
      %s234 = scalar_select %p233, %s20, 0
      %s235 = sadd.s32 %s234, %s232
      %s236 = smul.addr %s235, 2
      %s237 = scalar_lea.vmem %s4, %s236
      %v239 = vld [vmem:[%s227] sm:$0x3]
      %v240 = vunpack.c.l.bf16 %v239
      %v241 = vld [vmem:[%s230] sm:$0x1]
      %v243 = vlaneseq
      %v244 = vshrl.u32 %v243, 7
      %v245 = vsub.s32 0, %v244
      %v246 = vrot.slane %v241, %v245
      %v248 = vmul.f32 %v240, %v246
      %v249 = vadd.f32 %v248, 3.0
      %v250 = vmax.f32 %v249, 0.0
      %v251 = vmin.f32 %v250, 6.0
      %v252 = vrcp.pop 6.0
      %v253 = vmul.f32 %v251, %v252
      %v254 = vmul.f32 %v248, %v253
      %v255 = vpack.c.bf16 %v254, %v254
      %v256 = vld [vmem:[%s2] sm:$0xf]
      %v257 = vld [vmem:[%s2 + $0x4] sm:$0xf]
      %v258 = vld [vmem:[%s2 + $0x8] sm:$0xf]
      %v259 = vld [vmem:[%s2 + $0xc] sm:$0xf]
      %v260 = vld [vmem:[%s2 + $0x10] sm:$0xf]
      %v261 = vld [vmem:[%s2 + $0x14] sm:$0xf]
      %v262 = vld [vmem:[%s2 + $0x18] sm:$0xf]
      %v263 = vld [vmem:[%s2 + $0x1c] sm:$0xf]
      %v264 = vld [vmem:[%s2 + $0x20] sm:$0xf]
      %v265 = vld [vmem:[%s2 + $0x24] sm:$0xf]
      %v266 = vld [vmem:[%s2 + $0x28] sm:$0xf]
      %v267 = vld [vmem:[%s2 + $0x2c] sm:$0xf]
      %v268 = vld [vmem:[%s3] sm:$0x1]
      %v270 = vlaneseq
      %v271 = vshrl.u32 %v270, 7
      %v272 = vsub.s32 0, %v271
      %v273 = vrot.slane %v268, %v272
      %v287 = vunpack.c.l.b16 %v256
      %v288 = vunpack.c.l.b16 %v257
      %v289 = vunpack.c.l.b16 %v258
      %v290 = vunpack.c.l.b16 %v259
      %v291 = vunpack.c.l.b16 %v260
      %v292 = vunpack.c.l.b16 %v261
      %v293 = vunpack.c.l.b16 %v262
      %v294 = vunpack.c.l.b16 %v263
      %v295 = vunpack.c.l.b16 %v264
      %v296 = vunpack.c.l.b16 %v265
      %v297 = vunpack.c.l.b16 %v266
      %v298 = vunpack.c.l.b16 %v267
      %v299 = vpack.c.b16 %v288, %v287
      %v300 = vpack.c.b16 %v290, %v289
      %v301 = vpack.c.b16 %v292, %v291
      %v302 = vpack.c.b16 %v294, %v293
      %v303 = vpack.c.b16 %v296, %v295
      %v304 = vpack.c.b16 %v298, %v297
      %vm311 = vcmask 785408
      %v313 = vsel %vm311, %v255, 0
      %315 = vmatprep.subr.bf16.mxu0 0
      %316 = vmatpush1.bf16.msra.mxu0 %v299
      %317 = vmatprep.subr.bf16.mxu0 0
      %318 = vmatpush1.bf16.msra.mxu0 %v300
      %319 = vmatprep.subr.bf16.mxu0 0
      %320 = vmatpush1.bf16.msra.mxu0 %v301
      %321 = vmatprep.subr.bf16.mxu0 0
      %322 = vmatpush1.bf16.msra.mxu0 %v302
      %323 = vmatprep.subr.bf16.mxu0 0
      %324 = vmatpush1.bf16.msra.mxu0 %v303
      %325 = vmatprep.subr.bf16.mxu0 0
      %326 = vmatpush1.bf16.msra.mxu0 %v304
      %327 = vmatprep.subr.bf16.mxu0 0
      %328 = vmatpush1.bf16.msra.mxu0 0
      %329 = vmatprep.subr.bf16.mxu0 0
      %330 = vmatpush1.bf16.msra.mxu0 0
      %331 = vmatprep.subr.bf16.mxu0 0
      %332 = vmatpush1.bf16.msra.mxu0 0
      %333 = vmatprep.subr.bf16.mxu0 0
      %334 = vmatpush1.bf16.msra.mxu0 0
      %335 = vmatprep.subr.bf16.mxu0 0
      %336 = vmatpush1.bf16.msra.mxu0 0
      %337 = vmatprep.subr.bf16.mxu0 0
      %338 = vmatpush1.bf16.msra.mxu0 0
      %339 = vmatprep.subr.bf16.mxu0 0
      %340 = vmatpush1.bf16.msra.mxu0 0
      %341 = vmatprep.subr.bf16.mxu0 0
      %342 = vmatpush1.bf16.msra.mxu0 0
      %343 = vmatprep.subr.bf16.mxu0 0
      %344 = vmatpush1.bf16.msra.mxu0 0
      %345 = vmatprep.subr.bf16.mxu0 0
      %346 = vmatpush1.bf16.msra.mxu0 0
      %347 = vmatprep.mubr.bf16.mxu0 0
      %348 = vmatmul.mubr.bf16.gmra.mrb[0].mxu0 %v313
      %v349 = vpop.f32.mrb[0].mxu0
      %v350 = vadd.f32 %v273, %v349
      %v351 = vpop.f32.mrb[0].mxu0
      %v352 = vpop.f32.mrb[0].mxu0
      %v353 = vpop.f32.mrb[0].mxu0
      %354 = vdwg.mxu0
      %v355 = vpack.c.bf16 %v350, %v350
      %vm356 = vcmask 320512
      %357 = vst.msk [vmem:[%s237] sm:$0x3] %vm356, %v355
      %p358 = scmp.lt.s32.totalorder %s19, 1
      %s359 = scalar_select %p358, %s19, 1
      %p360 = scmp.lt.s32.totalorder %s20, 0
      %s361 = scalar_select %p360, %s20, 0
      %s362 = sadd.s32 %s361, %s359
      %s363 = smul.addr %s362, 2
      %s364 = scalar_lea.vmem %s4, %s363
      // Predicated region
      $region37: #{a_call__.31} parent=35 // pred_check
        %p365 = pneg %p143
      $region38: #{a_call__.31} parent=35 // pred_check_branch
        %367 = sbr.rel (%p365) target = $region40
      $region39: #{a_call__.31} parent=35 // pred_region
        _
      $region40: #{a_call__.31} parent=35 // pred_fallthru
        _
    $region36: #{a_call__.31} parent=5 // pred_fallthru
      _
    %p368 = scmp.le.s32.totalorder 2, %s10
    // Predicated region
    $region41: #{a_call__.31} parent=5 // pred_check
      %p369 = pneg %p368
    $region42: #{a_call__.31} parent=5 // pred_check_branch
      %371 = sbr.rel (%p369) target = $region44
    $region43: #{a_call__.31} parent=5 // pred_region
      %s372 = ssub.s32 %s10, 2
      // Predicated region
      $region45: #{a_call__.31} parent=43 // pred_check
        %p373 = pneg %p149
      $region46: #{a_call__.31} parent=43 // pred_check_branch
        %375 = sbr.rel (%p373) target = $region48
      $region47: #{a_call__.31} parent=43 // pred_region
        %p376 = scmp.lt.s32.totalorder %s21, 1
        %s377 = scalar_select %p376, %s21, 1
        %p378 = scmp.lt.s32.totalorder %s22, 0
        %s379 = scalar_select %p378, %s22, 0
        %s380 = sadd.s32 %s379, %s377
        %s381 = smul.addr %s380, 2
        %s382 = scalar_lea.vmem %s4, %s381
      $region48: #{a_call__.31} parent=43 // pred_fallthru
        _
    $region44: #{a_call__.31} parent=5 // pred_fallthru
      _
  $region6: #{a_call__.31} parent=0 // loop_footer
    %s14 = sadd.s32 1, %s10
  $region7: #{a_call__.31} parent=0 // loop_footer_branch
    %9 = sbr.rel target = $region3
  $region8: #{a_call__.31} parent=0 // loop_exit
    _

// kernel: a_call__.32
$region0: #{a_call__.32}
  #allocation0 [shape = 'u32[]', space=smem, size = 0x4, offset = 0x4, fixed_abs, tag = 'smem constant byte address 0x4 - core index']
  #allocation1 [shape = 'u32[144,128]{1,0:T(1,128)}', space=vmem, size = 0x12000, scoped, tag = 'internal scratch']
  %s0 = inlined_call_operand.vmem [shape: bf16[2,4,40], index: 0, kind: input, shape index: {}]
  %s1 = inlined_call_operand.vmem [shape: bf16[40,96], index: 1, kind: input, shape index: {}]
  %s2 = inlined_call_operand.vmem [shape: f32[1,96], index: 2, kind: input, shape index: {}]
  %s3 = inlined_call_operand.vmem [shape: bf16[2,4,96], index: 3, kind: output, shape index: {}]
  %s4 = sld [smem:[#allocation0]]
  $region45: #{a_call__.32} parent=0
    _
  %s6 = ssub.s32 1, %s4
  %s7 = scalar_select 0, %s6, %s4
  loop: start=0, step=1, limit=4
  $region2: #{a_call__.32} parent=0 // loop_pre_header
    _
  $region3: #{a_call__.32} parent=0 // loop_header
    %s9 = sphi 0, %s13
    %p10 = scmp.ge.s32.totalorder %s9, 4
    %s16 = sphi 0, %s28
    %s17 = sphi 0, %s24
    %s18 = sphi 0, %s16
    %s19 = sphi 0, %s17
    %s20 = sphi 0, %s18
    %s21 = sphi 0, %s19
    %s33 = sphi 0, %s35
    %s36 = sphi 0, %s33
    %s37 = sphi 0, %s36
    %s53 = sphi 0, %s37
    %s57 = sphi 0, %s57
    %s59 = sphi 0, %s57
    %s60 = sphi 0, %s59
    %s74 = sphi 0, %s60
    %s78 = sphi 0, %s78
    %s80 = sphi 0, %s78
    %s81 = sphi 0, %s80
    %s95 = sphi 0, %s81
    %s103 = sphi 0, %s105
    %s106 = sphi 0, %s103
    %s107 = sphi 0, %s106
    %s123 = sphi 0, %s107
  $region4: #{a_call__.32} parent=0 // loop_header_branch
    %12 = sbr.rel (%p10) target = $region8
  $region5: #{a_call__.32} parent=0 // loop_body
    %s14 = ssub.s32 %s9, 1
    %s15 = ssub.s32 %s9, 2
    %s22 = sadd.s32 1, %s17
    %p23 = scmp.ge.s32.totalorder %s22, 1
    %s24 = scalar_select %p23, 0, %s22
    %s25 = sadd.s32 1, %s16
    %s26 = scalar_select %p23, %s25, %s16
    %p27 = scmp.ge.s32.totalorder %s26, 2
    %s28 = scalar_select %p27, 0, %s26
    %s29 = ssub.s32 %s16, %s28
    %s30 = ssub.s32 %s17, %s24
    %s31 = sor.u32 %s29, %s30
    %p32 = scmp.eq.s32.totalorder %s31, 0
    %s34 = sadd.s32 %s33, 1
    %s35 = scalar_select %p32, %s33, %s34
    %p38 = pneg %p32
    %p39 = scmp.eq.s32.totalorder %s9, 1
    %p40 = por %p38, %p39
    %p41 = scmp.ne.s32.totalorder %s33, %s36
    %p42 = scmp.eq.s32.totalorder %s9, 0
    %p43 = por %p41, %p42
    %p44 = scmp.ne.s32.totalorder %s33, %s36
    %p45 = scmp.eq.s32.totalorder %s14, 1
    %p46 = por %p44, %p45
    %p47 = scmp.ne.s32.totalorder %s36, %s37
    %p48 = scmp.eq.s32.totalorder %s14, 0
    %p49 = por %p47, %p48
    %p50 = scmp.ne.s32.totalorder %s36, %s37
    %p51 = scmp.eq.s32.totalorder %s15, 1
    %p52 = por %p50, %p51
    %p54 = scmp.ne.s32.totalorder %s37, %s53
    %p55 = scmp.eq.s32.totalorder %s15, 0
    %p56 = por %p54, %p55
    %s58 = sadd.s32 %s57, 1
    %p61 = scmp.eq.s32.totalorder %s9, 1
    %p62 = scmp.ne.s32.totalorder %s57, %s59
    %p63 = scmp.eq.s32.totalorder %s9, 0
    %p64 = por %p62, %p63
    %p65 = scmp.ne.s32.totalorder %s57, %s59
    %p66 = scmp.eq.s32.totalorder %s14, 1
    %p67 = por %p65, %p66
    %p68 = scmp.ne.s32.totalorder %s59, %s60
    %p69 = scmp.eq.s32.totalorder %s14, 0
    %p70 = por %p68, %p69
    %p71 = scmp.ne.s32.totalorder %s59, %s60
    %p72 = scmp.eq.s32.totalorder %s15, 1
    %p73 = por %p71, %p72
    %p75 = scmp.ne.s32.totalorder %s60, %s74
    %p76 = scmp.eq.s32.totalorder %s15, 0
    %p77 = por %p75, %p76
    %s79 = sadd.s32 %s78, 1
    %p82 = scmp.eq.s32.totalorder %s9, 1
    %p83 = scmp.ne.s32.totalorder %s78, %s80
    %p84 = scmp.eq.s32.totalorder %s9, 0
    %p85 = por %p83, %p84
    %p86 = scmp.ne.s32.totalorder %s78, %s80
    %p87 = scmp.eq.s32.totalorder %s14, 1
    %p88 = por %p86, %p87
    %p89 = scmp.ne.s32.totalorder %s80, %s81
    %p90 = scmp.eq.s32.totalorder %s14, 0
    %p91 = por %p89, %p90
    %p92 = scmp.ne.s32.totalorder %s80, %s81
    %p93 = scmp.eq.s32.totalorder %s15, 1
    %p94 = por %p92, %p93
    %p96 = scmp.ne.s32.totalorder %s81, %s95
    %p97 = scmp.eq.s32.totalorder %s15, 0
    %p98 = por %p96, %p97
    %s99 = ssub.s32 %s16, %s28
    %s100 = ssub.s32 %s17, %s24
    %s101 = sor.u32 %s99, %s100
    %p102 = scmp.eq.s32.totalorder %s101, 0
    %s104 = sadd.s32 %s103, 1
    %s105 = scalar_select %p102, %s103, %s104
    %p108 = pneg %p102
    %p109 = scmp.eq.s32.totalorder %s9, 1
    %p110 = por %p108, %p109
    %p111 = scmp.ne.s32.totalorder %s103, %s106
    %p112 = scmp.eq.s32.totalorder %s9, 0
    %p113 = por %p111, %p112
    %p114 = scmp.ne.s32.totalorder %s103, %s106
    %p115 = scmp.eq.s32.totalorder %s14, 1
    %p116 = por %p114, %p115
    %p117 = scmp.ne.s32.totalorder %s106, %s107
    %p118 = scmp.eq.s32.totalorder %s14, 0
    %p119 = por %p117, %p118
    %p120 = scmp.ne.s32.totalorder %s106, %s107
    %p121 = scmp.eq.s32.totalorder %s15, 1
    %p122 = por %p120, %p121
    %p124 = scmp.ne.s32.totalorder %s107, %s123
    %p125 = scmp.eq.s32.totalorder %s15, 0
    %p126 = por %p124, %p125
    %p127 = scmp.le.s32.totalorder 1, %s9
    %p128 = scmp.lt.s32.totalorder %s9, 3
    %p129 = pnand %p127, %p128
    %p130 = pneg %p129
    // Predicated region
    $region9: #{a_call__.32} parent=5 // pred_check
      _
    $region10: #{a_call__.32} parent=5 // pred_check_branch
      %132 = sbr.rel (%p129) target = $region12
    $region11: #{a_call__.32} parent=5 // pred_region
      %s133 = ssub.s32 %s9, 1
      // Predicated region
      $region13: #{a_call__.32} parent=11 // pred_check
        %p134 = pneg %p70
      $region14: #{a_call__.32} parent=11 // pred_check_branch
        %136 = sbr.rel (%p134) target = $region16
      $region15: #{a_call__.32} parent=11 // pred_region
        _
      $region16: #{a_call__.32} parent=11 // pred_fallthru
        _
      // Predicated region
      $region17: #{a_call__.32} parent=11 // pred_check
        %p137 = pneg %p91
      $region18: #{a_call__.32} parent=11 // pred_check_branch
        %139 = sbr.rel (%p137) target = $region20
      $region19: #{a_call__.32} parent=11 // pred_region
        _
      $region20: #{a_call__.32} parent=11 // pred_fallthru
        _
    $region12: #{a_call__.32} parent=5 // pred_fallthru
      _
    %p140 = scmp.lt.s32.totalorder %s9, 2
    // Predicated region
    $region21: #{a_call__.32} parent=5 // pred_check
      %p141 = pneg %p140
    $region22: #{a_call__.32} parent=5 // pred_check_branch
      %143 = sbr.rel (%p141) target = $region24
    $region23: #{a_call__.32} parent=5 // pred_region
      // Predicated region
      $region25: #{a_call__.32} parent=23 // pred_check
        %p144 = pneg %p43
      $region26: #{a_call__.32} parent=23 // pred_check_branch
        %146 = sbr.rel (%p144) target = $region28
      $region27: #{a_call__.32} parent=23 // pred_region
        %p147 = scmp.lt.s32.totalorder %s16, 1
        %s148 = scalar_select %p147, %s16, 1
        %p149 = scmp.lt.s32.totalorder %s17, 0
        %s150 = scalar_select %p149, %s17, 0
        %s151 = sadd.s32 %s150, %s148
        %s152 = smul.addr %s151, 2
        %s153 = scalar_lea.vmem %s0, %s152
      $region28: #{a_call__.32} parent=23 // pred_fallthru
        _
    $region24: #{a_call__.32} parent=5 // pred_fallthru
      _
    %p154 = scmp.le.s32.totalorder 1, %s9
    %p155 = scmp.lt.s32.totalorder %s9, 3
    %p156 = pnand %p154, %p155
    %p157 = pneg %p156
    // Predicated region
    $region29: #{a_call__.32} parent=5 // pred_check
      _
    $region30: #{a_call__.32} parent=5 // pred_check_branch
      %159 = sbr.rel (%p156) target = $region32
    $region31: #{a_call__.32} parent=5 // pred_region
      %s160 = ssub.s32 %s9, 1
      %p161 = scmp.lt.s32.totalorder %s18, 1
      %s162 = scalar_select %p161, %s18, 1
      %p163 = scmp.lt.s32.totalorder %s19, 0
      %s164 = scalar_select %p163, %s19, 0
      %s165 = sadd.s32 %s164, %s162
      %s166 = smul.addr %s165, 2
      %s167 = scalar_lea.vmem %s0, %s166
      %p168 = pneg %p49
      %p169 = pneg %p46
      %p170 = pneg %p70
      %p171 = pneg %p67
      %p172 = pneg %p91
      %p173 = pneg %p88
      %p174 = pneg %p119
      %p175 = pneg %p116
      %p176 = scmp.lt.s32.totalorder %s18, 1
      %s177 = scalar_select %p176, %s18, 1
      %p178 = scmp.lt.s32.totalorder %s19, 0
      %s179 = scalar_select %p178, %s19, 0
      %s180 = sadd.s32 %s179, %s177
      %s181 = smul.addr %s180, 2
      %s182 = scalar_lea.vmem %s3, %s181
      %p183 = scmp.lt.s32.totalorder %s18, 1
      %s184 = scalar_select %p183, %s18, 1
      %p185 = scmp.lt.s32.totalorder %s19, 0
      %s186 = scalar_select %p185, %s19, 0
      %s187 = sadd.s32 %s186, %s184
      %s188 = smul.addr %s187, 2
      %s189 = scalar_lea.vmem %s0, %s188
      %p190 = scmp.lt.s32.totalorder %s18, 1
      %s191 = scalar_select %p190, %s18, 1
      %p192 = scmp.lt.s32.totalorder %s19, 0
      %s193 = scalar_select %p192, %s19, 0
      %s194 = sadd.s32 %s193, %s191
      %s195 = smul.addr %s194, 2
      %s196 = scalar_lea.vmem %s3, %s195
      %v198 = vld [vmem:[%s189] sm:$0x3]
      %v199 = vld [vmem:[%s1] sm:$0xf]
      %v200 = vld [vmem:[%s1 + $0x4] sm:$0xf]
      %v201 = vld [vmem:[%s1 + $0x8] sm:$0xf]
      %v202 = vld [vmem:[%s1 + $0xc] sm:$0xf]
      %v203 = vld [vmem:[%s1 + $0x10] sm:$0xf]
      %v204 = vld [vmem:[%s2] sm:$0x1]
      %v206 = vlaneseq
      %v207 = vshrl.u32 %v206, 7
      %v208 = vsub.s32 0, %v207
      %v209 = vrot.slane %v204, %v208
      %v216 = vunpack.c.l.b16 %v199
      %v217 = vunpack.c.l.b16 %v200
      %v218 = vunpack.c.l.b16 %v201
      %v219 = vunpack.c.l.b16 %v202
      %v220 = vunpack.c.l.b16 %v203
      %v221 = vpack.c.b16 %v217, %v216
      %v222 = vpack.c.b16 %v219, %v218
      %v223 = vpack.c.b16 %v220, %v220
      %vm226 = vcmask 326656
      %v228 = vsel %vm226, %v198, 0
      %vm230 = vcmask 1043456
      %v232 = vsel %vm230, %v223, 0
      %234 = vmatprep.subr.bf16.mxu0 0
      %235 = vmatpush1.bf16.msra.mxu0 %v221
      %236 = vmatprep.subr.bf16.mxu0 0
      %237 = vmatpush1.bf16.msra.mxu0 %v222
      %238 = vmatprep.subr.bf16.mxu0 0
      %239 = vmatpush1.bf16.msra.mxu0 %v232
      %240 = vmatprep.subr.bf16.mxu0 0
      %241 = vmatpush1.bf16.msra.mxu0 0
      %242 = vmatprep.subr.bf16.mxu0 0
      %243 = vmatpush1.bf16.msra.mxu0 0
      %244 = vmatprep.subr.bf16.mxu0 0
      %245 = vmatpush1.bf16.msra.mxu0 0
      %246 = vmatprep.subr.bf16.mxu0 0
      %247 = vmatpush1.bf16.msra.mxu0 0
      %248 = vmatprep.subr.bf16.mxu0 0
      %249 = vmatpush1.bf16.msra.mxu0 0
      %250 = vmatprep.subr.bf16.mxu0 0
      %251 = vmatpush1.bf16.msra.mxu0 0
      %252 = vmatprep.subr.bf16.mxu0 0
      %253 = vmatpush1.bf16.msra.mxu0 0
      %254 = vmatprep.subr.bf16.mxu0 0
      %255 = vmatpush1.bf16.msra.mxu0 0
      %256 = vmatprep.subr.bf16.mxu0 0
      %257 = vmatpush1.bf16.msra.mxu0 0
      %258 = vmatprep.subr.bf16.mxu0 0
      %259 = vmatpush1.bf16.msra.mxu0 0
      %260 = vmatprep.subr.bf16.mxu0 0
      %261 = vmatpush1.bf16.msra.mxu0 0
      %262 = vmatprep.subr.bf16.mxu0 0
      %263 = vmatpush1.bf16.msra.mxu0 0
      %264 = vmatprep.subr.bf16.mxu0 0
      %265 = vmatpush1.bf16.msra.mxu0 0
      %266 = vmatprep.mubr.bf16.mxu0 0
      %267 = vmatmul.mubr.bf16.gmra.mrb[0].mxu0 %v228
      %v268 = vpop.f32.mrb[0].mxu0
      %v269 = vadd.f32 %v209, %v268
      %v270 = vpop.f32.mrb[0].mxu0
      %v271 = vpop.f32.mrb[0].mxu0
      %v272 = vpop.f32.mrb[0].mxu0
      %273 = vdwg.mxu0
      %v274 = vadd.f32 %v269, 3.0
      %v275 = vmax.f32 %v274, 0.0
      %v276 = vmin.f32 %v275, 6.0
      %v277 = vrcp.pop 6.0
      %v278 = vmul.f32 %v276, %v277
      %v279 = vmul.f32 %v269, %v278
      %v280 = vpack.c.bf16 %v279, %v279
      %vm281 = vcmask 779264
      %282 = vst.msk [vmem:[%s196] sm:$0x3] %vm281, %v280
      %p283 = scmp.lt.s32.totalorder %s18, 1
      %s284 = scalar_select %p283, %s18, 1
      %p285 = scmp.lt.s32.totalorder %s19, 0
      %s286 = scalar_select %p285, %s19, 0
      %s287 = sadd.s32 %s286, %s284
      %s288 = smul.addr %s287, 2
      %s289 = scalar_lea.vmem %s3, %s288
      // Predicated region
      $region33: #{a_call__.32} parent=31 // pred_check
        %p290 = pneg %p116
      $region34: #{a_call__.32} parent=31 // pred_check_branch
        %292 = sbr.rel (%p290) target = $region36
      $region35: #{a_call__.32} parent=31 // pred_region
        _
      $region36: #{a_call__.32} parent=31 // pred_fallthru
        _
    $region32: #{a_call__.32} parent=5 // pred_fallthru
      _
    %p293 = scmp.le.s32.totalorder 2, %s9
    // Predicated region
    $region37: #{a_call__.32} parent=5 // pred_check
      %p294 = pneg %p293
    $region38: #{a_call__.32} parent=5 // pred_check_branch
      %296 = sbr.rel (%p294) target = $region40
    $region39: #{a_call__.32} parent=5 // pred_region
      %s297 = ssub.s32 %s9, 2
      // Predicated region
      $region41: #{a_call__.32} parent=39 // pred_check
        %p298 = pneg %p122
      $region42: #{a_call__.32} parent=39 // pred_check_branch
        %300 = sbr.rel (%p298) target = $region44
      $region43: #{a_call__.32} parent=39 // pred_region
        %p301 = scmp.lt.s32.totalorder %s20, 1
        %s302 = scalar_select %p301, %s20, 1
        %p303 = scmp.lt.s32.totalorder %s21, 0
        %s304 = scalar_select %p303, %s21, 0
        %s305 = sadd.s32 %s304, %s302
        %s306 = smul.addr %s305, 2
        %s307 = scalar_lea.vmem %s3, %s306
      $region44: #{a_call__.32} parent=39 // pred_fallthru
        _
    $region40: #{a_call__.32} parent=5 // pred_fallthru
      _
  $region6: #{a_call__.32} parent=0 // loop_footer
    %s13 = sadd.s32 1, %s9
  $region7: #{a_call__.32} parent=0 // loop_footer_branch
    %8 = sbr.rel target = $region3
  $region8: #{a_call__.32} parent=0 // loop_exit
    _

// kernel: a_call__.33
$region0: #{a_call__.33}
  #allocation0 [shape = 'u32[]', space=smem, size = 0x4, offset = 0x4, fixed_abs, tag = 'smem constant byte address 0x4 - core index']
  #allocation1 [shape = 'u32[144,128]{1,0:T(1,128)}', space=vmem, size = 0x12000, scoped, tag = 'internal scratch']
  %s0 = inlined_call_operand.vmem [shape: bf16[2,4,96], index: 0, kind: input, shape index: {}]
  %s1 = inlined_call_operand.vmem [shape: f32[2,1,96], index: 1, kind: output, shape index: {}]
  %s2 = sld [smem:[#allocation0]]
  $region37: #{a_call__.33} parent=0
    _
  %s4 = ssub.s32 1, %s2
  %s5 = scalar_select 0, %s4, %s2
  loop: start=0, step=1, limit=4
  $region2: #{a_call__.33} parent=0 // loop_pre_header
    _
  $region3: #{a_call__.33} parent=0 // loop_header
    %s7 = sphi 0, %s11
    %p8 = scmp.ge.s32.totalorder %s7, 4
    %s17 = sphi 0, %s19
    %s20 = sphi 0, %s17
    %s21 = sphi 0, %s20
    %s37 = sphi 0, %s21
    %s43 = sphi 0, %s45
    %s46 = sphi 0, %s43
    %s47 = sphi 0, %s46
    %s63 = sphi 0, %s47
  $region4: #{a_call__.33} parent=0 // loop_header_branch
    %10 = sbr.rel (%p8) target = $region8
  $region5: #{a_call__.33} parent=0 // loop_body
    %s12 = ssub.s32 %s7, 1
    %s13 = ssub.s32 %s7, 2
    %s14 = sadd.s32 %s7, 1
    %s15 = ssub.s32 %s7, %s14
    %p16 = scmp.eq.s32.totalorder %s15, 0
    %s18 = sadd.s32 %s17, 1
    %s19 = scalar_select %p16, %s17, %s18
    %p22 = pneg %p16
    %p23 = scmp.eq.s32.totalorder %s7, 1
    %p24 = por %p22, %p23
    %p25 = scmp.ne.s32.totalorder %s17, %s20
    %p26 = scmp.eq.s32.totalorder %s7, 0
    %p27 = por %p25, %p26
    %p28 = scmp.ne.s32.totalorder %s17, %s20
    %p29 = scmp.eq.s32.totalorder %s12, 1
    %p30 = por %p28, %p29
    %p31 = scmp.ne.s32.totalorder %s20, %s21
    %p32 = scmp.eq.s32.totalorder %s12, 0
    %p33 = por %p31, %p32
    %p34 = scmp.ne.s32.totalorder %s20, %s21
    %p35 = scmp.eq.s32.totalorder %s13, 1
    %p36 = por %p34, %p35
    %p38 = scmp.ne.s32.totalorder %s21, %s37
    %p39 = scmp.eq.s32.totalorder %s13, 0
    %p40 = por %p38, %p39
    %s41 = ssub.s32 %s7, %s14
    %p42 = scmp.eq.s32.totalorder %s41, 0
    %s44 = sadd.s32 %s43, 1
    %s45 = scalar_select %p42, %s43, %s44
    %p48 = pneg %p42
    %p49 = scmp.eq.s32.totalorder %s7, 1
    %p50 = por %p48, %p49
    %p51 = scmp.ne.s32.totalorder %s43, %s46
    %p52 = scmp.eq.s32.totalorder %s7, 0
    %p53 = por %p51, %p52
    %p54 = scmp.ne.s32.totalorder %s43, %s46
    %p55 = scmp.eq.s32.totalorder %s12, 1
    %p56 = por %p54, %p55
    %p57 = scmp.ne.s32.totalorder %s46, %s47
    %p58 = scmp.eq.s32.totalorder %s12, 0
    %p59 = por %p57, %p58
    %p60 = scmp.ne.s32.totalorder %s46, %s47
    %p61 = scmp.eq.s32.totalorder %s13, 1
    %p62 = por %p60, %p61
    %p64 = scmp.ne.s32.totalorder %s47, %s63
    %p65 = scmp.eq.s32.totalorder %s13, 0
    %p66 = por %p64, %p65
    %p67 = scmp.le.s32.totalorder 1, %s7
    %p68 = scmp.lt.s32.totalorder %s7, 3
    %p69 = pnand %p67, %p68
    %p70 = pneg %p69
    // Predicated region
    $region9: #{a_call__.33} parent=5 // pred_check
      _
    $region10: #{a_call__.33} parent=5 // pred_check_branch
      %72 = sbr.rel (%p69) target = $region12
    $region11: #{a_call__.33} parent=5 // pred_region
      %s73 = ssub.s32 %s7, 1
    $region12: #{a_call__.33} parent=5 // pred_fallthru
      _
    %p74 = scmp.lt.s32.totalorder %s7, 2
    // Predicated region
    $region13: #{a_call__.33} parent=5 // pred_check
      %p75 = pneg %p74
    $region14: #{a_call__.33} parent=5 // pred_check_branch
      %77 = sbr.rel (%p75) target = $region16
    $region15: #{a_call__.33} parent=5 // pred_region
      // Predicated region
      $region17: #{a_call__.33} parent=15 // pred_check
        %p78 = pneg %p27
      $region18: #{a_call__.33} parent=15 // pred_check_branch
        %80 = sbr.rel (%p78) target = $region20
      $region19: #{a_call__.33} parent=15 // pred_region
        %p81 = scmp.lt.s32.totalorder %s7, 1
        %s82 = scalar_select %p81, %s7, 1
        %s83 = smul.addr %s82, 2
        %s84 = scalar_lea.vmem %s0, %s83
      $region20: #{a_call__.33} parent=15 // pred_fallthru
        _
    $region16: #{a_call__.33} parent=5 // pred_fallthru
      _
    %p85 = scmp.le.s32.totalorder 1, %s7
    %p86 = scmp.lt.s32.totalorder %s7, 3
    %p87 = pnand %p85, %p86
    %p88 = pneg %p87
    // Predicated region
    $region21: #{a_call__.33} parent=5 // pred_check
      _
    $region22: #{a_call__.33} parent=5 // pred_check_branch
      %90 = sbr.rel (%p87) target = $region24
    $region23: #{a_call__.33} parent=5 // pred_region
      %s91 = ssub.s32 %s7, 1
      %p92 = scmp.lt.s32.totalorder %s12, 1
      %s93 = scalar_select %p92, %s12, 1
      %s94 = smul.addr %s93, 2
      %s95 = scalar_lea.vmem %s0, %s94
      %p96 = pneg %p33
      %p97 = pneg %p30
      %p98 = pneg %p59
      %p99 = pneg %p56
      %p100 = scmp.lt.s32.totalorder %s12, 1
      %s101 = scalar_select %p100, %s12, 1
      %s102 = scalar_lea.vmem %s1, %s101
      %p103 = scmp.lt.s32.totalorder %s12, 1
      %s104 = scalar_select %p103, %s12, 1
      %s105 = smul.addr %s104, 2
      %s106 = scalar_lea.vmem %s0, %s105
      %p107 = scmp.lt.s32.totalorder %s12, 1
      %s108 = scalar_select %p107, %s12, 1
      %s109 = scalar_lea.vmem %s1, %s108
      %v110 = vld [vmem:[%s106] sm:$0x3]
      %v111 = vunpack.c.l.bf16 %v110
      %vm112 = vcmask 781312
      %v113 = vsel %vm112, %v111, 0.0
      %v114 = vrot.slane %v113, 4
      %v115 = vadd.f32 %v113, %v114
      %v116 = vrot.slane %v115, 2
      %v117 = vadd.f32 %v115, %v116
      %v118 = vrot.slane %v117, 1
      %v119 = vadd.f32 %v117, %v118
      %v120 = vrcp.pop 4.0
      %v121 = vmul.f32 %v119, %v120
      %vm122 = vcmask 778240
      %123 = vst.msk [vmem:[%s109] sm:$0x1] %vm122, %v121
      %p124 = scmp.lt.s32.totalorder %s12, 1
      %s125 = scalar_select %p124, %s12, 1
      %s126 = scalar_lea.vmem %s1, %s125
      // Predicated region
      $region25: #{a_call__.33} parent=23 // pred_check
        %p127 = pneg %p56
      $region26: #{a_call__.33} parent=23 // pred_check_branch
        %129 = sbr.rel (%p127) target = $region28
      $region27: #{a_call__.33} parent=23 // pred_region
        _
      $region28: #{a_call__.33} parent=23 // pred_fallthru
        _
    $region24: #{a_call__.33} parent=5 // pred_fallthru
      _
    %p130 = scmp.le.s32.totalorder 2, %s7
    // Predicated region
    $region29: #{a_call__.33} parent=5 // pred_check
      %p131 = pneg %p130
    $region30: #{a_call__.33} parent=5 // pred_check_branch
      %133 = sbr.rel (%p131) target = $region32
    $region31: #{a_call__.33} parent=5 // pred_region
      %s134 = ssub.s32 %s7, 2
      // Predicated region
      $region33: #{a_call__.33} parent=31 // pred_check
        %p135 = pneg %p62
      $region34: #{a_call__.33} parent=31 // pred_check_branch
        %137 = sbr.rel (%p135) target = $region36
      $region35: #{a_call__.33} parent=31 // pred_region
        %p138 = scmp.lt.s32.totalorder %s13, 1
        %s139 = scalar_select %p138, %s13, 1
        %s140 = scalar_lea.vmem %s1, %s139
      $region36: #{a_call__.33} parent=31 // pred_fallthru
        _
    $region32: #{a_call__.33} parent=5 // pred_fallthru
      _
  $region6: #{a_call__.33} parent=0 // loop_footer
    %s11 = sadd.s32 1, %s7
  $region7: #{a_call__.33} parent=0 // loop_footer_branch
    %6 = sbr.rel target = $region3
  $region8: #{a_call__.33} parent=0 // loop_exit
    _

// kernel: a_call__.29
$region0: #{a_call__.29}
  #allocation0 [shape = 'u32[]', space=smem, size = 0x4, offset = 0x4, fixed_abs, tag = 'smem constant byte address 0x4 - core index']
  #allocation1 [shape = 'u32[144,128]{1,0:T(1,128)}', space=vmem, size = 0x12000, scoped, tag = 'internal scratch']
  %s0 = inlined_call_operand.vmem [shape: bf16[2,16,4,96], index: 0, kind: input, shape index: {}]
  %s1 = inlined_call_operand.vmem [shape: f32[25,1,96], index: 1, kind: input, shape index: {}]
  %s2 = inlined_call_operand.vmem [shape: f32[1,1,96], index: 2, kind: input, shape index: {}]
  %s3 = inlined_call_operand.vmem [shape: bf16[2,2,2,96], index: 3, kind: output, shape index: {0}]
  %s4 = inlined_call_operand.vmem [shape: f32[2,1,96], index: 4, kind: output, shape index: {1}]
  %5 = xla_tuple %s3, %s4
  %s6 = sld [smem:[#allocation0]]
  $region53: #{a_call__.29} parent=0
    _
  %s8 = ssub.s32 1, %s6
  %s9 = scalar_select 0, %s8, %s6
  loop: start=0, step=1, limit=4
  $region2: #{a_call__.29} parent=0 // loop_pre_header
    _
  $region3: #{a_call__.29} parent=0 // loop_header
    %s11 = sphi 0, %s15
    %p12 = scmp.ge.s32.totalorder %s11, 4
    %s21 = sphi 0, %s23
    %s24 = sphi 0, %s21
    %s25 = sphi 0, %s24
    %s41 = sphi 0, %s25
    %s45 = sphi 0, %s45
    %s47 = sphi 0, %s45
    %s48 = sphi 0, %s47
    %s62 = sphi 0, %s48
    %s66 = sphi 0, %s66
    %s68 = sphi 0, %s66
    %s69 = sphi 0, %s68
    %s83 = sphi 0, %s69
    %s89 = sphi 0, %s91
    %s92 = sphi 0, %s89
    %s93 = sphi 0, %s92
    %s109 = sphi 0, %s93
    %s115 = sphi 0, %s117
    %s118 = sphi 0, %s115
    %s119 = sphi 0, %s118
    %s135 = sphi 0, %s119
  $region4: #{a_call__.29} parent=0 // loop_header_branch
    %14 = sbr.rel (%p12) target = $region8
  $region5: #{a_call__.29} parent=0 // loop_body
    %s16 = ssub.s32 %s11, 1
    %s17 = ssub.s32 %s11, 2
    %s18 = sadd.s32 %s11, 1
    %s19 = ssub.s32 %s11, %s18
    %p20 = scmp.eq.s32.totalorder %s19, 0
    %s22 = sadd.s32 %s21, 1
    %s23 = scalar_select %p20, %s21, %s22
    %p26 = pneg %p20
    %p27 = scmp.eq.s32.totalorder %s11, 1
    %p28 = por %p26, %p27
    %p29 = scmp.ne.s32.totalorder %s21, %s24
    %p30 = scmp.eq.s32.totalorder %s11, 0
    %p31 = por %p29, %p30
    %p32 = scmp.ne.s32.totalorder %s21, %s24
    %p33 = scmp.eq.s32.totalorder %s16, 1
    %p34 = por %p32, %p33
    %p35 = scmp.ne.s32.totalorder %s24, %s25
    %p36 = scmp.eq.s32.totalorder %s16, 0
    %p37 = por %p35, %p36
    %p38 = scmp.ne.s32.totalorder %s24, %s25
    %p39 = scmp.eq.s32.totalorder %s17, 1
    %p40 = por %p38, %p39
    %p42 = scmp.ne.s32.totalorder %s25, %s41
    %p43 = scmp.eq.s32.totalorder %s17, 0
    %p44 = por %p42, %p43
    %s46 = sadd.s32 %s45, 1
    %p49 = scmp.eq.s32.totalorder %s11, 1
    %p50 = scmp.ne.s32.totalorder %s45, %s47
    %p51 = scmp.eq.s32.totalorder %s11, 0
    %p52 = por %p50, %p51
    %p53 = scmp.ne.s32.totalorder %s45, %s47
    %p54 = scmp.eq.s32.totalorder %s16, 1
    %p55 = por %p53, %p54
    %p56 = scmp.ne.s32.totalorder %s47, %s48
    %p57 = scmp.eq.s32.totalorder %s16, 0
    %p58 = por %p56, %p57
    %p59 = scmp.ne.s32.totalorder %s47, %s48
    %p60 = scmp.eq.s32.totalorder %s17, 1
    %p61 = por %p59, %p60
    %p63 = scmp.ne.s32.totalorder %s48, %s62
    %p64 = scmp.eq.s32.totalorder %s17, 0
    %p65 = por %p63, %p64
    %s67 = sadd.s32 %s66, 1
    %p70 = scmp.eq.s32.totalorder %s11, 1
    %p71 = scmp.ne.s32.totalorder %s66, %s68
    %p72 = scmp.eq.s32.totalorder %s11, 0
    %p73 = por %p71, %p72
    %p74 = scmp.ne.s32.totalorder %s66, %s68
    %p75 = scmp.eq.s32.totalorder %s16, 1
    %p76 = por %p74, %p75
    %p77 = scmp.ne.s32.totalorder %s68, %s69
    %p78 = scmp.eq.s32.totalorder %s16, 0
    %p79 = por %p77, %p78
    %p80 = scmp.ne.s32.totalorder %s68, %s69
    %p81 = scmp.eq.s32.totalorder %s17, 1
    %p82 = por %p80, %p81
    %p84 = scmp.ne.s32.totalorder %s69, %s83
    %p85 = scmp.eq.s32.totalorder %s17, 0
    %p86 = por %p84, %p85
    %s87 = ssub.s32 %s11, %s18
    %p88 = scmp.eq.s32.totalorder %s87, 0
    %s90 = sadd.s32 %s89, 1
    %s91 = scalar_select %p88, %s89, %s90
    %p94 = pneg %p88
    %p95 = scmp.eq.s32.totalorder %s11, 1
    %p96 = por %p94, %p95
    %p97 = scmp.ne.s32.totalorder %s89, %s92
    %p98 = scmp.eq.s32.totalorder %s11, 0
    %p99 = por %p97, %p98
    %p100 = scmp.ne.s32.totalorder %s89, %s92
    %p101 = scmp.eq.s32.totalorder %s16, 1
    %p102 = por %p100, %p101
    %p103 = scmp.ne.s32.totalorder %s92, %s93
    %p104 = scmp.eq.s32.totalorder %s16, 0
    %p105 = por %p103, %p104
    %p106 = scmp.ne.s32.totalorder %s92, %s93
    %p107 = scmp.eq.s32.totalorder %s17, 1
    %p108 = por %p106, %p107
    %p110 = scmp.ne.s32.totalorder %s93, %s109
    %p111 = scmp.eq.s32.totalorder %s17, 0
    %p112 = por %p110, %p111
    %s113 = ssub.s32 %s11, %s18
    %p114 = scmp.eq.s32.totalorder %s113, 0
    %s116 = sadd.s32 %s115, 1
    %s117 = scalar_select %p114, %s115, %s116
    %p120 = pneg %p114
    %p121 = scmp.eq.s32.totalorder %s11, 1
    %p122 = por %p120, %p121
    %p123 = scmp.ne.s32.totalorder %s115, %s118
    %p124 = scmp.eq.s32.totalorder %s11, 0
    %p125 = por %p123, %p124
    %p126 = scmp.ne.s32.totalorder %s115, %s118
    %p127 = scmp.eq.s32.totalorder %s16, 1
    %p128 = por %p126, %p127
    %p129 = scmp.ne.s32.totalorder %s118, %s119
    %p130 = scmp.eq.s32.totalorder %s16, 0
    %p131 = por %p129, %p130
    %p132 = scmp.ne.s32.totalorder %s118, %s119
    %p133 = scmp.eq.s32.totalorder %s17, 1
    %p134 = por %p132, %p133
    %p136 = scmp.ne.s32.totalorder %s119, %s135
    %p137 = scmp.eq.s32.totalorder %s17, 0
    %p138 = por %p136, %p137
    %p139 = scmp.le.s32.totalorder 1, %s11
    %p140 = scmp.lt.s32.totalorder %s11, 3
    %p141 = pnand %p139, %p140
    %p142 = pneg %p141
    // Predicated region
    $region9: #{a_call__.29} parent=5 // pred_check
      _
    $region10: #{a_call__.29} parent=5 // pred_check_branch
      %144 = sbr.rel (%p141) target = $region12
    $region11: #{a_call__.29} parent=5 // pred_region
      %s145 = ssub.s32 %s11, 1
      // Predicated region
      $region13: #{a_call__.29} parent=11 // pred_check
        %p146 = pneg %p58
      $region14: #{a_call__.29} parent=11 // pred_check_branch
        %148 = sbr.rel (%p146) target = $region16
      $region15: #{a_call__.29} parent=11 // pred_region
        _
      $region16: #{a_call__.29} parent=11 // pred_fallthru
        _
      // Predicated region
      $region17: #{a_call__.29} parent=11 // pred_check
        %p149 = pneg %p79
      $region18: #{a_call__.29} parent=11 // pred_check_branch
        %151 = sbr.rel (%p149) target = $region20
      $region19: #{a_call__.29} parent=11 // pred_region
        _
      $region20: #{a_call__.29} parent=11 // pred_fallthru
        _
    $region12: #{a_call__.29} parent=5 // pred_fallthru
      _
    %p152 = scmp.lt.s32.totalorder %s11, 2
    // Predicated region
    $region21: #{a_call__.29} parent=5 // pred_check
      %p153 = pneg %p152
    $region22: #{a_call__.29} parent=5 // pred_check_branch
      %155 = sbr.rel (%p153) target = $region24
    $region23: #{a_call__.29} parent=5 // pred_region
      // Predicated region
      $region25: #{a_call__.29} parent=23 // pred_check
        %p156 = pneg %p31
      $region26: #{a_call__.29} parent=23 // pred_check_branch
        %158 = sbr.rel (%p156) target = $region28
      $region27: #{a_call__.29} parent=23 // pred_region
        %p159 = scmp.lt.s32.totalorder %s11, 1
        %s160 = scalar_select %p159, %s11, 1
        %s161 = smul.addr %s160, 16
        %s162 = smul.addr %s161, 2
        %s163 = scalar_lea.vmem %s0, %s162
      $region28: #{a_call__.29} parent=23 // pred_fallthru
        _
    $region24: #{a_call__.29} parent=5 // pred_fallthru
      _
    %p164 = scmp.le.s32.totalorder 1, %s11
    %p165 = scmp.lt.s32.totalorder %s11, 3
    %p166 = pnand %p164, %p165
    %p167 = pneg %p166
    // Predicated region
    $region29: #{a_call__.29} parent=5 // pred_check
      _
    $region30: #{a_call__.29} parent=5 // pred_check_branch
      %169 = sbr.rel (%p166) target = $region32
    $region31: #{a_call__.29} parent=5 // pred_region
      %s170 = ssub.s32 %s11, 1
      %p171 = scmp.lt.s32.totalorder %s16, 1
      %s172 = scalar_select %p171, %s16, 1
      %s173 = smul.addr %s172, 16
      %s174 = smul.addr %s173, 2
      %s175 = scalar_lea.vmem %s0, %s174
      %p176 = pneg %p37
      %p177 = pneg %p34
      %p178 = pneg %p58
      %p179 = pneg %p55
      %p180 = pneg %p79
      %p181 = pneg %p76
      %p182 = pneg %p105
      %p183 = pneg %p102
      %p184 = scmp.lt.s32.totalorder %s16, 1
      %s185 = scalar_select %p184, %s16, 1
      %s186 = smul.addr %s185, 2
      %s187 = scalar_lea.vmem %s3, %s186
      %p188 = pneg %p131
      %p189 = pneg %p128
      %p190 = scmp.lt.s32.totalorder %s16, 1
      %s191 = scalar_select %p190, %s16, 1
      %s192 = scalar_lea.vmem %s4, %s191
      %p193 = scmp.lt.s32.totalorder %s16, 1
      %s194 = scalar_select %p193, %s16, 1
      %s195 = smul.addr %s194, 16
      %s196 = smul.addr %s195, 2
      %s197 = scalar_lea.vmem %s0, %s196
      %p198 = scmp.lt.s32.totalorder %s16, 1
      %s199 = scalar_select %p198, %s16, 1
      %s200 = smul.addr %s199, 2
      %s201 = scalar_lea.vmem %s3, %s200
      %p202 = scmp.lt.s32.totalorder %s16, 1
      %s203 = scalar_select %p202, %s16, 1
      %s204 = scalar_lea.vmem %s4, %s203
      %v205 = vld [vmem:[%s197] sm:$0x1]
      %v206 = vld [vmem:[%s197 + $0x2] sm:$0x1]
      %v207 = vunpack.c.l.bf16 %v205
      %v208 = vunpack.c.l.bf16 %v206
      %v209 = vld [vmem:[%s1] sm:$0x1]
      %v211 = vlaneseq
      %v212 = vshrl.u32 %v211, 7
      %v213 = vsub.s32 0, %v212
      %v214 = vrot.slane %v209, %v213
      %v216 = vmul.f32 %v207, %v214
      %v217 = vmul.f32 %v208, %v214
      %v218 = vadd.f32 %v216, 0.0
      %v219 = vadd.f32 %v217, 0.0
      %s220 = scalar_lea.vmem %s197, 8
      %v221 = vld [vmem:[%s220] sm:$0x1]
      %v222 = vld [vmem:[%s220 + $0x2] sm:$0x1]
      %v223 = vunpack.c.l.bf16 %v221
      %v224 = vunpack.c.l.bf16 %v222
      %s225 = scalar_lea.vmem %s1, 1
      %v226 = vld [vmem:[%s225] sm:$0x1]
      %v228 = vlaneseq
      %v229 = vshrl.u32 %v228, 7
      %v230 = vsub.s32 0, %v229
      %v231 = vrot.slane %v226, %v230
      %v233 = vmul.f32 %v223, %v231
      %v234 = vmul.f32 %v224, %v231
      %v235 = vadd.f32 %v218, %v233
      %v236 = vadd.f32 %v219, %v234
      %v237 = vld [vmem:[%s197] sm:$0x3]
      %v238 = vld [vmem:[%s197 + $0x2] sm:$0x3]
      %v239 = vunpack.c.l.bf16 %v237
      %v240 = vunpack.c.l.bf16 %v238
      %s241 = scalar_lea.vmem %s1, 2
      %v242 = vld [vmem:[%s241] sm:$0x1]
      %v244 = vlaneseq
      %v245 = vshrl.u32 %v244, 7
      %v246 = vsub.s32 0, %v245
      %v247 = vrot.slane %v242, %v246
      %v249 = vmul.f32 %v239, %v247
      %v250 = vmul.f32 %v240, %v247
      %v253 = vrot.slane %v249, 5
      %v254 = vrot.slane %v253, 4
      %v255 = vrot.slane %v250, 5
      %v256 = vrot.slane %v255, 4
      %v259 = vadd.f32 %v235, %v254
      %v260 = vadd.f32 %v236, %v256
      %v261 = vld [vmem:[%s220] sm:$0x3]
      %v262 = vld [vmem:[%s220 + $0x2] sm:$0x3]
      %v263 = vunpack.c.l.bf16 %v261
      %v264 = vunpack.c.l.bf16 %v262
      %s265 = scalar_lea.vmem %s1, 3
      %v266 = vld [vmem:[%s265] sm:$0x1]
      %v268 = vlaneseq
      %v269 = vshrl.u32 %v268, 7
      %v270 = vsub.s32 0, %v269
      %v271 = vrot.slane %v266, %v270
      %v273 = vmul.f32 %v263, %v271
      %v274 = vmul.f32 %v264, %v271
      %v277 = vrot.slane %v273, 5
      %v278 = vrot.slane %v277, 4
      %v279 = vrot.slane %v274, 5
      %v280 = vrot.slane %v279, 4
      %v283 = vadd.f32 %v259, %v278
      %v284 = vadd.f32 %v260, %v280
      %v285 = vld [vmem:[%s197] sm:$0x2]
      %v286 = vld [vmem:[%s197 + $0x2] sm:$0x2]
      %v287 = vunpack.c.l.bf16 %v285
      %v288 = vunpack.c.l.bf16 %v286
      %s289 = scalar_lea.vmem %s1, 4
      %v290 = vld [vmem:[%s289] sm:$0x1]
      %v292 = vlaneseq
      %v293 = vshrl.u32 %v292, 7
      %v294 = vsub.s32 0, %v293
      %v295 = vrot.slane %v290, %v294
      %v297 = vmul.f32 %v287, %v295
      %v298 = vmul.f32 %v288, %v295
      %v301 = vrot.slane %v297, 6
      %v302 = vrot.slane %v301, 4
      %v303 = vrot.slane %v298, 6
      %v304 = vrot.slane %v303, 4
      %v307 = vadd.f32 %v283, %v302
      %v308 = vadd.f32 %v284, %v304
      %s309 = scalar_lea.vmem %s197, 16
      %v310 = vld [vmem:[%s309] sm:$0x1]
      %v311 = vld [vmem:[%s309 + $0x2] sm:$0x1]
      %v312 = vunpack.c.l.bf16 %v310
      %v313 = vunpack.c.l.bf16 %v311
      %s314 = scalar_lea.vmem %s1, 5
      %v315 = vld [vmem:[%s314] sm:$0x1]
      %v317 = vlaneseq
      %v318 = vshrl.u32 %v317, 7
      %v319 = vsub.s32 0, %v318
      %v320 = vrot.slane %v315, %v319
      %v322 = vmul.f32 %v312, %v320
      %v323 = vmul.f32 %v313, %v320
      %v324 = vadd.f32 %v307, %v322
      %v325 = vadd.f32 %v308, %v323
      %s326 = scalar_lea.vmem %s197, 24
      %v327 = vld [vmem:[%s326] sm:$0x1]
      %v328 = vld [vmem:[%s326 + $0x2] sm:$0x1]
      %v329 = vunpack.c.l.bf16 %v327
      %v330 = vunpack.c.l.bf16 %v328
      %s331 = scalar_lea.vmem %s1, 6
      %v332 = vld [vmem:[%s331] sm:$0x1]
      %v334 = vlaneseq
      %v335 = vshrl.u32 %v334, 7
      %v336 = vsub.s32 0, %v335
      %v337 = vrot.slane %v332, %v336
      %v339 = vmul.f32 %v329, %v337
      %v340 = vmul.f32 %v330, %v337
      %v341 = vadd.f32 %v324, %v339
      %v342 = vadd.f32 %v325, %v340
      %v343 = vld [vmem:[%s309] sm:$0x3]
      %v344 = vld [vmem:[%s309 + $0x2] sm:$0x3]
      %v345 = vunpack.c.l.bf16 %v343
      %v346 = vunpack.c.l.bf16 %v344
      %s347 = scalar_lea.vmem %s1, 7
      %v348 = vld [vmem:[%s347] sm:$0x1]
      %v350 = vlaneseq
      %v351 = vshrl.u32 %v350, 7
      %v352 = vsub.s32 0, %v351
      %v353 = vrot.slane %v348, %v352
      %v355 = vmul.f32 %v345, %v353
      %v356 = vmul.f32 %v346, %v353
      %v359 = vrot.slane %v355, 5
      %v360 = vrot.slane %v359, 4
      %v361 = vrot.slane %v356, 5
      %v362 = vrot.slane %v361, 4
      %v365 = vadd.f32 %v341, %v360
      %v366 = vadd.f32 %v342, %v362
      %v367 = vld [vmem:[%s326] sm:$0x3]
      %v368 = vld [vmem:[%s326 + $0x2] sm:$0x3]
      %v369 = vunpack.c.l.bf16 %v367
      %v370 = vunpack.c.l.bf16 %v368
      %s371 = scalar_lea.vmem %s1, 8
      %v372 = vld [vmem:[%s371] sm:$0x1]
      %v374 = vlaneseq
      %v375 = vshrl.u32 %v374, 7
      %v376 = vsub.s32 0, %v375
      %v377 = vrot.slane %v372, %v376
      %v379 = vmul.f32 %v369, %v377
      %v380 = vmul.f32 %v370, %v377
      %v383 = vrot.slane %v379, 5
      %v384 = vrot.slane %v383, 4
      %v385 = vrot.slane %v380, 5
      %v386 = vrot.slane %v385, 4
      %v389 = vadd.f32 %v365, %v384
      %v390 = vadd.f32 %v366, %v386
      %v391 = vld [vmem:[%s309] sm:$0x2]
      %v392 = vld [vmem:[%s309 + $0x2] sm:$0x2]
      %v393 = vunpack.c.l.bf16 %v391
      %v394 = vunpack.c.l.bf16 %v392
      %s395 = scalar_lea.vmem %s1, 9
      %v396 = vld [vmem:[%s395] sm:$0x1]
      %v398 = vlaneseq
      %v399 = vshrl.u32 %v398, 7
      %v400 = vsub.s32 0, %v399
      %v401 = vrot.slane %v396, %v400
      %v403 = vmul.f32 %v393, %v401
      %v404 = vmul.f32 %v394, %v401
      %v407 = vrot.slane %v403, 6
      %v408 = vrot.slane %v407, 4
      %v409 = vrot.slane %v404, 6
      %v410 = vrot.slane %v409, 4
      %v413 = vadd.f32 %v389, %v408
      %v414 = vadd.f32 %v390, %v410
      %s415 = scalar_lea.vmem %s197, 2
      %v416 = vld [vmem:[%s415] sm:$0x1]
      %v417 = vld [vmem:[%s415 + $0x2] sm:$0x1]
      %v418 = vunpack.c.l.bf16 %v416
      %v419 = vunpack.c.l.bf16 %v417
      %s420 = scalar_lea.vmem %s1, 10
      %v421 = vld [vmem:[%s420] sm:$0x1]
      %v423 = vlaneseq
      %v424 = vshrl.u32 %v423, 7
      %v425 = vsub.s32 0, %v424
      %v426 = vrot.slane %v421, %v425
      %v428 = vmul.f32 %v418, %v426
      %v429 = vmul.f32 %v419, %v426
      %v430 = vadd.f32 %v413, %v428
      %v431 = vadd.f32 %v414, %v429
      %s432 = scalar_lea.vmem %s197, 10
      %v433 = vld [vmem:[%s432] sm:$0x1]
      %v434 = vld [vmem:[%s432 + $0x2] sm:$0x1]
      %v435 = vunpack.c.l.bf16 %v433
      %v436 = vunpack.c.l.bf16 %v434
      %s437 = scalar_lea.vmem %s1, 11
      %v438 = vld [vmem:[%s437] sm:$0x1]
      %v440 = vlaneseq
      %v441 = vshrl.u32 %v440, 7
      %v442 = vsub.s32 0, %v441
      %v443 = vrot.slane %v438, %v442
      %v445 = vmul.f32 %v435, %v443
      %v446 = vmul.f32 %v436, %v443
      %v447 = vadd.f32 %v430, %v445
      %v448 = vadd.f32 %v431, %v446
      %v449 = vld [vmem:[%s415] sm:$0x3]
      %v450 = vld [vmem:[%s415 + $0x2] sm:$0x3]
      %v451 = vunpack.c.l.bf16 %v449
      %v452 = vunpack.c.l.bf16 %v450
      %s453 = scalar_lea.vmem %s1, 12
      %v454 = vld [vmem:[%s453] sm:$0x1]
      %v456 = vlaneseq
      %v457 = vshrl.u32 %v456, 7
      %v458 = vsub.s32 0, %v457
      %v459 = vrot.slane %v454, %v458
      %v461 = vmul.f32 %v451, %v459
      %v462 = vmul.f32 %v452, %v459
      %v465 = vrot.slane %v461, 5
      %v466 = vrot.slane %v465, 4
      %v467 = vrot.slane %v462, 5
      %v468 = vrot.slane %v467, 4
      %v471 = vadd.f32 %v447, %v466
      %v472 = vadd.f32 %v448, %v468
      %v473 = vld [vmem:[%s432] sm:$0x3]
      %v474 = vld [vmem:[%s432 + $0x2] sm:$0x3]
      %v475 = vunpack.c.l.bf16 %v473
      %v476 = vunpack.c.l.bf16 %v474
      %s477 = scalar_lea.vmem %s1, 13
      %v478 = vld [vmem:[%s477] sm:$0x1]
      %v480 = vlaneseq
      %v481 = vshrl.u32 %v480, 7
      %v482 = vsub.s32 0, %v481
      %v483 = vrot.slane %v478, %v482
      %v485 = vmul.f32 %v475, %v483
      %v486 = vmul.f32 %v476, %v483
      %v489 = vrot.slane %v485, 5
      %v490 = vrot.slane %v489, 4
      %v491 = vrot.slane %v486, 5
      %v492 = vrot.slane %v491, 4
      %v495 = vadd.f32 %v471, %v490
      %v496 = vadd.f32 %v472, %v492
      %v497 = vld [vmem:[%s415] sm:$0x2]
      %v498 = vld [vmem:[%s415 + $0x2] sm:$0x2]
      %v499 = vunpack.c.l.bf16 %v497
      %v500 = vunpack.c.l.bf16 %v498
      %s501 = scalar_lea.vmem %s1, 14
      %v502 = vld [vmem:[%s501] sm:$0x1]
      %v504 = vlaneseq
      %v505 = vshrl.u32 %v504, 7
      %v506 = vsub.s32 0, %v505
      %v507 = vrot.slane %v502, %v506
      %v509 = vmul.f32 %v499, %v507
      %v510 = vmul.f32 %v500, %v507
      %v513 = vrot.slane %v509, 6
      %v514 = vrot.slane %v513, 4
      %v515 = vrot.slane %v510, 6
      %v516 = vrot.slane %v515, 4
      %v519 = vadd.f32 %v495, %v514
      %v520 = vadd.f32 %v496, %v516
      %s521 = scalar_lea.vmem %s197, 18
      %v522 = vld [vmem:[%s521] sm:$0x1]
      %v523 = vld [vmem:[%s521 + $0x2] sm:$0x1]
      %v524 = vunpack.c.l.bf16 %v522
      %v525 = vunpack.c.l.bf16 %v523
      %s526 = scalar_lea.vmem %s1, 15
      %v527 = vld [vmem:[%s526] sm:$0x1]
      %v529 = vlaneseq
      %v530 = vshrl.u32 %v529, 7
      %v531 = vsub.s32 0, %v530
      %v532 = vrot.slane %v527, %v531
      %v534 = vmul.f32 %v524, %v532
      %v535 = vmul.f32 %v525, %v532
      %v536 = vadd.f32 %v519, %v534
      %v537 = vadd.f32 %v520, %v535
      %s538 = scalar_lea.vmem %s197, 26
      %v539 = vld [vmem:[%s538] sm:$0x1]
      %v540 = vld [vmem:[%s538 + $0x2] sm:$0x1]
      %v541 = vunpack.c.l.bf16 %v539
      %v542 = vunpack.c.l.bf16 %v540
      %s543 = scalar_lea.vmem %s1, 16
      %v544 = vld [vmem:[%s543] sm:$0x1]
      %v546 = vlaneseq
      %v547 = vshrl.u32 %v546, 7
      %v548 = vsub.s32 0, %v547
      %v549 = vrot.slane %v544, %v548
      %v551 = vmul.f32 %v541, %v549
      %v552 = vmul.f32 %v542, %v549
      %v553 = vadd.f32 %v536, %v551
      %v554 = vadd.f32 %v537, %v552
      %v555 = vld [vmem:[%s521] sm:$0x3]
      %v556 = vld [vmem:[%s521 + $0x2] sm:$0x3]
      %v557 = vunpack.c.l.bf16 %v555
      %v558 = vunpack.c.l.bf16 %v556
      %s559 = scalar_lea.vmem %s1, 17
      %v560 = vld [vmem:[%s559] sm:$0x1]
      %v562 = vlaneseq
      %v563 = vshrl.u32 %v562, 7
      %v564 = vsub.s32 0, %v563
      %v565 = vrot.slane %v560, %v564
      %v567 = vmul.f32 %v557, %v565
      %v568 = vmul.f32 %v558, %v565
      %v571 = vrot.slane %v567, 5
      %v572 = vrot.slane %v571, 4
      %v573 = vrot.slane %v568, 5
      %v574 = vrot.slane %v573, 4
      %v577 = vadd.f32 %v553, %v572
      %v578 = vadd.f32 %v554, %v574
      %v579 = vld [vmem:[%s538] sm:$0x3]
      %v580 = vld [vmem:[%s538 + $0x2] sm:$0x3]
      %v581 = vunpack.c.l.bf16 %v579
      %v582 = vunpack.c.l.bf16 %v580
      %s583 = scalar_lea.vmem %s1, 18
      %v584 = vld [vmem:[%s583] sm:$0x1]
      %v586 = vlaneseq
      %v587 = vshrl.u32 %v586, 7
      %v588 = vsub.s32 0, %v587
      %v589 = vrot.slane %v584, %v588
      %v591 = vmul.f32 %v581, %v589
      %v592 = vmul.f32 %v582, %v589
      %v595 = vrot.slane %v591, 5
      %v596 = vrot.slane %v595, 4
      %v597 = vrot.slane %v592, 5
      %v598 = vrot.slane %v597, 4
      %v601 = vadd.f32 %v577, %v596
      %v602 = vadd.f32 %v578, %v598
      %v603 = vld [vmem:[%s521] sm:$0x2]
      %v604 = vld [vmem:[%s521 + $0x2] sm:$0x2]
      %v605 = vunpack.c.l.bf16 %v603
      %v606 = vunpack.c.l.bf16 %v604
      %s607 = scalar_lea.vmem %s1, 19
      %v608 = vld [vmem:[%s607] sm:$0x1]
      %v610 = vlaneseq
      %v611 = vshrl.u32 %v610, 7
      %v612 = vsub.s32 0, %v611
      %v613 = vrot.slane %v608, %v612
      %v615 = vmul.f32 %v605, %v613
      %v616 = vmul.f32 %v606, %v613
      %v619 = vrot.slane %v615, 6
      %v620 = vrot.slane %v619, 4
      %v621 = vrot.slane %v616, 6
      %v622 = vrot.slane %v621, 4
      %v625 = vadd.f32 %v601, %v620
      %v626 = vadd.f32 %v602, %v622
      %s627 = scalar_lea.vmem %s197, 4
      %v628 = vld [vmem:[%s627] sm:$0x1]
      %v629 = vld [vmem:[%s627 + $0x2] sm:$0x1]
      %v630 = vunpack.c.l.bf16 %v628
      %v631 = vunpack.c.l.bf16 %v629
      %s632 = scalar_lea.vmem %s1, 20
      %v633 = vld [vmem:[%s632] sm:$0x1]
      %v635 = vlaneseq
      %v636 = vshrl.u32 %v635, 7
      %v637 = vsub.s32 0, %v636
      %v638 = vrot.slane %v633, %v637
      %v640 = vmul.f32 %v630, %v638
      %v641 = vmul.f32 %v631, %v638
      %v642 = vadd.f32 %v625, %v640
      %v643 = vadd.f32 %v626, %v641
      %s644 = scalar_lea.vmem %s197, 12
      %v645 = vld [vmem:[%s644] sm:$0x1]
      %v646 = vld [vmem:[%s644 + $0x2] sm:$0x1]
      %v647 = vunpack.c.l.bf16 %v645
      %v648 = vunpack.c.l.bf16 %v646
      %s649 = scalar_lea.vmem %s1, 21
      %v650 = vld [vmem:[%s649] sm:$0x1]
      %v652 = vlaneseq
      %v653 = vshrl.u32 %v652, 7
      %v654 = vsub.s32 0, %v653
      %v655 = vrot.slane %v650, %v654
      %v657 = vmul.f32 %v647, %v655
      %v658 = vmul.f32 %v648, %v655
      %v659 = vadd.f32 %v642, %v657
      %v660 = vadd.f32 %v643, %v658
      %v661 = vld [vmem:[%s627] sm:$0x3]
      %v662 = vld [vmem:[%s627 + $0x2] sm:$0x3]
      %v663 = vunpack.c.l.bf16 %v661
      %v664 = vunpack.c.l.bf16 %v662
      %s665 = scalar_lea.vmem %s1, 22
      %v666 = vld [vmem:[%s665] sm:$0x1]
      %v668 = vlaneseq
      %v669 = vshrl.u32 %v668, 7
      %v670 = vsub.s32 0, %v669
      %v671 = vrot.slane %v666, %v670
      %v673 = vmul.f32 %v663, %v671
      %v674 = vmul.f32 %v664, %v671
      %v677 = vrot.slane %v673, 5
      %v678 = vrot.slane %v677, 4
      %v679 = vrot.slane %v674, 5
      %v680 = vrot.slane %v679, 4
      %v683 = vadd.f32 %v659, %v678
      %v684 = vadd.f32 %v660, %v680
      %v685 = vld [vmem:[%s644] sm:$0x3]
      %v686 = vld [vmem:[%s644 + $0x2] sm:$0x3]
      %v687 = vunpack.c.l.bf16 %v685
      %v688 = vunpack.c.l.bf16 %v686
      %s689 = scalar_lea.vmem %s1, 23
      %v690 = vld [vmem:[%s689] sm:$0x1]
      %v692 = vlaneseq
      %v693 = vshrl.u32 %v692, 7
      %v694 = vsub.s32 0, %v693
      %v695 = vrot.slane %v690, %v694
      %v697 = vmul.f32 %v687, %v695
      %v698 = vmul.f32 %v688, %v695
      %v701 = vrot.slane %v697, 5
      %v702 = vrot.slane %v701, 4
      %v703 = vrot.slane %v698, 5
      %v704 = vrot.slane %v703, 4
      %v707 = vadd.f32 %v683, %v702
      %v708 = vadd.f32 %v684, %v704
      %v709 = vld [vmem:[%s627] sm:$0x2]
      %v710 = vld [vmem:[%s627 + $0x2] sm:$0x2]
      %v711 = vunpack.c.l.bf16 %v709
      %v712 = vunpack.c.l.bf16 %v710
      %s713 = scalar_lea.vmem %s1, 24
      %v714 = vld [vmem:[%s713] sm:$0x1]
      %v716 = vlaneseq
      %v717 = vshrl.u32 %v716, 7
      %v718 = vsub.s32 0, %v717
      %v719 = vrot.slane %v714, %v718
      %v721 = vmul.f32 %v711, %v719
      %v722 = vmul.f32 %v712, %v719
      %v725 = vrot.slane %v721, 6
      %v726 = vrot.slane %v725, 4
      %v727 = vrot.slane %v722, 6
      %v728 = vrot.slane %v727, 4
      %v731 = vadd.f32 %v707, %v726
      %v732 = vadd.f32 %v708, %v728
      %v733 = vld [vmem:[%s2] sm:$0x1]
      %v735 = vlaneseq
      %v736 = vshrl.u32 %v735, 7
      %v737 = vsub.s32 0, %v736
      %v738 = vrot.slane %v733, %v737
      %v740 = vadd.f32 %v731, %v738
      %v741 = vadd.f32 %v732, %v738
      %v742 = vpack.c.bf16 %v740, %v740
      %v743 = vpack.c.bf16 %v741, %v741
      %vm744 = vcmask 778240
      %745 = vst.msk [vmem:[%s201] sm:$0x1] %vm744, %v742
      %746 = vst.msk [vmem:[%s201 + $0x1] sm:$0x1] %vm744, %v743
      %vm747 = vcmask 779264
      %v748 = vsel %vm747, %v740, 0.0
      %v749 = vsel %vm747, %v741, 0.0
      %v750 = vadd.f32 %v748, %v749
      %v751 = vrot.slane %v750, 4
      %v752 = vadd.f32 %v750, %v751
      %v753 = vrot.slane %v752, 2
      %v754 = vadd.f32 %v752, %v753
      %v755 = vrot.slane %v754, 1
      %v756 = vadd.f32 %v754, %v755
      %v757 = vrcp.pop 4.0
      %v758 = vmul.f32 %v756, %v757
      %759 = vst.msk [vmem:[%s204] sm:$0x1] %vm744, %v758
      %p760 = scmp.lt.s32.totalorder %s16, 1
      %s761 = scalar_select %p760, %s16, 1
      %s762 = smul.addr %s761, 2
      %s763 = scalar_lea.vmem %s3, %s762
      %p764 = scmp.lt.s32.totalorder %s16, 1
      %s765 = scalar_select %p764, %s16, 1
      %s766 = scalar_lea.vmem %s4, %s765
      // Predicated region
      $region33: #{a_call__.29} parent=31 // pred_check
        %p767 = pneg %p102
      $region34: #{a_call__.29} parent=31 // pred_check_branch
        %769 = sbr.rel (%p767) target = $region36
      $region35: #{a_call__.29} parent=31 // pred_region
        _
      $region36: #{a_call__.29} parent=31 // pred_fallthru
        _
      // Predicated region
      $region37: #{a_call__.29} parent=31 // pred_check
        %p770 = pneg %p128
      $region38: #{a_call__.29} parent=31 // pred_check_branch
        %772 = sbr.rel (%p770) target = $region40
      $region39: #{a_call__.29} parent=31 // pred_region
        _
      $region40: #{a_call__.29} parent=31 // pred_fallthru
        _
    $region32: #{a_call__.29} parent=5 // pred_fallthru
      _
    %p773 = scmp.le.s32.totalorder 2, %s11
    // Predicated region
    $region41: #{a_call__.29} parent=5 // pred_check
      %p774 = pneg %p773
    $region42: #{a_call__.29} parent=5 // pred_check_branch
      %776 = sbr.rel (%p774) target = $region44
    $region43: #{a_call__.29} parent=5 // pred_region
      %s777 = ssub.s32 %s11, 2
      // Predicated region
      $region45: #{a_call__.29} parent=43 // pred_check
        %p778 = pneg %p108
      $region46: #{a_call__.29} parent=43 // pred_check_branch
        %780 = sbr.rel (%p778) target = $region48
      $region47: #{a_call__.29} parent=43 // pred_region
        %p781 = scmp.lt.s32.totalorder %s17, 1
        %s782 = scalar_select %p781, %s17, 1
        %s783 = smul.addr %s782, 2
        %s784 = scalar_lea.vmem %s3, %s783
      $region48: #{a_call__.29} parent=43 // pred_fallthru
        _
      // Predicated region
      $region49: #{a_call__.29} parent=43 // pred_check
        %p785 = pneg %p134
      $region50: #{a_call__.29} parent=43 // pred_check_branch
        %787 = sbr.rel (%p785) target = $region52
      $region51: #{a_call__.29} parent=43 // pred_region
        %p788 = scmp.lt.s32.totalorder %s17, 1
        %s789 = scalar_select %p788, %s17, 1
        %s790 = scalar_lea.vmem %s4, %s789
      $region52: #{a_call__.29} parent=43 // pred_fallthru
        _
    $region44: #{a_call__.29} parent=5 // pred_fallthru
      _
  $region6: #{a_call__.29} parent=0 // loop_footer
    %s15 = sadd.s32 1, %s11
  $region7: #{a_call__.29} parent=0 // loop_footer_branch
    %10 = sbr.rel target = $region3
  $region8: #{a_call__.29} parent=0 // loop_exit
    _

// kernel: a_call__.34
$region0: #{a_call__.34}
  #allocation0 [shape = 'u32[]', space=smem, size = 0x4, offset = 0x4, fixed_abs, tag = 'smem constant byte address 0x4 - core index']
  #allocation1 [shape = 'u32[144,128]{1,0:T(1,128)}', space=vmem, size = 0x12000, scoped, tag = 'internal scratch']
  %s0 = inlined_call_operand.vmem [shape: bf16[1,2,96], index: 0, kind: input, shape index: {}]
  %s1 = inlined_call_operand.vmem [shape: bf16[96,1024], index: 1, kind: input, shape index: {}]
  %s2 = inlined_call_operand.vmem [shape: f32[1,1024], index: 2, kind: input, shape index: {}]
  %s3 = inlined_call_operand.vmem [shape: bf16[1,2,1024], index: 3, kind: output, shape index: {}]
  %s4 = sld [smem:[#allocation0]]
  $region22: #{a_call__.34} parent=0
    _
  %s6 = ssub.s32 1, %s4
  %s7 = scalar_select 0, %s6, %s4
  // Predicated region
  $region2: #{a_call__.34} parent=0 // pred_check
    _
  $region3: #{a_call__.34} parent=0 // pred_check_branch
    %9 = sbr.rel (0) target = $region5
  $region4: #{a_call__.34} parent=0 // pred_region
    _
  $region5: #{a_call__.34} parent=0 // pred_fallthru
    _
  // Predicated region
  $region6: #{a_call__.34} parent=0 // pred_check
    _
  $region7: #{a_call__.34} parent=0 // pred_check_branch
    %11 = sbr.rel (0) target = $region9
  $region8: #{a_call__.34} parent=0 // pred_region
    _
  $region9: #{a_call__.34} parent=0 // pred_fallthru
    _
  // Predicated region
  $region10: #{a_call__.34} parent=0 // pred_check
    _
  $region11: #{a_call__.34} parent=0 // pred_check_branch
    %13 = sbr.rel (0) target = $region13
  $region12: #{a_call__.34} parent=0 // pred_region
    _
  $region13: #{a_call__.34} parent=0 // pred_fallthru
    _
  %v15 = vld [vmem:[%s0] sm:$0x1]
  %v16 = vld [vmem:[%s1] sm:$0xff]
  %v17 = vld [vmem:[%s1 + $0x8] sm:$0xff]
  %v18 = vld [vmem:[%s1 + $0x10] sm:$0xff]
  %v19 = vld [vmem:[%s1 + $0x18] sm:$0xff]
  %v20 = vld [vmem:[%s1 + $0x20] sm:$0xff]
  %v21 = vld [vmem:[%s1 + $0x28] sm:$0xff]
  %v22 = vld [vmem:[%s1 + $0x30] sm:$0xff]
  %v23 = vld [vmem:[%s1 + $0x38] sm:$0xff]
  %v24 = vld [vmem:[%s1 + $0x40] sm:$0xff]
  %v25 = vld [vmem:[%s1 + $0x48] sm:$0xff]
  %v26 = vld [vmem:[%s1 + $0x50] sm:$0xff]
  %v27 = vld [vmem:[%s1 + $0x58] sm:$0xff]
  %v28 = vld [vmem:[%s1 + $0x60] sm:$0xff]
  %v29 = vld [vmem:[%s1 + $0x68] sm:$0xff]
  %v30 = vld [vmem:[%s1 + $0x70] sm:$0xff]
  %v31 = vld [vmem:[%s1 + $0x78] sm:$0xff]
  %v32 = vld [vmem:[%s1 + $0x80] sm:$0xff]
  %v33 = vld [vmem:[%s1 + $0x88] sm:$0xff]
  %v34 = vld [vmem:[%s1 + $0x90] sm:$0xff]
  %v35 = vld [vmem:[%s1 + $0x98] sm:$0xff]
  %v36 = vld [vmem:[%s1 + $0xa0] sm:$0xff]
  %v37 = vld [vmem:[%s1 + $0xa8] sm:$0xff]
  %v38 = vld [vmem:[%s1 + $0xb0] sm:$0xff]
  %v39 = vld [vmem:[%s1 + $0xb8] sm:$0xff]
  %v40 = vld [vmem:[%s1 + $0xc0] sm:$0xff]
  %v41 = vld [vmem:[%s1 + $0xc8] sm:$0xff]
  %v42 = vld [vmem:[%s1 + $0xd0] sm:$0xff]
  %v43 = vld [vmem:[%s1 + $0xd8] sm:$0xff]
  %v44 = vld [vmem:[%s1 + $0xe0] sm:$0xff]
  %v45 = vld [vmem:[%s1 + $0xe8] sm:$0xff]
  %v46 = vld [vmem:[%s1 + $0xf0] sm:$0xff]
  %v47 = vld [vmem:[%s1 + $0xf8] sm:$0xff]
  %v48 = vld [vmem:[%s1 + $0x100] sm:$0xff]
  %v49 = vld [vmem:[%s1 + $0x108] sm:$0xff]
  %v50 = vld [vmem:[%s1 + $0x110] sm:$0xff]
  %v51 = vld [vmem:[%s1 + $0x118] sm:$0xff]
  %v52 = vld [vmem:[%s1 + $0x120] sm:$0xff]
  %v53 = vld [vmem:[%s1 + $0x128] sm:$0xff]
  %v54 = vld [vmem:[%s1 + $0x130] sm:$0xff]
  %v55 = vld [vmem:[%s1 + $0x138] sm:$0xff]
  %v56 = vld [vmem:[%s1 + $0x140] sm:$0xff]
  %v57 = vld [vmem:[%s1 + $0x148] sm:$0xff]
  %v58 = vld [vmem:[%s1 + $0x150] sm:$0xff]
  %v59 = vld [vmem:[%s1 + $0x158] sm:$0xff]
  %v60 = vld [vmem:[%s1 + $0x160] sm:$0xff]
  %v61 = vld [vmem:[%s1 + $0x168] sm:$0xff]
  %v62 = vld [vmem:[%s1 + $0x170] sm:$0xff]
  %v63 = vld [vmem:[%s1 + $0x178] sm:$0xff]
  %v64 = vld [vmem:[%s2] sm:$0xff]
  %v66 = vlaneseq
  %v67 = vshrl.u32 %v66, 7
  %v68 = vsub.s32 0, %v67
  %v69 = vrot.slane %v64, %v68
  %v70 = vlaneseq
  %v71 = vshrl.u32 %v70, 7
  %v72 = vsub.s32 1, %v71
  %v73 = vrot.slane %v64, %v72
  %v74 = vlaneseq
  %v75 = vshrl.u32 %v74, 7
  %v76 = vsub.s32 2, %v75
  %v77 = vrot.slane %v64, %v76
  %v78 = vlaneseq
  %v79 = vshrl.u32 %v78, 7
  %v80 = vsub.s32 3, %v79
  %v81 = vrot.slane %v64, %v80
  %v82 = vlaneseq
  %v83 = vshrl.u32 %v82, 7
  %v84 = vsub.s32 4, %v83
  %v85 = vrot.slane %v64, %v84
  %v86 = vlaneseq
  %v87 = vshrl.u32 %v86, 7
  %v88 = vsub.s32 5, %v87
  %v89 = vrot.slane %v64, %v88
  %v90 = vlaneseq
  %v91 = vshrl.u32 %v90, 7
  %v92 = vsub.s32 6, %v91
  %v93 = vrot.slane %v64, %v92
  %v94 = vlaneseq
  %v95 = vshrl.u32 %v94, 7
  %v96 = vsub.s32 7, %v95
  %v97 = vrot.slane %v64, %v96
  %v154 = vunpack.c.l.b16 %v16
  %v155 = vunpack.c.h.b16 %v16
  %v156 = vunpack.c.l.b16 %v17
  %v157 = vunpack.c.h.b16 %v17
  %v158 = vunpack.c.l.b16 %v18
  %v159 = vunpack.c.h.b16 %v18
  %v160 = vunpack.c.l.b16 %v19
  %v161 = vunpack.c.h.b16 %v19
  %v162 = vunpack.c.l.b16 %v20
  %v163 = vunpack.c.h.b16 %v20
  %v164 = vunpack.c.l.b16 %v21
  %v165 = vunpack.c.h.b16 %v21
  %v166 = vunpack.c.l.b16 %v22
  %v167 = vunpack.c.h.b16 %v22
  %v168 = vunpack.c.l.b16 %v23
  %v169 = vunpack.c.h.b16 %v23
  %v170 = vunpack.c.l.b16 %v24
  %v171 = vunpack.c.h.b16 %v24
  %v172 = vunpack.c.l.b16 %v25
  %v173 = vunpack.c.h.b16 %v25
  %v174 = vunpack.c.l.b16 %v26
  %v175 = vunpack.c.h.b16 %v26
  %v176 = vunpack.c.l.b16 %v27
  %v177 = vunpack.c.h.b16 %v27
  %v178 = vunpack.c.l.b16 %v28
  %v179 = vunpack.c.h.b16 %v28
  %v180 = vunpack.c.l.b16 %v29
  %v181 = vunpack.c.h.b16 %v29
  %v182 = vunpack.c.l.b16 %v30
  %v183 = vunpack.c.h.b16 %v30
  %v184 = vunpack.c.l.b16 %v31
  %v185 = vunpack.c.h.b16 %v31
  %v186 = vunpack.c.l.b16 %v32
  %v187 = vunpack.c.h.b16 %v32
  %v188 = vunpack.c.l.b16 %v33
  %v189 = vunpack.c.h.b16 %v33
  %v190 = vunpack.c.l.b16 %v34
  %v191 = vunpack.c.h.b16 %v34
  %v192 = vunpack.c.l.b16 %v35
  %v193 = vunpack.c.h.b16 %v35
  %v194 = vunpack.c.l.b16 %v36
  %v195 = vunpack.c.h.b16 %v36
  %v196 = vunpack.c.l.b16 %v37
  %v197 = vunpack.c.h.b16 %v37
  %v198 = vunpack.c.l.b16 %v38
  %v199 = vunpack.c.h.b16 %v38
  %v200 = vunpack.c.l.b16 %v39
  %v201 = vunpack.c.h.b16 %v39
  %v202 = vunpack.c.l.b16 %v40
  %v203 = vunpack.c.h.b16 %v40
  %v204 = vunpack.c.l.b16 %v41
  %v205 = vunpack.c.h.b16 %v41
  %v206 = vunpack.c.l.b16 %v42
  %v207 = vunpack.c.h.b16 %v42
  %v208 = vunpack.c.l.b16 %v43
  %v209 = vunpack.c.h.b16 %v43
  %v210 = vunpack.c.l.b16 %v44
  %v211 = vunpack.c.h.b16 %v44
  %v212 = vunpack.c.l.b16 %v45
  %v213 = vunpack.c.h.b16 %v45
  %v214 = vunpack.c.l.b16 %v46
  %v215 = vunpack.c.h.b16 %v46
  %v216 = vunpack.c.l.b16 %v47
  %v217 = vunpack.c.h.b16 %v47
  %v218 = vunpack.c.l.b16 %v48
  %v219 = vunpack.c.h.b16 %v48
  %v220 = vunpack.c.l.b16 %v49
  %v221 = vunpack.c.h.b16 %v49
  %v222 = vunpack.c.l.b16 %v50
  %v223 = vunpack.c.h.b16 %v50
  %v224 = vunpack.c.l.b16 %v51
  %v225 = vunpack.c.h.b16 %v51
  %v226 = vunpack.c.l.b16 %v52
  %v227 = vunpack.c.h.b16 %v52
  %v228 = vunpack.c.l.b16 %v53
  %v229 = vunpack.c.h.b16 %v53
  %v230 = vunpack.c.l.b16 %v54
  %v231 = vunpack.c.h.b16 %v54
  %v232 = vunpack.c.l.b16 %v55
  %v233 = vunpack.c.h.b16 %v55
  %v234 = vunpack.c.l.b16 %v56
  %v235 = vunpack.c.h.b16 %v56
  %v236 = vunpack.c.l.b16 %v57
  %v237 = vunpack.c.h.b16 %v57
  %v238 = vunpack.c.l.b16 %v58
  %v239 = vunpack.c.h.b16 %v58
  %v240 = vunpack.c.l.b16 %v59
  %v241 = vunpack.c.h.b16 %v59
  %v242 = vunpack.c.l.b16 %v60
  %v243 = vunpack.c.h.b16 %v60
  %v244 = vunpack.c.l.b16 %v61
  %v245 = vunpack.c.h.b16 %v61
  %v246 = vunpack.c.l.b16 %v62
  %v247 = vunpack.c.h.b16 %v62
  %v248 = vunpack.c.l.b16 %v63
  %v249 = vunpack.c.h.b16 %v63
  %v250 = vpack.c.b16 %v162, %v154
  %v251 = vpack.c.b16 %v163, %v155
  %v252 = vpack.c.b16 %v164, %v156
  %v253 = vpack.c.b16 %v165, %v157
  %v254 = vpack.c.b16 %v166, %v158
  %v255 = vpack.c.b16 %v167, %v159
  %v256 = vpack.c.b16 %v168, %v160
  %v257 = vpack.c.b16 %v169, %v161
  %v258 = vpack.c.b16 %v178, %v170
  %v259 = vpack.c.b16 %v179, %v171
  %v260 = vpack.c.b16 %v180, %v172
  %v261 = vpack.c.b16 %v181, %v173
  %v262 = vpack.c.b16 %v182, %v174
  %v263 = vpack.c.b16 %v183, %v175
  %v264 = vpack.c.b16 %v184, %v176
  %v265 = vpack.c.b16 %v185, %v177
  %v266 = vpack.c.b16 %v194, %v186
  %v267 = vpack.c.b16 %v195, %v187
  %v268 = vpack.c.b16 %v196, %v188
  %v269 = vpack.c.b16 %v197, %v189
  %v270 = vpack.c.b16 %v198, %v190
  %v271 = vpack.c.b16 %v199, %v191
  %v272 = vpack.c.b16 %v200, %v192
  %v273 = vpack.c.b16 %v201, %v193
  %v274 = vpack.c.b16 %v210, %v202
  %v275 = vpack.c.b16 %v211, %v203
  %v276 = vpack.c.b16 %v212, %v204
  %v277 = vpack.c.b16 %v213, %v205
  %v278 = vpack.c.b16 %v214, %v206
  %v279 = vpack.c.b16 %v215, %v207
  %v280 = vpack.c.b16 %v216, %v208
  %v281 = vpack.c.b16 %v217, %v209
  %v282 = vpack.c.b16 %v226, %v218
  %v283 = vpack.c.b16 %v227, %v219
  %v284 = vpack.c.b16 %v228, %v220
  %v285 = vpack.c.b16 %v229, %v221
  %v286 = vpack.c.b16 %v230, %v222
  %v287 = vpack.c.b16 %v231, %v223
  %v288 = vpack.c.b16 %v232, %v224
  %v289 = vpack.c.b16 %v233, %v225
  %v290 = vpack.c.b16 %v242, %v234
  %v291 = vpack.c.b16 %v243, %v235
  %v292 = vpack.c.b16 %v244, %v236
  %v293 = vpack.c.b16 %v245, %v237
  %v294 = vpack.c.b16 %v246, %v238
  %v295 = vpack.c.b16 %v247, %v239
  %v296 = vpack.c.b16 %v248, %v240
  %v297 = vpack.c.b16 %v249, %v241
  %vm346 = vcmask 785408
  %v348 = vsel %vm346, %v15, 0
  %350 = vmatprep.subr.bf16.mxu0 %v251
  %351 = vmatpush1.bf16.msra.mxu0 %v250
  %352 = vmatprep.subr.bf16.mxu0 %v259
  %353 = vmatpush1.bf16.msra.mxu0 %v258
  %354 = vmatprep.subr.bf16.mxu0 %v267
  %355 = vmatpush1.bf16.msra.mxu0 %v266
  %356 = vmatprep.subr.bf16.mxu0 %v275
  %357 = vmatpush1.bf16.msra.mxu0 %v274
  %358 = vmatprep.subr.bf16.mxu0 %v283
  %359 = vmatpush1.bf16.msra.mxu0 %v282
  %360 = vmatprep.subr.bf16.mxu0 %v291
  %361 = vmatpush1.bf16.msra.mxu0 %v290
  %362 = vmatprep.subr.bf16.mxu0 0
  %363 = vmatpush1.bf16.msra.mxu0 0
  %364 = vmatprep.subr.bf16.mxu0 0
  %365 = vmatpush1.bf16.msra.mxu0 0
  %366 = vmatprep.subr.bf16.mxu0 0
  %367 = vmatpush1.bf16.msra.mxu0 0
  %368 = vmatprep.subr.bf16.mxu0 0
  %369 = vmatpush1.bf16.msra.mxu0 0
  %370 = vmatprep.subr.bf16.mxu0 0
  %371 = vmatpush1.bf16.msra.mxu0 0
  %372 = vmatprep.subr.bf16.mxu0 0
  %373 = vmatpush1.bf16.msra.mxu0 0
  %374 = vmatprep.subr.bf16.mxu0 0
  %375 = vmatpush1.bf16.msra.mxu0 0
  %376 = vmatprep.subr.bf16.mxu0 0
  %377 = vmatpush1.bf16.msra.mxu0 0
  %378 = vmatprep.subr.bf16.mxu0 0
  %379 = vmatpush1.bf16.msra.mxu0 0
  %380 = vmatprep.subr.bf16.mxu0 0
  %381 = vmatpush1.bf16.msra.mxu0 0
  %382 = vmatprep.mubr.bf16.mxu0 0
  %383 = vmatmul.mubr.bf16.gmra.mrb[0].mxu0 %v348
  %v384 = vpop.f32.mrb[0].mxu0
  %v385 = vadd.f32 %v69, %v384
  %v386 = vpop.f32.mrb[0].mxu0
  %v387 = vadd.f32 %v73, %v386
  %v388 = vpop.f32.mrb[0].mxu0
  %v389 = vpop.f32.mrb[0].mxu0
  %390 = vdwg.mxu0
  %391 = vmatprep.subr.bf16.mxu0 %v253
  %392 = vmatpush1.bf16.msra.mxu0 %v252
  %393 = vmatprep.subr.bf16.mxu0 %v261
  %394 = vmatpush1.bf16.msra.mxu0 %v260
  %395 = vmatprep.subr.bf16.mxu0 %v269
  %396 = vmatpush1.bf16.msra.mxu0 %v268
  %397 = vmatprep.subr.bf16.mxu0 %v277
  %398 = vmatpush1.bf16.msra.mxu0 %v276
  %399 = vmatprep.subr.bf16.mxu0 %v285
  %400 = vmatpush1.bf16.msra.mxu0 %v284
  %401 = vmatprep.subr.bf16.mxu0 %v293
  %402 = vmatpush1.bf16.msra.mxu0 %v292
  %403 = vmatprep.subr.bf16.mxu0 0
  %404 = vmatpush1.bf16.msra.mxu0 0
  %405 = vmatprep.subr.bf16.mxu0 0
  %406 = vmatpush1.bf16.msra.mxu0 0
  %407 = vmatprep.subr.bf16.mxu0 0
  %408 = vmatpush1.bf16.msra.mxu0 0
  %409 = vmatprep.subr.bf16.mxu0 0
  %410 = vmatpush1.bf16.msra.mxu0 0
  %411 = vmatprep.subr.bf16.mxu0 0
  %412 = vmatpush1.bf16.msra.mxu0 0
  %413 = vmatprep.subr.bf16.mxu0 0
  %414 = vmatpush1.bf16.msra.mxu0 0
  %415 = vmatprep.subr.bf16.mxu0 0
  %416 = vmatpush1.bf16.msra.mxu0 0
  %417 = vmatprep.subr.bf16.mxu0 0
  %418 = vmatpush1.bf16.msra.mxu0 0
  %419 = vmatprep.subr.bf16.mxu0 0
  %420 = vmatpush1.bf16.msra.mxu0 0
  %421 = vmatprep.subr.bf16.mxu0 0
  %422 = vmatpush1.bf16.msra.mxu0 0
  %423 = vmatprep.mubr.bf16.mxu0 0
  %424 = vmatmul.mubr.bf16.gmra.mrb[0].mxu0 %v348
  %v425 = vpop.f32.mrb[0].mxu0
  %v426 = vadd.f32 %v77, %v425
  %v427 = vpop.f32.mrb[0].mxu0
  %v428 = vadd.f32 %v81, %v427
  %v429 = vpop.f32.mrb[0].mxu0
  %v430 = vpop.f32.mrb[0].mxu0
  %431 = vdwg.mxu0
  %432 = vmatprep.subr.bf16.mxu0 %v255
  %433 = vmatpush1.bf16.msra.mxu0 %v254
  %434 = vmatprep.subr.bf16.mxu0 %v263
  %435 = vmatpush1.bf16.msra.mxu0 %v262
  %436 = vmatprep.subr.bf16.mxu0 %v271
  %437 = vmatpush1.bf16.msra.mxu0 %v270
  %438 = vmatprep.subr.bf16.mxu0 %v279
  %439 = vmatpush1.bf16.msra.mxu0 %v278
  %440 = vmatprep.subr.bf16.mxu0 %v287
  %441 = vmatpush1.bf16.msra.mxu0 %v286
  %442 = vmatprep.subr.bf16.mxu0 %v295
  %443 = vmatpush1.bf16.msra.mxu0 %v294
  %444 = vmatprep.subr.bf16.mxu0 0
  %445 = vmatpush1.bf16.msra.mxu0 0
  %446 = vmatprep.subr.bf16.mxu0 0
  %447 = vmatpush1.bf16.msra.mxu0 0
  %448 = vmatprep.subr.bf16.mxu0 0
  %449 = vmatpush1.bf16.msra.mxu0 0
  %450 = vmatprep.subr.bf16.mxu0 0
  %451 = vmatpush1.bf16.msra.mxu0 0
  %452 = vmatprep.subr.bf16.mxu0 0
  %453 = vmatpush1.bf16.msra.mxu0 0
  %454 = vmatprep.subr.bf16.mxu0 0
  %455 = vmatpush1.bf16.msra.mxu0 0
  %456 = vmatprep.subr.bf16.mxu0 0
  %457 = vmatpush1.bf16.msra.mxu0 0
  %458 = vmatprep.subr.bf16.mxu0 0
  %459 = vmatpush1.bf16.msra.mxu0 0
  %460 = vmatprep.subr.bf16.mxu0 0
  %461 = vmatpush1.bf16.msra.mxu0 0
  %462 = vmatprep.subr.bf16.mxu0 0
  %463 = vmatpush1.bf16.msra.mxu0 0
  %464 = vmatprep.mubr.bf16.mxu0 0
  %465 = vmatmul.mubr.bf16.gmra.mrb[0].mxu0 %v348
  %v466 = vpop.f32.mrb[0].mxu0
  %v467 = vadd.f32 %v85, %v466
  %v468 = vpop.f32.mrb[0].mxu0
  %v469 = vadd.f32 %v89, %v468
  %v470 = vpop.f32.mrb[0].mxu0
  %v471 = vpop.f32.mrb[0].mxu0
  %472 = vdwg.mxu0
  %473 = vmatprep.subr.bf16.mxu0 %v257
  %474 = vmatpush1.bf16.msra.mxu0 %v256
  %475 = vmatprep.subr.bf16.mxu0 %v265
  %476 = vmatpush1.bf16.msra.mxu0 %v264
  %477 = vmatprep.subr.bf16.mxu0 %v273
  %478 = vmatpush1.bf16.msra.mxu0 %v272
  %479 = vmatprep.subr.bf16.mxu0 %v281
  %480 = vmatpush1.bf16.msra.mxu0 %v280
  %481 = vmatprep.subr.bf16.mxu0 %v289
  %482 = vmatpush1.bf16.msra.mxu0 %v288
  %483 = vmatprep.subr.bf16.mxu0 %v297
  %484 = vmatpush1.bf16.msra.mxu0 %v296
  %485 = vmatprep.subr.bf16.mxu0 0
  %486 = vmatpush1.bf16.msra.mxu0 0
  %487 = vmatprep.subr.bf16.mxu0 0
  %488 = vmatpush1.bf16.msra.mxu0 0
  %489 = vmatprep.subr.bf16.mxu0 0
  %490 = vmatpush1.bf16.msra.mxu0 0
  %491 = vmatprep.subr.bf16.mxu0 0
  %492 = vmatpush1.bf16.msra.mxu0 0
  %493 = vmatprep.subr.bf16.mxu0 0
  %494 = vmatpush1.bf16.msra.mxu0 0
  %495 = vmatprep.subr.bf16.mxu0 0
  %496 = vmatpush1.bf16.msra.mxu0 0
  %497 = vmatprep.subr.bf16.mxu0 0
  %498 = vmatpush1.bf16.msra.mxu0 0
  %499 = vmatprep.subr.bf16.mxu0 0
  %500 = vmatpush1.bf16.msra.mxu0 0
  %501 = vmatprep.subr.bf16.mxu0 0
  %502 = vmatpush1.bf16.msra.mxu0 0
  %503 = vmatprep.subr.bf16.mxu0 0
  %504 = vmatpush1.bf16.msra.mxu0 0
  %505 = vmatprep.mubr.bf16.mxu0 0
  %506 = vmatmul.mubr.bf16.gmra.mrb[0].mxu0 %v348
  %v507 = vpop.f32.mrb[0].mxu0
  %v508 = vadd.f32 %v93, %v507
  %v509 = vpop.f32.mrb[0].mxu0
  %v510 = vadd.f32 %v97, %v509
  %v511 = vpop.f32.mrb[0].mxu0
  %v512 = vpop.f32.mrb[0].mxu0
  %513 = vdwg.mxu0
  %v514 = vadd.f32 %v385, 3.0
  %v515 = vadd.f32 %v387, 3.0
  %v516 = vadd.f32 %v426, 3.0
  %v517 = vadd.f32 %v428, 3.0
  %v518 = vadd.f32 %v467, 3.0
  %v519 = vadd.f32 %v469, 3.0
  %v520 = vadd.f32 %v508, 3.0
  %v521 = vadd.f32 %v510, 3.0
  %v522 = vmax.f32 %v514, 0.0
  %v523 = vmax.f32 %v515, 0.0
  %v524 = vmax.f32 %v516, 0.0
  %v525 = vmax.f32 %v517, 0.0
  %v526 = vmax.f32 %v518, 0.0
  %v527 = vmax.f32 %v519, 0.0
  %v528 = vmax.f32 %v520, 0.0
  %v529 = vmax.f32 %v521, 0.0
  %v530 = vmin.f32 %v522, 6.0
  %v531 = vmin.f32 %v523, 6.0
  %v532 = vmin.f32 %v524, 6.0
  %v533 = vmin.f32 %v525, 6.0
  %v534 = vmin.f32 %v526, 6.0
  %v535 = vmin.f32 %v527, 6.0
  %v536 = vmin.f32 %v528, 6.0
  %v537 = vmin.f32 %v529, 6.0
  %v538 = vrcp.pop 6.0
  %v539 = vmul.f32 %v530, %v538
  %v540 = vmul.f32 %v531, %v538
  %v541 = vmul.f32 %v532, %v538
  %v542 = vmul.f32 %v533, %v538
  %v543 = vmul.f32 %v534, %v538
  %v544 = vmul.f32 %v535, %v538
  %v545 = vmul.f32 %v536, %v538
  %v546 = vmul.f32 %v537, %v538
  %v547 = vmul.f32 %v385, %v539
  %v548 = vmul.f32 %v387, %v540
  %v549 = vmul.f32 %v426, %v541
  %v550 = vmul.f32 %v428, %v542
  %v551 = vmul.f32 %v467, %v543
  %v552 = vmul.f32 %v469, %v544
  %v553 = vmul.f32 %v508, %v545
  %v554 = vmul.f32 %v510, %v546
  %v555 = vpack.c.bf16 %v547, %v547
  %v556 = vpack.c.bf16 %v548, %v548
  %v557 = vpack.c.bf16 %v549, %v549
  %v558 = vpack.c.bf16 %v550, %v550
  %v559 = vpack.c.bf16 %v551, %v551
  %v560 = vpack.c.bf16 %v552, %v552
  %v561 = vpack.c.bf16 %v553, %v553
  %v562 = vpack.c.bf16 %v554, %v554
  %v571 = vcombine.low %v555, %v556
  %v572 = vcombine.low %v557, %v558
  %v573 = vcombine.low %v559, %v560
  %v574 = vcombine.low %v561, %v562
  %v576 = vunpack.c.l.s4 1966171168
  %v577 = vunpack.c.0.s8 %v576
  %v578 = vlaneseq
  %v579 = vshrl.u32 %v578, 7
  %v580 = vsub.s32 %v577, %v579
  %v581 = vrot.slane %v571, %v580
  %v583 = vunpack.c.l.s4 1966171168
  %v584 = vunpack.c.0.s8 %v583
  %v585 = vlaneseq
  %v586 = vshrl.u32 %v585, 7
  %v587 = vsub.s32 %v584, %v586
  %v588 = vrot.slane %v572, %v587
  %v590 = vunpack.c.l.s4 1966171168
  %v591 = vunpack.c.0.s8 %v590
  %v592 = vlaneseq
  %v593 = vshrl.u32 %v592, 7
  %v594 = vsub.s32 %v591, %v593
  %v595 = vrot.slane %v573, %v594
  %v597 = vunpack.c.l.s4 1966171168
  %v598 = vunpack.c.0.s8 %v597
  %v599 = vlaneseq
  %v600 = vshrl.u32 %v599, 7
  %v601 = vsub.s32 %v598, %v600
  %v602 = vrot.slane %v574, %v601
  %v603 = vcombine.low %v581, %v588
  %v604 = vcombine.low %v595, %v602
  %v606 = vunpack.c.l.s4 1966171168
  %v607 = vunpack.c.0.s8 %v606
  %v608 = vlaneseq
  %v609 = vshrl.u32 %v608, 7
  %v610 = vsub.s32 %v607, %v609
  %v611 = vrot.slane %v603, %v610
  %v613 = vunpack.c.l.s4 1966171168
  %v614 = vunpack.c.0.s8 %v613
  %v615 = vlaneseq
  %v616 = vshrl.u32 %v615, 7
  %v617 = vsub.s32 %v614, %v616
  %v618 = vrot.slane %v604, %v617
  %v619 = vcombine.low %v611, %v618
  %621 = vst [vmem:[%s3] sm:$0xff] %v619
  // Predicated region
  $region14: #{a_call__.34} parent=0 // pred_check
    _
  $region15: #{a_call__.34} parent=0 // pred_check_branch
    %623 = sbr.rel (0) target = $region17
  $region16: #{a_call__.34} parent=0 // pred_region
    _
  $region17: #{a_call__.34} parent=0 // pred_fallthru
    _
  // Predicated region
  $region18: #{a_call__.34} parent=0 // pred_check
    _
  $region19: #{a_call__.34} parent=0 // pred_check_branch
    %625 = sbr.rel (0) target = $region21
  $region20: #{a_call__.34} parent=0 // pred_region
    _
  $region21: #{a_call__.34} parent=0 // pred_fallthru
    _

// kernel: a_call__.35
$region0: #{a_call__.35}
  #allocation0 [shape = 'u32[]', space=smem, size = 0x4, offset = 0x4, fixed_abs, tag = 'smem constant byte address 0x4 - core index']
  #allocation1 [shape = 'u32[144,128]{1,0:T(1,128)}', space=vmem, size = 0x12000, scoped, tag = 'internal scratch']
  %s0 = inlined_call_operand.vmem [shape: bf16[1,2,1024], index: 0, kind: input, shape index: {}]
  %s1 = inlined_call_operand.vmem [shape: bf16[1024,10], index: 1, kind: input, shape index: {}]
  %s2 = inlined_call_operand.vmem [shape: f32[1,10], index: 2, kind: input, shape index: {}]
  %s3 = inlined_call_operand.hbm [shape: f32[1,2,10], index: 3, kind: output, shape index: {}]
  %s4 = sld [smem:[#allocation0]]
  $region22: #{a_call__.35} parent=0
    _
  %s6 = ssub.s32 1, %s4
  %s7 = scalar_select 0, %s6, %s4
  $region1: #{a_call__.35} parent=0
    #allocation2 [shape = 'u8[1024]{0}', space=vmem, size = 0x400, scoped, tag = 'output window, operand 0, single buffered']
    #allocation3 [shape = 's32[1]{0}', space=sflag, size = 0x4, scoped, tag = 'scoped memory for a_call__.35']
    %8 = vsyncpa [#allocation3], 0
    // Predicated region
    $region2: #{a_call__.35} parent=1 // pred_check
      _
    $region3: #{a_call__.35} parent=1 // pred_check_branch
      %10 = sbr.rel (0) target = $region5
    $region4: #{a_call__.35} parent=1 // pred_region
      _
    $region5: #{a_call__.35} parent=1 // pred_fallthru
      _
    // Predicated region
    $region6: #{a_call__.35} parent=1 // pred_check
      _
    $region7: #{a_call__.35} parent=1 // pred_check_branch
      %12 = sbr.rel (0) target = $region9
    $region8: #{a_call__.35} parent=1 // pred_region
      _
    $region9: #{a_call__.35} parent=1 // pred_fallthru
      _
    // Predicated region
    $region10: #{a_call__.35} parent=1 // pred_check
      _
    $region11: #{a_call__.35} parent=1 // pred_check_branch
      %14 = sbr.rel (0) target = $region13
    $region12: #{a_call__.35} parent=1 // pred_region
      _
    $region13: #{a_call__.35} parent=1 // pred_fallthru
      _
    %v16 = vld [vmem:[%s0] sm:$0xff]
    %v17 = vld [vmem:[%s1] sm:$0xf]
    %v18 = vld [vmem:[%s1 + $0x4] sm:$0xf]
    %v19 = vld [vmem:[%s1 + $0x8] sm:$0xf]
    %v20 = vld [vmem:[%s1 + $0xc] sm:$0xf]
    %v21 = vld [vmem:[%s1 + $0x10] sm:$0xf]
    %v22 = vld [vmem:[%s1 + $0x14] sm:$0xf]
    %v23 = vld [vmem:[%s1 + $0x18] sm:$0xf]
    %v24 = vld [vmem:[%s1 + $0x1c] sm:$0xf]
    %v25 = vld [vmem:[%s1 + $0x20] sm:$0xf]
    %v26 = vld [vmem:[%s1 + $0x24] sm:$0xf]
    %v27 = vld [vmem:[%s1 + $0x28] sm:$0xf]
    %v28 = vld [vmem:[%s1 + $0x2c] sm:$0xf]
    %v29 = vld [vmem:[%s1 + $0x30] sm:$0xf]
    %v30 = vld [vmem:[%s1 + $0x34] sm:$0xf]
    %v31 = vld [vmem:[%s1 + $0x38] sm:$0xf]
    %v32 = vld [vmem:[%s1 + $0x3c] sm:$0xf]
    %v33 = vld [vmem:[%s1 + $0x40] sm:$0xf]
    %v34 = vld [vmem:[%s1 + $0x44] sm:$0xf]
    %v35 = vld [vmem:[%s1 + $0x48] sm:$0xf]
    %v36 = vld [vmem:[%s1 + $0x4c] sm:$0xf]
    %v37 = vld [vmem:[%s1 + $0x50] sm:$0xf]
    %v38 = vld [vmem:[%s1 + $0x54] sm:$0xf]
    %v39 = vld [vmem:[%s1 + $0x58] sm:$0xf]
    %v40 = vld [vmem:[%s1 + $0x5c] sm:$0xf]
    %v41 = vld [vmem:[%s1 + $0x60] sm:$0xf]
    %v42 = vld [vmem:[%s1 + $0x64] sm:$0xf]
    %v43 = vld [vmem:[%s1 + $0x68] sm:$0xf]
    %v44 = vld [vmem:[%s1 + $0x6c] sm:$0xf]
    %v45 = vld [vmem:[%s1 + $0x70] sm:$0xf]
    %v46 = vld [vmem:[%s1 + $0x74] sm:$0xf]
    %v47 = vld [vmem:[%s1 + $0x78] sm:$0xf]
    %v48 = vld [vmem:[%s1 + $0x7c] sm:$0xf]
    %v49 = vld [vmem:[%s1 + $0x80] sm:$0xf]
    %v50 = vld [vmem:[%s1 + $0x84] sm:$0xf]
    %v51 = vld [vmem:[%s1 + $0x88] sm:$0xf]
    %v52 = vld [vmem:[%s1 + $0x8c] sm:$0xf]
    %v53 = vld [vmem:[%s1 + $0x90] sm:$0xf]
    %v54 = vld [vmem:[%s1 + $0x94] sm:$0xf]
    %v55 = vld [vmem:[%s1 + $0x98] sm:$0xf]
    %v56 = vld [vmem:[%s1 + $0x9c] sm:$0xf]
    %v57 = vld [vmem:[%s1 + $0xa0] sm:$0xf]
    %v58 = vld [vmem:[%s1 + $0xa4] sm:$0xf]
    %v59 = vld [vmem:[%s1 + $0xa8] sm:$0xf]
    %v60 = vld [vmem:[%s1 + $0xac] sm:$0xf]
    %v61 = vld [vmem:[%s1 + $0xb0] sm:$0xf]
    %v62 = vld [vmem:[%s1 + $0xb4] sm:$0xf]
    %v63 = vld [vmem:[%s1 + $0xb8] sm:$0xf]
    %v64 = vld [vmem:[%s1 + $0xbc] sm:$0xf]
    %v65 = vld [vmem:[%s1 + $0xc0] sm:$0xf]
    %v66 = vld [vmem:[%s1 + $0xc4] sm:$0xf]
    %v67 = vld [vmem:[%s1 + $0xc8] sm:$0xf]
    %v68 = vld [vmem:[%s1 + $0xcc] sm:$0xf]
    %v69 = vld [vmem:[%s1 + $0xd0] sm:$0xf]
    %v70 = vld [vmem:[%s1 + $0xd4] sm:$0xf]
    %v71 = vld [vmem:[%s1 + $0xd8] sm:$0xf]
    %v72 = vld [vmem:[%s1 + $0xdc] sm:$0xf]
    %v73 = vld [vmem:[%s1 + $0xe0] sm:$0xf]
    %v74 = vld [vmem:[%s1 + $0xe4] sm:$0xf]
    %v75 = vld [vmem:[%s1 + $0xe8] sm:$0xf]
    %v76 = vld [vmem:[%s1 + $0xec] sm:$0xf]
    %v77 = vld [vmem:[%s1 + $0xf0] sm:$0xf]
    %v78 = vld [vmem:[%s1 + $0xf4] sm:$0xf]
    %v79 = vld [vmem:[%s1 + $0xf8] sm:$0xf]
    %v80 = vld [vmem:[%s1 + $0xfc] sm:$0xf]
    %v81 = vld [vmem:[%s1 + $0x100] sm:$0xf]
    %v82 = vld [vmem:[%s1 + $0x104] sm:$0xf]
    %v83 = vld [vmem:[%s1 + $0x108] sm:$0xf]
    %v84 = vld [vmem:[%s1 + $0x10c] sm:$0xf]
    %v85 = vld [vmem:[%s1 + $0x110] sm:$0xf]
    %v86 = vld [vmem:[%s1 + $0x114] sm:$0xf]
    %v87 = vld [vmem:[%s1 + $0x118] sm:$0xf]
    %v88 = vld [vmem:[%s1 + $0x11c] sm:$0xf]
    %v89 = vld [vmem:[%s1 + $0x120] sm:$0xf]
    %v90 = vld [vmem:[%s1 + $0x124] sm:$0xf]
    %v91 = vld [vmem:[%s1 + $0x128] sm:$0xf]
    %v92 = vld [vmem:[%s1 + $0x12c] sm:$0xf]
    %v93 = vld [vmem:[%s1 + $0x130] sm:$0xf]
    %v94 = vld [vmem:[%s1 + $0x134] sm:$0xf]
    %v95 = vld [vmem:[%s1 + $0x138] sm:$0xf]
    %v96 = vld [vmem:[%s1 + $0x13c] sm:$0xf]
    %v97 = vld [vmem:[%s1 + $0x140] sm:$0xf]
    %v98 = vld [vmem:[%s1 + $0x144] sm:$0xf]
    %v99 = vld [vmem:[%s1 + $0x148] sm:$0xf]
    %v100 = vld [vmem:[%s1 + $0x14c] sm:$0xf]
    %v101 = vld [vmem:[%s1 + $0x150] sm:$0xf]
    %v102 = vld [vmem:[%s1 + $0x154] sm:$0xf]
    %v103 = vld [vmem:[%s1 + $0x158] sm:$0xf]
    %v104 = vld [vmem:[%s1 + $0x15c] sm:$0xf]
    %v105 = vld [vmem:[%s1 + $0x160] sm:$0xf]
    %v106 = vld [vmem:[%s1 + $0x164] sm:$0xf]
    %v107 = vld [vmem:[%s1 + $0x168] sm:$0xf]
    %v108 = vld [vmem:[%s1 + $0x16c] sm:$0xf]
    %v109 = vld [vmem:[%s1 + $0x170] sm:$0xf]
    %v110 = vld [vmem:[%s1 + $0x174] sm:$0xf]
    %v111 = vld [vmem:[%s1 + $0x178] sm:$0xf]
    %v112 = vld [vmem:[%s1 + $0x17c] sm:$0xf]
    %v113 = vld [vmem:[%s1 + $0x180] sm:$0xf]
    %v114 = vld [vmem:[%s1 + $0x184] sm:$0xf]
    %v115 = vld [vmem:[%s1 + $0x188] sm:$0xf]
    %v116 = vld [vmem:[%s1 + $0x18c] sm:$0xf]
    %v117 = vld [vmem:[%s1 + $0x190] sm:$0xf]
    %v118 = vld [vmem:[%s1 + $0x194] sm:$0xf]
    %v119 = vld [vmem:[%s1 + $0x198] sm:$0xf]
    %v120 = vld [vmem:[%s1 + $0x19c] sm:$0xf]
    %v121 = vld [vmem:[%s1 + $0x1a0] sm:$0xf]
    %v122 = vld [vmem:[%s1 + $0x1a4] sm:$0xf]
    %v123 = vld [vmem:[%s1 + $0x1a8] sm:$0xf]
    %v124 = vld [vmem:[%s1 + $0x1ac] sm:$0xf]
    %v125 = vld [vmem:[%s1 + $0x1b0] sm:$0xf]
    %v126 = vld [vmem:[%s1 + $0x1b4] sm:$0xf]
    %v127 = vld [vmem:[%s1 + $0x1b8] sm:$0xf]
    %v128 = vld [vmem:[%s1 + $0x1bc] sm:$0xf]
    %v129 = vld [vmem:[%s1 + $0x1c0] sm:$0xf]
    %v130 = vld [vmem:[%s1 + $0x1c4] sm:$0xf]
    %v131 = vld [vmem:[%s1 + $0x1c8] sm:$0xf]
    %v132 = vld [vmem:[%s1 + $0x1cc] sm:$0xf]
    %v133 = vld [vmem:[%s1 + $0x1d0] sm:$0xf]
    %v134 = vld [vmem:[%s1 + $0x1d4] sm:$0xf]
    %v135 = vld [vmem:[%s1 + $0x1d8] sm:$0xf]
    %v136 = vld [vmem:[%s1 + $0x1dc] sm:$0xf]
    %v137 = vld [vmem:[%s1 + $0x1e0] sm:$0xf]
    %v138 = vld [vmem:[%s1 + $0x1e4] sm:$0xf]
    %v139 = vld [vmem:[%s1 + $0x1e8] sm:$0xf]
    %v140 = vld [vmem:[%s1 + $0x1ec] sm:$0xf]
    %v141 = vld [vmem:[%s1 + $0x1f0] sm:$0xf]
    %v142 = vld [vmem:[%s1 + $0x1f4] sm:$0xf]
    %v143 = vld [vmem:[%s1 + $0x1f8] sm:$0xf]
    %v144 = vld [vmem:[%s1 + $0x1fc] sm:$0xf]
    %v145 = vld [vmem:[%s2] sm:$0x1]
    %v147 = vlaneseq
    %v148 = vshrl.u32 %v147, 7
    %v149 = vsub.s32 0, %v148
    %v150 = vrot.slane %v145, %v149
    %v153 = vcombine.high %v16, %v16
    %v155 = vunpack.c.l.s4 1966171168
    %v156 = vunpack.c.0.s8 %v155
    %v157 = vlaneseq
    %v158 = vshrl.u32 %v157, 7
    %v159 = vsub.s32 %v156, %v158
    %v160 = vrot.slane %v16, %v159
    %v162 = vunpack.c.l.s4 1966171168
    %v163 = vunpack.c.0.s8 %v162
    %v164 = vlaneseq
    %v165 = vshrl.u32 %v164, 7
    %v166 = vsub.s32 %v163, %v165
    %v167 = vrot.slane %v153, %v166
    %v168 = vcombine.high %v160, %v160
    %v169 = vcombine.high %v167, %v167
    %v171 = vunpack.c.l.s4 1966171168
    %v172 = vunpack.c.0.s8 %v171
    %v173 = vlaneseq
    %v174 = vshrl.u32 %v173, 7
    %v175 = vsub.s32 %v172, %v174
    %v176 = vrot.slane %v160, %v175
    %v178 = vunpack.c.l.s4 1966171168
    %v179 = vunpack.c.0.s8 %v178
    %v180 = vlaneseq
    %v181 = vshrl.u32 %v180, 7
    %v182 = vsub.s32 %v179, %v181
    %v183 = vrot.slane %v167, %v182
    %v185 = vunpack.c.l.s4 1966171168
    %v186 = vunpack.c.0.s8 %v185
    %v187 = vlaneseq
    %v188 = vshrl.u32 %v187, 7
    %v189 = vsub.s32 %v186, %v188
    %v190 = vrot.slane %v168, %v189
    %v192 = vunpack.c.l.s4 1966171168
    %v193 = vunpack.c.0.s8 %v192
    %v194 = vlaneseq
    %v195 = vshrl.u32 %v194, 7
    %v196 = vsub.s32 %v193, %v195
    %v197 = vrot.slane %v169, %v196
    %v198 = vcombine.high %v176, %v176
    %v199 = vcombine.high %v183, %v183
    %v200 = vcombine.high %v190, %v190
    %v201 = vcombine.high %v197, %v197
    %v338 = vunpack.c.l.b16 %v17
    %v339 = vunpack.c.l.b16 %v18
    %v340 = vunpack.c.l.b16 %v19
    %v341 = vunpack.c.l.b16 %v20
    %v342 = vunpack.c.l.b16 %v21
    %v343 = vunpack.c.l.b16 %v22
    %v344 = vunpack.c.l.b16 %v23
    %v345 = vunpack.c.l.b16 %v24
    %v346 = vunpack.c.l.b16 %v25
    %v347 = vunpack.c.l.b16 %v26
    %v348 = vunpack.c.l.b16 %v27
    %v349 = vunpack.c.l.b16 %v28
    %v350 = vunpack.c.l.b16 %v29
    %v351 = vunpack.c.l.b16 %v30
    %v352 = vunpack.c.l.b16 %v31
    %v353 = vunpack.c.l.b16 %v32
    %v354 = vunpack.c.l.b16 %v33
    %v355 = vunpack.c.l.b16 %v34
    %v356 = vunpack.c.l.b16 %v35
    %v357 = vunpack.c.l.b16 %v36
    %v358 = vunpack.c.l.b16 %v37
    %v359 = vunpack.c.l.b16 %v38
    %v360 = vunpack.c.l.b16 %v39
    %v361 = vunpack.c.l.b16 %v40
    %v362 = vunpack.c.l.b16 %v41
    %v363 = vunpack.c.l.b16 %v42
    %v364 = vunpack.c.l.b16 %v43
    %v365 = vunpack.c.l.b16 %v44
    %v366 = vunpack.c.l.b16 %v45
    %v367 = vunpack.c.l.b16 %v46
    %v368 = vunpack.c.l.b16 %v47
    %v369 = vunpack.c.l.b16 %v48
    %v370 = vunpack.c.l.b16 %v49
    %v371 = vunpack.c.l.b16 %v50
    %v372 = vunpack.c.l.b16 %v51
    %v373 = vunpack.c.l.b16 %v52
    %v374 = vunpack.c.l.b16 %v53
    %v375 = vunpack.c.l.b16 %v54
    %v376 = vunpack.c.l.b16 %v55
    %v377 = vunpack.c.l.b16 %v56
    %v378 = vunpack.c.l.b16 %v57
    %v379 = vunpack.c.l.b16 %v58
    %v380 = vunpack.c.l.b16 %v59
    %v381 = vunpack.c.l.b16 %v60
    %v382 = vunpack.c.l.b16 %v61
    %v383 = vunpack.c.l.b16 %v62
    %v384 = vunpack.c.l.b16 %v63
    %v385 = vunpack.c.l.b16 %v64
    %v386 = vunpack.c.l.b16 %v65
    %v387 = vunpack.c.l.b16 %v66
    %v388 = vunpack.c.l.b16 %v67
    %v389 = vunpack.c.l.b16 %v68
    %v390 = vunpack.c.l.b16 %v69
    %v391 = vunpack.c.l.b16 %v70
    %v392 = vunpack.c.l.b16 %v71
    %v393 = vunpack.c.l.b16 %v72
    %v394 = vunpack.c.l.b16 %v73
    %v395 = vunpack.c.l.b16 %v74
    %v396 = vunpack.c.l.b16 %v75
    %v397 = vunpack.c.l.b16 %v76
    %v398 = vunpack.c.l.b16 %v77
    %v399 = vunpack.c.l.b16 %v78
    %v400 = vunpack.c.l.b16 %v79
    %v401 = vunpack.c.l.b16 %v80
    %v402 = vunpack.c.l.b16 %v81
    %v403 = vunpack.c.l.b16 %v82
    %v404 = vunpack.c.l.b16 %v83
    %v405 = vunpack.c.l.b16 %v84
    %v406 = vunpack.c.l.b16 %v85
    %v407 = vunpack.c.l.b16 %v86
    %v408 = vunpack.c.l.b16 %v87
    %v409 = vunpack.c.l.b16 %v88
    %v410 = vunpack.c.l.b16 %v89
    %v411 = vunpack.c.l.b16 %v90
    %v412 = vunpack.c.l.b16 %v91
    %v413 = vunpack.c.l.b16 %v92
    %v414 = vunpack.c.l.b16 %v93
    %v415 = vunpack.c.l.b16 %v94
    %v416 = vunpack.c.l.b16 %v95
    %v417 = vunpack.c.l.b16 %v96
    %v418 = vunpack.c.l.b16 %v97
    %v419 = vunpack.c.l.b16 %v98
    %v420 = vunpack.c.l.b16 %v99
    %v421 = vunpack.c.l.b16 %v100
    %v422 = vunpack.c.l.b16 %v101
    %v423 = vunpack.c.l.b16 %v102
    %v424 = vunpack.c.l.b16 %v103
    %v425 = vunpack.c.l.b16 %v104
    %v426 = vunpack.c.l.b16 %v105
    %v427 = vunpack.c.l.b16 %v106
    %v428 = vunpack.c.l.b16 %v107
    %v429 = vunpack.c.l.b16 %v108
    %v430 = vunpack.c.l.b16 %v109
    %v431 = vunpack.c.l.b16 %v110
    %v432 = vunpack.c.l.b16 %v111
    %v433 = vunpack.c.l.b16 %v112
    %v434 = vunpack.c.l.b16 %v113
    %v435 = vunpack.c.l.b16 %v114
    %v436 = vunpack.c.l.b16 %v115
    %v437 = vunpack.c.l.b16 %v116
    %v438 = vunpack.c.l.b16 %v117
    %v439 = vunpack.c.l.b16 %v118
    %v440 = vunpack.c.l.b16 %v119
    %v441 = vunpack.c.l.b16 %v120
    %v442 = vunpack.c.l.b16 %v121
    %v443 = vunpack.c.l.b16 %v122
    %v444 = vunpack.c.l.b16 %v123
    %v445 = vunpack.c.l.b16 %v124
    %v446 = vunpack.c.l.b16 %v125
    %v447 = vunpack.c.l.b16 %v126
    %v448 = vunpack.c.l.b16 %v127
    %v449 = vunpack.c.l.b16 %v128
    %v450 = vunpack.c.l.b16 %v129
    %v451 = vunpack.c.l.b16 %v130
    %v452 = vunpack.c.l.b16 %v131
    %v453 = vunpack.c.l.b16 %v132
    %v454 = vunpack.c.l.b16 %v133
    %v455 = vunpack.c.l.b16 %v134
    %v456 = vunpack.c.l.b16 %v135
    %v457 = vunpack.c.l.b16 %v136
    %v458 = vunpack.c.l.b16 %v137
    %v459 = vunpack.c.l.b16 %v138
    %v460 = vunpack.c.l.b16 %v139
    %v461 = vunpack.c.l.b16 %v140
    %v462 = vunpack.c.l.b16 %v141
    %v463 = vunpack.c.l.b16 %v142
    %v464 = vunpack.c.l.b16 %v143
    %v465 = vunpack.c.l.b16 %v144
    %v466 = vpack.c.b16 %v339, %v338
    %v467 = vpack.c.b16 %v341, %v340
    %v468 = vpack.c.b16 %v343, %v342
    %v469 = vpack.c.b16 %v345, %v344
    %v470 = vpack.c.b16 %v347, %v346
    %v471 = vpack.c.b16 %v349, %v348
    %v472 = vpack.c.b16 %v351, %v350
    %v473 = vpack.c.b16 %v353, %v352
    %v474 = vpack.c.b16 %v355, %v354
    %v475 = vpack.c.b16 %v357, %v356
    %v476 = vpack.c.b16 %v359, %v358
    %v477 = vpack.c.b16 %v361, %v360
    %v478 = vpack.c.b16 %v363, %v362
    %v479 = vpack.c.b16 %v365, %v364
    %v480 = vpack.c.b16 %v367, %v366
    %v481 = vpack.c.b16 %v369, %v368
    %v482 = vpack.c.b16 %v371, %v370
    %v483 = vpack.c.b16 %v373, %v372
    %v484 = vpack.c.b16 %v375, %v374
    %v485 = vpack.c.b16 %v377, %v376
    %v486 = vpack.c.b16 %v379, %v378
    %v487 = vpack.c.b16 %v381, %v380
    %v488 = vpack.c.b16 %v383, %v382
    %v489 = vpack.c.b16 %v385, %v384
    %v490 = vpack.c.b16 %v387, %v386
    %v491 = vpack.c.b16 %v389, %v388
    %v492 = vpack.c.b16 %v391, %v390
    %v493 = vpack.c.b16 %v393, %v392
    %v494 = vpack.c.b16 %v395, %v394
    %v495 = vpack.c.b16 %v397, %v396
    %v496 = vpack.c.b16 %v399, %v398
    %v497 = vpack.c.b16 %v401, %v400
    %v498 = vpack.c.b16 %v403, %v402
    %v499 = vpack.c.b16 %v405, %v404
    %v500 = vpack.c.b16 %v407, %v406
    %v501 = vpack.c.b16 %v409, %v408
    %v502 = vpack.c.b16 %v411, %v410
    %v503 = vpack.c.b16 %v413, %v412
    %v504 = vpack.c.b16 %v415, %v414
    %v505 = vpack.c.b16 %v417, %v416
    %v506 = vpack.c.b16 %v419, %v418
    %v507 = vpack.c.b16 %v421, %v420
    %v508 = vpack.c.b16 %v423, %v422
    %v509 = vpack.c.b16 %v425, %v424
    %v510 = vpack.c.b16 %v427, %v426
    %v511 = vpack.c.b16 %v429, %v428
    %v512 = vpack.c.b16 %v431, %v430
    %v513 = vpack.c.b16 %v433, %v432
    %v514 = vpack.c.b16 %v435, %v434
    %v515 = vpack.c.b16 %v437, %v436
    %v516 = vpack.c.b16 %v439, %v438
    %v517 = vpack.c.b16 %v441, %v440
    %v518 = vpack.c.b16 %v443, %v442
    %v519 = vpack.c.b16 %v445, %v444
    %v520 = vpack.c.b16 %v447, %v446
    %v521 = vpack.c.b16 %v449, %v448
    %v522 = vpack.c.b16 %v451, %v450
    %v523 = vpack.c.b16 %v453, %v452
    %v524 = vpack.c.b16 %v455, %v454
    %v525 = vpack.c.b16 %v457, %v456
    %v526 = vpack.c.b16 %v459, %v458
    %v527 = vpack.c.b16 %v461, %v460
    %v528 = vpack.c.b16 %v463, %v462
    %v529 = vpack.c.b16 %v465, %v464
    %594 = vmatprep.subr.bf16.mxu0 0
    %595 = vmatpush1.bf16.msra.mxu0 %v466
    %596 = vmatprep.subr.bf16.mxu0 0
    %597 = vmatpush1.bf16.msra.mxu0 %v467
    %598 = vmatprep.subr.bf16.mxu0 0
    %599 = vmatpush1.bf16.msra.mxu0 %v468
    %600 = vmatprep.subr.bf16.mxu0 0
    %601 = vmatpush1.bf16.msra.mxu0 %v469
    %602 = vmatprep.subr.bf16.mxu0 0
    %603 = vmatpush1.bf16.msra.mxu0 %v470
    %604 = vmatprep.subr.bf16.mxu0 0
    %605 = vmatpush1.bf16.msra.mxu0 %v471
    %606 = vmatprep.subr.bf16.mxu0 0
    %607 = vmatpush1.bf16.msra.mxu0 %v472
    %608 = vmatprep.subr.bf16.mxu0 0
    %609 = vmatpush1.bf16.msra.mxu0 %v473
    %610 = vmatprep.subr.bf16.mxu0 0
    %611 = vmatpush1.bf16.msra.mxu0 %v474
    %612 = vmatprep.subr.bf16.mxu0 0
    %613 = vmatpush1.bf16.msra.mxu0 %v475
    %614 = vmatprep.subr.bf16.mxu0 0
    %615 = vmatpush1.bf16.msra.mxu0 %v476
    %616 = vmatprep.subr.bf16.mxu0 0
    %617 = vmatpush1.bf16.msra.mxu0 %v477
    %618 = vmatprep.subr.bf16.mxu0 0
    %619 = vmatpush1.bf16.msra.mxu0 %v478
    %620 = vmatprep.subr.bf16.mxu0 0
    %621 = vmatpush1.bf16.msra.mxu0 %v479
    %622 = vmatprep.subr.bf16.mxu0 0
    %623 = vmatpush1.bf16.msra.mxu0 %v480
    %624 = vmatprep.subr.bf16.mxu0 0
    %625 = vmatpush1.bf16.msra.mxu0 %v481
    %626 = vmatprep.mubr.bf16.mxu0 %v190
    %627 = vmatmul.mubr.bf16.gmra.mrb[0].mxu0 %v176
    %v628 = vpop.f32.mrb[0].mxu0
    %v629 = vadd.f32 %v150, %v628
    %v630 = vpop.f32.mrb[0].mxu0
    %v631 = vpop.f32.mrb[0].mxu0
    %v632 = vpop.f32.mrb[0].mxu0
    %633 = vdwg.mxu0
    %634 = vmatprep.subr.bf16.mxu0 0
    %635 = vmatpush1.bf16.msra.mxu0 %v482
    %636 = vmatprep.subr.bf16.mxu0 0
    %637 = vmatpush1.bf16.msra.mxu0 %v483
    %638 = vmatprep.subr.bf16.mxu0 0
    %639 = vmatpush1.bf16.msra.mxu0 %v484
    %640 = vmatprep.subr.bf16.mxu0 0
    %641 = vmatpush1.bf16.msra.mxu0 %v485
    %642 = vmatprep.subr.bf16.mxu0 0
    %643 = vmatpush1.bf16.msra.mxu0 %v486
    %644 = vmatprep.subr.bf16.mxu0 0
    %645 = vmatpush1.bf16.msra.mxu0 %v487
    %646 = vmatprep.subr.bf16.mxu0 0
    %647 = vmatpush1.bf16.msra.mxu0 %v488
    %648 = vmatprep.subr.bf16.mxu0 0
    %649 = vmatpush1.bf16.msra.mxu0 %v489
    %650 = vmatprep.subr.bf16.mxu0 0
    %651 = vmatpush1.bf16.msra.mxu0 %v490
    %652 = vmatprep.subr.bf16.mxu0 0
    %653 = vmatpush1.bf16.msra.mxu0 %v491
    %654 = vmatprep.subr.bf16.mxu0 0
    %655 = vmatpush1.bf16.msra.mxu0 %v492
    %656 = vmatprep.subr.bf16.mxu0 0
    %657 = vmatpush1.bf16.msra.mxu0 %v493
    %658 = vmatprep.subr.bf16.mxu0 0
    %659 = vmatpush1.bf16.msra.mxu0 %v494
    %660 = vmatprep.subr.bf16.mxu0 0
    %661 = vmatpush1.bf16.msra.mxu0 %v495
    %662 = vmatprep.subr.bf16.mxu0 0
    %663 = vmatpush1.bf16.msra.mxu0 %v496
    %664 = vmatprep.subr.bf16.mxu0 0
    %665 = vmatpush1.bf16.msra.mxu0 %v497
    %666 = vmatprep.mubr.bf16.mxu0 %v200
    %667 = vmatmul.mubr.bf16.gmra.mrb[0].mxu0 %v198
    %v668 = vpop.f32.mrb[0].mxu0
    %v669 = vadd.f32 %v629, %v668
    %v670 = vpop.f32.mrb[0].mxu0
    %v671 = vpop.f32.mrb[0].mxu0
    %v672 = vpop.f32.mrb[0].mxu0
    %673 = vdwg.mxu0
    %674 = vmatprep.subr.bf16.mxu0 0
    %675 = vmatpush1.bf16.msra.mxu0 %v498
    %676 = vmatprep.subr.bf16.mxu0 0
    %677 = vmatpush1.bf16.msra.mxu0 %v499
    %678 = vmatprep.subr.bf16.mxu0 0
    %679 = vmatpush1.bf16.msra.mxu0 %v500
    %680 = vmatprep.subr.bf16.mxu0 0
    %681 = vmatpush1.bf16.msra.mxu0 %v501
    %682 = vmatprep.subr.bf16.mxu0 0
    %683 = vmatpush1.bf16.msra.mxu0 %v502
    %684 = vmatprep.subr.bf16.mxu0 0
    %685 = vmatpush1.bf16.msra.mxu0 %v503
    %686 = vmatprep.subr.bf16.mxu0 0
    %687 = vmatpush1.bf16.msra.mxu0 %v504
    %688 = vmatprep.subr.bf16.mxu0 0
    %689 = vmatpush1.bf16.msra.mxu0 %v505
    %690 = vmatprep.subr.bf16.mxu0 0
    %691 = vmatpush1.bf16.msra.mxu0 %v506
    %692 = vmatprep.subr.bf16.mxu0 0
    %693 = vmatpush1.bf16.msra.mxu0 %v507
    %694 = vmatprep.subr.bf16.mxu0 0
    %695 = vmatpush1.bf16.msra.mxu0 %v508
    %696 = vmatprep.subr.bf16.mxu0 0
    %697 = vmatpush1.bf16.msra.mxu0 %v509
    %698 = vmatprep.subr.bf16.mxu0 0
    %699 = vmatpush1.bf16.msra.mxu0 %v510
    %700 = vmatprep.subr.bf16.mxu0 0
    %701 = vmatpush1.bf16.msra.mxu0 %v511
    %702 = vmatprep.subr.bf16.mxu0 0
    %703 = vmatpush1.bf16.msra.mxu0 %v512
    %704 = vmatprep.subr.bf16.mxu0 0
    %705 = vmatpush1.bf16.msra.mxu0 %v513
    %706 = vmatprep.mubr.bf16.mxu0 %v197
    %707 = vmatmul.mubr.bf16.gmra.mrb[0].mxu0 %v183
    %v708 = vpop.f32.mrb[0].mxu0
    %v709 = vadd.f32 %v669, %v708
    %v710 = vpop.f32.mrb[0].mxu0
    %v711 = vpop.f32.mrb[0].mxu0
    %v712 = vpop.f32.mrb[0].mxu0
    %713 = vdwg.mxu0
    %714 = vmatprep.subr.bf16.mxu0 0
    %715 = vmatpush1.bf16.msra.mxu0 %v514
    %716 = vmatprep.subr.bf16.mxu0 0
    %717 = vmatpush1.bf16.msra.mxu0 %v515
    %718 = vmatprep.subr.bf16.mxu0 0
    %719 = vmatpush1.bf16.msra.mxu0 %v516
    %720 = vmatprep.subr.bf16.mxu0 0
    %721 = vmatpush1.bf16.msra.mxu0 %v517
    %722 = vmatprep.subr.bf16.mxu0 0
    %723 = vmatpush1.bf16.msra.mxu0 %v518
    %724 = vmatprep.subr.bf16.mxu0 0
    %725 = vmatpush1.bf16.msra.mxu0 %v519
    %726 = vmatprep.subr.bf16.mxu0 0
    %727 = vmatpush1.bf16.msra.mxu0 %v520
    %728 = vmatprep.subr.bf16.mxu0 0
    %729 = vmatpush1.bf16.msra.mxu0 %v521
    %730 = vmatprep.subr.bf16.mxu0 0
    %731 = vmatpush1.bf16.msra.mxu0 %v522
    %732 = vmatprep.subr.bf16.mxu0 0
    %733 = vmatpush1.bf16.msra.mxu0 %v523
    %734 = vmatprep.subr.bf16.mxu0 0
    %735 = vmatpush1.bf16.msra.mxu0 %v524
    %736 = vmatprep.subr.bf16.mxu0 0
    %737 = vmatpush1.bf16.msra.mxu0 %v525
    %738 = vmatprep.subr.bf16.mxu0 0
    %739 = vmatpush1.bf16.msra.mxu0 %v526
    %740 = vmatprep.subr.bf16.mxu0 0
    %741 = vmatpush1.bf16.msra.mxu0 %v527
    %742 = vmatprep.subr.bf16.mxu0 0
    %743 = vmatpush1.bf16.msra.mxu0 %v528
    %744 = vmatprep.subr.bf16.mxu0 0
    %745 = vmatpush1.bf16.msra.mxu0 %v529
    %746 = vmatprep.mubr.bf16.mxu0 %v201
    %747 = vmatmul.mubr.bf16.gmra.mrb[0].mxu0 %v199
    %v748 = vpop.f32.mrb[0].mxu0
    %v749 = vadd.f32 %v709, %v748
    %v750 = vpop.f32.mrb[0].mxu0
    %v751 = vpop.f32.mrb[0].mxu0
    %v752 = vpop.f32.mrb[0].mxu0
    %753 = vdwg.mxu0
    %vm754 = vcmask 74752
    %755 = vst.msk [vmem:[#allocation2] sm:$0x3] %vm754, %v749
    // Predicated region
    $region14: #{a_call__.35} parent=1 // pred_check
      _
    $region15: #{a_call__.35} parent=1 // pred_check_branch
      %757 = sbr.rel (0) target = $region17
    $region16: #{a_call__.35} parent=1 // pred_region
      %s759 = ssub.s32 32, 32
      %760 = vsyncadd [#allocation3], %s759
      %s762 = sshll.u32 [#allocation2], 4
      %s763 = int_to_ptr.vmem [resolvable:$true] %s762
      %765 = dma.vmem_to_hbm [thread:$0]  %s763, 32, %s3, [#allocation3]
    $region17: #{a_call__.35} parent=1 // pred_fallthru
      _
    // Predicated region
    $region18: #{a_call__.35} parent=1 // pred_check
      _
    $region19: #{a_call__.35} parent=1 // pred_check_branch
      %767 = sbr.rel (0) target = $region21
    $region20: #{a_call__.35} parent=1 // pred_region
      %768 = dma.done [#allocation3], 32
    $region21: #{a_call__.35} parent=1 // pred_fallthru
      _
    %769 = vsyncpa [#allocation3], 1

</llo_original>
